<compile_context>
chip_gen: v7x
topology: tpu7x:2x2x1
jax: 0.10.0
libtpu: 0.0.40
codegen_flags: <defaults>
</compile_context>

<pallas_src>
import functools

import numpy as np
import jax
import jax.numpy as jnp
from jax.experimental import pallas as pl
from jax.experimental.pallas import tpu as pltpu


KSIZE, STRIDE, PAD = 3, 2, 1
_LAYER_CHANNELS = [(256, 128), (128, 64), (64, 32), (32, 16), (16, 1)]
_ACTS = ["relu", "relu", "relu", "relu", "sigmoid"]

# Set to jnp.bfloat16 on v6e / v7x for MXU throughput at larger batches
# (accumulation stays f32; at the toy size the kernel is latency-bound so f32
# keeps the check against the f32 reference exact).
COMPUTE_DTYPE = jnp.float32


def _round_up(x, m):
    return ((x + m - 1) // m) * m


# ----------------------------------------------------------------------------
# Host-side: 0/1 tap-selection ("gather") matrix for a 3x3 / stride-2 / pad-1
# conv on an (nb, h_in, w_in, C) activation stored row-major as
# (nb * rin_pad, C); real rows of sample s live at [s*rin_pad, s*rin_pad+h*w).
# Returns G of shape (9 * nb * rout_pad, nb * rin_pad): tap t occupies rows
# [t*nb*rout_pad, (t+1)*nb*rout_pad).  Pure geometry, built once, no FLOPs at
# run time beyond one MXU matmul per layer.
# ----------------------------------------------------------------------------
def _build_gather(nb, h_in, w_in, rin_pad):
    h_out = (h_in + 2 * PAD - KSIZE) // STRIDE + 1
    w_out = (w_in + 2 * PAD - KSIZE) // STRIDE + 1
    rout_real = h_out * w_out
    rout_pad = _round_up(rout_real, 8)              # sublane-aligned row count
    g = np.zeros((KSIZE * KSIZE, nb * rout_pad, nb * rin_pad), np.float32)
    for dh in range(KSIZE):
        for dw in range(KSIZE):
            t = dh * KSIZE + dw
            for s in range(nb):
                for i in range(h_out):
                    for j in range(w_out):
                        h = STRIDE * i + dh - PAD
                        w = STRIDE * j + dw - PAD
                        if 0 <= h < h_in and 0 <= w < w_in:
                            g[t, s * rout_pad + i * w_out + j,
                              s * rin_pad + h * w_in + w] = 1.0
    return (g.reshape(KSIZE * KSIZE * nb * rout_pad, nb * rin_pad),
            h_out, w_out, rout_pad)


# ----------------------------------------------------------------------------
# The fused Pallas kernel: 5 x (gather-matmul + 9 tap matmuls + bias + act)
# plus the final average pool, all on VMEM-resident data.
# ----------------------------------------------------------------------------
def _disc_fused_kernel(x_ref,
                       g1, g2, g3, g4, g5,
                       w1, w2, w3, w4, w5,
                       b1, b2, b3, b4, b5,
                       o_ref, *, nb, layers, pool_rows, pool_pad, compute_dtype):
    cd = compute_dtype
    a = x_ref[...].astype(cd)                                   # (nb*H*W, 256)

    for (rows, cin, cout, act), g_ref, w_ref, b_ref in zip(
            layers, (g1, g2, g3, g4, g5), (w1, w2, w3, w4, w5),
            (b1, b2, b3, b4, b5)):
        # In-kernel im2col: one MXU matmul with the 0/1 tap-selection matrix.
        p = jnp.dot(g_ref[...].astype(cd), a,
                    preferred_element_type=jnp.float32).astype(cd)  # (9*rows, cin)
        # Bias folded into the f32 accumulator init.
        acc = jnp.broadcast_to(b_ref[...], (rows, cout)).astype(jnp.float32)
        for t in range(KSIZE * KSIZE):                          # unrolled taps
            acc = acc + jnp.dot(p[t * rows:(t + 1) * rows, :],
                                w_ref[t * cin:(t + 1) * cin, :].astype(cd),
                                preferred_element_type=jnp.float32)
        acc = jnp.maximum(acc, 0.0) if act == "relu" else jax.nn.sigmoid(acc)
        a = acc.astype(cd)

    # AdaptiveAvgPool2d(1) + view(-1): mean over the real spatial rows of the
    # (lane-padded) conv5 output; column 0 holds the single real channel.
    segs = []
    for s in range(nb):
        seg = a[s * pool_pad:s * pool_pad + pool_rows, 0:1]
        segs.append(seg if pool_rows == 1
                    else jnp.mean(seg, axis=0, keepdims=True))
    pooled = segs[0] if nb == 1 else jnp.concatenate(segs, axis=0)   # (nb, 1)
    o_ref[...] = pooled.reshape(1, nb, 1).astype(o_ref.dtype)


# ----------------------------------------------------------------------------
# Parameter construction (deterministic, synthetic — no checkpoint load)
# Weights stored HWIO-flattened: [kh*kw*Cin, Cout]; bias [1, Cout].
# ----------------------------------------------------------------------------
def init_params(key):
    params = []
    for (cin, cout) in _LAYER_CHANNELS:
        key, kw_, kb_ = jax.random.split(key, 3)
        fan_in = cin * KSIZE * KSIZE
        w = jax.random.normal(kw_, (KSIZE, KSIZE, cin, cout),
                              jnp.float32) / np.sqrt(fan_in)
        b = 0.01 * jax.random.normal(kb_, (cout,), jnp.float32)
        params.append((w.reshape(KSIZE * KSIZE * cin, cout), b.reshape(1, cout)))
    return params


# ----------------------------------------------------------------------------
# Forward pass (matches Discriminator.forward semantics)
# ----------------------------------------------------------------------------
def discriminator_forward(x_nchw, params, *, batch_tile=1,
                          compute_dtype=COMPUTE_DTYPE):
    n, cin0, h, w = x_nchw.shape
    assert n % batch_tile == 0, "batch must be divisible by batch_tile"
    nb = batch_tile
    num_blocks = n // nb

    # NCHW -> NHWC -> (N*H*W, C): pure layout glue, no FLOPs, no im2col.
    x2d = jnp.transpose(x_nchw, (0, 2, 3, 1)).reshape(n * h * w, cin0)

    # Per-layer geometry: gather matrices + (rows, cin, cout_padded, act).
    gs, layers = [], []
    h_in, w_in, rin_pad = h, w, h * w
    for (ci, co), act in zip(_LAYER_CHANNELS, _ACTS):
        g_np, h_out, w_out, rout_pad = _build_gather(nb, h_in, w_in, rin_pad)
        cout_pad = 128 if co == 1 else co           # lane-pad conv5: 1 -> 128
        gs.append(jnp.asarray(g_np))
        layers.append((nb * rout_pad, ci, cout_pad, act))
        h_in, w_in, rin_pad = h_out, w_out, rout_pad
    pool_rows, pool_pad = h_in * w_in, rin_pad

    # Weights / biases; pad conv5's Cout so the last matmul is lane-dense.
    ws, bs = [], []
    for (w_flat, b), (rows, ci, cout_pad, act) in zip(params, layers):
        co = w_flat.shape[1]
        if cout_pad != co:
            w_flat = jnp.pad(w_flat, ((0, 0), (0, cout_pad - co)))
            b = jnp.pad(b, ((0, 0), (0, cout_pad - co)))
        ws.append(w_flat)
        bs.append(b)

    kernel = functools.partial(
        _disc_fused_kernel, nb=nb, layers=tuple(layers),
        pool_rows=pool_rows, pool_pad=pool_pad, compute_dtype=compute_dtype)

    def full(arr):  # whole-array block, resident across all grid steps
        return pl.BlockSpec(arr.shape, lambda i: (0,) * arr.ndim)

    in_specs = ([pl.BlockSpec((nb * h * w, cin0), lambda i: (i, 0))]
                + [full(g) for g in gs]
                + [full(wt) for wt in ws]
                + [full(bb) for bb in bs])
    out_specs = pl.BlockSpec((1, nb, 1), lambda i: (i, 0, 0))

    # Advisory cost estimate so XLA schedules around the fused call.
    flops = 0
    bytes_accessed = x2d.size * 4 + n * 4
    for g_arr, (rows, ci, co, act), w_arr, b_arr in zip(gs, layers, ws, bs):
        flops += 2 * num_blocks * (g_arr.shape[0] * g_arr.shape[1] * ci
                                   + KSIZE * KSIZE * rows * ci * co)
        bytes_accessed += (g_arr.size + w_arr.size + b_arr.size) * 4
    cost = pl.CostEstimate(flops=int(flops),
                           transcendentals=int(num_blocks * layers[-1][0]
                                               * layers[-1][2]),
                           bytes_accessed=int(bytes_accessed))

    out = pl.pallas_call(
        kernel,
        out_shape=jax.ShapeDtypeStruct((num_blocks, nb, 1), jnp.float32),
        grid=(num_blocks,),
        in_specs=in_specs,
        out_specs=out_specs,
        compiler_params=pltpu.CompilerParams(
            dimension_semantics=("parallel",)),   # megacore-sharded on v7x
        cost_estimate=cost,
    )(x2d, *gs, *ws, *bs)

    return out.reshape(-1)                         # (N,)


# ----------------------------------------------------------------------------
# Pure-JAX reference (for correctness check)
# ----------------------------------------------------------------------------
def _reference_forward(x_nchw, params):
    x = x_nchw
    for (w_flat, b), act in zip(params, _ACTS):
        cout = w_flat.shape[1]
        cin = w_flat.shape[0] // (KSIZE * KSIZE)
        w = w_flat.reshape(KSIZE, KSIZE, cin, cout)        # HWIO
        y = jax.lax.conv_general_dilated(
            x, w, window_strides=(STRIDE, STRIDE),
            padding=((PAD, PAD), (PAD, PAD)),
            dimension_numbers=("NCHW", "HWIO", "NCHW"),
            precision=jax.lax.Precision.HIGHEST)
        y = y + b.reshape(1, cout, 1, 1)
        x = jnp.maximum(y, 0.0) if act == "relu" else jax.nn.sigmoid(y)
    return jnp.mean(x, axis=(2, 3)).reshape(-1)


if __name__ == "__main__":
    key = jax.random.PRNGKey(0)
    kx, kp = jax.random.split(key)

    # PyTorch-style NCHW input: batch=2, C=256 (fixed by conv1), 16x16 spatial.
    x = jax.random.normal(kx, (2, 256, 16, 16), jnp.float32)
    params = init_params(kp)

    out = jax.block_until_ready(discriminator_forward(x, params, batch_tile=1))
    ref = jax.block_until_ready(_reference_forward(x, params))

    assert out.shape == (2,), out.shape
    assert jnp.allclose(out, ref, rtol=1e-4, atol=1e-5), (out, ref)

    print("KERNEL_OK")
</pallas_src>

<mosaic_0001>
module attributes {stable_mosaic.version = 11 : i64} {
  func.func @_disc_fused_kernel(%arg0: i32, %arg1: memref<256x256xf32, #tpu.memory_space<vmem>>, %arg2: memref<576x256xf32, #tpu.memory_space<vmem>>, %arg3: memref<144x64xf32, #tpu.memory_space<vmem>>, %arg4: memref<72x16xf32, #tpu.memory_space<vmem>>, %arg5: memref<72x8xf32, #tpu.memory_space<vmem>>, %arg6: memref<72x8xf32, #tpu.memory_space<vmem>>, %arg7: memref<2304x128xf32, #tpu.memory_space<vmem>>, %arg8: memref<1152x64xf32, #tpu.memory_space<vmem>>, %arg9: memref<576x32xf32, #tpu.memory_space<vmem>>, %arg10: memref<288x16xf32, #tpu.memory_space<vmem>>, %arg11: memref<144x128xf32, #tpu.memory_space<vmem>>, %arg12: memref<1x128xf32, #tpu.memory_space<vmem>>, %arg13: memref<1x64xf32, #tpu.memory_space<vmem>>, %arg14: memref<1x32xf32, #tpu.memory_space<vmem>>, %arg15: memref<1x16xf32, #tpu.memory_space<vmem>>, %arg16: memref<1x128xf32, #tpu.memory_space<vmem>>, %arg17: memref<1x1x1xf32, #tpu.memory_space<vmem>>) attributes {dimension_semantics = [#tpu.dimension_semantics<parallel>], iteration_bounds = array<i64: 2>, scalar_prefetch = 0 : i64, scratch_operands = 0 : i64, tpu.core_type = #tpu.core_type<tc>, window_params = [{transform_indices = @transform_0, window_bounds = array<i64: 256, 256>}, {pipeline_mode = #tpu.pipeline_mode<synchronous>, transform_indices = @transform_1, window_bounds = array<i64: 576, 256>}, {pipeline_mode = #tpu.pipeline_mode<synchronous>, transform_indices = @transform_2, window_bounds = array<i64: 144, 64>}, {pipeline_mode = #tpu.pipeline_mode<synchronous>, transform_indices = @transform_3, window_bounds = array<i64: 72, 16>}, {pipeline_mode = #tpu.pipeline_mode<synchronous>, transform_indices = @transform_4, window_bounds = array<i64: 72, 8>}, {pipeline_mode = #tpu.pipeline_mode<synchronous>, transform_indices = @transform_5, window_bounds = array<i64: 72, 8>}, {pipeline_mode = #tpu.pipeline_mode<synchronous>, transform_indices = @transform_6, window_bounds = array<i64: 2304, 128>}, {pipeline_mode = #tpu.pipeline_mode<synchronous>, transform_indices = @transform_7, window_bounds = array<i64: 1152, 64>}, {pipeline_mode = #tpu.pipeline_mode<synchronous>, transform_indices = @transform_8, window_bounds = array<i64: 576, 32>}, {pipeline_mode = #tpu.pipeline_mode<synchronous>, transform_indices = @transform_9, window_bounds = array<i64: 288, 16>}, {pipeline_mode = #tpu.pipeline_mode<synchronous>, transform_indices = @transform_10, window_bounds = array<i64: 144, 128>}, {pipeline_mode = #tpu.pipeline_mode<synchronous>, transform_indices = @transform_11, window_bounds = array<i64: 1, 128>}, {pipeline_mode = #tpu.pipeline_mode<synchronous>, transform_indices = @transform_12, window_bounds = array<i64: 1, 64>}, {pipeline_mode = #tpu.pipeline_mode<synchronous>, transform_indices = @transform_13, window_bounds = array<i64: 1, 32>}, {pipeline_mode = #tpu.pipeline_mode<synchronous>, transform_indices = @transform_14, window_bounds = array<i64: 1, 16>}, {pipeline_mode = #tpu.pipeline_mode<synchronous>, transform_indices = @transform_15, window_bounds = array<i64: 1, 128>}, {transform_indices = @transform_16, window_bounds = array<i64: 1, 1, 1>}]} {
    %c0 = arith.constant 0 : index
    %c0_0 = arith.constant 0 : index
    %0 = vector.load %arg1[%c0, %c0_0] : memref<256x256xf32, #tpu.memory_space<vmem>>, vector<256x256xf32>
    %c0_1 = arith.constant 0 : index
    %c0_2 = arith.constant 0 : index
    %1 = vector.load %arg2[%c0_1, %c0_2] : memref<576x256xf32, #tpu.memory_space<vmem>>, vector<576x256xf32>
    %cst = arith.constant dense<0.000000e+00> : vector<576x256xf32>
    %2 = tpu.matmul %1, %0, %cst {dimension_numbers = #tpu.dot_dimension_numbers<[1], [0], [0], [1], [0, 0, 1, 1], [], []>} : vector<576x256xf32>, vector<256x256xf32>, vector<576x256xf32> -> vector<576x256xf32>
    %c0_3 = arith.constant 0 : index
    %c0_4 = arith.constant 0 : index
    %3 = vector.load %arg12[%c0_3, %c0_4] : memref<1x128xf32, #tpu.memory_space<vmem>>, vector<1x128xf32>
    %4 = vector.shape_cast %3 : vector<1x128xf32> to vector<1x128xf32>
    %5 = vector.broadcast %4 : vector<1x128xf32> to vector<64x128xf32>
    %6 = vector.extract_strided_slice %2 {offsets = [0, 0], sizes = [64, 256], strides = [1, 1]} : vector<576x256xf32> to vector<64x256xf32>
    %c0_5 = arith.constant 0 : index
    %c0_6 = arith.constant 0 : index
    %7 = vector.load %arg7[%c0_5, %c0_6] : memref<2304x128xf32, #tpu.memory_space<vmem>>, vector<256x128xf32>
    %cst_7 = arith.constant dense<0.000000e+00> : vector<64x128xf32>
    %8 = tpu.matmul %6, %7, %cst_7 {dimension_numbers = #tpu.dot_dimension_numbers<[1], [0], [0], [1], [0, 0, 1, 1], [], []>} : vector<64x256xf32>, vector<256x128xf32>, vector<64x128xf32> -> vector<64x128xf32>
    %9 = arith.addf %5, %8 : vector<64x128xf32>
    %10 = vector.extract_strided_slice %2 {offsets = [64, 0], sizes = [64, 256], strides = [1, 1]} : vector<576x256xf32> to vector<64x256xf32>
    %c256 = arith.constant 256 : index
    %c0_8 = arith.constant 0 : index
    %11 = vector.load %arg7[%c256, %c0_8] : memref<2304x128xf32, #tpu.memory_space<vmem>>, vector<256x128xf32>
    %cst_9 = arith.constant dense<0.000000e+00> : vector<64x128xf32>
    %12 = tpu.matmul %10, %11, %cst_9 {dimension_numbers = #tpu.dot_dimension_numbers<[1], [0], [0], [1], [0, 0, 1, 1], [], []>} : vector<64x256xf32>, vector<256x128xf32>, vector<64x128xf32> -> vector<64x128xf32>
    %13 = arith.addf %9, %12 : vector<64x128xf32>
    %14 = vector.extract_strided_slice %2 {offsets = [128, 0], sizes = [64, 256], strides = [1, 1]} : vector<576x256xf32> to vector<64x256xf32>
    %c512 = arith.constant 512 : index
    %c0_10 = arith.constant 0 : index
    %15 = vector.load %arg7[%c512, %c0_10] : memref<2304x128xf32, #tpu.memory_space<vmem>>, vector<256x128xf32>
    %cst_11 = arith.constant dense<0.000000e+00> : vector<64x128xf32>
    %16 = tpu.matmul %14, %15, %cst_11 {dimension_numbers = #tpu.dot_dimension_numbers<[1], [0], [0], [1], [0, 0, 1, 1], [], []>} : vector<64x256xf32>, vector<256x128xf32>, vector<64x128xf32> -> vector<64x128xf32>
    %17 = arith.addf %13, %16 : vector<64x128xf32>
    %18 = vector.extract_strided_slice %2 {offsets = [192, 0], sizes = [64, 256], strides = [1, 1]} : vector<576x256xf32> to vector<64x256xf32>
    %c768 = arith.constant 768 : index
    %c0_12 = arith.constant 0 : index
    %19 = vector.load %arg7[%c768, %c0_12] : memref<2304x128xf32, #tpu.memory_space<vmem>>, vector<256x128xf32>
    %cst_13 = arith.constant dense<0.000000e+00> : vector<64x128xf32>
    %20 = tpu.matmul %18, %19, %cst_13 {dimension_numbers = #tpu.dot_dimension_numbers<[1], [0], [0], [1], [0, 0, 1, 1], [], []>} : vector<64x256xf32>, vector<256x128xf32>, vector<64x128xf32> -> vector<64x128xf32>
    %21 = arith.addf %17, %20 : vector<64x128xf32>
    %22 = vector.extract_strided_slice %2 {offsets = [256, 0], sizes = [64, 256], strides = [1, 1]} : vector<576x256xf32> to vector<64x256xf32>
    %c1024 = arith.constant 1024 : index
    %c0_14 = arith.constant 0 : index
    %23 = vector.load %arg7[%c1024, %c0_14] : memref<2304x128xf32, #tpu.memory_space<vmem>>, vector<256x128xf32>
    %cst_15 = arith.constant dense<0.000000e+00> : vector<64x128xf32>
    %24 = tpu.matmul %22, %23, %cst_15 {dimension_numbers = #tpu.dot_dimension_numbers<[1], [0], [0], [1], [0, 0, 1, 1], [], []>} : vector<64x256xf32>, vector<256x128xf32>, vector<64x128xf32> -> vector<64x128xf32>
    %25 = arith.addf %21, %24 : vector<64x128xf32>
    %26 = vector.extract_strided_slice %2 {offsets = [320, 0], sizes = [64, 256], strides = [1, 1]} : vector<576x256xf32> to vector<64x256xf32>
    %c1280 = arith.constant 1280 : index
    %c0_16 = arith.constant 0 : index
    %27 = vector.load %arg7[%c1280, %c0_16] : memref<2304x128xf32, #tpu.memory_space<vmem>>, vector<256x128xf32>
    %cst_17 = arith.constant dense<0.000000e+00> : vector<64x128xf32>
    %28 = tpu.matmul %26, %27, %cst_17 {dimension_numbers = #tpu.dot_dimension_numbers<[1], [0], [0], [1], [0, 0, 1, 1], [], []>} : vector<64x256xf32>, vector<256x128xf32>, vector<64x128xf32> -> vector<64x128xf32>
    %29 = arith.addf %25, %28 : vector<64x128xf32>
    %30 = vector.extract_strided_slice %2 {offsets = [384, 0], sizes = [64, 256], strides = [1, 1]} : vector<576x256xf32> to vector<64x256xf32>
    %c1536 = arith.constant 1536 : index
    %c0_18 = arith.constant 0 : index
    %31 = vector.load %arg7[%c1536, %c0_18] : memref<2304x128xf32, #tpu.memory_space<vmem>>, vector<256x128xf32>
    %cst_19 = arith.constant dense<0.000000e+00> : vector<64x128xf32>
    %32 = tpu.matmul %30, %31, %cst_19 {dimension_numbers = #tpu.dot_dimension_numbers<[1], [0], [0], [1], [0, 0, 1, 1], [], []>} : vector<64x256xf32>, vector<256x128xf32>, vector<64x128xf32> -> vector<64x128xf32>
    %33 = arith.addf %29, %32 : vector<64x128xf32>
    %34 = vector.extract_strided_slice %2 {offsets = [448, 0], sizes = [64, 256], strides = [1, 1]} : vector<576x256xf32> to vector<64x256xf32>
    %c1792 = arith.constant 1792 : index
    %c0_20 = arith.constant 0 : index
    %35 = vector.load %arg7[%c1792, %c0_20] : memref<2304x128xf32, #tpu.memory_space<vmem>>, vector<256x128xf32>
    %cst_21 = arith.constant dense<0.000000e+00> : vector<64x128xf32>
    %36 = tpu.matmul %34, %35, %cst_21 {dimension_numbers = #tpu.dot_dimension_numbers<[1], [0], [0], [1], [0, 0, 1, 1], [], []>} : vector<64x256xf32>, vector<256x128xf32>, vector<64x128xf32> -> vector<64x128xf32>
    %37 = arith.addf %33, %36 : vector<64x128xf32>
    %38 = vector.extract_strided_slice %2 {offsets = [512, 0], sizes = [64, 256], strides = [1, 1]} : vector<576x256xf32> to vector<64x256xf32>
    %c2048 = arith.constant 2048 : index
    %c0_22 = arith.constant 0 : index
    %39 = vector.load %arg7[%c2048, %c0_22] : memref<2304x128xf32, #tpu.memory_space<vmem>>, vector<256x128xf32>
    %cst_23 = arith.constant dense<0.000000e+00> : vector<64x128xf32>
    %40 = tpu.matmul %38, %39, %cst_23 {dimension_numbers = #tpu.dot_dimension_numbers<[1], [0], [0], [1], [0, 0, 1, 1], [], []>} : vector<64x256xf32>, vector<256x128xf32>, vector<64x128xf32> -> vector<64x128xf32>
    %41 = arith.addf %37, %40 : vector<64x128xf32>
    %cst_24 = arith.constant 0.000000e+00 : f32
    %42 = vector.broadcast %cst_24 : f32 to vector<64x128xf32>
    %43 = arith.maximumf %41, %42 : vector<64x128xf32>
    %c0_25 = arith.constant 0 : index
    %c0_26 = arith.constant 0 : index
    %44 = vector.load %arg3[%c0_25, %c0_26] : memref<144x64xf32, #tpu.memory_space<vmem>>, vector<144x64xf32>
    %cst_27 = arith.constant dense<0.000000e+00> : vector<144x128xf32>
    %45 = tpu.matmul %44, %43, %cst_27 {dimension_numbers = #tpu.dot_dimension_numbers<[1], [0], [0], [1], [0, 0, 1, 1], [], []>} : vector<144x64xf32>, vector<64x128xf32>, vector<144x128xf32> -> vector<144x128xf32>
    %c0_28 = arith.constant 0 : index
    %c0_29 = arith.constant 0 : index
    %46 = vector.load %arg13[%c0_28, %c0_29] : memref<1x64xf32, #tpu.memory_space<vmem>>, vector<1x64xf32>
    %47 = vector.shape_cast %46 : vector<1x64xf32> to vector<1x64xf32>
    %48 = vector.broadcast %47 : vector<1x64xf32> to vector<16x64xf32>
    %49 = vector.extract_strided_slice %45 {offsets = [0, 0], sizes = [16, 128], strides = [1, 1]} : vector<144x128xf32> to vector<16x128xf32>
    %c0_30 = arith.constant 0 : index
    %c0_31 = arith.constant 0 : index
    %50 = vector.load %arg8[%c0_30, %c0_31] : memref<1152x64xf32, #tpu.memory_space<vmem>>, vector<128x64xf32>
    %cst_32 = arith.constant dense<0.000000e+00> : vector<16x64xf32>
    %51 = tpu.matmul %49, %50, %cst_32 {dimension_numbers = #tpu.dot_dimension_numbers<[1], [0], [0], [1], [0, 0, 1, 1], [], []>} : vector<16x128xf32>, vector<128x64xf32>, vector<16x64xf32> -> vector<16x64xf32>
    %52 = arith.addf %48, %51 : vector<16x64xf32>
    %53 = vector.extract_strided_slice %45 {offsets = [16, 0], sizes = [16, 128], strides = [1, 1]} : vector<144x128xf32> to vector<16x128xf32>
    %c128 = arith.constant 128 : index
    %c0_33 = arith.constant 0 : index
    %54 = vector.load %arg8[%c128, %c0_33] : memref<1152x64xf32, #tpu.memory_space<vmem>>, vector<128x64xf32>
    %cst_34 = arith.constant dense<0.000000e+00> : vector<16x64xf32>
    %55 = tpu.matmul %53, %54, %cst_34 {dimension_numbers = #tpu.dot_dimension_numbers<[1], [0], [0], [1], [0, 0, 1, 1], [], []>} : vector<16x128xf32>, vector<128x64xf32>, vector<16x64xf32> -> vector<16x64xf32>
    %56 = arith.addf %52, %55 : vector<16x64xf32>
    %57 = vector.extract_strided_slice %45 {offsets = [32, 0], sizes = [16, 128], strides = [1, 1]} : vector<144x128xf32> to vector<16x128xf32>
    %c256_35 = arith.constant 256 : index
    %c0_36 = arith.constant 0 : index
    %58 = vector.load %arg8[%c256_35, %c0_36] : memref<1152x64xf32, #tpu.memory_space<vmem>>, vector<128x64xf32>
    %cst_37 = arith.constant dense<0.000000e+00> : vector<16x64xf32>
    %59 = tpu.matmul %57, %58, %cst_37 {dimension_numbers = #tpu.dot_dimension_numbers<[1], [0], [0], [1], [0, 0, 1, 1], [], []>} : vector<16x128xf32>, vector<128x64xf32>, vector<16x64xf32> -> vector<16x64xf32>
    %60 = arith.addf %56, %59 : vector<16x64xf32>
    %61 = vector.extract_strided_slice %45 {offsets = [48, 0], sizes = [16, 128], strides = [1, 1]} : vector<144x128xf32> to vector<16x128xf32>
    %c384 = arith.constant 384 : index
    %c0_38 = arith.constant 0 : index
    %62 = vector.load %arg8[%c384, %c0_38] : memref<1152x64xf32, #tpu.memory_space<vmem>>, vector<128x64xf32>
    %cst_39 = arith.constant dense<0.000000e+00> : vector<16x64xf32>
    %63 = tpu.matmul %61, %62, %cst_39 {dimension_numbers = #tpu.dot_dimension_numbers<[1], [0], [0], [1], [0, 0, 1, 1], [], []>} : vector<16x128xf32>, vector<128x64xf32>, vector<16x64xf32> -> vector<16x64xf32>
    %64 = arith.addf %60, %63 : vector<16x64xf32>
    %65 = vector.extract_strided_slice %45 {offsets = [64, 0], sizes = [16, 128], strides = [1, 1]} : vector<144x128xf32> to vector<16x128xf32>
    %c512_40 = arith.constant 512 : index
    %c0_41 = arith.constant 0 : index
    %66 = vector.load %arg8[%c512_40, %c0_41] : memref<1152x64xf32, #tpu.memory_space<vmem>>, vector<128x64xf32>
    %cst_42 = arith.constant dense<0.000000e+00> : vector<16x64xf32>
    %67 = tpu.matmul %65, %66, %cst_42 {dimension_numbers = #tpu.dot_dimension_numbers<[1], [0], [0], [1], [0, 0, 1, 1], [], []>} : vector<16x128xf32>, vector<128x64xf32>, vector<16x64xf32> -> vector<16x64xf32>
    %68 = arith.addf %64, %67 : vector<16x64xf32>
    %69 = vector.extract_strided_slice %45 {offsets = [80, 0], sizes = [16, 128], strides = [1, 1]} : vector<144x128xf32> to vector<16x128xf32>
    %c640 = arith.constant 640 : index
    %c0_43 = arith.constant 0 : index
    %70 = vector.load %arg8[%c640, %c0_43] : memref<1152x64xf32, #tpu.memory_space<vmem>>, vector<128x64xf32>
    %cst_44 = arith.constant dense<0.000000e+00> : vector<16x64xf32>
    %71 = tpu.matmul %69, %70, %cst_44 {dimension_numbers = #tpu.dot_dimension_numbers<[1], [0], [0], [1], [0, 0, 1, 1], [], []>} : vector<16x128xf32>, vector<128x64xf32>, vector<16x64xf32> -> vector<16x64xf32>
    %72 = arith.addf %68, %71 : vector<16x64xf32>
    %73 = vector.extract_strided_slice %45 {offsets = [96, 0], sizes = [16, 128], strides = [1, 1]} : vector<144x128xf32> to vector<16x128xf32>
    %c768_45 = arith.constant 768 : index
    %c0_46 = arith.constant 0 : index
    %74 = vector.load %arg8[%c768_45, %c0_46] : memref<1152x64xf32, #tpu.memory_space<vmem>>, vector<128x64xf32>
    %cst_47 = arith.constant dense<0.000000e+00> : vector<16x64xf32>
    %75 = tpu.matmul %73, %74, %cst_47 {dimension_numbers = #tpu.dot_dimension_numbers<[1], [0], [0], [1], [0, 0, 1, 1], [], []>} : vector<16x128xf32>, vector<128x64xf32>, vector<16x64xf32> -> vector<16x64xf32>
    %76 = arith.addf %72, %75 : vector<16x64xf32>
    %77 = vector.extract_strided_slice %45 {offsets = [112, 0], sizes = [16, 128], strides = [1, 1]} : vector<144x128xf32> to vector<16x128xf32>
    %c896 = arith.constant 896 : index
    %c0_48 = arith.constant 0 : index
    %78 = vector.load %arg8[%c896, %c0_48] : memref<1152x64xf32, #tpu.memory_space<vmem>>, vector<128x64xf32>
    %cst_49 = arith.constant dense<0.000000e+00> : vector<16x64xf32>
    %79 = tpu.matmul %77, %78, %cst_49 {dimension_numbers = #tpu.dot_dimension_numbers<[1], [0], [0], [1], [0, 0, 1, 1], [], []>} : vector<16x128xf32>, vector<128x64xf32>, vector<16x64xf32> -> vector<16x64xf32>
    %80 = arith.addf %76, %79 : vector<16x64xf32>
    %81 = vector.extract_strided_slice %45 {offsets = [128, 0], sizes = [16, 128], strides = [1, 1]} : vector<144x128xf32> to vector<16x128xf32>
    %c1024_50 = arith.constant 1024 : index
    %c0_51 = arith.constant 0 : index
    %82 = vector.load %arg8[%c1024_50, %c0_51] : memref<1152x64xf32, #tpu.memory_space<vmem>>, vector<128x64xf32>
    %cst_52 = arith.constant dense<0.000000e+00> : vector<16x64xf32>
    %83 = tpu.matmul %81, %82, %cst_52 {dimension_numbers = #tpu.dot_dimension_numbers<[1], [0], [0], [1], [0, 0, 1, 1], [], []>} : vector<16x128xf32>, vector<128x64xf32>, vector<16x64xf32> -> vector<16x64xf32>
    %84 = arith.addf %80, %83 : vector<16x64xf32>
    %cst_53 = arith.constant 0.000000e+00 : f32
    %85 = vector.broadcast %cst_53 : f32 to vector<16x64xf32>
    %86 = arith.maximumf %84, %85 : vector<16x64xf32>
    %c0_54 = arith.constant 0 : index
    %c0_55 = arith.constant 0 : index
    %87 = vector.load %arg4[%c0_54, %c0_55] : memref<72x16xf32, #tpu.memory_space<vmem>>, vector<72x16xf32>
    %cst_56 = arith.constant dense<0.000000e+00> : vector<72x64xf32>
    %88 = tpu.matmul %87, %86, %cst_56 {dimension_numbers = #tpu.dot_dimension_numbers<[1], [0], [0], [1], [0, 0, 1, 1], [], []>} : vector<72x16xf32>, vector<16x64xf32>, vector<72x64xf32> -> vector<72x64xf32>
    %c0_57 = arith.constant 0 : index
    %c0_58 = arith.constant 0 : index
    %89 = vector.load %arg14[%c0_57, %c0_58] : memref<1x32xf32, #tpu.memory_space<vmem>>, vector<1x32xf32>
    %90 = vector.shape_cast %89 : vector<1x32xf32> to vector<1x32xf32>
    %91 = vector.broadcast %90 : vector<1x32xf32> to vector<8x32xf32>
    %92 = vector.extract_strided_slice %88 {offsets = [0, 0], sizes = [8, 64], strides = [1, 1]} : vector<72x64xf32> to vector<8x64xf32>
    %c0_59 = arith.constant 0 : index
    %c0_60 = arith.constant 0 : index
    %93 = vector.load %arg9[%c0_59, %c0_60] : memref<576x32xf32, #tpu.memory_space<vmem>>, vector<64x32xf32>
    %cst_61 = arith.constant dense<0.000000e+00> : vector<8x32xf32>
    %94 = tpu.matmul %92, %93, %cst_61 {dimension_numbers = #tpu.dot_dimension_numbers<[1], [0], [0], [1], [0, 0, 1, 1], [], []>} : vector<8x64xf32>, vector<64x32xf32>, vector<8x32xf32> -> vector<8x32xf32>
    %95 = arith.addf %91, %94 : vector<8x32xf32>
    %96 = vector.extract_strided_slice %88 {offsets = [8, 0], sizes = [8, 64], strides = [1, 1]} : vector<72x64xf32> to vector<8x64xf32>
    %c64 = arith.constant 64 : index
    %c0_62 = arith.constant 0 : index
    %97 = vector.load %arg9[%c64, %c0_62] : memref<576x32xf32, #tpu.memory_space<vmem>>, vector<64x32xf32>
    %cst_63 = arith.constant dense<0.000000e+00> : vector<8x32xf32>
    %98 = tpu.matmul %96, %97, %cst_63 {dimension_numbers = #tpu.dot_dimension_numbers<[1], [0], [0], [1], [0, 0, 1, 1], [], []>} : vector<8x64xf32>, vector<64x32xf32>, vector<8x32xf32> -> vector<8x32xf32>
    %99 = arith.addf %95, %98 : vector<8x32xf32>
    %100 = vector.extract_strided_slice %88 {offsets = [16, 0], sizes = [8, 64], strides = [1, 1]} : vector<72x64xf32> to vector<8x64xf32>
    %c128_64 = arith.constant 128 : index
    %c0_65 = arith.constant 0 : index
    %101 = vector.load %arg9[%c128_64, %c0_65] : memref<576x32xf32, #tpu.memory_space<vmem>>, vector<64x32xf32>
    %cst_66 = arith.constant dense<0.000000e+00> : vector<8x32xf32>
    %102 = tpu.matmul %100, %101, %cst_66 {dimension_numbers = #tpu.dot_dimension_numbers<[1], [0], [0], [1], [0, 0, 1, 1], [], []>} : vector<8x64xf32>, vector<64x32xf32>, vector<8x32xf32> -> vector<8x32xf32>
    %103 = arith.addf %99, %102 : vector<8x32xf32>
    %104 = vector.extract_strided_slice %88 {offsets = [24, 0], sizes = [8, 64], strides = [1, 1]} : vector<72x64xf32> to vector<8x64xf32>
    %c192 = arith.constant 192 : index
    %c0_67 = arith.constant 0 : index
    %105 = vector.load %arg9[%c192, %c0_67] : memref<576x32xf32, #tpu.memory_space<vmem>>, vector<64x32xf32>
    %cst_68 = arith.constant dense<0.000000e+00> : vector<8x32xf32>
    %106 = tpu.matmul %104, %105, %cst_68 {dimension_numbers = #tpu.dot_dimension_numbers<[1], [0], [0], [1], [0, 0, 1, 1], [], []>} : vector<8x64xf32>, vector<64x32xf32>, vector<8x32xf32> -> vector<8x32xf32>
    %107 = arith.addf %103, %106 : vector<8x32xf32>
    %108 = vector.extract_strided_slice %88 {offsets = [32, 0], sizes = [8, 64], strides = [1, 1]} : vector<72x64xf32> to vector<8x64xf32>
    %c256_69 = arith.constant 256 : index
    %c0_70 = arith.constant 0 : index
    %109 = vector.load %arg9[%c256_69, %c0_70] : memref<576x32xf32, #tpu.memory_space<vmem>>, vector<64x32xf32>
    %cst_71 = arith.constant dense<0.000000e+00> : vector<8x32xf32>
    %110 = tpu.matmul %108, %109, %cst_71 {dimension_numbers = #tpu.dot_dimension_numbers<[1], [0], [0], [1], [0, 0, 1, 1], [], []>} : vector<8x64xf32>, vector<64x32xf32>, vector<8x32xf32> -> vector<8x32xf32>
    %111 = arith.addf %107, %110 : vector<8x32xf32>
    %112 = vector.extract_strided_slice %88 {offsets = [40, 0], sizes = [8, 64], strides = [1, 1]} : vector<72x64xf32> to vector<8x64xf32>
    %c320 = arith.constant 320 : index
    %c0_72 = arith.constant 0 : index
    %113 = vector.load %arg9[%c320, %c0_72] : memref<576x32xf32, #tpu.memory_space<vmem>>, vector<64x32xf32>
    %cst_73 = arith.constant dense<0.000000e+00> : vector<8x32xf32>
    %114 = tpu.matmul %112, %113, %cst_73 {dimension_numbers = #tpu.dot_dimension_numbers<[1], [0], [0], [1], [0, 0, 1, 1], [], []>} : vector<8x64xf32>, vector<64x32xf32>, vector<8x32xf32> -> vector<8x32xf32>
    %115 = arith.addf %111, %114 : vector<8x32xf32>
    %116 = vector.extract_strided_slice %88 {offsets = [48, 0], sizes = [8, 64], strides = [1, 1]} : vector<72x64xf32> to vector<8x64xf32>
    %c384_74 = arith.constant 384 : index
    %c0_75 = arith.constant 0 : index
    %117 = vector.load %arg9[%c384_74, %c0_75] : memref<576x32xf32, #tpu.memory_space<vmem>>, vector<64x32xf32>
    %cst_76 = arith.constant dense<0.000000e+00> : vector<8x32xf32>
    %118 = tpu.matmul %116, %117, %cst_76 {dimension_numbers = #tpu.dot_dimension_numbers<[1], [0], [0], [1], [0, 0, 1, 1], [], []>} : vector<8x64xf32>, vector<64x32xf32>, vector<8x32xf32> -> vector<8x32xf32>
    %119 = arith.addf %115, %118 : vector<8x32xf32>
    %120 = vector.extract_strided_slice %88 {offsets = [56, 0], sizes = [8, 64], strides = [1, 1]} : vector<72x64xf32> to vector<8x64xf32>
    %c448 = arith.constant 448 : index
    %c0_77 = arith.constant 0 : index
    %121 = vector.load %arg9[%c448, %c0_77] : memref<576x32xf32, #tpu.memory_space<vmem>>, vector<64x32xf32>
    %cst_78 = arith.constant dense<0.000000e+00> : vector<8x32xf32>
    %122 = tpu.matmul %120, %121, %cst_78 {dimension_numbers = #tpu.dot_dimension_numbers<[1], [0], [0], [1], [0, 0, 1, 1], [], []>} : vector<8x64xf32>, vector<64x32xf32>, vector<8x32xf32> -> vector<8x32xf32>
    %123 = arith.addf %119, %122 : vector<8x32xf32>
    %124 = vector.extract_strided_slice %88 {offsets = [64, 0], sizes = [8, 64], strides = [1, 1]} : vector<72x64xf32> to vector<8x64xf32>
    %c512_79 = arith.constant 512 : index
    %c0_80 = arith.constant 0 : index
    %125 = vector.load %arg9[%c512_79, %c0_80] : memref<576x32xf32, #tpu.memory_space<vmem>>, vector<64x32xf32>
    %cst_81 = arith.constant dense<0.000000e+00> : vector<8x32xf32>
    %126 = tpu.matmul %124, %125, %cst_81 {dimension_numbers = #tpu.dot_dimension_numbers<[1], [0], [0], [1], [0, 0, 1, 1], [], []>} : vector<8x64xf32>, vector<64x32xf32>, vector<8x32xf32> -> vector<8x32xf32>
    %127 = arith.addf %123, %126 : vector<8x32xf32>
    %cst_82 = arith.constant 0.000000e+00 : f32
    %128 = vector.broadcast %cst_82 : f32 to vector<8x32xf32>
    %129 = arith.maximumf %127, %128 : vector<8x32xf32>
    %c0_83 = arith.constant 0 : index
    %c0_84 = arith.constant 0 : index
    %130 = vector.load %arg5[%c0_83, %c0_84] : memref<72x8xf32, #tpu.memory_space<vmem>>, vector<72x8xf32>
    %cst_85 = arith.constant dense<0.000000e+00> : vector<72x32xf32>
    %131 = tpu.matmul %130, %129, %cst_85 {dimension_numbers = #tpu.dot_dimension_numbers<[1], [0], [0], [1], [0, 0, 1, 1], [], []>} : vector<72x8xf32>, vector<8x32xf32>, vector<72x32xf32> -> vector<72x32xf32>
    %c0_86 = arith.constant 0 : index
    %c0_87 = arith.constant 0 : index
    %132 = vector.load %arg15[%c0_86, %c0_87] : memref<1x16xf32, #tpu.memory_space<vmem>>, vector<1x16xf32>
    %133 = vector.shape_cast %132 : vector<1x16xf32> to vector<1x16xf32>
    %134 = vector.broadcast %133 : vector<1x16xf32> to vector<8x16xf32>
    %135 = vector.extract_strided_slice %131 {offsets = [0, 0], sizes = [8, 32], strides = [1, 1]} : vector<72x32xf32> to vector<8x32xf32>
    %c0_88 = arith.constant 0 : index
    %c0_89 = arith.constant 0 : index
    %136 = vector.load %arg10[%c0_88, %c0_89] : memref<288x16xf32, #tpu.memory_space<vmem>>, vector<32x16xf32>
    %cst_90 = arith.constant dense<0.000000e+00> : vector<8x16xf32>
    %137 = tpu.matmul %135, %136, %cst_90 {dimension_numbers = #tpu.dot_dimension_numbers<[1], [0], [0], [1], [0, 0, 1, 1], [], []>} : vector<8x32xf32>, vector<32x16xf32>, vector<8x16xf32> -> vector<8x16xf32>
    %138 = arith.addf %134, %137 : vector<8x16xf32>
    %139 = vector.extract_strided_slice %131 {offsets = [8, 0], sizes = [8, 32], strides = [1, 1]} : vector<72x32xf32> to vector<8x32xf32>
    %c32 = arith.constant 32 : index
    %c0_91 = arith.constant 0 : index
    %140 = vector.load %arg10[%c32, %c0_91] : memref<288x16xf32, #tpu.memory_space<vmem>>, vector<32x16xf32>
    %cst_92 = arith.constant dense<0.000000e+00> : vector<8x16xf32>
    %141 = tpu.matmul %139, %140, %cst_92 {dimension_numbers = #tpu.dot_dimension_numbers<[1], [0], [0], [1], [0, 0, 1, 1], [], []>} : vector<8x32xf32>, vector<32x16xf32>, vector<8x16xf32> -> vector<8x16xf32>
    %142 = arith.addf %138, %141 : vector<8x16xf32>
    %143 = vector.extract_strided_slice %131 {offsets = [16, 0], sizes = [8, 32], strides = [1, 1]} : vector<72x32xf32> to vector<8x32xf32>
    %c64_93 = arith.constant 64 : index
    %c0_94 = arith.constant 0 : index
    %144 = vector.load %arg10[%c64_93, %c0_94] : memref<288x16xf32, #tpu.memory_space<vmem>>, vector<32x16xf32>
    %cst_95 = arith.constant dense<0.000000e+00> : vector<8x16xf32>
    %145 = tpu.matmul %143, %144, %cst_95 {dimension_numbers = #tpu.dot_dimension_numbers<[1], [0], [0], [1], [0, 0, 1, 1], [], []>} : vector<8x32xf32>, vector<32x16xf32>, vector<8x16xf32> -> vector<8x16xf32>
    %146 = arith.addf %142, %145 : vector<8x16xf32>
    %147 = vector.extract_strided_slice %131 {offsets = [24, 0], sizes = [8, 32], strides = [1, 1]} : vector<72x32xf32> to vector<8x32xf32>
    %c96 = arith.constant 96 : index
    %c0_96 = arith.constant 0 : index
    %148 = vector.load %arg10[%c96, %c0_96] : memref<288x16xf32, #tpu.memory_space<vmem>>, vector<32x16xf32>
    %cst_97 = arith.constant dense<0.000000e+00> : vector<8x16xf32>
    %149 = tpu.matmul %147, %148, %cst_97 {dimension_numbers = #tpu.dot_dimension_numbers<[1], [0], [0], [1], [0, 0, 1, 1], [], []>} : vector<8x32xf32>, vector<32x16xf32>, vector<8x16xf32> -> vector<8x16xf32>
    %150 = arith.addf %146, %149 : vector<8x16xf32>
    %151 = vector.extract_strided_slice %131 {offsets = [32, 0], sizes = [8, 32], strides = [1, 1]} : vector<72x32xf32> to vector<8x32xf32>
    %c128_98 = arith.constant 128 : index
    %c0_99 = arith.constant 0 : index
    %152 = vector.load %arg10[%c128_98, %c0_99] : memref<288x16xf32, #tpu.memory_space<vmem>>, vector<32x16xf32>
    %cst_100 = arith.constant dense<0.000000e+00> : vector<8x16xf32>
    %153 = tpu.matmul %151, %152, %cst_100 {dimension_numbers = #tpu.dot_dimension_numbers<[1], [0], [0], [1], [0, 0, 1, 1], [], []>} : vector<8x32xf32>, vector<32x16xf32>, vector<8x16xf32> -> vector<8x16xf32>
    %154 = arith.addf %150, %153 : vector<8x16xf32>
    %155 = vector.extract_strided_slice %131 {offsets = [40, 0], sizes = [8, 32], strides = [1, 1]} : vector<72x32xf32> to vector<8x32xf32>
    %c160 = arith.constant 160 : index
    %c0_101 = arith.constant 0 : index
    %156 = vector.load %arg10[%c160, %c0_101] : memref<288x16xf32, #tpu.memory_space<vmem>>, vector<32x16xf32>
    %cst_102 = arith.constant dense<0.000000e+00> : vector<8x16xf32>
    %157 = tpu.matmul %155, %156, %cst_102 {dimension_numbers = #tpu.dot_dimension_numbers<[1], [0], [0], [1], [0, 0, 1, 1], [], []>} : vector<8x32xf32>, vector<32x16xf32>, vector<8x16xf32> -> vector<8x16xf32>
    %158 = arith.addf %154, %157 : vector<8x16xf32>
    %159 = vector.extract_strided_slice %131 {offsets = [48, 0], sizes = [8, 32], strides = [1, 1]} : vector<72x32xf32> to vector<8x32xf32>
    %c192_103 = arith.constant 192 : index
    %c0_104 = arith.constant 0 : index
    %160 = vector.load %arg10[%c192_103, %c0_104] : memref<288x16xf32, #tpu.memory_space<vmem>>, vector<32x16xf32>
    %cst_105 = arith.constant dense<0.000000e+00> : vector<8x16xf32>
    %161 = tpu.matmul %159, %160, %cst_105 {dimension_numbers = #tpu.dot_dimension_numbers<[1], [0], [0], [1], [0, 0, 1, 1], [], []>} : vector<8x32xf32>, vector<32x16xf32>, vector<8x16xf32> -> vector<8x16xf32>
    %162 = arith.addf %158, %161 : vector<8x16xf32>
    %163 = vector.extract_strided_slice %131 {offsets = [56, 0], sizes = [8, 32], strides = [1, 1]} : vector<72x32xf32> to vector<8x32xf32>
    %c224 = arith.constant 224 : index
    %c0_106 = arith.constant 0 : index
    %164 = vector.load %arg10[%c224, %c0_106] : memref<288x16xf32, #tpu.memory_space<vmem>>, vector<32x16xf32>
    %cst_107 = arith.constant dense<0.000000e+00> : vector<8x16xf32>
    %165 = tpu.matmul %163, %164, %cst_107 {dimension_numbers = #tpu.dot_dimension_numbers<[1], [0], [0], [1], [0, 0, 1, 1], [], []>} : vector<8x32xf32>, vector<32x16xf32>, vector<8x16xf32> -> vector<8x16xf32>
    %166 = arith.addf %162, %165 : vector<8x16xf32>
    %167 = vector.extract_strided_slice %131 {offsets = [64, 0], sizes = [8, 32], strides = [1, 1]} : vector<72x32xf32> to vector<8x32xf32>
    %c256_108 = arith.constant 256 : index
    %c0_109 = arith.constant 0 : index
    %168 = vector.load %arg10[%c256_108, %c0_109] : memref<288x16xf32, #tpu.memory_space<vmem>>, vector<32x16xf32>
    %cst_110 = arith.constant dense<0.000000e+00> : vector<8x16xf32>
    %169 = tpu.matmul %167, %168, %cst_110 {dimension_numbers = #tpu.dot_dimension_numbers<[1], [0], [0], [1], [0, 0, 1, 1], [], []>} : vector<8x32xf32>, vector<32x16xf32>, vector<8x16xf32> -> vector<8x16xf32>
    %170 = arith.addf %166, %169 : vector<8x16xf32>
    %cst_111 = arith.constant 0.000000e+00 : f32
    %171 = vector.broadcast %cst_111 : f32 to vector<8x16xf32>
    %172 = arith.maximumf %170, %171 : vector<8x16xf32>
    %c0_112 = arith.constant 0 : index
    %c0_113 = arith.constant 0 : index
    %173 = vector.load %arg6[%c0_112, %c0_113] : memref<72x8xf32, #tpu.memory_space<vmem>>, vector<72x8xf32>
    %cst_114 = arith.constant dense<0.000000e+00> : vector<72x16xf32>
    %174 = tpu.matmul %173, %172, %cst_114 {dimension_numbers = #tpu.dot_dimension_numbers<[1], [0], [0], [1], [0, 0, 1, 1], [], []>} : vector<72x8xf32>, vector<8x16xf32>, vector<72x16xf32> -> vector<72x16xf32>
    %c0_115 = arith.constant 0 : index
    %c0_116 = arith.constant 0 : index
    %175 = vector.load %arg16[%c0_115, %c0_116] : memref<1x128xf32, #tpu.memory_space<vmem>>, vector<1x128xf32>
    %176 = vector.shape_cast %175 : vector<1x128xf32> to vector<1x128xf32>
    %177 = vector.broadcast %176 : vector<1x128xf32> to vector<8x128xf32>
    %178 = vector.extract_strided_slice %174 {offsets = [0, 0], sizes = [8, 16], strides = [1, 1]} : vector<72x16xf32> to vector<8x16xf32>
    %c0_117 = arith.constant 0 : index
    %c0_118 = arith.constant 0 : index
    %179 = vector.load %arg11[%c0_117, %c0_118] : memref<144x128xf32, #tpu.memory_space<vmem>>, vector<16x128xf32>
    %cst_119 = arith.constant dense<0.000000e+00> : vector<8x128xf32>
    %180 = tpu.matmul %178, %179, %cst_119 {dimension_numbers = #tpu.dot_dimension_numbers<[1], [0], [0], [1], [0, 0, 1, 1], [], []>} : vector<8x16xf32>, vector<16x128xf32>, vector<8x128xf32> -> vector<8x128xf32>
    %181 = arith.addf %177, %180 : vector<8x128xf32>
    %182 = vector.extract_strided_slice %174 {offsets = [8, 0], sizes = [8, 16], strides = [1, 1]} : vector<72x16xf32> to vector<8x16xf32>
    %c16 = arith.constant 16 : index
    %c0_120 = arith.constant 0 : index
    %183 = vector.load %arg11[%c16, %c0_120] : memref<144x128xf32, #tpu.memory_space<vmem>>, vector<16x128xf32>
    %cst_121 = arith.constant dense<0.000000e+00> : vector<8x128xf32>
    %184 = tpu.matmul %182, %183, %cst_121 {dimension_numbers = #tpu.dot_dimension_numbers<[1], [0], [0], [1], [0, 0, 1, 1], [], []>} : vector<8x16xf32>, vector<16x128xf32>, vector<8x128xf32> -> vector<8x128xf32>
    %185 = arith.addf %181, %184 : vector<8x128xf32>
    %186 = vector.extract_strided_slice %174 {offsets = [16, 0], sizes = [8, 16], strides = [1, 1]} : vector<72x16xf32> to vector<8x16xf32>
    %c32_122 = arith.constant 32 : index
    %c0_123 = arith.constant 0 : index
    %187 = vector.load %arg11[%c32_122, %c0_123] : memref<144x128xf32, #tpu.memory_space<vmem>>, vector<16x128xf32>
    %cst_124 = arith.constant dense<0.000000e+00> : vector<8x128xf32>
    %188 = tpu.matmul %186, %187, %cst_124 {dimension_numbers = #tpu.dot_dimension_numbers<[1], [0], [0], [1], [0, 0, 1, 1], [], []>} : vector<8x16xf32>, vector<16x128xf32>, vector<8x128xf32> -> vector<8x128xf32>
    %189 = arith.addf %185, %188 : vector<8x128xf32>
    %190 = vector.extract_strided_slice %174 {offsets = [24, 0], sizes = [8, 16], strides = [1, 1]} : vector<72x16xf32> to vector<8x16xf32>
    %c48 = arith.constant 48 : index
    %c0_125 = arith.constant 0 : index
    %191 = vector.load %arg11[%c48, %c0_125] : memref<144x128xf32, #tpu.memory_space<vmem>>, vector<16x128xf32>
    %cst_126 = arith.constant dense<0.000000e+00> : vector<8x128xf32>
    %192 = tpu.matmul %190, %191, %cst_126 {dimension_numbers = #tpu.dot_dimension_numbers<[1], [0], [0], [1], [0, 0, 1, 1], [], []>} : vector<8x16xf32>, vector<16x128xf32>, vector<8x128xf32> -> vector<8x128xf32>
    %193 = arith.addf %189, %192 : vector<8x128xf32>
    %194 = vector.extract_strided_slice %174 {offsets = [32, 0], sizes = [8, 16], strides = [1, 1]} : vector<72x16xf32> to vector<8x16xf32>
    %c64_127 = arith.constant 64 : index
    %c0_128 = arith.constant 0 : index
    %195 = vector.load %arg11[%c64_127, %c0_128] : memref<144x128xf32, #tpu.memory_space<vmem>>, vector<16x128xf32>
    %cst_129 = arith.constant dense<0.000000e+00> : vector<8x128xf32>
    %196 = tpu.matmul %194, %195, %cst_129 {dimension_numbers = #tpu.dot_dimension_numbers<[1], [0], [0], [1], [0, 0, 1, 1], [], []>} : vector<8x16xf32>, vector<16x128xf32>, vector<8x128xf32> -> vector<8x128xf32>
    %197 = arith.addf %193, %196 : vector<8x128xf32>
    %198 = vector.extract_strided_slice %174 {offsets = [40, 0], sizes = [8, 16], strides = [1, 1]} : vector<72x16xf32> to vector<8x16xf32>
    %c80 = arith.constant 80 : index
    %c0_130 = arith.constant 0 : index
    %199 = vector.load %arg11[%c80, %c0_130] : memref<144x128xf32, #tpu.memory_space<vmem>>, vector<16x128xf32>
    %cst_131 = arith.constant dense<0.000000e+00> : vector<8x128xf32>
    %200 = tpu.matmul %198, %199, %cst_131 {dimension_numbers = #tpu.dot_dimension_numbers<[1], [0], [0], [1], [0, 0, 1, 1], [], []>} : vector<8x16xf32>, vector<16x128xf32>, vector<8x128xf32> -> vector<8x128xf32>
    %201 = arith.addf %197, %200 : vector<8x128xf32>
    %202 = vector.extract_strided_slice %174 {offsets = [48, 0], sizes = [8, 16], strides = [1, 1]} : vector<72x16xf32> to vector<8x16xf32>
    %c96_132 = arith.constant 96 : index
    %c0_133 = arith.constant 0 : index
    %203 = vector.load %arg11[%c96_132, %c0_133] : memref<144x128xf32, #tpu.memory_space<vmem>>, vector<16x128xf32>
    %cst_134 = arith.constant dense<0.000000e+00> : vector<8x128xf32>
    %204 = tpu.matmul %202, %203, %cst_134 {dimension_numbers = #tpu.dot_dimension_numbers<[1], [0], [0], [1], [0, 0, 1, 1], [], []>} : vector<8x16xf32>, vector<16x128xf32>, vector<8x128xf32> -> vector<8x128xf32>
    %205 = arith.addf %201, %204 : vector<8x128xf32>
    %206 = vector.extract_strided_slice %174 {offsets = [56, 0], sizes = [8, 16], strides = [1, 1]} : vector<72x16xf32> to vector<8x16xf32>
    %c112 = arith.constant 112 : index
    %c0_135 = arith.constant 0 : index
    %207 = vector.load %arg11[%c112, %c0_135] : memref<144x128xf32, #tpu.memory_space<vmem>>, vector<16x128xf32>
    %cst_136 = arith.constant dense<0.000000e+00> : vector<8x128xf32>
    %208 = tpu.matmul %206, %207, %cst_136 {dimension_numbers = #tpu.dot_dimension_numbers<[1], [0], [0], [1], [0, 0, 1, 1], [], []>} : vector<8x16xf32>, vector<16x128xf32>, vector<8x128xf32> -> vector<8x128xf32>
    %209 = arith.addf %205, %208 : vector<8x128xf32>
    %210 = vector.extract_strided_slice %174 {offsets = [64, 0], sizes = [8, 16], strides = [1, 1]} : vector<72x16xf32> to vector<8x16xf32>
    %c128_137 = arith.constant 128 : index
    %c0_138 = arith.constant 0 : index
    %211 = vector.load %arg11[%c128_137, %c0_138] : memref<144x128xf32, #tpu.memory_space<vmem>>, vector<16x128xf32>
    %cst_139 = arith.constant dense<0.000000e+00> : vector<8x128xf32>
    %212 = tpu.matmul %210, %211, %cst_139 {dimension_numbers = #tpu.dot_dimension_numbers<[1], [0], [0], [1], [0, 0, 1, 1], [], []>} : vector<8x16xf32>, vector<16x128xf32>, vector<8x128xf32> -> vector<8x128xf32>
    %213 = arith.addf %209, %212 : vector<8x128xf32>
    %214 = arith.negf %213 : vector<8x128xf32>
    %215 = math.exp %214 : vector<8x128xf32>
    %cst_140 = arith.constant 1.000000e+00 : f32
    %216 = vector.broadcast %cst_140 : f32 to vector<8x128xf32>
    %217 = arith.addf %216, %215 : vector<8x128xf32>
    %218 = arith.divf %216, %217 : vector<8x128xf32>
    %219 = vector.extract_strided_slice %218 {offsets = [0, 0], sizes = [1, 1], strides = [1, 1]} : vector<8x128xf32> to vector<1x1xf32>
    %220 = vector.shape_cast %219 : vector<1x1xf32> to vector<1x1x1xf32>
    %c0_141 = arith.constant 0 : index
    %c0_142 = arith.constant 0 : index
    %c0_143 = arith.constant 0 : index
    %221 = vector.load %arg17[%c0_141, %c0_142, %c0_143] : memref<1x1x1xf32, #tpu.memory_space<vmem>>, vector<1x1x1xf32>
    tpu.vector_store %arg17[%c0_141, %c0_142, %c0_143], %220 {strides = array<i32>} : memref<1x1x1xf32, #tpu.memory_space<vmem>>, vector<1x1x1xf32>,
    return
  }
  func.func @transform_0(%arg0: i32) -> (i32, i32) {
    %c0_i32 = arith.constant 0 : i32
    %c0_i32_0 = arith.constant 0 : i32
    return %arg0, %c0_i32 : i32, i32
  }
  func.func @transform_1(%arg0: i32) -> (i32, i32) {
    %c0_i32 = arith.constant 0 : i32
    %c0_i32_0 = arith.constant 0 : i32
    %c0_i32_1 = arith.constant 0 : i32
    return %c0_i32, %c0_i32_0 : i32, i32
  }
  func.func @transform_2(%arg0: i32) -> (i32, i32) {
    %c0_i32 = arith.constant 0 : i32
    %c0_i32_0 = arith.constant 0 : i32
    %c0_i32_1 = arith.constant 0 : i32
    return %c0_i32, %c0_i32_0 : i32, i32
  }
  func.func @transform_3(%arg0: i32) -> (i32, i32) {
    %c0_i32 = arith.constant 0 : i32
    %c0_i32_0 = arith.constant 0 : i32
    %c0_i32_1 = arith.constant 0 : i32
    return %c0_i32, %c0_i32_0 : i32, i32
  }
  func.func @transform_4(%arg0: i32) -> (i32, i32) {
    %c0_i32 = arith.constant 0 : i32
    %c0_i32_0 = arith.constant 0 : i32
    %c0_i32_1 = arith.constant 0 : i32
    return %c0_i32, %c0_i32_0 : i32, i32
  }
  func.func @transform_5(%arg0: i32) -> (i32, i32) {
    %c0_i32 = arith.constant 0 : i32
    %c0_i32_0 = arith.constant 0 : i32
    %c0_i32_1 = arith.constant 0 : i32
    return %c0_i32, %c0_i32_0 : i32, i32
  }
  func.func @transform_6(%arg0: i32) -> (i32, i32) {
    %c0_i32 = arith.constant 0 : i32
    %c0_i32_0 = arith.constant 0 : i32
    %c0_i32_1 = arith.constant 0 : i32
    return %c0_i32, %c0_i32_0 : i32, i32
  }
  func.func @transform_7(%arg0: i32) -> (i32, i32) {
    %c0_i32 = arith.constant 0 : i32
    %c0_i32_0 = arith.constant 0 : i32
    %c0_i32_1 = arith.constant 0 : i32
    return %c0_i32, %c0_i32_0 : i32, i32
  }
  func.func @transform_8(%arg0: i32) -> (i32, i32) {
    %c0_i32 = arith.constant 0 : i32
    %c0_i32_0 = arith.constant 0 : i32
    %c0_i32_1 = arith.constant 0 : i32
    return %c0_i32, %c0_i32_0 : i32, i32
  }
  func.func @transform_9(%arg0: i32) -> (i32, i32) {
    %c0_i32 = arith.constant 0 : i32
    %c0_i32_0 = arith.constant 0 : i32
    %c0_i32_1 = arith.constant 0 : i32
    return %c0_i32, %c0_i32_0 : i32, i32
  }
  func.func @transform_10(%arg0: i32) -> (i32, i32) {
    %c0_i32 = arith.constant 0 : i32
    %c0_i32_0 = arith.constant 0 : i32
    %c0_i32_1 = arith.constant 0 : i32
    return %c0_i32, %c0_i32_0 : i32, i32
  }
  func.func @transform_11(%arg0: i32) -> (i32, i32) {
    %c0_i32 = arith.constant 0 : i32
    %c0_i32_0 = arith.constant 0 : i32
    %c0_i32_1 = arith.constant 0 : i32
    return %c0_i32, %c0_i32_0 : i32, i32
  }
  func.func @transform_12(%arg0: i32) -> (i32, i32) {
    %c0_i32 = arith.constant 0 : i32
    %c0_i32_0 = arith.constant 0 : i32
    %c0_i32_1 = arith.constant 0 : i32
    return %c0_i32, %c0_i32_0 : i32, i32
  }
  func.func @transform_13(%arg0: i32) -> (i32, i32) {
    %c0_i32 = arith.constant 0 : i32
    %c0_i32_0 = arith.constant 0 : i32
    %c0_i32_1 = arith.constant 0 : i32
    return %c0_i32, %c0_i32_0 : i32, i32
  }
  func.func @transform_14(%arg0: i32) -> (i32, i32) {
    %c0_i32 = arith.constant 0 : i32
    %c0_i32_0 = arith.constant 0 : i32
    %c0_i32_1 = arith.constant 0 : i32
    return %c0_i32, %c0_i32_0 : i32, i32
  }
  func.func @transform_15(%arg0: i32) -> (i32, i32) {
    %c0_i32 = arith.constant 0 : i32
    %c0_i32_0 = arith.constant 0 : i32
    %c0_i32_1 = arith.constant 0 : i32
    return %c0_i32, %c0_i32_0 : i32, i32
  }
  func.func @transform_16(%arg0: i32) -> (i32, i32, i32) {
    %c0_i32 = arith.constant 0 : i32
    %c0_i32_0 = arith.constant 0 : i32
    %c0_i32_1 = arith.constant 0 : i32
    return %arg0, %c0_i32, %c0_i32_0 : i32, i32, i32
  }
}

</mosaic_0001>

<llo_original>
// kernel: tpu_custom_call.1
$region0: #{tpu_custom_call.1}
  #allocation0 [shape = 'u32[]', space=smem, size = 0x4, offset = 0x4, fixed_abs, tag = 'smem constant byte address 0x4 - core index']
  #allocation1 [shape = 'u32[144,128]{1,0:T(1,128)}', space=vmem, size = 0x12000, scoped, tag = 'internal scratch']
  %s0 = inlined_call_operand.vmem [shape: f32[512,256], index: 0, kind: input, shape index: {}]
  %s1 = inlined_call_operand.hbm [shape: f32[576,256], index: 1, kind: input, shape index: {}]
  %s2 = inlined_call_operand.vmem [shape: f32[144,64], index: 2, kind: input, shape index: {}]
  %s3 = inlined_call_operand.vmem [shape: f32[72,16], index: 3, kind: input, shape index: {}]
  %s4 = inlined_call_operand.vmem [shape: f32[72,8], index: 4, kind: input, shape index: {}]
  %s5 = inlined_call_operand.vmem [shape: f32[72,8], index: 5, kind: input, shape index: {}]
  %s6 = inlined_call_operand.vmem [shape: f32[2304,128], index: 6, kind: input, shape index: {}]
  %s7 = inlined_call_operand.vmem [shape: f32[1152,64], index: 7, kind: input, shape index: {}]
  %s8 = inlined_call_operand.vmem [shape: f32[576,32], index: 8, kind: input, shape index: {}]
  %s9 = inlined_call_operand.vmem [shape: f32[288,16], index: 9, kind: input, shape index: {}]
  %s10 = inlined_call_operand.hbm [shape: f32[144,128], index: 10, kind: input, shape index: {}]
  %s11 = inlined_call_operand.vmem [shape: f32[1,128], index: 11, kind: input, shape index: {}]
  %s12 = inlined_call_operand.vmem [shape: f32[1,64], index: 12, kind: input, shape index: {}]
  %s13 = inlined_call_operand.vmem [shape: f32[1,32], index: 13, kind: input, shape index: {}]
  %s14 = inlined_call_operand.vmem [shape: f32[1,16], index: 14, kind: input, shape index: {}]
  %s15 = inlined_call_operand.vmem [shape: f32[1,128], index: 15, kind: input, shape index: {}]
  %s16 = inlined_call_operand.vmem [shape: f32[2,1,1], index: 16, kind: output, shape index: {}]
  %s17 = sld [smem:[#allocation0]]
  $region105: #{tpu_custom_call.1} parent=0
    _
  %s19 = ssub.s32 1, %s17
  %s20 = scalar_select 0, %s19, %s17
  $region1: #{tpu_custom_call.1} parent=0
    #allocation2 [shape = 'u8[589824]{0}', space=vmem, size = 0x90000, scoped, tag = 'input window, operand 1, single buffered']
    #allocation3 [shape = 's32[2]{0}', space=sflag, size = 0x8, scoped, tag = 'scoped memory for tpu_custom_call.1']
    #allocation4 [shape = 'u8[73728]{0}', space=vmem, size = 0x12000, scoped, tag = 'input window, operand 10, single buffered']
    #allocation5 [shape = 's32[1]{0}', space=sflag, size = 0x4, scoped, tag = 'scoped memory for tpu_custom_call.1']
    %21 = vsyncpa [#allocation3], 0
    %22 = vsyncpa [#allocation5], 0
    loop: start=0, step=1, limit=4
    $region2: #{tpu_custom_call.1} parent=1 // loop_pre_header
      _
    $region3: #{tpu_custom_call.1} parent=1 // loop_header
      %s24 = sphi 0, %s28
      %p25 = scmp.ge.s32.totalorder %s24, 4
      %s34 = sphi 0, %s36
      %s37 = sphi 0, %s34
      %s38 = sphi 0, %s37
      %s54 = sphi 0, %s38
      %s58 = sphi 0, %s58
      %s60 = sphi 0, %s58
      %s61 = sphi 0, %s60
      %s75 = sphi 0, %s61
      %s79 = sphi 0, %s79
      %s81 = sphi 0, %s79
      %s82 = sphi 0, %s81
      %s96 = sphi 0, %s82
      %s100 = sphi 0, %s100
      %s102 = sphi 0, %s100
      %s103 = sphi 0, %s102
      %s117 = sphi 0, %s103
      %s121 = sphi 0, %s121
      %s123 = sphi 0, %s121
      %s124 = sphi 0, %s123
      %s138 = sphi 0, %s124
      %s142 = sphi 0, %s142
      %s144 = sphi 0, %s142
      %s145 = sphi 0, %s144
      %s159 = sphi 0, %s145
      %s163 = sphi 0, %s163
      %s165 = sphi 0, %s163
      %s166 = sphi 0, %s165
      %s180 = sphi 0, %s166
      %s184 = sphi 0, %s184
      %s186 = sphi 0, %s184
      %s187 = sphi 0, %s186
      %s201 = sphi 0, %s187
      %s205 = sphi 0, %s205
      %s207 = sphi 0, %s205
      %s208 = sphi 0, %s207
      %s222 = sphi 0, %s208
      %s226 = sphi 0, %s226
      %s228 = sphi 0, %s226
      %s229 = sphi 0, %s228
      %s243 = sphi 0, %s229
      %s247 = sphi 0, %s247
      %s249 = sphi 0, %s247
      %s250 = sphi 0, %s249
      %s264 = sphi 0, %s250
      %s268 = sphi 0, %s268
      %s270 = sphi 0, %s268
      %s271 = sphi 0, %s270
      %s285 = sphi 0, %s271
      %s289 = sphi 0, %s289
      %s291 = sphi 0, %s289
      %s292 = sphi 0, %s291
      %s306 = sphi 0, %s292
      %s310 = sphi 0, %s310
      %s312 = sphi 0, %s310
      %s313 = sphi 0, %s312
      %s327 = sphi 0, %s313
      %s331 = sphi 0, %s331
      %s333 = sphi 0, %s331
      %s334 = sphi 0, %s333
      %s348 = sphi 0, %s334
      %s352 = sphi 0, %s352
      %s354 = sphi 0, %s352
      %s355 = sphi 0, %s354
      %s369 = sphi 0, %s355
      %s375 = sphi 0, %s377
      %s378 = sphi 0, %s375
      %s379 = sphi 0, %s378
      %s395 = sphi 0, %s379
    $region4: #{tpu_custom_call.1} parent=1 // loop_header_branch
      %27 = sbr.rel (%p25) target = $region8
    $region5: #{tpu_custom_call.1} parent=1 // loop_body
      %s29 = ssub.s32 %s24, 1
      %s30 = ssub.s32 %s24, 2
      %s31 = sadd.s32 %s24, 1
      %s32 = ssub.s32 %s24, %s31
      %p33 = scmp.eq.s32.totalorder %s32, 0
      %s35 = sadd.s32 %s34, 1
      %s36 = scalar_select %p33, %s34, %s35
      %p39 = pneg %p33
      %p40 = scmp.eq.s32.totalorder %s24, 1
      %p41 = por %p39, %p40
      %p42 = scmp.ne.s32.totalorder %s34, %s37
      %p43 = scmp.eq.s32.totalorder %s24, 0
      %p44 = por %p42, %p43
      %p45 = scmp.ne.s32.totalorder %s34, %s37
      %p46 = scmp.eq.s32.totalorder %s29, 1
      %p47 = por %p45, %p46
      %p48 = scmp.ne.s32.totalorder %s37, %s38
      %p49 = scmp.eq.s32.totalorder %s29, 0
      %p50 = por %p48, %p49
      %p51 = scmp.ne.s32.totalorder %s37, %s38
      %p52 = scmp.eq.s32.totalorder %s30, 1
      %p53 = por %p51, %p52
      %p55 = scmp.ne.s32.totalorder %s38, %s54
      %p56 = scmp.eq.s32.totalorder %s30, 0
      %p57 = por %p55, %p56
      %s59 = sadd.s32 %s58, 1
      %p62 = scmp.eq.s32.totalorder %s24, 1
      %p63 = scmp.ne.s32.totalorder %s58, %s60
      %p64 = scmp.eq.s32.totalorder %s24, 0
      %p65 = por %p63, %p64
      %p66 = scmp.ne.s32.totalorder %s58, %s60
      %p67 = scmp.eq.s32.totalorder %s29, 1
      %p68 = por %p66, %p67
      %p69 = scmp.ne.s32.totalorder %s60, %s61
      %p70 = scmp.eq.s32.totalorder %s29, 0
      %p71 = por %p69, %p70
      %p72 = scmp.ne.s32.totalorder %s60, %s61
      %p73 = scmp.eq.s32.totalorder %s30, 1
      %p74 = por %p72, %p73
      %p76 = scmp.ne.s32.totalorder %s61, %s75
      %p77 = scmp.eq.s32.totalorder %s30, 0
      %p78 = por %p76, %p77
      %s80 = sadd.s32 %s79, 1
      %p83 = scmp.eq.s32.totalorder %s24, 1
      %p84 = scmp.ne.s32.totalorder %s79, %s81
      %p85 = scmp.eq.s32.totalorder %s24, 0
      %p86 = por %p84, %p85
      %p87 = scmp.ne.s32.totalorder %s79, %s81
      %p88 = scmp.eq.s32.totalorder %s29, 1
      %p89 = por %p87, %p88
      %p90 = scmp.ne.s32.totalorder %s81, %s82
      %p91 = scmp.eq.s32.totalorder %s29, 0
      %p92 = por %p90, %p91
      %p93 = scmp.ne.s32.totalorder %s81, %s82
      %p94 = scmp.eq.s32.totalorder %s30, 1
      %p95 = por %p93, %p94
      %p97 = scmp.ne.s32.totalorder %s82, %s96
      %p98 = scmp.eq.s32.totalorder %s30, 0
      %p99 = por %p97, %p98
      %s101 = sadd.s32 %s100, 1
      %p104 = scmp.eq.s32.totalorder %s24, 1
      %p105 = scmp.ne.s32.totalorder %s100, %s102
      %p106 = scmp.eq.s32.totalorder %s24, 0
      %p107 = por %p105, %p106
      %p108 = scmp.ne.s32.totalorder %s100, %s102
      %p109 = scmp.eq.s32.totalorder %s29, 1
      %p110 = por %p108, %p109
      %p111 = scmp.ne.s32.totalorder %s102, %s103
      %p112 = scmp.eq.s32.totalorder %s29, 0
      %p113 = por %p111, %p112
      %p114 = scmp.ne.s32.totalorder %s102, %s103
      %p115 = scmp.eq.s32.totalorder %s30, 1
      %p116 = por %p114, %p115
      %p118 = scmp.ne.s32.totalorder %s103, %s117
      %p119 = scmp.eq.s32.totalorder %s30, 0
      %p120 = por %p118, %p119
      %s122 = sadd.s32 %s121, 1
      %p125 = scmp.eq.s32.totalorder %s24, 1
      %p126 = scmp.ne.s32.totalorder %s121, %s123
      %p127 = scmp.eq.s32.totalorder %s24, 0
      %p128 = por %p126, %p127
      %p129 = scmp.ne.s32.totalorder %s121, %s123
      %p130 = scmp.eq.s32.totalorder %s29, 1
      %p131 = por %p129, %p130
      %p132 = scmp.ne.s32.totalorder %s123, %s124
      %p133 = scmp.eq.s32.totalorder %s29, 0
      %p134 = por %p132, %p133
      %p135 = scmp.ne.s32.totalorder %s123, %s124
      %p136 = scmp.eq.s32.totalorder %s30, 1
      %p137 = por %p135, %p136
      %p139 = scmp.ne.s32.totalorder %s124, %s138
      %p140 = scmp.eq.s32.totalorder %s30, 0
      %p141 = por %p139, %p140
      %s143 = sadd.s32 %s142, 1
      %p146 = scmp.eq.s32.totalorder %s24, 1
      %p147 = scmp.ne.s32.totalorder %s142, %s144
      %p148 = scmp.eq.s32.totalorder %s24, 0
      %p149 = por %p147, %p148
      %p150 = scmp.ne.s32.totalorder %s142, %s144
      %p151 = scmp.eq.s32.totalorder %s29, 1
      %p152 = por %p150, %p151
      %p153 = scmp.ne.s32.totalorder %s144, %s145
      %p154 = scmp.eq.s32.totalorder %s29, 0
      %p155 = por %p153, %p154
      %p156 = scmp.ne.s32.totalorder %s144, %s145
      %p157 = scmp.eq.s32.totalorder %s30, 1
      %p158 = por %p156, %p157
      %p160 = scmp.ne.s32.totalorder %s145, %s159
      %p161 = scmp.eq.s32.totalorder %s30, 0
      %p162 = por %p160, %p161
      %s164 = sadd.s32 %s163, 1
      %p167 = scmp.eq.s32.totalorder %s24, 1
      %p168 = scmp.ne.s32.totalorder %s163, %s165
      %p169 = scmp.eq.s32.totalorder %s24, 0
      %p170 = por %p168, %p169
      %p171 = scmp.ne.s32.totalorder %s163, %s165
      %p172 = scmp.eq.s32.totalorder %s29, 1
      %p173 = por %p171, %p172
      %p174 = scmp.ne.s32.totalorder %s165, %s166
      %p175 = scmp.eq.s32.totalorder %s29, 0
      %p176 = por %p174, %p175
      %p177 = scmp.ne.s32.totalorder %s165, %s166
      %p178 = scmp.eq.s32.totalorder %s30, 1
      %p179 = por %p177, %p178
      %p181 = scmp.ne.s32.totalorder %s166, %s180
      %p182 = scmp.eq.s32.totalorder %s30, 0
      %p183 = por %p181, %p182
      %s185 = sadd.s32 %s184, 1
      %p188 = scmp.eq.s32.totalorder %s24, 1
      %p189 = scmp.ne.s32.totalorder %s184, %s186
      %p190 = scmp.eq.s32.totalorder %s24, 0
      %p191 = por %p189, %p190
      %p192 = scmp.ne.s32.totalorder %s184, %s186
      %p193 = scmp.eq.s32.totalorder %s29, 1
      %p194 = por %p192, %p193
      %p195 = scmp.ne.s32.totalorder %s186, %s187
      %p196 = scmp.eq.s32.totalorder %s29, 0
      %p197 = por %p195, %p196
      %p198 = scmp.ne.s32.totalorder %s186, %s187
      %p199 = scmp.eq.s32.totalorder %s30, 1
      %p200 = por %p198, %p199
      %p202 = scmp.ne.s32.totalorder %s187, %s201
      %p203 = scmp.eq.s32.totalorder %s30, 0
      %p204 = por %p202, %p203
      %s206 = sadd.s32 %s205, 1
      %p209 = scmp.eq.s32.totalorder %s24, 1
      %p210 = scmp.ne.s32.totalorder %s205, %s207
      %p211 = scmp.eq.s32.totalorder %s24, 0
      %p212 = por %p210, %p211
      %p213 = scmp.ne.s32.totalorder %s205, %s207
      %p214 = scmp.eq.s32.totalorder %s29, 1
      %p215 = por %p213, %p214
      %p216 = scmp.ne.s32.totalorder %s207, %s208
      %p217 = scmp.eq.s32.totalorder %s29, 0
      %p218 = por %p216, %p217
      %p219 = scmp.ne.s32.totalorder %s207, %s208
      %p220 = scmp.eq.s32.totalorder %s30, 1
      %p221 = por %p219, %p220
      %p223 = scmp.ne.s32.totalorder %s208, %s222
      %p224 = scmp.eq.s32.totalorder %s30, 0
      %p225 = por %p223, %p224
      %s227 = sadd.s32 %s226, 1
      %p230 = scmp.eq.s32.totalorder %s24, 1
      %p231 = scmp.ne.s32.totalorder %s226, %s228
      %p232 = scmp.eq.s32.totalorder %s24, 0
      %p233 = por %p231, %p232
      %p234 = scmp.ne.s32.totalorder %s226, %s228
      %p235 = scmp.eq.s32.totalorder %s29, 1
      %p236 = por %p234, %p235
      %p237 = scmp.ne.s32.totalorder %s228, %s229
      %p238 = scmp.eq.s32.totalorder %s29, 0
      %p239 = por %p237, %p238
      %p240 = scmp.ne.s32.totalorder %s228, %s229
      %p241 = scmp.eq.s32.totalorder %s30, 1
      %p242 = por %p240, %p241
      %p244 = scmp.ne.s32.totalorder %s229, %s243
      %p245 = scmp.eq.s32.totalorder %s30, 0
      %p246 = por %p244, %p245
      %s248 = sadd.s32 %s247, 1
      %p251 = scmp.eq.s32.totalorder %s24, 1
      %p252 = scmp.ne.s32.totalorder %s247, %s249
      %p253 = scmp.eq.s32.totalorder %s24, 0
      %p254 = por %p252, %p253
      %p255 = scmp.ne.s32.totalorder %s247, %s249
      %p256 = scmp.eq.s32.totalorder %s29, 1
      %p257 = por %p255, %p256
      %p258 = scmp.ne.s32.totalorder %s249, %s250
      %p259 = scmp.eq.s32.totalorder %s29, 0
      %p260 = por %p258, %p259
      %p261 = scmp.ne.s32.totalorder %s249, %s250
      %p262 = scmp.eq.s32.totalorder %s30, 1
      %p263 = por %p261, %p262
      %p265 = scmp.ne.s32.totalorder %s250, %s264
      %p266 = scmp.eq.s32.totalorder %s30, 0
      %p267 = por %p265, %p266
      %s269 = sadd.s32 %s268, 1
      %p272 = scmp.eq.s32.totalorder %s24, 1
      %p273 = scmp.ne.s32.totalorder %s268, %s270
      %p274 = scmp.eq.s32.totalorder %s24, 0
      %p275 = por %p273, %p274
      %p276 = scmp.ne.s32.totalorder %s268, %s270
      %p277 = scmp.eq.s32.totalorder %s29, 1
      %p278 = por %p276, %p277
      %p279 = scmp.ne.s32.totalorder %s270, %s271
      %p280 = scmp.eq.s32.totalorder %s29, 0
      %p281 = por %p279, %p280
      %p282 = scmp.ne.s32.totalorder %s270, %s271
      %p283 = scmp.eq.s32.totalorder %s30, 1
      %p284 = por %p282, %p283
      %p286 = scmp.ne.s32.totalorder %s271, %s285
      %p287 = scmp.eq.s32.totalorder %s30, 0
      %p288 = por %p286, %p287
      %s290 = sadd.s32 %s289, 1
      %p293 = scmp.eq.s32.totalorder %s24, 1
      %p294 = scmp.ne.s32.totalorder %s289, %s291
      %p295 = scmp.eq.s32.totalorder %s24, 0
      %p296 = por %p294, %p295
      %p297 = scmp.ne.s32.totalorder %s289, %s291
      %p298 = scmp.eq.s32.totalorder %s29, 1
      %p299 = por %p297, %p298
      %p300 = scmp.ne.s32.totalorder %s291, %s292
      %p301 = scmp.eq.s32.totalorder %s29, 0
      %p302 = por %p300, %p301
      %p303 = scmp.ne.s32.totalorder %s291, %s292
      %p304 = scmp.eq.s32.totalorder %s30, 1
      %p305 = por %p303, %p304
      %p307 = scmp.ne.s32.totalorder %s292, %s306
      %p308 = scmp.eq.s32.totalorder %s30, 0
      %p309 = por %p307, %p308
      %s311 = sadd.s32 %s310, 1
      %p314 = scmp.eq.s32.totalorder %s24, 1
      %p315 = scmp.ne.s32.totalorder %s310, %s312
      %p316 = scmp.eq.s32.totalorder %s24, 0
      %p317 = por %p315, %p316
      %p318 = scmp.ne.s32.totalorder %s310, %s312
      %p319 = scmp.eq.s32.totalorder %s29, 1
      %p320 = por %p318, %p319
      %p321 = scmp.ne.s32.totalorder %s312, %s313
      %p322 = scmp.eq.s32.totalorder %s29, 0
      %p323 = por %p321, %p322
      %p324 = scmp.ne.s32.totalorder %s312, %s313
      %p325 = scmp.eq.s32.totalorder %s30, 1
      %p326 = por %p324, %p325
      %p328 = scmp.ne.s32.totalorder %s313, %s327
      %p329 = scmp.eq.s32.totalorder %s30, 0
      %p330 = por %p328, %p329
      %s332 = sadd.s32 %s331, 1
      %p335 = scmp.eq.s32.totalorder %s24, 1
      %p336 = scmp.ne.s32.totalorder %s331, %s333
      %p337 = scmp.eq.s32.totalorder %s24, 0
      %p338 = por %p336, %p337
      %p339 = scmp.ne.s32.totalorder %s331, %s333
      %p340 = scmp.eq.s32.totalorder %s29, 1
      %p341 = por %p339, %p340
      %p342 = scmp.ne.s32.totalorder %s333, %s334
      %p343 = scmp.eq.s32.totalorder %s29, 0
      %p344 = por %p342, %p343
      %p345 = scmp.ne.s32.totalorder %s333, %s334
      %p346 = scmp.eq.s32.totalorder %s30, 1
      %p347 = por %p345, %p346
      %p349 = scmp.ne.s32.totalorder %s334, %s348
      %p350 = scmp.eq.s32.totalorder %s30, 0
      %p351 = por %p349, %p350
      %s353 = sadd.s32 %s352, 1
      %p356 = scmp.eq.s32.totalorder %s24, 1
      %p357 = scmp.ne.s32.totalorder %s352, %s354
      %p358 = scmp.eq.s32.totalorder %s24, 0
      %p359 = por %p357, %p358
      %p360 = scmp.ne.s32.totalorder %s352, %s354
      %p361 = scmp.eq.s32.totalorder %s29, 1
      %p362 = por %p360, %p361
      %p363 = scmp.ne.s32.totalorder %s354, %s355
      %p364 = scmp.eq.s32.totalorder %s29, 0
      %p365 = por %p363, %p364
      %p366 = scmp.ne.s32.totalorder %s354, %s355
      %p367 = scmp.eq.s32.totalorder %s30, 1
      %p368 = por %p366, %p367
      %p370 = scmp.ne.s32.totalorder %s355, %s369
      %p371 = scmp.eq.s32.totalorder %s30, 0
      %p372 = por %p370, %p371
      %s373 = ssub.s32 %s24, %s31
      %p374 = scmp.eq.s32.totalorder %s373, 0
      %s376 = sadd.s32 %s375, 1
      %s377 = scalar_select %p374, %s375, %s376
      %p380 = pneg %p374
      %p381 = scmp.eq.s32.totalorder %s24, 1
      %p382 = por %p380, %p381
      %p383 = scmp.ne.s32.totalorder %s375, %s378
      %p384 = scmp.eq.s32.totalorder %s24, 0
      %p385 = por %p383, %p384
      %p386 = scmp.ne.s32.totalorder %s375, %s378
      %p387 = scmp.eq.s32.totalorder %s29, 1
      %p388 = por %p386, %p387
      %p389 = scmp.ne.s32.totalorder %s378, %s379
      %p390 = scmp.eq.s32.totalorder %s29, 0
      %p391 = por %p389, %p390
      %p392 = scmp.ne.s32.totalorder %s378, %s379
      %p393 = scmp.eq.s32.totalorder %s30, 1
      %p394 = por %p392, %p393
      %p396 = scmp.ne.s32.totalorder %s379, %s395
      %p397 = scmp.eq.s32.totalorder %s30, 0
      %p398 = por %p396, %p397
      %p399 = scmp.le.s32.totalorder 1, %s24
      %p400 = scmp.lt.s32.totalorder %s24, 3
      %p401 = pnand %p399, %p400
      %p402 = pneg %p401
      // Predicated region
      $region9: #{tpu_custom_call.1} parent=5 // pred_check
        _
      $region10: #{tpu_custom_call.1} parent=5 // pred_check_branch
        %404 = sbr.rel (%p401) target = $region12
      $region11: #{tpu_custom_call.1} parent=5 // pred_region
        %s405 = ssub.s32 %s24, 1
        // Predicated region
        $region13: #{tpu_custom_call.1} parent=11 // pred_check
          %p406 = pneg %p71
        $region14: #{tpu_custom_call.1} parent=11 // pred_check_branch
          %408 = sbr.rel (%p406) target = $region16
        $region15: #{tpu_custom_call.1} parent=11 // pred_region
          %s410 = ssub.s32 18432, 18432
          %411 = vsyncadd [#allocation3], %s410
          %s412 = sshll.u32 [#allocation2], 4
          %s413 = int_to_ptr.vmem [resolvable:$true] %s412
          %418 = dma.hbm_to_vmem [thread:$0]  %s1, 18432, %s413, [#allocation3], 256, 256, 16
        $region16: #{tpu_custom_call.1} parent=11 // pred_fallthru
          _
        // Predicated region
        $region17: #{tpu_custom_call.1} parent=11 // pred_check
          %p419 = pneg %p92
        $region18: #{tpu_custom_call.1} parent=11 // pred_check_branch
          %421 = sbr.rel (%p419) target = $region20
        $region19: #{tpu_custom_call.1} parent=11 // pred_region
          _
        $region20: #{tpu_custom_call.1} parent=11 // pred_fallthru
          _
        // Predicated region
        $region21: #{tpu_custom_call.1} parent=11 // pred_check
          %p422 = pneg %p113
        $region22: #{tpu_custom_call.1} parent=11 // pred_check_branch
          %424 = sbr.rel (%p422) target = $region24
        $region23: #{tpu_custom_call.1} parent=11 // pred_region
          _
        $region24: #{tpu_custom_call.1} parent=11 // pred_fallthru
          _
        // Predicated region
        $region25: #{tpu_custom_call.1} parent=11 // pred_check
          %p425 = pneg %p134
        $region26: #{tpu_custom_call.1} parent=11 // pred_check_branch
          %427 = sbr.rel (%p425) target = $region28
        $region27: #{tpu_custom_call.1} parent=11 // pred_region
          _
        $region28: #{tpu_custom_call.1} parent=11 // pred_fallthru
          _
        // Predicated region
        $region29: #{tpu_custom_call.1} parent=11 // pred_check
          %p428 = pneg %p155
        $region30: #{tpu_custom_call.1} parent=11 // pred_check_branch
          %430 = sbr.rel (%p428) target = $region32
        $region31: #{tpu_custom_call.1} parent=11 // pred_region
          _
        $region32: #{tpu_custom_call.1} parent=11 // pred_fallthru
          _
        // Predicated region
        $region33: #{tpu_custom_call.1} parent=11 // pred_check
          %p431 = pneg %p176
        $region34: #{tpu_custom_call.1} parent=11 // pred_check_branch
          %433 = sbr.rel (%p431) target = $region36
        $region35: #{tpu_custom_call.1} parent=11 // pred_region
          _
        $region36: #{tpu_custom_call.1} parent=11 // pred_fallthru
          _
        // Predicated region
        $region37: #{tpu_custom_call.1} parent=11 // pred_check
          %p434 = pneg %p197
        $region38: #{tpu_custom_call.1} parent=11 // pred_check_branch
          %436 = sbr.rel (%p434) target = $region40
        $region39: #{tpu_custom_call.1} parent=11 // pred_region
          _
        $region40: #{tpu_custom_call.1} parent=11 // pred_fallthru
          _
        // Predicated region
        $region41: #{tpu_custom_call.1} parent=11 // pred_check
          %p437 = pneg %p218
        $region42: #{tpu_custom_call.1} parent=11 // pred_check_branch
          %439 = sbr.rel (%p437) target = $region44
        $region43: #{tpu_custom_call.1} parent=11 // pred_region
          _
        $region44: #{tpu_custom_call.1} parent=11 // pred_fallthru
          _
        // Predicated region
        $region45: #{tpu_custom_call.1} parent=11 // pred_check
          %p440 = pneg %p239
        $region46: #{tpu_custom_call.1} parent=11 // pred_check_branch
          %442 = sbr.rel (%p440) target = $region48
        $region47: #{tpu_custom_call.1} parent=11 // pred_region
          _
        $region48: #{tpu_custom_call.1} parent=11 // pred_fallthru
          _
        // Predicated region
        $region49: #{tpu_custom_call.1} parent=11 // pred_check
          %p443 = pneg %p260
        $region50: #{tpu_custom_call.1} parent=11 // pred_check_branch
          %445 = sbr.rel (%p443) target = $region52
        $region51: #{tpu_custom_call.1} parent=11 // pred_region
          %s447 = ssub.s32 2304, 2304
          %448 = vsyncadd [#allocation5], %s447
          %s449 = sshll.u32 [#allocation4], 4
          %s450 = int_to_ptr.vmem [resolvable:$true] %s449
          %455 = dma.hbm_to_vmem [thread:$0]  %s10, 2304, %s450, [#allocation5], 128, 128, 8
        $region52: #{tpu_custom_call.1} parent=11 // pred_fallthru
          _
        // Predicated region
        $region53: #{tpu_custom_call.1} parent=11 // pred_check
          %p456 = pneg %p281
        $region54: #{tpu_custom_call.1} parent=11 // pred_check_branch
          %458 = sbr.rel (%p456) target = $region56
        $region55: #{tpu_custom_call.1} parent=11 // pred_region
          _
        $region56: #{tpu_custom_call.1} parent=11 // pred_fallthru
          _
        // Predicated region
        $region57: #{tpu_custom_call.1} parent=11 // pred_check
          %p459 = pneg %p302
        $region58: #{tpu_custom_call.1} parent=11 // pred_check_branch
          %461 = sbr.rel (%p459) target = $region60
        $region59: #{tpu_custom_call.1} parent=11 // pred_region
          _
        $region60: #{tpu_custom_call.1} parent=11 // pred_fallthru
          _
        // Predicated region
        $region61: #{tpu_custom_call.1} parent=11 // pred_check
          %p462 = pneg %p323
        $region62: #{tpu_custom_call.1} parent=11 // pred_check_branch
          %464 = sbr.rel (%p462) target = $region64
        $region63: #{tpu_custom_call.1} parent=11 // pred_region
          _
        $region64: #{tpu_custom_call.1} parent=11 // pred_fallthru
          _
        // Predicated region
        $region65: #{tpu_custom_call.1} parent=11 // pred_check
          %p465 = pneg %p344
        $region66: #{tpu_custom_call.1} parent=11 // pred_check_branch
          %467 = sbr.rel (%p465) target = $region68
        $region67: #{tpu_custom_call.1} parent=11 // pred_region
          _
        $region68: #{tpu_custom_call.1} parent=11 // pred_fallthru
          _
        // Predicated region
        $region69: #{tpu_custom_call.1} parent=11 // pred_check
          %p468 = pneg %p365
        $region70: #{tpu_custom_call.1} parent=11 // pred_check_branch
          %470 = sbr.rel (%p468) target = $region72
        $region71: #{tpu_custom_call.1} parent=11 // pred_region
          _
        $region72: #{tpu_custom_call.1} parent=11 // pred_fallthru
          _
      $region12: #{tpu_custom_call.1} parent=5 // pred_fallthru
        _
      %p471 = scmp.lt.s32.totalorder %s24, 2
      // Predicated region
      $region73: #{tpu_custom_call.1} parent=5 // pred_check
        %p472 = pneg %p471
      $region74: #{tpu_custom_call.1} parent=5 // pred_check_branch
        %474 = sbr.rel (%p472) target = $region76
      $region75: #{tpu_custom_call.1} parent=5 // pred_region
        // Predicated region
        $region77: #{tpu_custom_call.1} parent=75 // pred_check
          %p475 = pneg %p44
        $region78: #{tpu_custom_call.1} parent=75 // pred_check_branch
          %477 = sbr.rel (%p475) target = $region80
        $region79: #{tpu_custom_call.1} parent=75 // pred_region
          %s478 = smul.u32 32, %s24
          %p479 = scmp.lt.s32.totalorder %s478, 63
          %s480 = scalar_select %p479, %s478, 63
          %s481 = smul.addr %s480, 2
          %s482 = smul.addr %s481, 8
          %s483 = scalar_lea.vmem %s0, %s482
          %s484 = smul.u32 32, %s24
        $region80: #{tpu_custom_call.1} parent=75 // pred_fallthru
          _
      $region76: #{tpu_custom_call.1} parent=5 // pred_fallthru
        _
      %p485 = scmp.le.s32.totalorder 1, %s24
      %p486 = scmp.lt.s32.totalorder %s24, 3
      %p487 = pnand %p485, %p486
      %p488 = pneg %p487
      // Predicated region
      $region81: #{tpu_custom_call.1} parent=5 // pred_check
        _
      $region82: #{tpu_custom_call.1} parent=5 // pred_check_branch
        %490 = sbr.rel (%p487) target = $region84
      $region83: #{tpu_custom_call.1} parent=5 // pred_region
        %s491 = ssub.s32 %s24, 1
        // Predicated region
        $region85: #{tpu_custom_call.1} parent=83 // pred_check
          %p492 = pneg %p71
        $region86: #{tpu_custom_call.1} parent=83 // pred_check_branch
          %494 = sbr.rel (%p492) target = $region88
        $region87: #{tpu_custom_call.1} parent=83 // pred_region
          %495 = dma.done [#allocation3], 18432
        $region88: #{tpu_custom_call.1} parent=83 // pred_fallthru
          _
        // Predicated region
        $region89: #{tpu_custom_call.1} parent=83 // pred_check
          %p496 = pneg %p260
        $region90: #{tpu_custom_call.1} parent=83 // pred_check_branch
          %498 = sbr.rel (%p496) target = $region92
        $region91: #{tpu_custom_call.1} parent=83 // pred_region
          %499 = dma.done [#allocation5], 2304
        $region92: #{tpu_custom_call.1} parent=83 // pred_fallthru
          _
        %s500 = smul.u32 32, %s29
        %p501 = scmp.lt.s32.totalorder %s500, 63
        %s502 = scalar_select %p501, %s500, 63
        %s503 = smul.addr %s502, 2
        %s504 = smul.addr %s503, 8
        %s505 = scalar_lea.vmem %s0, %s504
        %p506 = pneg %p50
        %p507 = pneg %p47
        %p508 = pneg %p71
        %p509 = pneg %p68
        %p510 = pneg %p92
        %p511 = pneg %p89
        %p512 = pneg %p113
        %p513 = pneg %p110
        %p514 = pneg %p134
        %p515 = pneg %p131
        %p516 = pneg %p155
        %p517 = pneg %p152
        %p518 = pneg %p176
        %p519 = pneg %p173
        %p520 = pneg %p197
        %p521 = pneg %p194
        %p522 = pneg %p218
        %p523 = pneg %p215
        %p524 = pneg %p239
        %p525 = pneg %p236
        %p526 = pneg %p260
        %p527 = pneg %p257
        %p528 = pneg %p281
        %p529 = pneg %p278
        %p530 = pneg %p302
        %p531 = pneg %p299
        %p532 = pneg %p323
        %p533 = pneg %p320
        %p534 = pneg %p344
        %p535 = pneg %p341
        %p536 = pneg %p365
        %p537 = pneg %p362
        %p538 = pneg %p391
        %p539 = pneg %p388
        %p540 = scmp.lt.s32.totalorder %s29, 1
        %s541 = scalar_select %p540, %s29, 1
        %s542 = scalar_lea.vmem %s16, %s541
        %s543 = smul.u32 32, %s29
        %p544 = scmp.lt.s32.totalorder %s543, 63
        %s545 = scalar_select %p544, %s543, 63
        %s546 = smul.addr %s545, 2
        %s547 = smul.addr %s546, 8
        %s548 = scalar_lea.vmem %s0, %s547
        %s549 = smul.u32 32, %s29
        %p550 = scmp.lt.s32.totalorder %s29, 1
        %s551 = scalar_select %p550, %s29, 1
        %s552 = scalar_lea.vmem %s16, %s551
        %v553 = vld [vmem:[%s548] sm:$0xff]
        %v554 = vld [vmem:[%s548 + $0x8] sm:$0xff]
        %v555 = vld [vmem:[%s548 + $0x10] sm:$0xff]
        %v556 = vld [vmem:[%s548 + $0x18] sm:$0xff]
        %v557 = vld [vmem:[%s548 + $0x20] sm:$0xff]
        %v558 = vld [vmem:[%s548 + $0x28] sm:$0xff]
        %v559 = vld [vmem:[%s548 + $0x30] sm:$0xff]
        %v560 = vld [vmem:[%s548 + $0x38] sm:$0xff]
        %v561 = vld [vmem:[%s548 + $0x40] sm:$0xff]
        %v562 = vld [vmem:[%s548 + $0x48] sm:$0xff]
        %v563 = vld [vmem:[%s548 + $0x50] sm:$0xff]
        %v564 = vld [vmem:[%s548 + $0x58] sm:$0xff]
        %v565 = vld [vmem:[%s548 + $0x60] sm:$0xff]
        %v566 = vld [vmem:[%s548 + $0x68] sm:$0xff]
        %v567 = vld [vmem:[%s548 + $0x70] sm:$0xff]
        %v568 = vld [vmem:[%s548 + $0x78] sm:$0xff]
        %v569 = vld [vmem:[%s548 + $0x80] sm:$0xff]
        %v570 = vld [vmem:[%s548 + $0x88] sm:$0xff]
        %v571 = vld [vmem:[%s548 + $0x90] sm:$0xff]
        %v572 = vld [vmem:[%s548 + $0x98] sm:$0xff]
        %v573 = vld [vmem:[%s548 + $0xa0] sm:$0xff]
        %v574 = vld [vmem:[%s548 + $0xa8] sm:$0xff]
        %v575 = vld [vmem:[%s548 + $0xb0] sm:$0xff]
        %v576 = vld [vmem:[%s548 + $0xb8] sm:$0xff]
        %v577 = vld [vmem:[%s548 + $0xc0] sm:$0xff]
        %v578 = vld [vmem:[%s548 + $0xc8] sm:$0xff]
        %v579 = vld [vmem:[%s548 + $0xd0] sm:$0xff]
        %v580 = vld [vmem:[%s548 + $0xd8] sm:$0xff]
        %v581 = vld [vmem:[%s548 + $0xe0] sm:$0xff]
        %v582 = vld [vmem:[%s548 + $0xe8] sm:$0xff]
        %v583 = vld [vmem:[%s548 + $0xf0] sm:$0xff]
        %v584 = vld [vmem:[%s548 + $0xf8] sm:$0xff]
        %v585 = vld [vmem:[%s548 + $0x100] sm:$0xff]
        %v586 = vld [vmem:[%s548 + $0x108] sm:$0xff]
        %v587 = vld [vmem:[%s548 + $0x110] sm:$0xff]
        %v588 = vld [vmem:[%s548 + $0x118] sm:$0xff]
        %v589 = vld [vmem:[%s548 + $0x120] sm:$0xff]
        %v590 = vld [vmem:[%s548 + $0x128] sm:$0xff]
        %v591 = vld [vmem:[%s548 + $0x130] sm:$0xff]
        %v592 = vld [vmem:[%s548 + $0x138] sm:$0xff]
        %v593 = vld [vmem:[%s548 + $0x140] sm:$0xff]
        %v594 = vld [vmem:[%s548 + $0x148] sm:$0xff]
        %v595 = vld [vmem:[%s548 + $0x150] sm:$0xff]
        %v596 = vld [vmem:[%s548 + $0x158] sm:$0xff]
        %v597 = vld [vmem:[%s548 + $0x160] sm:$0xff]
        %v598 = vld [vmem:[%s548 + $0x168] sm:$0xff]
        %v599 = vld [vmem:[%s548 + $0x170] sm:$0xff]
        %v600 = vld [vmem:[%s548 + $0x178] sm:$0xff]
        %v601 = vld [vmem:[%s548 + $0x180] sm:$0xff]
        %v602 = vld [vmem:[%s548 + $0x188] sm:$0xff]
        %v603 = vld [vmem:[%s548 + $0x190] sm:$0xff]
        %v604 = vld [vmem:[%s548 + $0x198] sm:$0xff]
        %v605 = vld [vmem:[%s548 + $0x1a0] sm:$0xff]
        %v606 = vld [vmem:[%s548 + $0x1a8] sm:$0xff]
        %v607 = vld [vmem:[%s548 + $0x1b0] sm:$0xff]
        %v608 = vld [vmem:[%s548 + $0x1b8] sm:$0xff]
        %v609 = vld [vmem:[%s548 + $0x1c0] sm:$0xff]
        %v610 = vld [vmem:[%s548 + $0x1c8] sm:$0xff]
        %v611 = vld [vmem:[%s548 + $0x1d0] sm:$0xff]
        %v612 = vld [vmem:[%s548 + $0x1d8] sm:$0xff]
        %v613 = vld [vmem:[%s548 + $0x1e0] sm:$0xff]
        %v614 = vld [vmem:[%s548 + $0x1e8] sm:$0xff]
        %v615 = vld [vmem:[%s548 + $0x1f0] sm:$0xff]
        %v616 = vld [vmem:[%s548 + $0x1f8] sm:$0xff]
        %v617 = vld [vmem:[#allocation2] sm:$0xff]
        %v618 = vld [vmem:[#allocation2 + $0x8] sm:$0xff]
        %v619 = vld [vmem:[#allocation2 + $0x10] sm:$0xff]
        %v620 = vld [vmem:[#allocation2 + $0x18] sm:$0xff]
        %v621 = vld [vmem:[#allocation2 + $0x20] sm:$0xff]
        %v622 = vld [vmem:[#allocation2 + $0x28] sm:$0xff]
        %v623 = vld [vmem:[#allocation2 + $0x30] sm:$0xff]
        %v624 = vld [vmem:[#allocation2 + $0x38] sm:$0xff]
        %v625 = vld [vmem:[#allocation2 + $0x40] sm:$0xff]
        %v626 = vld [vmem:[#allocation2 + $0x48] sm:$0xff]
        %v627 = vld [vmem:[#allocation2 + $0x50] sm:$0xff]
        %v628 = vld [vmem:[#allocation2 + $0x58] sm:$0xff]
        %v629 = vld [vmem:[#allocation2 + $0x60] sm:$0xff]
        %v630 = vld [vmem:[#allocation2 + $0x68] sm:$0xff]
        %v631 = vld [vmem:[#allocation2 + $0x70] sm:$0xff]
        %v632 = vld [vmem:[#allocation2 + $0x78] sm:$0xff]
        %v633 = vld [vmem:[#allocation2 + $0x80] sm:$0xff]
        %v634 = vld [vmem:[#allocation2 + $0x88] sm:$0xff]
        %v635 = vld [vmem:[#allocation2 + $0x90] sm:$0xff]
        %v636 = vld [vmem:[#allocation2 + $0x98] sm:$0xff]
        %v637 = vld [vmem:[#allocation2 + $0xa0] sm:$0xff]
        %v638 = vld [vmem:[#allocation2 + $0xa8] sm:$0xff]
        %v639 = vld [vmem:[#allocation2 + $0xb0] sm:$0xff]
        %v640 = vld [vmem:[#allocation2 + $0xb8] sm:$0xff]
        %v641 = vld [vmem:[#allocation2 + $0xc0] sm:$0xff]
        %v642 = vld [vmem:[#allocation2 + $0xc8] sm:$0xff]
        %v643 = vld [vmem:[#allocation2 + $0xd0] sm:$0xff]
        %v644 = vld [vmem:[#allocation2 + $0xd8] sm:$0xff]
        %v645 = vld [vmem:[#allocation2 + $0xe0] sm:$0xff]
        %v646 = vld [vmem:[#allocation2 + $0xe8] sm:$0xff]
        %v647 = vld [vmem:[#allocation2 + $0xf0] sm:$0xff]
        %v648 = vld [vmem:[#allocation2 + $0xf8] sm:$0xff]
        %v649 = vld [vmem:[#allocation2 + $0x100] sm:$0xff]
        %v650 = vld [vmem:[#allocation2 + $0x108] sm:$0xff]
        %v651 = vld [vmem:[#allocation2 + $0x110] sm:$0xff]
        %v652 = vld [vmem:[#allocation2 + $0x118] sm:$0xff]
        %v653 = vld [vmem:[#allocation2 + $0x120] sm:$0xff]
        %v654 = vld [vmem:[#allocation2 + $0x128] sm:$0xff]
        %v655 = vld [vmem:[#allocation2 + $0x130] sm:$0xff]
        %v656 = vld [vmem:[#allocation2 + $0x138] sm:$0xff]
        %v657 = vld [vmem:[#allocation2 + $0x140] sm:$0xff]
        %v658 = vld [vmem:[#allocation2 + $0x148] sm:$0xff]
        %v659 = vld [vmem:[#allocation2 + $0x150] sm:$0xff]
        %v660 = vld [vmem:[#allocation2 + $0x158] sm:$0xff]
        %v661 = vld [vmem:[#allocation2 + $0x160] sm:$0xff]
        %v662 = vld [vmem:[#allocation2 + $0x168] sm:$0xff]
        %v663 = vld [vmem:[#allocation2 + $0x170] sm:$0xff]
        %v664 = vld [vmem:[#allocation2 + $0x178] sm:$0xff]
        %v665 = vld [vmem:[#allocation2 + $0x180] sm:$0xff]
        %v666 = vld [vmem:[#allocation2 + $0x188] sm:$0xff]
        %v667 = vld [vmem:[#allocation2 + $0x190] sm:$0xff]
        %v668 = vld [vmem:[#allocation2 + $0x198] sm:$0xff]
        %v669 = vld [vmem:[#allocation2 + $0x1a0] sm:$0xff]
        %v670 = vld [vmem:[#allocation2 + $0x1a8] sm:$0xff]
        %v671 = vld [vmem:[#allocation2 + $0x1b0] sm:$0xff]
        %v672 = vld [vmem:[#allocation2 + $0x1b8] sm:$0xff]
        %v673 = vld [vmem:[#allocation2 + $0x1c0] sm:$0xff]
        %v674 = vld [vmem:[#allocation2 + $0x1c8] sm:$0xff]
        %v675 = vld [vmem:[#allocation2 + $0x1d0] sm:$0xff]
        %v676 = vld [vmem:[#allocation2 + $0x1d8] sm:$0xff]
        %v677 = vld [vmem:[#allocation2 + $0x1e0] sm:$0xff]
        %v678 = vld [vmem:[#allocation2 + $0x1e8] sm:$0xff]
        %v679 = vld [vmem:[#allocation2 + $0x1f0] sm:$0xff]
        %v680 = vld [vmem:[#allocation2 + $0x1f8] sm:$0xff]
        %v681 = vld [vmem:[#allocation2 + $0x200] sm:$0xff]
        %v682 = vld [vmem:[#allocation2 + $0x208] sm:$0xff]
        %v683 = vld [vmem:[#allocation2 + $0x210] sm:$0xff]
        %v684 = vld [vmem:[#allocation2 + $0x218] sm:$0xff]
        %v685 = vld [vmem:[#allocation2 + $0x220] sm:$0xff]
        %v686 = vld [vmem:[#allocation2 + $0x228] sm:$0xff]
        %v687 = vld [vmem:[#allocation2 + $0x230] sm:$0xff]
        %v688 = vld [vmem:[#allocation2 + $0x238] sm:$0xff]
        %v689 = vld [vmem:[#allocation2 + $0x240] sm:$0xff]
        %v690 = vld [vmem:[#allocation2 + $0x248] sm:$0xff]
        %v691 = vld [vmem:[#allocation2 + $0x250] sm:$0xff]
        %v692 = vld [vmem:[#allocation2 + $0x258] sm:$0xff]
        %v693 = vld [vmem:[#allocation2 + $0x260] sm:$0xff]
        %v694 = vld [vmem:[#allocation2 + $0x268] sm:$0xff]
        %v695 = vld [vmem:[#allocation2 + $0x270] sm:$0xff]
        %v696 = vld [vmem:[#allocation2 + $0x278] sm:$0xff]
        %v697 = vld [vmem:[#allocation2 + $0x280] sm:$0xff]
        %v698 = vld [vmem:[#allocation2 + $0x288] sm:$0xff]
        %v699 = vld [vmem:[#allocation2 + $0x290] sm:$0xff]
        %v700 = vld [vmem:[#allocation2 + $0x298] sm:$0xff]
        %v701 = vld [vmem:[#allocation2 + $0x2a0] sm:$0xff]
        %v702 = vld [vmem:[#allocation2 + $0x2a8] sm:$0xff]
        %v703 = vld [vmem:[#allocation2 + $0x2b0] sm:$0xff]
        %v704 = vld [vmem:[#allocation2 + $0x2b8] sm:$0xff]
        %v705 = vld [vmem:[#allocation2 + $0x2c0] sm:$0xff]
        %v706 = vld [vmem:[#allocation2 + $0x2c8] sm:$0xff]
        %v707 = vld [vmem:[#allocation2 + $0x2d0] sm:$0xff]
        %v708 = vld [vmem:[#allocation2 + $0x2d8] sm:$0xff]
        %v709 = vld [vmem:[#allocation2 + $0x2e0] sm:$0xff]
        %v710 = vld [vmem:[#allocation2 + $0x2e8] sm:$0xff]
        %v711 = vld [vmem:[#allocation2 + $0x2f0] sm:$0xff]
        %v712 = vld [vmem:[#allocation2 + $0x2f8] sm:$0xff]
        %v713 = vld [vmem:[#allocation2 + $0x300] sm:$0xff]
        %v714 = vld [vmem:[#allocation2 + $0x308] sm:$0xff]
        %v715 = vld [vmem:[#allocation2 + $0x310] sm:$0xff]
        %v716 = vld [vmem:[#allocation2 + $0x318] sm:$0xff]
        %v717 = vld [vmem:[#allocation2 + $0x320] sm:$0xff]
        %v718 = vld [vmem:[#allocation2 + $0x328] sm:$0xff]
        %v719 = vld [vmem:[#allocation2 + $0x330] sm:$0xff]
        %v720 = vld [vmem:[#allocation2 + $0x338] sm:$0xff]
        %v721 = vld [vmem:[#allocation2 + $0x340] sm:$0xff]
        %v722 = vld [vmem:[#allocation2 + $0x348] sm:$0xff]
        %v723 = vld [vmem:[#allocation2 + $0x350] sm:$0xff]
        %v724 = vld [vmem:[#allocation2 + $0x358] sm:$0xff]
        %v725 = vld [vmem:[#allocation2 + $0x360] sm:$0xff]
        %v726 = vld [vmem:[#allocation2 + $0x368] sm:$0xff]
        %v727 = vld [vmem:[#allocation2 + $0x370] sm:$0xff]
        %v728 = vld [vmem:[#allocation2 + $0x378] sm:$0xff]
        %v729 = vld [vmem:[#allocation2 + $0x380] sm:$0xff]
        %v730 = vld [vmem:[#allocation2 + $0x388] sm:$0xff]
        %v731 = vld [vmem:[#allocation2 + $0x390] sm:$0xff]
        %v732 = vld [vmem:[#allocation2 + $0x398] sm:$0xff]
        %v733 = vld [vmem:[#allocation2 + $0x3a0] sm:$0xff]
        %v734 = vld [vmem:[#allocation2 + $0x3a8] sm:$0xff]
        %v735 = vld [vmem:[#allocation2 + $0x3b0] sm:$0xff]
        %v736 = vld [vmem:[#allocation2 + $0x3b8] sm:$0xff]
        %v737 = vld [vmem:[#allocation2 + $0x3c0] sm:$0xff]
        %v738 = vld [vmem:[#allocation2 + $0x3c8] sm:$0xff]
        %v739 = vld [vmem:[#allocation2 + $0x3d0] sm:$0xff]
        %v740 = vld [vmem:[#allocation2 + $0x3d8] sm:$0xff]
        %v741 = vld [vmem:[#allocation2 + $0x3e0] sm:$0xff]
        %v742 = vld [vmem:[#allocation2 + $0x3e8] sm:$0xff]
        %v743 = vld [vmem:[#allocation2 + $0x3f0] sm:$0xff]
        %v744 = vld [vmem:[#allocation2 + $0x3f8] sm:$0xff]
        %v745 = vld [vmem:[#allocation2 + $0x400] sm:$0xff]
        %v746 = vld [vmem:[#allocation2 + $0x408] sm:$0xff]
        %v747 = vld [vmem:[#allocation2 + $0x410] sm:$0xff]
        %v748 = vld [vmem:[#allocation2 + $0x418] sm:$0xff]
        %v749 = vld [vmem:[#allocation2 + $0x420] sm:$0xff]
        %v750 = vld [vmem:[#allocation2 + $0x428] sm:$0xff]
        %v751 = vld [vmem:[#allocation2 + $0x430] sm:$0xff]
        %v752 = vld [vmem:[#allocation2 + $0x438] sm:$0xff]
        %v753 = vld [vmem:[#allocation2 + $0x440] sm:$0xff]
        %v754 = vld [vmem:[#allocation2 + $0x448] sm:$0xff]
        %v755 = vld [vmem:[#allocation2 + $0x450] sm:$0xff]
        %v756 = vld [vmem:[#allocation2 + $0x458] sm:$0xff]
        %v757 = vld [vmem:[#allocation2 + $0x460] sm:$0xff]
        %v758 = vld [vmem:[#allocation2 + $0x468] sm:$0xff]
        %v759 = vld [vmem:[#allocation2 + $0x470] sm:$0xff]
        %v760 = vld [vmem:[#allocation2 + $0x478] sm:$0xff]
        %761 = vmatprep.subr.mxu0 %v554
        %762 = vmatpush1.msra.mxu0 %v553
        %763 = vmatprep.subr.mxu0 %v556
        %764 = vmatpush1.msra.mxu0 %v555
        %765 = vmatprep.subr.mxu0 %v558
        %766 = vmatpush1.msra.mxu0 %v557
        %767 = vmatprep.subr.mxu0 %v560
        %768 = vmatpush1.msra.mxu0 %v559
        %769 = vmatprep.subr.mxu0 %v562
        %770 = vmatpush1.msra.mxu0 %v561
        %771 = vmatprep.subr.mxu0 %v564
        %772 = vmatpush1.msra.mxu0 %v563
        %773 = vmatprep.subr.mxu0 %v566
        %774 = vmatpush1.msra.mxu0 %v565
        %775 = vmatprep.subr.mxu0 %v568
        %776 = vmatpush1.msra.mxu0 %v567
        %777 = vmatprep.subr.mxu0 %v570
        %778 = vmatpush1.msra.mxu0 %v569
        %779 = vmatprep.subr.mxu0 %v572
        %780 = vmatpush1.msra.mxu0 %v571
        %781 = vmatprep.subr.mxu0 %v574
        %782 = vmatpush1.msra.mxu0 %v573
        %783 = vmatprep.subr.mxu0 %v576
        %784 = vmatpush1.msra.mxu0 %v575
        %785 = vmatprep.subr.mxu0 %v578
        %786 = vmatpush1.msra.mxu0 %v577
        %787 = vmatprep.subr.mxu0 %v580
        %788 = vmatpush1.msra.mxu0 %v579
        %789 = vmatprep.subr.mxu0 %v582
        %790 = vmatpush1.msra.mxu0 %v581
        %791 = vmatprep.subr.mxu0 %v584
        %792 = vmatpush1.msra.mxu0 %v583
        %793 = vmatprep.subr.mxu0 %v586
        %794 = vmatpush1.msra.mxu0 %v585
        %795 = vmatprep.subr.mxu0 %v588
        %796 = vmatpush1.msra.mxu0 %v587
        %797 = vmatprep.subr.mxu0 %v590
        %798 = vmatpush1.msra.mxu0 %v589
        %799 = vmatprep.subr.mxu0 %v592
        %800 = vmatpush1.msra.mxu0 %v591
        %801 = vmatprep.subr.mxu0 %v594
        %802 = vmatpush1.msra.mxu0 %v593
        %803 = vmatprep.subr.mxu0 %v596
        %804 = vmatpush1.msra.mxu0 %v595
        %805 = vmatprep.subr.mxu0 %v598
        %806 = vmatpush1.msra.mxu0 %v597
        %807 = vmatprep.subr.mxu0 %v600
        %808 = vmatpush1.msra.mxu0 %v599
        %809 = vmatprep.subr.mxu0 %v602
        %810 = vmatpush1.msra.mxu0 %v601
        %811 = vmatprep.subr.mxu0 %v604
        %812 = vmatpush1.msra.mxu0 %v603
        %813 = vmatprep.subr.mxu0 %v606
        %814 = vmatpush1.msra.mxu0 %v605
        %815 = vmatprep.subr.mxu0 %v608
        %816 = vmatpush1.msra.mxu0 %v607
        %817 = vmatprep.subr.mxu0 %v610
        %818 = vmatpush1.msra.mxu0 %v609
        %819 = vmatprep.subr.mxu0 %v612
        %820 = vmatpush1.msra.mxu0 %v611
        %821 = vmatprep.subr.mxu0 %v614
        %822 = vmatpush1.msra.mxu0 %v613
        %823 = vmatprep.subr.mxu0 %v616
        %824 = vmatpush1.msra.mxu0 %v615
        %825 = vmatprep.mubr.f32.mxu0 %v618
        %826 = vmatmul.mubr.f32.gmra.mrb[0].mxu0 %v617
        %v827 = vpop.f32.mrb[0].mxu0
        %v828 = vadd.f32 0.0, %v827
        %v829 = vpop.f32.mrb[0].mxu0
        %v830 = vadd.f32 0.0, %v829
        %831 = vmatprep.mubr.f32.mxu0 %v620
        %832 = vmatmul.mubr.f32.gmra.mrb[0].mxu0 %v619
        %v833 = vpop.f32.mrb[0].mxu0
        %v834 = vadd.f32 0.0, %v833
        %v835 = vpop.f32.mrb[0].mxu0
        %v836 = vadd.f32 0.0, %v835
        %837 = vmatprep.mubr.f32.mxu0 %v622
        %838 = vmatmul.mubr.f32.gmra.mrb[0].mxu0 %v621
        %v839 = vpop.f32.mrb[0].mxu0
        %v840 = vadd.f32 0.0, %v839
        %v841 = vpop.f32.mrb[0].mxu0
        %v842 = vadd.f32 0.0, %v841
        %843 = vmatprep.mubr.f32.mxu0 %v624
        %844 = vmatmul.mubr.f32.gmra.mrb[0].mxu0 %v623
        %v845 = vpop.f32.mrb[0].mxu0
        %v846 = vadd.f32 0.0, %v845
        %v847 = vpop.f32.mrb[0].mxu0
        %v848 = vadd.f32 0.0, %v847
        %849 = vmatprep.mubr.f32.mxu0 %v626
        %850 = vmatmul.mubr.f32.gmra.mrb[0].mxu0 %v625
        %v851 = vpop.f32.mrb[0].mxu0
        %v852 = vadd.f32 0.0, %v851
        %v853 = vpop.f32.mrb[0].mxu0
        %v854 = vadd.f32 0.0, %v853
        %855 = vmatprep.mubr.f32.mxu0 %v628
        %856 = vmatmul.mubr.f32.gmra.mrb[0].mxu0 %v627
        %v857 = vpop.f32.mrb[0].mxu0
        %v858 = vadd.f32 0.0, %v857
        %v859 = vpop.f32.mrb[0].mxu0
        %v860 = vadd.f32 0.0, %v859
        %861 = vmatprep.mubr.f32.mxu0 %v630
        %862 = vmatmul.mubr.f32.gmra.mrb[0].mxu0 %v629
        %v863 = vpop.f32.mrb[0].mxu0
        %v864 = vadd.f32 0.0, %v863
        %v865 = vpop.f32.mrb[0].mxu0
        %v866 = vadd.f32 0.0, %v865
        %867 = vmatprep.mubr.f32.mxu0 %v632
        %868 = vmatmul.mubr.f32.gmra.mrb[0].mxu0 %v631
        %v869 = vpop.f32.mrb[0].mxu0
        %v870 = vadd.f32 0.0, %v869
        %v871 = vpop.f32.mrb[0].mxu0
        %v872 = vadd.f32 0.0, %v871
        %873 = vmatprep.mubr.f32.mxu0 %v634
        %874 = vmatmul.mubr.f32.gmra.mrb[0].mxu0 %v633
        %v875 = vpop.f32.mrb[0].mxu0
        %v876 = vadd.f32 0.0, %v875
        %v877 = vpop.f32.mrb[0].mxu0
        %v878 = vadd.f32 0.0, %v877
        %879 = vmatprep.mubr.f32.mxu0 %v636
        %880 = vmatmul.mubr.f32.gmra.mrb[0].mxu0 %v635
        %v881 = vpop.f32.mrb[0].mxu0
        %v882 = vadd.f32 0.0, %v881
        %v883 = vpop.f32.mrb[0].mxu0
        %v884 = vadd.f32 0.0, %v883
        %885 = vmatprep.mubr.f32.mxu0 %v638
        %886 = vmatmul.mubr.f32.gmra.mrb[0].mxu0 %v637
        %v887 = vpop.f32.mrb[0].mxu0
        %v888 = vadd.f32 0.0, %v887
        %v889 = vpop.f32.mrb[0].mxu0
        %v890 = vadd.f32 0.0, %v889
        %891 = vmatprep.mubr.f32.mxu0 %v640
        %892 = vmatmul.mubr.f32.gmra.mrb[0].mxu0 %v639
        %v893 = vpop.f32.mrb[0].mxu0
        %v894 = vadd.f32 0.0, %v893
        %v895 = vpop.f32.mrb[0].mxu0
        %v896 = vadd.f32 0.0, %v895
        %897 = vmatprep.mubr.f32.mxu0 %v642
        %898 = vmatmul.mubr.f32.gmra.mrb[0].mxu0 %v641
        %v899 = vpop.f32.mrb[0].mxu0
        %v900 = vadd.f32 0.0, %v899
        %v901 = vpop.f32.mrb[0].mxu0
        %v902 = vadd.f32 0.0, %v901
        %903 = vmatprep.mubr.f32.mxu0 %v644
        %904 = vmatmul.mubr.f32.gmra.mrb[0].mxu0 %v643
        %v905 = vpop.f32.mrb[0].mxu0
        %v906 = vadd.f32 0.0, %v905
        %v907 = vpop.f32.mrb[0].mxu0
        %v908 = vadd.f32 0.0, %v907
        %909 = vmatprep.mubr.f32.mxu0 %v646
        %910 = vmatmul.mubr.f32.gmra.mrb[0].mxu0 %v645
        %v911 = vpop.f32.mrb[0].mxu0
        %v912 = vadd.f32 0.0, %v911
        %v913 = vpop.f32.mrb[0].mxu0
        %v914 = vadd.f32 0.0, %v913
        %915 = vmatprep.mubr.f32.mxu0 %v648
        %916 = vmatmul.mubr.f32.gmra.mrb[0].mxu0 %v647
        %v917 = vpop.f32.mrb[0].mxu0
        %v918 = vadd.f32 0.0, %v917
        %v919 = vpop.f32.mrb[0].mxu0
        %v920 = vadd.f32 0.0, %v919
        %921 = vmatprep.mubr.f32.mxu0 %v650
        %922 = vmatmul.mubr.f32.gmra.mrb[0].mxu0 %v649
        %v923 = vpop.f32.mrb[0].mxu0
        %v924 = vadd.f32 0.0, %v923
        %v925 = vpop.f32.mrb[0].mxu0
        %v926 = vadd.f32 0.0, %v925
        %927 = vmatprep.mubr.f32.mxu0 %v652
        %928 = vmatmul.mubr.f32.gmra.mrb[0].mxu0 %v651
        %v929 = vpop.f32.mrb[0].mxu0
        %v930 = vadd.f32 0.0, %v929
        %v931 = vpop.f32.mrb[0].mxu0
        %v932 = vadd.f32 0.0, %v931
        %933 = vmatprep.mubr.f32.mxu0 %v654
        %934 = vmatmul.mubr.f32.gmra.mrb[0].mxu0 %v653
        %v935 = vpop.f32.mrb[0].mxu0
        %v936 = vadd.f32 0.0, %v935
        %v937 = vpop.f32.mrb[0].mxu0
        %v938 = vadd.f32 0.0, %v937
        %939 = vmatprep.mubr.f32.mxu0 %v656
        %940 = vmatmul.mubr.f32.gmra.mrb[0].mxu0 %v655
        %v941 = vpop.f32.mrb[0].mxu0
        %v942 = vadd.f32 0.0, %v941
        %v943 = vpop.f32.mrb[0].mxu0
        %v944 = vadd.f32 0.0, %v943
        %945 = vmatprep.mubr.f32.mxu0 %v658
        %946 = vmatmul.mubr.f32.gmra.mrb[0].mxu0 %v657
        %v947 = vpop.f32.mrb[0].mxu0
        %v948 = vadd.f32 0.0, %v947
        %v949 = vpop.f32.mrb[0].mxu0
        %v950 = vadd.f32 0.0, %v949
        %951 = vmatprep.mubr.f32.mxu0 %v660
        %952 = vmatmul.mubr.f32.gmra.mrb[0].mxu0 %v659
        %v953 = vpop.f32.mrb[0].mxu0
        %v954 = vadd.f32 0.0, %v953
        %v955 = vpop.f32.mrb[0].mxu0
        %v956 = vadd.f32 0.0, %v955
        %957 = vmatprep.mubr.f32.mxu0 %v662
        %958 = vmatmul.mubr.f32.gmra.mrb[0].mxu0 %v661
        %v959 = vpop.f32.mrb[0].mxu0
        %v960 = vadd.f32 0.0, %v959
        %v961 = vpop.f32.mrb[0].mxu0
        %v962 = vadd.f32 0.0, %v961
        %963 = vmatprep.mubr.f32.mxu0 %v664
        %964 = vmatmul.mubr.f32.gmra.mrb[0].mxu0 %v663
        %v965 = vpop.f32.mrb[0].mxu0
        %v966 = vadd.f32 0.0, %v965
        %v967 = vpop.f32.mrb[0].mxu0
        %v968 = vadd.f32 0.0, %v967
        %969 = vmatprep.mubr.f32.mxu0 %v666
        %970 = vmatmul.mubr.f32.gmra.mrb[0].mxu0 %v665
        %v971 = vpop.f32.mrb[0].mxu0
        %v972 = vadd.f32 0.0, %v971
        %v973 = vpop.f32.mrb[0].mxu0
        %v974 = vadd.f32 0.0, %v973
        %975 = vmatprep.mubr.f32.mxu0 %v668
        %976 = vmatmul.mubr.f32.gmra.mrb[0].mxu0 %v667
        %v977 = vpop.f32.mrb[0].mxu0
        %v978 = vadd.f32 0.0, %v977
        %v979 = vpop.f32.mrb[0].mxu0
        %v980 = vadd.f32 0.0, %v979
        %981 = vmatprep.mubr.f32.mxu0 %v670
        %982 = vmatmul.mubr.f32.gmra.mrb[0].mxu0 %v669
        %v983 = vpop.f32.mrb[0].mxu0
        %v984 = vadd.f32 0.0, %v983
        %v985 = vpop.f32.mrb[0].mxu0
        %v986 = vadd.f32 0.0, %v985
        %987 = vmatprep.mubr.f32.mxu0 %v672
        %988 = vmatmul.mubr.f32.gmra.mrb[0].mxu0 %v671
        %v989 = vpop.f32.mrb[0].mxu0
        %v990 = vadd.f32 0.0, %v989
        %v991 = vpop.f32.mrb[0].mxu0
        %v992 = vadd.f32 0.0, %v991
        %993 = vmatprep.mubr.f32.mxu0 %v674
        %994 = vmatmul.mubr.f32.gmra.mrb[0].mxu0 %v673
        %v995 = vpop.f32.mrb[0].mxu0
        %v996 = vadd.f32 0.0, %v995
        %v997 = vpop.f32.mrb[0].mxu0
        %v998 = vadd.f32 0.0, %v997
        %999 = vmatprep.mubr.f32.mxu0 %v676
        %1000 = vmatmul.mubr.f32.gmra.mrb[0].mxu0 %v675
        %v1001 = vpop.f32.mrb[0].mxu0
        %v1002 = vadd.f32 0.0, %v1001
        %v1003 = vpop.f32.mrb[0].mxu0
        %v1004 = vadd.f32 0.0, %v1003
        %1005 = vmatprep.mubr.f32.mxu0 %v678
        %1006 = vmatmul.mubr.f32.gmra.mrb[0].mxu0 %v677
        %v1007 = vpop.f32.mrb[0].mxu0
        %v1008 = vadd.f32 0.0, %v1007
        %v1009 = vpop.f32.mrb[0].mxu0
        %v1010 = vadd.f32 0.0, %v1009
        %1011 = vmatprep.mubr.f32.mxu0 %v680
        %1012 = vmatmul.mubr.f32.gmra.mrb[0].mxu0 %v679
        %v1013 = vpop.f32.mrb[0].mxu0
        %v1014 = vadd.f32 0.0, %v1013
        %v1015 = vpop.f32.mrb[0].mxu0
        %v1016 = vadd.f32 0.0, %v1015
        %1017 = vmatprep.mubr.f32.mxu0 %v682
        %1018 = vmatmul.mubr.f32.gmra.mrb[0].mxu0 %v681
        %v1019 = vpop.f32.mrb[0].mxu0
        %v1020 = vadd.f32 0.0, %v1019
        %v1021 = vpop.f32.mrb[0].mxu0
        %v1022 = vadd.f32 0.0, %v1021
        %1023 = vmatprep.mubr.f32.mxu0 %v684
        %1024 = vmatmul.mubr.f32.gmra.mrb[0].mxu0 %v683
        %v1025 = vpop.f32.mrb[0].mxu0
        %v1026 = vadd.f32 0.0, %v1025
        %v1027 = vpop.f32.mrb[0].mxu0
        %v1028 = vadd.f32 0.0, %v1027
        %1029 = vmatprep.mubr.f32.mxu0 %v686
        %1030 = vmatmul.mubr.f32.gmra.mrb[0].mxu0 %v685
        %v1031 = vpop.f32.mrb[0].mxu0
        %v1032 = vadd.f32 0.0, %v1031
        %v1033 = vpop.f32.mrb[0].mxu0
        %v1034 = vadd.f32 0.0, %v1033
        %1035 = vmatprep.mubr.f32.mxu0 %v688
        %1036 = vmatmul.mubr.f32.gmra.mrb[0].mxu0 %v687
        %v1037 = vpop.f32.mrb[0].mxu0
        %v1038 = vadd.f32 0.0, %v1037
        %v1039 = vpop.f32.mrb[0].mxu0
        %v1040 = vadd.f32 0.0, %v1039
        %1041 = vmatprep.mubr.f32.mxu0 %v690
        %1042 = vmatmul.mubr.f32.gmra.mrb[0].mxu0 %v689
        %v1043 = vpop.f32.mrb[0].mxu0
        %v1044 = vadd.f32 0.0, %v1043
        %v1045 = vpop.f32.mrb[0].mxu0
        %v1046 = vadd.f32 0.0, %v1045
        %1047 = vmatprep.mubr.f32.mxu0 %v692
        %1048 = vmatmul.mubr.f32.gmra.mrb[0].mxu0 %v691
        %v1049 = vpop.f32.mrb[0].mxu0
        %v1050 = vadd.f32 0.0, %v1049
        %v1051 = vpop.f32.mrb[0].mxu0
        %v1052 = vadd.f32 0.0, %v1051
        %1053 = vmatprep.mubr.f32.mxu0 %v694
        %1054 = vmatmul.mubr.f32.gmra.mrb[0].mxu0 %v693
        %v1055 = vpop.f32.mrb[0].mxu0
        %v1056 = vadd.f32 0.0, %v1055
        %v1057 = vpop.f32.mrb[0].mxu0
        %v1058 = vadd.f32 0.0, %v1057
        %1059 = vmatprep.mubr.f32.mxu0 %v696
        %1060 = vmatmul.mubr.f32.gmra.mrb[0].mxu0 %v695
        %v1061 = vpop.f32.mrb[0].mxu0
        %v1062 = vadd.f32 0.0, %v1061
        %v1063 = vpop.f32.mrb[0].mxu0
        %v1064 = vadd.f32 0.0, %v1063
        %1065 = vmatprep.mubr.f32.mxu0 %v698
        %1066 = vmatmul.mubr.f32.gmra.mrb[0].mxu0 %v697
        %v1067 = vpop.f32.mrb[0].mxu0
        %v1068 = vadd.f32 0.0, %v1067
        %v1069 = vpop.f32.mrb[0].mxu0
        %v1070 = vadd.f32 0.0, %v1069
        %1071 = vmatprep.mubr.f32.mxu0 %v700
        %1072 = vmatmul.mubr.f32.gmra.mrb[0].mxu0 %v699
        %v1073 = vpop.f32.mrb[0].mxu0
        %v1074 = vadd.f32 0.0, %v1073
        %v1075 = vpop.f32.mrb[0].mxu0
        %v1076 = vadd.f32 0.0, %v1075
        %1077 = vmatprep.mubr.f32.mxu0 %v702
        %1078 = vmatmul.mubr.f32.gmra.mrb[0].mxu0 %v701
        %v1079 = vpop.f32.mrb[0].mxu0
        %v1080 = vadd.f32 0.0, %v1079
        %v1081 = vpop.f32.mrb[0].mxu0
        %v1082 = vadd.f32 0.0, %v1081
        %1083 = vmatprep.mubr.f32.mxu0 %v704
        %1084 = vmatmul.mubr.f32.gmra.mrb[0].mxu0 %v703
        %v1085 = vpop.f32.mrb[0].mxu0
        %v1086 = vadd.f32 0.0, %v1085
        %v1087 = vpop.f32.mrb[0].mxu0
        %v1088 = vadd.f32 0.0, %v1087
        %1089 = vmatprep.mubr.f32.mxu0 %v706
        %1090 = vmatmul.mubr.f32.gmra.mrb[0].mxu0 %v705
        %v1091 = vpop.f32.mrb[0].mxu0
        %v1092 = vadd.f32 0.0, %v1091
        %v1093 = vpop.f32.mrb[0].mxu0
        %v1094 = vadd.f32 0.0, %v1093
        %1095 = vmatprep.mubr.f32.mxu0 %v708
        %1096 = vmatmul.mubr.f32.gmra.mrb[0].mxu0 %v707
        %v1097 = vpop.f32.mrb[0].mxu0
        %v1098 = vadd.f32 0.0, %v1097
        %v1099 = vpop.f32.mrb[0].mxu0
        %v1100 = vadd.f32 0.0, %v1099
        %1101 = vmatprep.mubr.f32.mxu0 %v710
        %1102 = vmatmul.mubr.f32.gmra.mrb[0].mxu0 %v709
        %v1103 = vpop.f32.mrb[0].mxu0
        %v1104 = vadd.f32 0.0, %v1103
        %v1105 = vpop.f32.mrb[0].mxu0
        %v1106 = vadd.f32 0.0, %v1105
        %1107 = vmatprep.mubr.f32.mxu0 %v712
        %1108 = vmatmul.mubr.f32.gmra.mrb[0].mxu0 %v711
        %v1109 = vpop.f32.mrb[0].mxu0
        %v1110 = vadd.f32 0.0, %v1109
        %v1111 = vpop.f32.mrb[0].mxu0
        %v1112 = vadd.f32 0.0, %v1111
        %1113 = vmatprep.mubr.f32.mxu0 %v714
        %1114 = vmatmul.mubr.f32.gmra.mrb[0].mxu0 %v713
        %v1115 = vpop.f32.mrb[0].mxu0
        %v1116 = vadd.f32 0.0, %v1115
        %v1117 = vpop.f32.mrb[0].mxu0
        %v1118 = vadd.f32 0.0, %v1117
        %1119 = vmatprep.mubr.f32.mxu0 %v716
        %1120 = vmatmul.mubr.f32.gmra.mrb[0].mxu0 %v715
        %v1121 = vpop.f32.mrb[0].mxu0
        %v1122 = vadd.f32 0.0, %v1121
        %v1123 = vpop.f32.mrb[0].mxu0
        %v1124 = vadd.f32 0.0, %v1123
        %1125 = vmatprep.mubr.f32.mxu0 %v718
        %1126 = vmatmul.mubr.f32.gmra.mrb[0].mxu0 %v717
        %v1127 = vpop.f32.mrb[0].mxu0
        %v1128 = vadd.f32 0.0, %v1127
        %v1129 = vpop.f32.mrb[0].mxu0
        %v1130 = vadd.f32 0.0, %v1129
        %1131 = vmatprep.mubr.f32.mxu0 %v720
        %1132 = vmatmul.mubr.f32.gmra.mrb[0].mxu0 %v719
        %v1133 = vpop.f32.mrb[0].mxu0
        %v1134 = vadd.f32 0.0, %v1133
        %v1135 = vpop.f32.mrb[0].mxu0
        %v1136 = vadd.f32 0.0, %v1135
        %1137 = vmatprep.mubr.f32.mxu0 %v722
        %1138 = vmatmul.mubr.f32.gmra.mrb[0].mxu0 %v721
        %v1139 = vpop.f32.mrb[0].mxu0
        %v1140 = vadd.f32 0.0, %v1139
        %v1141 = vpop.f32.mrb[0].mxu0
        %v1142 = vadd.f32 0.0, %v1141
        %1143 = vmatprep.mubr.f32.mxu0 %v724
        %1144 = vmatmul.mubr.f32.gmra.mrb[0].mxu0 %v723
        %v1145 = vpop.f32.mrb[0].mxu0
        %v1146 = vadd.f32 0.0, %v1145
        %v1147 = vpop.f32.mrb[0].mxu0
        %v1148 = vadd.f32 0.0, %v1147
        %1149 = vmatprep.mubr.f32.mxu0 %v726
        %1150 = vmatmul.mubr.f32.gmra.mrb[0].mxu0 %v725
        %v1151 = vpop.f32.mrb[0].mxu0
        %v1152 = vadd.f32 0.0, %v1151
        %v1153 = vpop.f32.mrb[0].mxu0
        %v1154 = vadd.f32 0.0, %v1153
        %1155 = vmatprep.mubr.f32.mxu0 %v728
        %1156 = vmatmul.mubr.f32.gmra.mrb[0].mxu0 %v727
        %v1157 = vpop.f32.mrb[0].mxu0
        %v1158 = vadd.f32 0.0, %v1157
        %v1159 = vpop.f32.mrb[0].mxu0
        %v1160 = vadd.f32 0.0, %v1159
        %1161 = vmatprep.mubr.f32.mxu0 %v730
        %1162 = vmatmul.mubr.f32.gmra.mrb[0].mxu0 %v729
        %v1163 = vpop.f32.mrb[0].mxu0
        %v1164 = vadd.f32 0.0, %v1163
        %v1165 = vpop.f32.mrb[0].mxu0
        %v1166 = vadd.f32 0.0, %v1165
        %1167 = vmatprep.mubr.f32.mxu0 %v732
        %1168 = vmatmul.mubr.f32.gmra.mrb[0].mxu0 %v731
        %v1169 = vpop.f32.mrb[0].mxu0
        %v1170 = vadd.f32 0.0, %v1169
        %v1171 = vpop.f32.mrb[0].mxu0
        %v1172 = vadd.f32 0.0, %v1171
        %1173 = vmatprep.mubr.f32.mxu0 %v734
        %1174 = vmatmul.mubr.f32.gmra.mrb[0].mxu0 %v733
        %v1175 = vpop.f32.mrb[0].mxu0
        %v1176 = vadd.f32 0.0, %v1175
        %v1177 = vpop.f32.mrb[0].mxu0
        %v1178 = vadd.f32 0.0, %v1177
        %1179 = vmatprep.mubr.f32.mxu0 %v736
        %1180 = vmatmul.mubr.f32.gmra.mrb[0].mxu0 %v735
        %v1181 = vpop.f32.mrb[0].mxu0
        %v1182 = vadd.f32 0.0, %v1181
        %v1183 = vpop.f32.mrb[0].mxu0
        %v1184 = vadd.f32 0.0, %v1183
        %1185 = vmatprep.mubr.f32.mxu0 %v738
        %1186 = vmatmul.mubr.f32.gmra.mrb[0].mxu0 %v737
        %v1187 = vpop.f32.mrb[0].mxu0
        %v1188 = vadd.f32 0.0, %v1187
        %v1189 = vpop.f32.mrb[0].mxu0
        %v1190 = vadd.f32 0.0, %v1189
        %1191 = vmatprep.mubr.f32.mxu0 %v740
        %1192 = vmatmul.mubr.f32.gmra.mrb[0].mxu0 %v739
        %v1193 = vpop.f32.mrb[0].mxu0
        %v1194 = vadd.f32 0.0, %v1193
        %v1195 = vpop.f32.mrb[0].mxu0
        %v1196 = vadd.f32 0.0, %v1195
        %1197 = vmatprep.mubr.f32.mxu0 %v742
        %1198 = vmatmul.mubr.f32.gmra.mrb[0].mxu0 %v741
        %v1199 = vpop.f32.mrb[0].mxu0
        %v1200 = vadd.f32 0.0, %v1199
        %v1201 = vpop.f32.mrb[0].mxu0
        %v1202 = vadd.f32 0.0, %v1201
        %1203 = vmatprep.mubr.f32.mxu0 %v744
        %1204 = vmatmul.mubr.f32.gmra.mrb[0].mxu0 %v743
        %v1205 = vpop.f32.mrb[0].mxu0
        %v1206 = vadd.f32 0.0, %v1205
        %v1207 = vpop.f32.mrb[0].mxu0
        %v1208 = vadd.f32 0.0, %v1207
        %1209 = vmatprep.mubr.f32.mxu0 %v746
        %1210 = vmatmul.mubr.f32.gmra.mrb[0].mxu0 %v745
        %v1211 = vpop.f32.mrb[0].mxu0
        %v1212 = vadd.f32 0.0, %v1211
        %v1213 = vpop.f32.mrb[0].mxu0
        %v1214 = vadd.f32 0.0, %v1213
        %1215 = vmatprep.mubr.f32.mxu0 %v748
        %1216 = vmatmul.mubr.f32.gmra.mrb[0].mxu0 %v747
        %v1217 = vpop.f32.mrb[0].mxu0
        %v1218 = vadd.f32 0.0, %v1217
        %v1219 = vpop.f32.mrb[0].mxu0
        %v1220 = vadd.f32 0.0, %v1219
        %1221 = vmatprep.mubr.f32.mxu0 %v750
        %1222 = vmatmul.mubr.f32.gmra.mrb[0].mxu0 %v749
        %v1223 = vpop.f32.mrb[0].mxu0
        %v1224 = vadd.f32 0.0, %v1223
        %v1225 = vpop.f32.mrb[0].mxu0
        %v1226 = vadd.f32 0.0, %v1225
        %1227 = vmatprep.mubr.f32.mxu0 %v752
        %1228 = vmatmul.mubr.f32.gmra.mrb[0].mxu0 %v751
        %v1229 = vpop.f32.mrb[0].mxu0
        %v1230 = vadd.f32 0.0, %v1229
        %v1231 = vpop.f32.mrb[0].mxu0
        %v1232 = vadd.f32 0.0, %v1231
        %1233 = vmatprep.mubr.f32.mxu0 %v754
        %1234 = vmatmul.mubr.f32.gmra.mrb[0].mxu0 %v753
        %v1235 = vpop.f32.mrb[0].mxu0
        %v1236 = vadd.f32 0.0, %v1235
        %v1237 = vpop.f32.mrb[0].mxu0
        %v1238 = vadd.f32 0.0, %v1237
        %1239 = vmatprep.mubr.f32.mxu0 %v756
        %1240 = vmatmul.mubr.f32.gmra.mrb[0].mxu0 %v755
        %v1241 = vpop.f32.mrb[0].mxu0
        %v1242 = vadd.f32 0.0, %v1241
        %v1243 = vpop.f32.mrb[0].mxu0
        %v1244 = vadd.f32 0.0, %v1243
        %1245 = vmatprep.mubr.f32.mxu0 %v758
        %1246 = vmatmul.mubr.f32.gmra.mrb[0].mxu0 %v757
        %v1247 = vpop.f32.mrb[0].mxu0
        %v1248 = vadd.f32 0.0, %v1247
        %v1249 = vpop.f32.mrb[0].mxu0
        %v1250 = vadd.f32 0.0, %v1249
        %1251 = vmatprep.mubr.f32.mxu0 %v760
        %1252 = vmatmul.mubr.f32.gmra.mrb[0].mxu0 %v759
        %v1253 = vpop.f32.mrb[0].mxu0
        %v1254 = vadd.f32 0.0, %v1253
        %v1255 = vpop.f32.mrb[0].mxu0
        %v1256 = vadd.f32 0.0, %v1255
        %1257 = vdwg.mxu0
        %v1258 = vld [vmem:[%s11] sm:$0x1]
        %v1260 = vlaneseq
        %v1261 = vshrl.u32 %v1260, 7
        %v1262 = vsub.s32 0, %v1261
        %v1263 = vrot.slane %v1258, %v1262
        %v1265 = vld [vmem:[%s6] sm:$0xff]
        %v1266 = vld [vmem:[%s6 + $0x8] sm:$0xff]
        %v1267 = vld [vmem:[%s6 + $0x10] sm:$0xff]
        %v1268 = vld [vmem:[%s6 + $0x18] sm:$0xff]
        %v1269 = vld [vmem:[%s6 + $0x20] sm:$0xff]
        %v1270 = vld [vmem:[%s6 + $0x28] sm:$0xff]
        %v1271 = vld [vmem:[%s6 + $0x30] sm:$0xff]
        %v1272 = vld [vmem:[%s6 + $0x38] sm:$0xff]
        %v1273 = vld [vmem:[%s6 + $0x40] sm:$0xff]
        %v1274 = vld [vmem:[%s6 + $0x48] sm:$0xff]
        %v1275 = vld [vmem:[%s6 + $0x50] sm:$0xff]
        %v1276 = vld [vmem:[%s6 + $0x58] sm:$0xff]
        %v1277 = vld [vmem:[%s6 + $0x60] sm:$0xff]
        %v1278 = vld [vmem:[%s6 + $0x68] sm:$0xff]
        %v1279 = vld [vmem:[%s6 + $0x70] sm:$0xff]
        %v1280 = vld [vmem:[%s6 + $0x78] sm:$0xff]
        %v1281 = vld [vmem:[%s6 + $0x80] sm:$0xff]
        %v1282 = vld [vmem:[%s6 + $0x88] sm:$0xff]
        %v1283 = vld [vmem:[%s6 + $0x90] sm:$0xff]
        %v1284 = vld [vmem:[%s6 + $0x98] sm:$0xff]
        %v1285 = vld [vmem:[%s6 + $0xa0] sm:$0xff]
        %v1286 = vld [vmem:[%s6 + $0xa8] sm:$0xff]
        %v1287 = vld [vmem:[%s6 + $0xb0] sm:$0xff]
        %v1288 = vld [vmem:[%s6 + $0xb8] sm:$0xff]
        %v1289 = vld [vmem:[%s6 + $0xc0] sm:$0xff]
        %v1290 = vld [vmem:[%s6 + $0xc8] sm:$0xff]
        %v1291 = vld [vmem:[%s6 + $0xd0] sm:$0xff]
        %v1292 = vld [vmem:[%s6 + $0xd8] sm:$0xff]
        %v1293 = vld [vmem:[%s6 + $0xe0] sm:$0xff]
        %v1294 = vld [vmem:[%s6 + $0xe8] sm:$0xff]
        %v1295 = vld [vmem:[%s6 + $0xf0] sm:$0xff]
        %v1296 = vld [vmem:[%s6 + $0xf8] sm:$0xff]
        %1297 = vmatprep.subr.mxu0 0.0
        %1298 = vmatpush1.msra.mxu0 %v1265
        %1299 = vmatprep.subr.mxu0 0.0
        %1300 = vmatpush1.msra.mxu0 %v1266
        %1301 = vmatprep.subr.mxu0 0.0
        %1302 = vmatpush1.msra.mxu0 %v1267
        %1303 = vmatprep.subr.mxu0 0.0
        %1304 = vmatpush1.msra.mxu0 %v1268
        %1305 = vmatprep.subr.mxu0 0.0
        %1306 = vmatpush1.msra.mxu0 %v1269
        %1307 = vmatprep.subr.mxu0 0.0
        %1308 = vmatpush1.msra.mxu0 %v1270
        %1309 = vmatprep.subr.mxu0 0.0
        %1310 = vmatpush1.msra.mxu0 %v1271
        %1311 = vmatprep.subr.mxu0 0.0
        %1312 = vmatpush1.msra.mxu0 %v1272
        %1313 = vmatprep.subr.mxu0 0.0
        %1314 = vmatpush1.msra.mxu0 %v1273
        %1315 = vmatprep.subr.mxu0 0.0
        %1316 = vmatpush1.msra.mxu0 %v1274
        %1317 = vmatprep.subr.mxu0 0.0
        %1318 = vmatpush1.msra.mxu0 %v1275
        %1319 = vmatprep.subr.mxu0 0.0
        %1320 = vmatpush1.msra.mxu0 %v1276
        %1321 = vmatprep.subr.mxu0 0.0
        %1322 = vmatpush1.msra.mxu0 %v1277
        %1323 = vmatprep.subr.mxu0 0.0
        %1324 = vmatpush1.msra.mxu0 %v1278
        %1325 = vmatprep.subr.mxu0 0.0
        %1326 = vmatpush1.msra.mxu0 %v1279
        %1327 = vmatprep.subr.mxu0 0.0
        %1328 = vmatpush1.msra.mxu0 %v1280
        %1329 = vmatprep.subr.mxu0 0.0
        %1330 = vmatpush1.msra.mxu0 %v1281
        %1331 = vmatprep.subr.mxu0 0.0
        %1332 = vmatpush1.msra.mxu0 %v1282
        %1333 = vmatprep.subr.mxu0 0.0
        %1334 = vmatpush1.msra.mxu0 %v1283
        %1335 = vmatprep.subr.mxu0 0.0
        %1336 = vmatpush1.msra.mxu0 %v1284
        %1337 = vmatprep.subr.mxu0 0.0
        %1338 = vmatpush1.msra.mxu0 %v1285
        %1339 = vmatprep.subr.mxu0 0.0
        %1340 = vmatpush1.msra.mxu0 %v1286
        %1341 = vmatprep.subr.mxu0 0.0
        %1342 = vmatpush1.msra.mxu0 %v1287
        %1343 = vmatprep.subr.mxu0 0.0
        %1344 = vmatpush1.msra.mxu0 %v1288
        %1345 = vmatprep.subr.mxu0 0.0
        %1346 = vmatpush1.msra.mxu0 %v1289
        %1347 = vmatprep.subr.mxu0 0.0
        %1348 = vmatpush1.msra.mxu0 %v1290
        %1349 = vmatprep.subr.mxu0 0.0
        %1350 = vmatpush1.msra.mxu0 %v1291
        %1351 = vmatprep.subr.mxu0 0.0
        %1352 = vmatpush1.msra.mxu0 %v1292
        %1353 = vmatprep.subr.mxu0 0.0
        %1354 = vmatpush1.msra.mxu0 %v1293
        %1355 = vmatprep.subr.mxu0 0.0
        %1356 = vmatpush1.msra.mxu0 %v1294
        %1357 = vmatprep.subr.mxu0 0.0
        %1358 = vmatpush1.msra.mxu0 %v1295
        %1359 = vmatprep.subr.mxu0 0.0
        %1360 = vmatpush1.msra.mxu0 %v1296
        %1361 = vmatprep.mubr.f32.mxu0 %v830
        %1362 = vmatmul.mubr.f32.gmra.mrb[0].mxu0 %v828
        %v1363 = vpop.f32.mrb[0].mxu0
        %v1364 = vadd.f32 0.0, %v1363
        %v1365 = vpop.f32.mrb[0].mxu0
        %1366 = vmatprep.mubr.f32.mxu0 %v836
        %1367 = vmatmul.mubr.f32.gmra.mrb[0].mxu0 %v834
        %v1368 = vpop.f32.mrb[0].mxu0
        %v1369 = vadd.f32 0.0, %v1368
        %v1370 = vpop.f32.mrb[0].mxu0
        %1371 = vmatprep.mubr.f32.mxu0 %v842
        %1372 = vmatmul.mubr.f32.gmra.mrb[0].mxu0 %v840
        %v1373 = vpop.f32.mrb[0].mxu0
        %v1374 = vadd.f32 0.0, %v1373
        %v1375 = vpop.f32.mrb[0].mxu0
        %1376 = vmatprep.mubr.f32.mxu0 %v848
        %1377 = vmatmul.mubr.f32.gmra.mrb[0].mxu0 %v846
        %v1378 = vpop.f32.mrb[0].mxu0
        %v1379 = vadd.f32 0.0, %v1378
        %v1380 = vpop.f32.mrb[0].mxu0
        %1381 = vmatprep.mubr.f32.mxu0 %v854
        %1382 = vmatmul.mubr.f32.gmra.mrb[0].mxu0 %v852
        %v1383 = vpop.f32.mrb[0].mxu0
        %v1384 = vadd.f32 0.0, %v1383
        %v1385 = vpop.f32.mrb[0].mxu0
        %1386 = vmatprep.mubr.f32.mxu0 %v860
        %1387 = vmatmul.mubr.f32.gmra.mrb[0].mxu0 %v858
        %v1388 = vpop.f32.mrb[0].mxu0
        %v1389 = vadd.f32 0.0, %v1388
        %v1390 = vpop.f32.mrb[0].mxu0
        %1391 = vmatprep.mubr.f32.mxu0 %v866
        %1392 = vmatmul.mubr.f32.gmra.mrb[0].mxu0 %v864
        %v1393 = vpop.f32.mrb[0].mxu0
        %v1394 = vadd.f32 0.0, %v1393
        %v1395 = vpop.f32.mrb[0].mxu0
        %1396 = vmatprep.mubr.f32.mxu0 %v872
        %1397 = vmatmul.mubr.f32.gmra.mrb[0].mxu0 %v870
        %v1398 = vpop.f32.mrb[0].mxu0
        %v1399 = vadd.f32 0.0, %v1398
        %v1400 = vpop.f32.mrb[0].mxu0
        %1401 = vdwg.mxu0
        %v1402 = vadd.f32 %v1263, %v1364
        %v1403 = vadd.f32 %v1263, %v1369
        %v1404 = vadd.f32 %v1263, %v1374
        %v1405 = vadd.f32 %v1263, %v1379
        %v1406 = vadd.f32 %v1263, %v1384
        %v1407 = vadd.f32 %v1263, %v1389
        %v1408 = vadd.f32 %v1263, %v1394
        %v1409 = vadd.f32 %v1263, %v1399
        %v1410 = vld [vmem:[%s6 + $0x100] sm:$0xff]
        %v1411 = vld [vmem:[%s6 + $0x108] sm:$0xff]
        %v1412 = vld [vmem:[%s6 + $0x110] sm:$0xff]
        %v1413 = vld [vmem:[%s6 + $0x118] sm:$0xff]
        %v1414 = vld [vmem:[%s6 + $0x120] sm:$0xff]
        %v1415 = vld [vmem:[%s6 + $0x128] sm:$0xff]
        %v1416 = vld [vmem:[%s6 + $0x130] sm:$0xff]
        %v1417 = vld [vmem:[%s6 + $0x138] sm:$0xff]
        %v1418 = vld [vmem:[%s6 + $0x140] sm:$0xff]
        %v1419 = vld [vmem:[%s6 + $0x148] sm:$0xff]
        %v1420 = vld [vmem:[%s6 + $0x150] sm:$0xff]
        %v1421 = vld [vmem:[%s6 + $0x158] sm:$0xff]
        %v1422 = vld [vmem:[%s6 + $0x160] sm:$0xff]
        %v1423 = vld [vmem:[%s6 + $0x168] sm:$0xff]
        %v1424 = vld [vmem:[%s6 + $0x170] sm:$0xff]
        %v1425 = vld [vmem:[%s6 + $0x178] sm:$0xff]
        %v1426 = vld [vmem:[%s6 + $0x180] sm:$0xff]
        %v1427 = vld [vmem:[%s6 + $0x188] sm:$0xff]
        %v1428 = vld [vmem:[%s6 + $0x190] sm:$0xff]
        %v1429 = vld [vmem:[%s6 + $0x198] sm:$0xff]
        %v1430 = vld [vmem:[%s6 + $0x1a0] sm:$0xff]
        %v1431 = vld [vmem:[%s6 + $0x1a8] sm:$0xff]
        %v1432 = vld [vmem:[%s6 + $0x1b0] sm:$0xff]
        %v1433 = vld [vmem:[%s6 + $0x1b8] sm:$0xff]
        %v1434 = vld [vmem:[%s6 + $0x1c0] sm:$0xff]
        %v1435 = vld [vmem:[%s6 + $0x1c8] sm:$0xff]
        %v1436 = vld [vmem:[%s6 + $0x1d0] sm:$0xff]
        %v1437 = vld [vmem:[%s6 + $0x1d8] sm:$0xff]
        %v1438 = vld [vmem:[%s6 + $0x1e0] sm:$0xff]
        %v1439 = vld [vmem:[%s6 + $0x1e8] sm:$0xff]
        %v1440 = vld [vmem:[%s6 + $0x1f0] sm:$0xff]
        %v1441 = vld [vmem:[%s6 + $0x1f8] sm:$0xff]
        %1442 = vmatprep.subr.mxu0 0.0
        %1443 = vmatpush1.msra.mxu0 %v1410
        %1444 = vmatprep.subr.mxu0 0.0
        %1445 = vmatpush1.msra.mxu0 %v1411
        %1446 = vmatprep.subr.mxu0 0.0
        %1447 = vmatpush1.msra.mxu0 %v1412
        %1448 = vmatprep.subr.mxu0 0.0
        %1449 = vmatpush1.msra.mxu0 %v1413
        %1450 = vmatprep.subr.mxu0 0.0
        %1451 = vmatpush1.msra.mxu0 %v1414
        %1452 = vmatprep.subr.mxu0 0.0
        %1453 = vmatpush1.msra.mxu0 %v1415
        %1454 = vmatprep.subr.mxu0 0.0
        %1455 = vmatpush1.msra.mxu0 %v1416
        %1456 = vmatprep.subr.mxu0 0.0
        %1457 = vmatpush1.msra.mxu0 %v1417
        %1458 = vmatprep.subr.mxu0 0.0
        %1459 = vmatpush1.msra.mxu0 %v1418
        %1460 = vmatprep.subr.mxu0 0.0
        %1461 = vmatpush1.msra.mxu0 %v1419
        %1462 = vmatprep.subr.mxu0 0.0
        %1463 = vmatpush1.msra.mxu0 %v1420
        %1464 = vmatprep.subr.mxu0 0.0
        %1465 = vmatpush1.msra.mxu0 %v1421
        %1466 = vmatprep.subr.mxu0 0.0
        %1467 = vmatpush1.msra.mxu0 %v1422
        %1468 = vmatprep.subr.mxu0 0.0
        %1469 = vmatpush1.msra.mxu0 %v1423
        %1470 = vmatprep.subr.mxu0 0.0
        %1471 = vmatpush1.msra.mxu0 %v1424
        %1472 = vmatprep.subr.mxu0 0.0
        %1473 = vmatpush1.msra.mxu0 %v1425
        %1474 = vmatprep.subr.mxu0 0.0
        %1475 = vmatpush1.msra.mxu0 %v1426
        %1476 = vmatprep.subr.mxu0 0.0
        %1477 = vmatpush1.msra.mxu0 %v1427
        %1478 = vmatprep.subr.mxu0 0.0
        %1479 = vmatpush1.msra.mxu0 %v1428
        %1480 = vmatprep.subr.mxu0 0.0
        %1481 = vmatpush1.msra.mxu0 %v1429
        %1482 = vmatprep.subr.mxu0 0.0
        %1483 = vmatpush1.msra.mxu0 %v1430
        %1484 = vmatprep.subr.mxu0 0.0
        %1485 = vmatpush1.msra.mxu0 %v1431
        %1486 = vmatprep.subr.mxu0 0.0
        %1487 = vmatpush1.msra.mxu0 %v1432
        %1488 = vmatprep.subr.mxu0 0.0
        %1489 = vmatpush1.msra.mxu0 %v1433
        %1490 = vmatprep.subr.mxu0 0.0
        %1491 = vmatpush1.msra.mxu0 %v1434
        %1492 = vmatprep.subr.mxu0 0.0
        %1493 = vmatpush1.msra.mxu0 %v1435
        %1494 = vmatprep.subr.mxu0 0.0
        %1495 = vmatpush1.msra.mxu0 %v1436
        %1496 = vmatprep.subr.mxu0 0.0
        %1497 = vmatpush1.msra.mxu0 %v1437
        %1498 = vmatprep.subr.mxu0 0.0
        %1499 = vmatpush1.msra.mxu0 %v1438
        %1500 = vmatprep.subr.mxu0 0.0
        %1501 = vmatpush1.msra.mxu0 %v1439
        %1502 = vmatprep.subr.mxu0 0.0
        %1503 = vmatpush1.msra.mxu0 %v1440
        %1504 = vmatprep.subr.mxu0 0.0
        %1505 = vmatpush1.msra.mxu0 %v1441
        %1506 = vmatprep.mubr.f32.mxu0 %v878
        %1507 = vmatmul.mubr.f32.gmra.mrb[0].mxu0 %v876
        %v1508 = vpop.f32.mrb[0].mxu0
        %v1509 = vadd.f32 0.0, %v1508
        %v1510 = vpop.f32.mrb[0].mxu0
        %1511 = vmatprep.mubr.f32.mxu0 %v884
        %1512 = vmatmul.mubr.f32.gmra.mrb[0].mxu0 %v882
        %v1513 = vpop.f32.mrb[0].mxu0
        %v1514 = vadd.f32 0.0, %v1513
        %v1515 = vpop.f32.mrb[0].mxu0
        %1516 = vmatprep.mubr.f32.mxu0 %v890
        %1517 = vmatmul.mubr.f32.gmra.mrb[0].mxu0 %v888
        %v1518 = vpop.f32.mrb[0].mxu0
        %v1519 = vadd.f32 0.0, %v1518
        %v1520 = vpop.f32.mrb[0].mxu0
        %1521 = vmatprep.mubr.f32.mxu0 %v896
        %1522 = vmatmul.mubr.f32.gmra.mrb[0].mxu0 %v894
        %v1523 = vpop.f32.mrb[0].mxu0
        %v1524 = vadd.f32 0.0, %v1523
        %v1525 = vpop.f32.mrb[0].mxu0
        %1526 = vmatprep.mubr.f32.mxu0 %v902
        %1527 = vmatmul.mubr.f32.gmra.mrb[0].mxu0 %v900
        %v1528 = vpop.f32.mrb[0].mxu0
        %v1529 = vadd.f32 0.0, %v1528
        %v1530 = vpop.f32.mrb[0].mxu0
        %1531 = vmatprep.mubr.f32.mxu0 %v908
        %1532 = vmatmul.mubr.f32.gmra.mrb[0].mxu0 %v906
        %v1533 = vpop.f32.mrb[0].mxu0
        %v1534 = vadd.f32 0.0, %v1533
        %v1535 = vpop.f32.mrb[0].mxu0
        %1536 = vmatprep.mubr.f32.mxu0 %v914
        %1537 = vmatmul.mubr.f32.gmra.mrb[0].mxu0 %v912
        %v1538 = vpop.f32.mrb[0].mxu0
        %v1539 = vadd.f32 0.0, %v1538
        %v1540 = vpop.f32.mrb[0].mxu0
        %1541 = vmatprep.mubr.f32.mxu0 %v920
        %1542 = vmatmul.mubr.f32.gmra.mrb[0].mxu0 %v918
        %v1543 = vpop.f32.mrb[0].mxu0
        %v1544 = vadd.f32 0.0, %v1543
        %v1545 = vpop.f32.mrb[0].mxu0
        %1546 = vdwg.mxu0
        %v1547 = vadd.f32 %v1402, %v1509
        %v1548 = vadd.f32 %v1403, %v1514
        %v1549 = vadd.f32 %v1404, %v1519
        %v1550 = vadd.f32 %v1405, %v1524
        %v1551 = vadd.f32 %v1406, %v1529
        %v1552 = vadd.f32 %v1407, %v1534
        %v1553 = vadd.f32 %v1408, %v1539
        %v1554 = vadd.f32 %v1409, %v1544
        %v1555 = vld [vmem:[%s6 + $0x200] sm:$0xff]
        %v1556 = vld [vmem:[%s6 + $0x208] sm:$0xff]
        %v1557 = vld [vmem:[%s6 + $0x210] sm:$0xff]
        %v1558 = vld [vmem:[%s6 + $0x218] sm:$0xff]
        %v1559 = vld [vmem:[%s6 + $0x220] sm:$0xff]
        %v1560 = vld [vmem:[%s6 + $0x228] sm:$0xff]
        %v1561 = vld [vmem:[%s6 + $0x230] sm:$0xff]
        %v1562 = vld [vmem:[%s6 + $0x238] sm:$0xff]
        %v1563 = vld [vmem:[%s6 + $0x240] sm:$0xff]
        %v1564 = vld [vmem:[%s6 + $0x248] sm:$0xff]
        %v1565 = vld [vmem:[%s6 + $0x250] sm:$0xff]
        %v1566 = vld [vmem:[%s6 + $0x258] sm:$0xff]
        %v1567 = vld [vmem:[%s6 + $0x260] sm:$0xff]
        %v1568 = vld [vmem:[%s6 + $0x268] sm:$0xff]
        %v1569 = vld [vmem:[%s6 + $0x270] sm:$0xff]
        %v1570 = vld [vmem:[%s6 + $0x278] sm:$0xff]
        %v1571 = vld [vmem:[%s6 + $0x280] sm:$0xff]
        %v1572 = vld [vmem:[%s6 + $0x288] sm:$0xff]
        %v1573 = vld [vmem:[%s6 + $0x290] sm:$0xff]
        %v1574 = vld [vmem:[%s6 + $0x298] sm:$0xff]
        %v1575 = vld [vmem:[%s6 + $0x2a0] sm:$0xff]
        %v1576 = vld [vmem:[%s6 + $0x2a8] sm:$0xff]
        %v1577 = vld [vmem:[%s6 + $0x2b0] sm:$0xff]
        %v1578 = vld [vmem:[%s6 + $0x2b8] sm:$0xff]
        %v1579 = vld [vmem:[%s6 + $0x2c0] sm:$0xff]
        %v1580 = vld [vmem:[%s6 + $0x2c8] sm:$0xff]
        %v1581 = vld [vmem:[%s6 + $0x2d0] sm:$0xff]
        %v1582 = vld [vmem:[%s6 + $0x2d8] sm:$0xff]
        %v1583 = vld [vmem:[%s6 + $0x2e0] sm:$0xff]
        %v1584 = vld [vmem:[%s6 + $0x2e8] sm:$0xff]
        %v1585 = vld [vmem:[%s6 + $0x2f0] sm:$0xff]
        %v1586 = vld [vmem:[%s6 + $0x2f8] sm:$0xff]
        %1587 = vmatprep.subr.mxu0 0.0
        %1588 = vmatpush1.msra.mxu0 %v1555
        %1589 = vmatprep.subr.mxu0 0.0
        %1590 = vmatpush1.msra.mxu0 %v1556
        %1591 = vmatprep.subr.mxu0 0.0
        %1592 = vmatpush1.msra.mxu0 %v1557
        %1593 = vmatprep.subr.mxu0 0.0
        %1594 = vmatpush1.msra.mxu0 %v1558
        %1595 = vmatprep.subr.mxu0 0.0
        %1596 = vmatpush1.msra.mxu0 %v1559
        %1597 = vmatprep.subr.mxu0 0.0
        %1598 = vmatpush1.msra.mxu0 %v1560
        %1599 = vmatprep.subr.mxu0 0.0
        %1600 = vmatpush1.msra.mxu0 %v1561
        %1601 = vmatprep.subr.mxu0 0.0
        %1602 = vmatpush1.msra.mxu0 %v1562
        %1603 = vmatprep.subr.mxu0 0.0
        %1604 = vmatpush1.msra.mxu0 %v1563
        %1605 = vmatprep.subr.mxu0 0.0
        %1606 = vmatpush1.msra.mxu0 %v1564
        %1607 = vmatprep.subr.mxu0 0.0
        %1608 = vmatpush1.msra.mxu0 %v1565
        %1609 = vmatprep.subr.mxu0 0.0
        %1610 = vmatpush1.msra.mxu0 %v1566
        %1611 = vmatprep.subr.mxu0 0.0
        %1612 = vmatpush1.msra.mxu0 %v1567
        %1613 = vmatprep.subr.mxu0 0.0
        %1614 = vmatpush1.msra.mxu0 %v1568
        %1615 = vmatprep.subr.mxu0 0.0
        %1616 = vmatpush1.msra.mxu0 %v1569
        %1617 = vmatprep.subr.mxu0 0.0
        %1618 = vmatpush1.msra.mxu0 %v1570
        %1619 = vmatprep.subr.mxu0 0.0
        %1620 = vmatpush1.msra.mxu0 %v1571
        %1621 = vmatprep.subr.mxu0 0.0
        %1622 = vmatpush1.msra.mxu0 %v1572
        %1623 = vmatprep.subr.mxu0 0.0
        %1624 = vmatpush1.msra.mxu0 %v1573
        %1625 = vmatprep.subr.mxu0 0.0
        %1626 = vmatpush1.msra.mxu0 %v1574
        %1627 = vmatprep.subr.mxu0 0.0
        %1628 = vmatpush1.msra.mxu0 %v1575
        %1629 = vmatprep.subr.mxu0 0.0
        %1630 = vmatpush1.msra.mxu0 %v1576
        %1631 = vmatprep.subr.mxu0 0.0
        %1632 = vmatpush1.msra.mxu0 %v1577
        %1633 = vmatprep.subr.mxu0 0.0
        %1634 = vmatpush1.msra.mxu0 %v1578
        %1635 = vmatprep.subr.mxu0 0.0
        %1636 = vmatpush1.msra.mxu0 %v1579
        %1637 = vmatprep.subr.mxu0 0.0
        %1638 = vmatpush1.msra.mxu0 %v1580
        %1639 = vmatprep.subr.mxu0 0.0
        %1640 = vmatpush1.msra.mxu0 %v1581
        %1641 = vmatprep.subr.mxu0 0.0
        %1642 = vmatpush1.msra.mxu0 %v1582
        %1643 = vmatprep.subr.mxu0 0.0
        %1644 = vmatpush1.msra.mxu0 %v1583
        %1645 = vmatprep.subr.mxu0 0.0
        %1646 = vmatpush1.msra.mxu0 %v1584
        %1647 = vmatprep.subr.mxu0 0.0
        %1648 = vmatpush1.msra.mxu0 %v1585
        %1649 = vmatprep.subr.mxu0 0.0
        %1650 = vmatpush1.msra.mxu0 %v1586
        %1651 = vmatprep.mubr.f32.mxu0 %v926
        %1652 = vmatmul.mubr.f32.gmra.mrb[0].mxu0 %v924
        %v1653 = vpop.f32.mrb[0].mxu0
        %v1654 = vadd.f32 0.0, %v1653
        %v1655 = vpop.f32.mrb[0].mxu0
        %1656 = vmatprep.mubr.f32.mxu0 %v932
        %1657 = vmatmul.mubr.f32.gmra.mrb[0].mxu0 %v930
        %v1658 = vpop.f32.mrb[0].mxu0
        %v1659 = vadd.f32 0.0, %v1658
        %v1660 = vpop.f32.mrb[0].mxu0
        %1661 = vmatprep.mubr.f32.mxu0 %v938
        %1662 = vmatmul.mubr.f32.gmra.mrb[0].mxu0 %v936
        %v1663 = vpop.f32.mrb[0].mxu0
        %v1664 = vadd.f32 0.0, %v1663
        %v1665 = vpop.f32.mrb[0].mxu0
        %1666 = vmatprep.mubr.f32.mxu0 %v944
        %1667 = vmatmul.mubr.f32.gmra.mrb[0].mxu0 %v942
        %v1668 = vpop.f32.mrb[0].mxu0
        %v1669 = vadd.f32 0.0, %v1668
        %v1670 = vpop.f32.mrb[0].mxu0
        %1671 = vmatprep.mubr.f32.mxu0 %v950
        %1672 = vmatmul.mubr.f32.gmra.mrb[0].mxu0 %v948
        %v1673 = vpop.f32.mrb[0].mxu0
        %v1674 = vadd.f32 0.0, %v1673
        %v1675 = vpop.f32.mrb[0].mxu0
        %1676 = vmatprep.mubr.f32.mxu0 %v956
        %1677 = vmatmul.mubr.f32.gmra.mrb[0].mxu0 %v954
        %v1678 = vpop.f32.mrb[0].mxu0
        %v1679 = vadd.f32 0.0, %v1678
        %v1680 = vpop.f32.mrb[0].mxu0
        %1681 = vmatprep.mubr.f32.mxu0 %v962
        %1682 = vmatmul.mubr.f32.gmra.mrb[0].mxu0 %v960
        %v1683 = vpop.f32.mrb[0].mxu0
        %v1684 = vadd.f32 0.0, %v1683
        %v1685 = vpop.f32.mrb[0].mxu0
        %1686 = vmatprep.mubr.f32.mxu0 %v968
        %1687 = vmatmul.mubr.f32.gmra.mrb[0].mxu0 %v966
        %v1688 = vpop.f32.mrb[0].mxu0
        %v1689 = vadd.f32 0.0, %v1688
        %v1690 = vpop.f32.mrb[0].mxu0
        %1691 = vdwg.mxu0
        %v1692 = vadd.f32 %v1547, %v1654
        %v1693 = vadd.f32 %v1548, %v1659
        %v1694 = vadd.f32 %v1549, %v1664
        %v1695 = vadd.f32 %v1550, %v1669
        %v1696 = vadd.f32 %v1551, %v1674
        %v1697 = vadd.f32 %v1552, %v1679
        %v1698 = vadd.f32 %v1553, %v1684
        %v1699 = vadd.f32 %v1554, %v1689
        %v1700 = vld [vmem:[%s6 + $0x300] sm:$0xff]
        %v1701 = vld [vmem:[%s6 + $0x308] sm:$0xff]
        %v1702 = vld [vmem:[%s6 + $0x310] sm:$0xff]
        %v1703 = vld [vmem:[%s6 + $0x318] sm:$0xff]
        %v1704 = vld [vmem:[%s6 + $0x320] sm:$0xff]
        %v1705 = vld [vmem:[%s6 + $0x328] sm:$0xff]
        %v1706 = vld [vmem:[%s6 + $0x330] sm:$0xff]
        %v1707 = vld [vmem:[%s6 + $0x338] sm:$0xff]
        %v1708 = vld [vmem:[%s6 + $0x340] sm:$0xff]
        %v1709 = vld [vmem:[%s6 + $0x348] sm:$0xff]
        %v1710 = vld [vmem:[%s6 + $0x350] sm:$0xff]
        %v1711 = vld [vmem:[%s6 + $0x358] sm:$0xff]
        %v1712 = vld [vmem:[%s6 + $0x360] sm:$0xff]
        %v1713 = vld [vmem:[%s6 + $0x368] sm:$0xff]
        %v1714 = vld [vmem:[%s6 + $0x370] sm:$0xff]
        %v1715 = vld [vmem:[%s6 + $0x378] sm:$0xff]
        %v1716 = vld [vmem:[%s6 + $0x380] sm:$0xff]
        %v1717 = vld [vmem:[%s6 + $0x388] sm:$0xff]
        %v1718 = vld [vmem:[%s6 + $0x390] sm:$0xff]
        %v1719 = vld [vmem:[%s6 + $0x398] sm:$0xff]
        %v1720 = vld [vmem:[%s6 + $0x3a0] sm:$0xff]
        %v1721 = vld [vmem:[%s6 + $0x3a8] sm:$0xff]
        %v1722 = vld [vmem:[%s6 + $0x3b0] sm:$0xff]
        %v1723 = vld [vmem:[%s6 + $0x3b8] sm:$0xff]
        %v1724 = vld [vmem:[%s6 + $0x3c0] sm:$0xff]
        %v1725 = vld [vmem:[%s6 + $0x3c8] sm:$0xff]
        %v1726 = vld [vmem:[%s6 + $0x3d0] sm:$0xff]
        %v1727 = vld [vmem:[%s6 + $0x3d8] sm:$0xff]
        %v1728 = vld [vmem:[%s6 + $0x3e0] sm:$0xff]
        %v1729 = vld [vmem:[%s6 + $0x3e8] sm:$0xff]
        %v1730 = vld [vmem:[%s6 + $0x3f0] sm:$0xff]
        %v1731 = vld [vmem:[%s6 + $0x3f8] sm:$0xff]
        %1732 = vmatprep.subr.mxu0 0.0
        %1733 = vmatpush1.msra.mxu0 %v1700
        %1734 = vmatprep.subr.mxu0 0.0
        %1735 = vmatpush1.msra.mxu0 %v1701
        %1736 = vmatprep.subr.mxu0 0.0
        %1737 = vmatpush1.msra.mxu0 %v1702
        %1738 = vmatprep.subr.mxu0 0.0
        %1739 = vmatpush1.msra.mxu0 %v1703
        %1740 = vmatprep.subr.mxu0 0.0
        %1741 = vmatpush1.msra.mxu0 %v1704
        %1742 = vmatprep.subr.mxu0 0.0
        %1743 = vmatpush1.msra.mxu0 %v1705
        %1744 = vmatprep.subr.mxu0 0.0
        %1745 = vmatpush1.msra.mxu0 %v1706
        %1746 = vmatprep.subr.mxu0 0.0
        %1747 = vmatpush1.msra.mxu0 %v1707
        %1748 = vmatprep.subr.mxu0 0.0
        %1749 = vmatpush1.msra.mxu0 %v1708
        %1750 = vmatprep.subr.mxu0 0.0
        %1751 = vmatpush1.msra.mxu0 %v1709
        %1752 = vmatprep.subr.mxu0 0.0
        %1753 = vmatpush1.msra.mxu0 %v1710
        %1754 = vmatprep.subr.mxu0 0.0
        %1755 = vmatpush1.msra.mxu0 %v1711
        %1756 = vmatprep.subr.mxu0 0.0
        %1757 = vmatpush1.msra.mxu0 %v1712
        %1758 = vmatprep.subr.mxu0 0.0
        %1759 = vmatpush1.msra.mxu0 %v1713
        %1760 = vmatprep.subr.mxu0 0.0
        %1761 = vmatpush1.msra.mxu0 %v1714
        %1762 = vmatprep.subr.mxu0 0.0
        %1763 = vmatpush1.msra.mxu0 %v1715
        %1764 = vmatprep.subr.mxu0 0.0
        %1765 = vmatpush1.msra.mxu0 %v1716
        %1766 = vmatprep.subr.mxu0 0.0
        %1767 = vmatpush1.msra.mxu0 %v1717
        %1768 = vmatprep.subr.mxu0 0.0
        %1769 = vmatpush1.msra.mxu0 %v1718
        %1770 = vmatprep.subr.mxu0 0.0
        %1771 = vmatpush1.msra.mxu0 %v1719
        %1772 = vmatprep.subr.mxu0 0.0
        %1773 = vmatpush1.msra.mxu0 %v1720
        %1774 = vmatprep.subr.mxu0 0.0
        %1775 = vmatpush1.msra.mxu0 %v1721
        %1776 = vmatprep.subr.mxu0 0.0
        %1777 = vmatpush1.msra.mxu0 %v1722
        %1778 = vmatprep.subr.mxu0 0.0
        %1779 = vmatpush1.msra.mxu0 %v1723
        %1780 = vmatprep.subr.mxu0 0.0
        %1781 = vmatpush1.msra.mxu0 %v1724
        %1782 = vmatprep.subr.mxu0 0.0
        %1783 = vmatpush1.msra.mxu0 %v1725
        %1784 = vmatprep.subr.mxu0 0.0
        %1785 = vmatpush1.msra.mxu0 %v1726
        %1786 = vmatprep.subr.mxu0 0.0
        %1787 = vmatpush1.msra.mxu0 %v1727
        %1788 = vmatprep.subr.mxu0 0.0
        %1789 = vmatpush1.msra.mxu0 %v1728
        %1790 = vmatprep.subr.mxu0 0.0
        %1791 = vmatpush1.msra.mxu0 %v1729
        %1792 = vmatprep.subr.mxu0 0.0
        %1793 = vmatpush1.msra.mxu0 %v1730
        %1794 = vmatprep.subr.mxu0 0.0
        %1795 = vmatpush1.msra.mxu0 %v1731
        %1796 = vmatprep.mubr.f32.mxu0 %v974
        %1797 = vmatmul.mubr.f32.gmra.mrb[0].mxu0 %v972
        %v1798 = vpop.f32.mrb[0].mxu0
        %v1799 = vadd.f32 0.0, %v1798
        %v1800 = vpop.f32.mrb[0].mxu0
        %1801 = vmatprep.mubr.f32.mxu0 %v980
        %1802 = vmatmul.mubr.f32.gmra.mrb[0].mxu0 %v978
        %v1803 = vpop.f32.mrb[0].mxu0
        %v1804 = vadd.f32 0.0, %v1803
        %v1805 = vpop.f32.mrb[0].mxu0
        %1806 = vmatprep.mubr.f32.mxu0 %v986
        %1807 = vmatmul.mubr.f32.gmra.mrb[0].mxu0 %v984
        %v1808 = vpop.f32.mrb[0].mxu0
        %v1809 = vadd.f32 0.0, %v1808
        %v1810 = vpop.f32.mrb[0].mxu0
        %1811 = vmatprep.mubr.f32.mxu0 %v992
        %1812 = vmatmul.mubr.f32.gmra.mrb[0].mxu0 %v990
        %v1813 = vpop.f32.mrb[0].mxu0
        %v1814 = vadd.f32 0.0, %v1813
        %v1815 = vpop.f32.mrb[0].mxu0
        %1816 = vmatprep.mubr.f32.mxu0 %v998
        %1817 = vmatmul.mubr.f32.gmra.mrb[0].mxu0 %v996
        %v1818 = vpop.f32.mrb[0].mxu0
        %v1819 = vadd.f32 0.0, %v1818
        %v1820 = vpop.f32.mrb[0].mxu0
        %1821 = vmatprep.mubr.f32.mxu0 %v1004
        %1822 = vmatmul.mubr.f32.gmra.mrb[0].mxu0 %v1002
        %v1823 = vpop.f32.mrb[0].mxu0
        %v1824 = vadd.f32 0.0, %v1823
        %v1825 = vpop.f32.mrb[0].mxu0
        %1826 = vmatprep.mubr.f32.mxu0 %v1010
        %1827 = vmatmul.mubr.f32.gmra.mrb[0].mxu0 %v1008
        %v1828 = vpop.f32.mrb[0].mxu0
        %v1829 = vadd.f32 0.0, %v1828
        %v1830 = vpop.f32.mrb[0].mxu0
        %1831 = vmatprep.mubr.f32.mxu0 %v1016
        %1832 = vmatmul.mubr.f32.gmra.mrb[0].mxu0 %v1014
        %v1833 = vpop.f32.mrb[0].mxu0
        %v1834 = vadd.f32 0.0, %v1833
        %v1835 = vpop.f32.mrb[0].mxu0
        %1836 = vdwg.mxu0
        %v1837 = vadd.f32 %v1692, %v1799
        %v1838 = vadd.f32 %v1693, %v1804
        %v1839 = vadd.f32 %v1694, %v1809
        %v1840 = vadd.f32 %v1695, %v1814
        %v1841 = vadd.f32 %v1696, %v1819
        %v1842 = vadd.f32 %v1697, %v1824
        %v1843 = vadd.f32 %v1698, %v1829
        %v1844 = vadd.f32 %v1699, %v1834
        %v1845 = vld [vmem:[%s6 + $0x400] sm:$0xff]
        %v1846 = vld [vmem:[%s6 + $0x408] sm:$0xff]
        %v1847 = vld [vmem:[%s6 + $0x410] sm:$0xff]
        %v1848 = vld [vmem:[%s6 + $0x418] sm:$0xff]
        %v1849 = vld [vmem:[%s6 + $0x420] sm:$0xff]
        %v1850 = vld [vmem:[%s6 + $0x428] sm:$0xff]
        %v1851 = vld [vmem:[%s6 + $0x430] sm:$0xff]
        %v1852 = vld [vmem:[%s6 + $0x438] sm:$0xff]
        %v1853 = vld [vmem:[%s6 + $0x440] sm:$0xff]
        %v1854 = vld [vmem:[%s6 + $0x448] sm:$0xff]
        %v1855 = vld [vmem:[%s6 + $0x450] sm:$0xff]
        %v1856 = vld [vmem:[%s6 + $0x458] sm:$0xff]
        %v1857 = vld [vmem:[%s6 + $0x460] sm:$0xff]
        %v1858 = vld [vmem:[%s6 + $0x468] sm:$0xff]
        %v1859 = vld [vmem:[%s6 + $0x470] sm:$0xff]
        %v1860 = vld [vmem:[%s6 + $0x478] sm:$0xff]
        %v1861 = vld [vmem:[%s6 + $0x480] sm:$0xff]
        %v1862 = vld [vmem:[%s6 + $0x488] sm:$0xff]
        %v1863 = vld [vmem:[%s6 + $0x490] sm:$0xff]
        %v1864 = vld [vmem:[%s6 + $0x498] sm:$0xff]
        %v1865 = vld [vmem:[%s6 + $0x4a0] sm:$0xff]
        %v1866 = vld [vmem:[%s6 + $0x4a8] sm:$0xff]
        %v1867 = vld [vmem:[%s6 + $0x4b0] sm:$0xff]
        %v1868 = vld [vmem:[%s6 + $0x4b8] sm:$0xff]
        %v1869 = vld [vmem:[%s6 + $0x4c0] sm:$0xff]
        %v1870 = vld [vmem:[%s6 + $0x4c8] sm:$0xff]
        %v1871 = vld [vmem:[%s6 + $0x4d0] sm:$0xff]
        %v1872 = vld [vmem:[%s6 + $0x4d8] sm:$0xff]
        %v1873 = vld [vmem:[%s6 + $0x4e0] sm:$0xff]
        %v1874 = vld [vmem:[%s6 + $0x4e8] sm:$0xff]
        %v1875 = vld [vmem:[%s6 + $0x4f0] sm:$0xff]
        %v1876 = vld [vmem:[%s6 + $0x4f8] sm:$0xff]
        %1877 = vmatprep.subr.mxu0 0.0
        %1878 = vmatpush1.msra.mxu0 %v1845
        %1879 = vmatprep.subr.mxu0 0.0
        %1880 = vmatpush1.msra.mxu0 %v1846
        %1881 = vmatprep.subr.mxu0 0.0
        %1882 = vmatpush1.msra.mxu0 %v1847
        %1883 = vmatprep.subr.mxu0 0.0
        %1884 = vmatpush1.msra.mxu0 %v1848
        %1885 = vmatprep.subr.mxu0 0.0
        %1886 = vmatpush1.msra.mxu0 %v1849
        %1887 = vmatprep.subr.mxu0 0.0
        %1888 = vmatpush1.msra.mxu0 %v1850
        %1889 = vmatprep.subr.mxu0 0.0
        %1890 = vmatpush1.msra.mxu0 %v1851
        %1891 = vmatprep.subr.mxu0 0.0
        %1892 = vmatpush1.msra.mxu0 %v1852
        %1893 = vmatprep.subr.mxu0 0.0
        %1894 = vmatpush1.msra.mxu0 %v1853
        %1895 = vmatprep.subr.mxu0 0.0
        %1896 = vmatpush1.msra.mxu0 %v1854
        %1897 = vmatprep.subr.mxu0 0.0
        %1898 = vmatpush1.msra.mxu0 %v1855
        %1899 = vmatprep.subr.mxu0 0.0
        %1900 = vmatpush1.msra.mxu0 %v1856
        %1901 = vmatprep.subr.mxu0 0.0
        %1902 = vmatpush1.msra.mxu0 %v1857
        %1903 = vmatprep.subr.mxu0 0.0
        %1904 = vmatpush1.msra.mxu0 %v1858
        %1905 = vmatprep.subr.mxu0 0.0
        %1906 = vmatpush1.msra.mxu0 %v1859
        %1907 = vmatprep.subr.mxu0 0.0
        %1908 = vmatpush1.msra.mxu0 %v1860
        %1909 = vmatprep.subr.mxu0 0.0
        %1910 = vmatpush1.msra.mxu0 %v1861
        %1911 = vmatprep.subr.mxu0 0.0
        %1912 = vmatpush1.msra.mxu0 %v1862
        %1913 = vmatprep.subr.mxu0 0.0
        %1914 = vmatpush1.msra.mxu0 %v1863
        %1915 = vmatprep.subr.mxu0 0.0
        %1916 = vmatpush1.msra.mxu0 %v1864
        %1917 = vmatprep.subr.mxu0 0.0
        %1918 = vmatpush1.msra.mxu0 %v1865
        %1919 = vmatprep.subr.mxu0 0.0
        %1920 = vmatpush1.msra.mxu0 %v1866
        %1921 = vmatprep.subr.mxu0 0.0
        %1922 = vmatpush1.msra.mxu0 %v1867
        %1923 = vmatprep.subr.mxu0 0.0
        %1924 = vmatpush1.msra.mxu0 %v1868
        %1925 = vmatprep.subr.mxu0 0.0
        %1926 = vmatpush1.msra.mxu0 %v1869
        %1927 = vmatprep.subr.mxu0 0.0
        %1928 = vmatpush1.msra.mxu0 %v1870
        %1929 = vmatprep.subr.mxu0 0.0
        %1930 = vmatpush1.msra.mxu0 %v1871
        %1931 = vmatprep.subr.mxu0 0.0
        %1932 = vmatpush1.msra.mxu0 %v1872
        %1933 = vmatprep.subr.mxu0 0.0
        %1934 = vmatpush1.msra.mxu0 %v1873
        %1935 = vmatprep.subr.mxu0 0.0
        %1936 = vmatpush1.msra.mxu0 %v1874
        %1937 = vmatprep.subr.mxu0 0.0
        %1938 = vmatpush1.msra.mxu0 %v1875
        %1939 = vmatprep.subr.mxu0 0.0
        %1940 = vmatpush1.msra.mxu0 %v1876
        %1941 = vmatprep.mubr.f32.mxu0 %v1022
        %1942 = vmatmul.mubr.f32.gmra.mrb[0].mxu0 %v1020
        %v1943 = vpop.f32.mrb[0].mxu0
        %v1944 = vadd.f32 0.0, %v1943
        %v1945 = vpop.f32.mrb[0].mxu0
        %1946 = vmatprep.mubr.f32.mxu0 %v1028
        %1947 = vmatmul.mubr.f32.gmra.mrb[0].mxu0 %v1026
        %v1948 = vpop.f32.mrb[0].mxu0
        %v1949 = vadd.f32 0.0, %v1948
        %v1950 = vpop.f32.mrb[0].mxu0
        %1951 = vmatprep.mubr.f32.mxu0 %v1034
        %1952 = vmatmul.mubr.f32.gmra.mrb[0].mxu0 %v1032
        %v1953 = vpop.f32.mrb[0].mxu0
        %v1954 = vadd.f32 0.0, %v1953
        %v1955 = vpop.f32.mrb[0].mxu0
        %1956 = vmatprep.mubr.f32.mxu0 %v1040
        %1957 = vmatmul.mubr.f32.gmra.mrb[0].mxu0 %v1038
        %v1958 = vpop.f32.mrb[0].mxu0
        %v1959 = vadd.f32 0.0, %v1958
        %v1960 = vpop.f32.mrb[0].mxu0
        %1961 = vmatprep.mubr.f32.mxu0 %v1046
        %1962 = vmatmul.mubr.f32.gmra.mrb[0].mxu0 %v1044
        %v1963 = vpop.f32.mrb[0].mxu0
        %v1964 = vadd.f32 0.0, %v1963
        %v1965 = vpop.f32.mrb[0].mxu0
        %1966 = vmatprep.mubr.f32.mxu0 %v1052
        %1967 = vmatmul.mubr.f32.gmra.mrb[0].mxu0 %v1050
        %v1968 = vpop.f32.mrb[0].mxu0
        %v1969 = vadd.f32 0.0, %v1968
        %v1970 = vpop.f32.mrb[0].mxu0
        %1971 = vmatprep.mubr.f32.mxu0 %v1058
        %1972 = vmatmul.mubr.f32.gmra.mrb[0].mxu0 %v1056
        %v1973 = vpop.f32.mrb[0].mxu0
        %v1974 = vadd.f32 0.0, %v1973
        %v1975 = vpop.f32.mrb[0].mxu0
        %1976 = vmatprep.mubr.f32.mxu0 %v1064
        %1977 = vmatmul.mubr.f32.gmra.mrb[0].mxu0 %v1062
        %v1978 = vpop.f32.mrb[0].mxu0
        %v1979 = vadd.f32 0.0, %v1978
        %v1980 = vpop.f32.mrb[0].mxu0
        %1981 = vdwg.mxu0
        %v1982 = vadd.f32 %v1837, %v1944
        %v1983 = vadd.f32 %v1838, %v1949
        %v1984 = vadd.f32 %v1839, %v1954
        %v1985 = vadd.f32 %v1840, %v1959
        %v1986 = vadd.f32 %v1841, %v1964
        %v1987 = vadd.f32 %v1842, %v1969
        %v1988 = vadd.f32 %v1843, %v1974
        %v1989 = vadd.f32 %v1844, %v1979
        %v1990 = vld [vmem:[%s6 + $0x500] sm:$0xff]
        %v1991 = vld [vmem:[%s6 + $0x508] sm:$0xff]
        %v1992 = vld [vmem:[%s6 + $0x510] sm:$0xff]
        %v1993 = vld [vmem:[%s6 + $0x518] sm:$0xff]
        %v1994 = vld [vmem:[%s6 + $0x520] sm:$0xff]
        %v1995 = vld [vmem:[%s6 + $0x528] sm:$0xff]
        %v1996 = vld [vmem:[%s6 + $0x530] sm:$0xff]
        %v1997 = vld [vmem:[%s6 + $0x538] sm:$0xff]
        %v1998 = vld [vmem:[%s6 + $0x540] sm:$0xff]
        %v1999 = vld [vmem:[%s6 + $0x548] sm:$0xff]
        %v2000 = vld [vmem:[%s6 + $0x550] sm:$0xff]
        %v2001 = vld [vmem:[%s6 + $0x558] sm:$0xff]
        %v2002 = vld [vmem:[%s6 + $0x560] sm:$0xff]
        %v2003 = vld [vmem:[%s6 + $0x568] sm:$0xff]
        %v2004 = vld [vmem:[%s6 + $0x570] sm:$0xff]
        %v2005 = vld [vmem:[%s6 + $0x578] sm:$0xff]
        %v2006 = vld [vmem:[%s6 + $0x580] sm:$0xff]
        %v2007 = vld [vmem:[%s6 + $0x588] sm:$0xff]
        %v2008 = vld [vmem:[%s6 + $0x590] sm:$0xff]
        %v2009 = vld [vmem:[%s6 + $0x598] sm:$0xff]
        %v2010 = vld [vmem:[%s6 + $0x5a0] sm:$0xff]
        %v2011 = vld [vmem:[%s6 + $0x5a8] sm:$0xff]
        %v2012 = vld [vmem:[%s6 + $0x5b0] sm:$0xff]
        %v2013 = vld [vmem:[%s6 + $0x5b8] sm:$0xff]
        %v2014 = vld [vmem:[%s6 + $0x5c0] sm:$0xff]
        %v2015 = vld [vmem:[%s6 + $0x5c8] sm:$0xff]
        %v2016 = vld [vmem:[%s6 + $0x5d0] sm:$0xff]
        %v2017 = vld [vmem:[%s6 + $0x5d8] sm:$0xff]
        %v2018 = vld [vmem:[%s6 + $0x5e0] sm:$0xff]
        %v2019 = vld [vmem:[%s6 + $0x5e8] sm:$0xff]
        %v2020 = vld [vmem:[%s6 + $0x5f0] sm:$0xff]
        %v2021 = vld [vmem:[%s6 + $0x5f8] sm:$0xff]
        %2022 = vmatprep.subr.mxu0 0.0
        %2023 = vmatpush1.msra.mxu0 %v1990
        %2024 = vmatprep.subr.mxu0 0.0
        %2025 = vmatpush1.msra.mxu0 %v1991
        %2026 = vmatprep.subr.mxu0 0.0
        %2027 = vmatpush1.msra.mxu0 %v1992
        %2028 = vmatprep.subr.mxu0 0.0
        %2029 = vmatpush1.msra.mxu0 %v1993
        %2030 = vmatprep.subr.mxu0 0.0
        %2031 = vmatpush1.msra.mxu0 %v1994
        %2032 = vmatprep.subr.mxu0 0.0
        %2033 = vmatpush1.msra.mxu0 %v1995
        %2034 = vmatprep.subr.mxu0 0.0
        %2035 = vmatpush1.msra.mxu0 %v1996
        %2036 = vmatprep.subr.mxu0 0.0
        %2037 = vmatpush1.msra.mxu0 %v1997
        %2038 = vmatprep.subr.mxu0 0.0
        %2039 = vmatpush1.msra.mxu0 %v1998
        %2040 = vmatprep.subr.mxu0 0.0
        %2041 = vmatpush1.msra.mxu0 %v1999
        %2042 = vmatprep.subr.mxu0 0.0
        %2043 = vmatpush1.msra.mxu0 %v2000
        %2044 = vmatprep.subr.mxu0 0.0
        %2045 = vmatpush1.msra.mxu0 %v2001
        %2046 = vmatprep.subr.mxu0 0.0
        %2047 = vmatpush1.msra.mxu0 %v2002
        %2048 = vmatprep.subr.mxu0 0.0
        %2049 = vmatpush1.msra.mxu0 %v2003
        %2050 = vmatprep.subr.mxu0 0.0
        %2051 = vmatpush1.msra.mxu0 %v2004
        %2052 = vmatprep.subr.mxu0 0.0
        %2053 = vmatpush1.msra.mxu0 %v2005
        %2054 = vmatprep.subr.mxu0 0.0
        %2055 = vmatpush1.msra.mxu0 %v2006
        %2056 = vmatprep.subr.mxu0 0.0
        %2057 = vmatpush1.msra.mxu0 %v2007
        %2058 = vmatprep.subr.mxu0 0.0
        %2059 = vmatpush1.msra.mxu0 %v2008
        %2060 = vmatprep.subr.mxu0 0.0
        %2061 = vmatpush1.msra.mxu0 %v2009
        %2062 = vmatprep.subr.mxu0 0.0
        %2063 = vmatpush1.msra.mxu0 %v2010
        %2064 = vmatprep.subr.mxu0 0.0
        %2065 = vmatpush1.msra.mxu0 %v2011
        %2066 = vmatprep.subr.mxu0 0.0
        %2067 = vmatpush1.msra.mxu0 %v2012
        %2068 = vmatprep.subr.mxu0 0.0
        %2069 = vmatpush1.msra.mxu0 %v2013
        %2070 = vmatprep.subr.mxu0 0.0
        %2071 = vmatpush1.msra.mxu0 %v2014
        %2072 = vmatprep.subr.mxu0 0.0
        %2073 = vmatpush1.msra.mxu0 %v2015
        %2074 = vmatprep.subr.mxu0 0.0
        %2075 = vmatpush1.msra.mxu0 %v2016
        %2076 = vmatprep.subr.mxu0 0.0
        %2077 = vmatpush1.msra.mxu0 %v2017
        %2078 = vmatprep.subr.mxu0 0.0
        %2079 = vmatpush1.msra.mxu0 %v2018
        %2080 = vmatprep.subr.mxu0 0.0
        %2081 = vmatpush1.msra.mxu0 %v2019
        %2082 = vmatprep.subr.mxu0 0.0
        %2083 = vmatpush1.msra.mxu0 %v2020
        %2084 = vmatprep.subr.mxu0 0.0
        %2085 = vmatpush1.msra.mxu0 %v2021
        %2086 = vmatprep.mubr.f32.mxu0 %v1070
        %2087 = vmatmul.mubr.f32.gmra.mrb[0].mxu0 %v1068
        %v2088 = vpop.f32.mrb[0].mxu0
        %v2089 = vadd.f32 0.0, %v2088
        %v2090 = vpop.f32.mrb[0].mxu0
        %2091 = vmatprep.mubr.f32.mxu0 %v1076
        %2092 = vmatmul.mubr.f32.gmra.mrb[0].mxu0 %v1074
        %v2093 = vpop.f32.mrb[0].mxu0
        %v2094 = vadd.f32 0.0, %v2093
        %v2095 = vpop.f32.mrb[0].mxu0
        %2096 = vmatprep.mubr.f32.mxu0 %v1082
        %2097 = vmatmul.mubr.f32.gmra.mrb[0].mxu0 %v1080
        %v2098 = vpop.f32.mrb[0].mxu0
        %v2099 = vadd.f32 0.0, %v2098
        %v2100 = vpop.f32.mrb[0].mxu0
        %2101 = vmatprep.mubr.f32.mxu0 %v1088
        %2102 = vmatmul.mubr.f32.gmra.mrb[0].mxu0 %v1086
        %v2103 = vpop.f32.mrb[0].mxu0
        %v2104 = vadd.f32 0.0, %v2103
        %v2105 = vpop.f32.mrb[0].mxu0
        %2106 = vmatprep.mubr.f32.mxu0 %v1094
        %2107 = vmatmul.mubr.f32.gmra.mrb[0].mxu0 %v1092
        %v2108 = vpop.f32.mrb[0].mxu0
        %v2109 = vadd.f32 0.0, %v2108
        %v2110 = vpop.f32.mrb[0].mxu0
        %2111 = vmatprep.mubr.f32.mxu0 %v1100
        %2112 = vmatmul.mubr.f32.gmra.mrb[0].mxu0 %v1098
        %v2113 = vpop.f32.mrb[0].mxu0
        %v2114 = vadd.f32 0.0, %v2113
        %v2115 = vpop.f32.mrb[0].mxu0
        %2116 = vmatprep.mubr.f32.mxu0 %v1106
        %2117 = vmatmul.mubr.f32.gmra.mrb[0].mxu0 %v1104
        %v2118 = vpop.f32.mrb[0].mxu0
        %v2119 = vadd.f32 0.0, %v2118
        %v2120 = vpop.f32.mrb[0].mxu0
        %2121 = vmatprep.mubr.f32.mxu0 %v1112
        %2122 = vmatmul.mubr.f32.gmra.mrb[0].mxu0 %v1110
        %v2123 = vpop.f32.mrb[0].mxu0
        %v2124 = vadd.f32 0.0, %v2123
        %v2125 = vpop.f32.mrb[0].mxu0
        %2126 = vdwg.mxu0
        %v2127 = vadd.f32 %v1982, %v2089
        %v2128 = vadd.f32 %v1983, %v2094
        %v2129 = vadd.f32 %v1984, %v2099
        %v2130 = vadd.f32 %v1985, %v2104
        %v2131 = vadd.f32 %v1986, %v2109
        %v2132 = vadd.f32 %v1987, %v2114
        %v2133 = vadd.f32 %v1988, %v2119
        %v2134 = vadd.f32 %v1989, %v2124
        %v2135 = vld [vmem:[%s6 + $0x600] sm:$0xff]
        %v2136 = vld [vmem:[%s6 + $0x608] sm:$0xff]
        %v2137 = vld [vmem:[%s6 + $0x610] sm:$0xff]
        %v2138 = vld [vmem:[%s6 + $0x618] sm:$0xff]
        %v2139 = vld [vmem:[%s6 + $0x620] sm:$0xff]
        %v2140 = vld [vmem:[%s6 + $0x628] sm:$0xff]
        %v2141 = vld [vmem:[%s6 + $0x630] sm:$0xff]
        %v2142 = vld [vmem:[%s6 + $0x638] sm:$0xff]
        %v2143 = vld [vmem:[%s6 + $0x640] sm:$0xff]
        %v2144 = vld [vmem:[%s6 + $0x648] sm:$0xff]
        %v2145 = vld [vmem:[%s6 + $0x650] sm:$0xff]
        %v2146 = vld [vmem:[%s6 + $0x658] sm:$0xff]
        %v2147 = vld [vmem:[%s6 + $0x660] sm:$0xff]
        %v2148 = vld [vmem:[%s6 + $0x668] sm:$0xff]
        %v2149 = vld [vmem:[%s6 + $0x670] sm:$0xff]
        %v2150 = vld [vmem:[%s6 + $0x678] sm:$0xff]
        %v2151 = vld [vmem:[%s6 + $0x680] sm:$0xff]
        %v2152 = vld [vmem:[%s6 + $0x688] sm:$0xff]
        %v2153 = vld [vmem:[%s6 + $0x690] sm:$0xff]
        %v2154 = vld [vmem:[%s6 + $0x698] sm:$0xff]
        %v2155 = vld [vmem:[%s6 + $0x6a0] sm:$0xff]
        %v2156 = vld [vmem:[%s6 + $0x6a8] sm:$0xff]
        %v2157 = vld [vmem:[%s6 + $0x6b0] sm:$0xff]
        %v2158 = vld [vmem:[%s6 + $0x6b8] sm:$0xff]
        %v2159 = vld [vmem:[%s6 + $0x6c0] sm:$0xff]
        %v2160 = vld [vmem:[%s6 + $0x6c8] sm:$0xff]
        %v2161 = vld [vmem:[%s6 + $0x6d0] sm:$0xff]
        %v2162 = vld [vmem:[%s6 + $0x6d8] sm:$0xff]
        %v2163 = vld [vmem:[%s6 + $0x6e0] sm:$0xff]
        %v2164 = vld [vmem:[%s6 + $0x6e8] sm:$0xff]
        %v2165 = vld [vmem:[%s6 + $0x6f0] sm:$0xff]
        %v2166 = vld [vmem:[%s6 + $0x6f8] sm:$0xff]
        %2167 = vmatprep.subr.mxu0 0.0
        %2168 = vmatpush1.msra.mxu0 %v2135
        %2169 = vmatprep.subr.mxu0 0.0
        %2170 = vmatpush1.msra.mxu0 %v2136
        %2171 = vmatprep.subr.mxu0 0.0
        %2172 = vmatpush1.msra.mxu0 %v2137
        %2173 = vmatprep.subr.mxu0 0.0
        %2174 = vmatpush1.msra.mxu0 %v2138
        %2175 = vmatprep.subr.mxu0 0.0
        %2176 = vmatpush1.msra.mxu0 %v2139
        %2177 = vmatprep.subr.mxu0 0.0
        %2178 = vmatpush1.msra.mxu0 %v2140
        %2179 = vmatprep.subr.mxu0 0.0
        %2180 = vmatpush1.msra.mxu0 %v2141
        %2181 = vmatprep.subr.mxu0 0.0
        %2182 = vmatpush1.msra.mxu0 %v2142
        %2183 = vmatprep.subr.mxu0 0.0
        %2184 = vmatpush1.msra.mxu0 %v2143
        %2185 = vmatprep.subr.mxu0 0.0
        %2186 = vmatpush1.msra.mxu0 %v2144
        %2187 = vmatprep.subr.mxu0 0.0
        %2188 = vmatpush1.msra.mxu0 %v2145
        %2189 = vmatprep.subr.mxu0 0.0
        %2190 = vmatpush1.msra.mxu0 %v2146
        %2191 = vmatprep.subr.mxu0 0.0
        %2192 = vmatpush1.msra.mxu0 %v2147
        %2193 = vmatprep.subr.mxu0 0.0
        %2194 = vmatpush1.msra.mxu0 %v2148
        %2195 = vmatprep.subr.mxu0 0.0
        %2196 = vmatpush1.msra.mxu0 %v2149
        %2197 = vmatprep.subr.mxu0 0.0
        %2198 = vmatpush1.msra.mxu0 %v2150
        %2199 = vmatprep.subr.mxu0 0.0
        %2200 = vmatpush1.msra.mxu0 %v2151
        %2201 = vmatprep.subr.mxu0 0.0
        %2202 = vmatpush1.msra.mxu0 %v2152
        %2203 = vmatprep.subr.mxu0 0.0
        %2204 = vmatpush1.msra.mxu0 %v2153
        %2205 = vmatprep.subr.mxu0 0.0
        %2206 = vmatpush1.msra.mxu0 %v2154
        %2207 = vmatprep.subr.mxu0 0.0
        %2208 = vmatpush1.msra.mxu0 %v2155
        %2209 = vmatprep.subr.mxu0 0.0
        %2210 = vmatpush1.msra.mxu0 %v2156
        %2211 = vmatprep.subr.mxu0 0.0
        %2212 = vmatpush1.msra.mxu0 %v2157
        %2213 = vmatprep.subr.mxu0 0.0
        %2214 = vmatpush1.msra.mxu0 %v2158
        %2215 = vmatprep.subr.mxu0 0.0
        %2216 = vmatpush1.msra.mxu0 %v2159
        %2217 = vmatprep.subr.mxu0 0.0
        %2218 = vmatpush1.msra.mxu0 %v2160
        %2219 = vmatprep.subr.mxu0 0.0
        %2220 = vmatpush1.msra.mxu0 %v2161
        %2221 = vmatprep.subr.mxu0 0.0
        %2222 = vmatpush1.msra.mxu0 %v2162
        %2223 = vmatprep.subr.mxu0 0.0
        %2224 = vmatpush1.msra.mxu0 %v2163
        %2225 = vmatprep.subr.mxu0 0.0
        %2226 = vmatpush1.msra.mxu0 %v2164
        %2227 = vmatprep.subr.mxu0 0.0
        %2228 = vmatpush1.msra.mxu0 %v2165
        %2229 = vmatprep.subr.mxu0 0.0
        %2230 = vmatpush1.msra.mxu0 %v2166
        %2231 = vmatprep.mubr.f32.mxu0 %v1118
        %2232 = vmatmul.mubr.f32.gmra.mrb[0].mxu0 %v1116
        %v2233 = vpop.f32.mrb[0].mxu0
        %v2234 = vadd.f32 0.0, %v2233
        %v2235 = vpop.f32.mrb[0].mxu0
        %2236 = vmatprep.mubr.f32.mxu0 %v1124
        %2237 = vmatmul.mubr.f32.gmra.mrb[0].mxu0 %v1122
        %v2238 = vpop.f32.mrb[0].mxu0
        %v2239 = vadd.f32 0.0, %v2238
        %v2240 = vpop.f32.mrb[0].mxu0
        %2241 = vmatprep.mubr.f32.mxu0 %v1130
        %2242 = vmatmul.mubr.f32.gmra.mrb[0].mxu0 %v1128
        %v2243 = vpop.f32.mrb[0].mxu0
        %v2244 = vadd.f32 0.0, %v2243
        %v2245 = vpop.f32.mrb[0].mxu0
        %2246 = vmatprep.mubr.f32.mxu0 %v1136
        %2247 = vmatmul.mubr.f32.gmra.mrb[0].mxu0 %v1134
        %v2248 = vpop.f32.mrb[0].mxu0
        %v2249 = vadd.f32 0.0, %v2248
        %v2250 = vpop.f32.mrb[0].mxu0
        %2251 = vmatprep.mubr.f32.mxu0 %v1142
        %2252 = vmatmul.mubr.f32.gmra.mrb[0].mxu0 %v1140
        %v2253 = vpop.f32.mrb[0].mxu0
        %v2254 = vadd.f32 0.0, %v2253
        %v2255 = vpop.f32.mrb[0].mxu0
        %2256 = vmatprep.mubr.f32.mxu0 %v1148
        %2257 = vmatmul.mubr.f32.gmra.mrb[0].mxu0 %v1146
        %v2258 = vpop.f32.mrb[0].mxu0
        %v2259 = vadd.f32 0.0, %v2258
        %v2260 = vpop.f32.mrb[0].mxu0
        %2261 = vmatprep.mubr.f32.mxu0 %v1154
        %2262 = vmatmul.mubr.f32.gmra.mrb[0].mxu0 %v1152
        %v2263 = vpop.f32.mrb[0].mxu0
        %v2264 = vadd.f32 0.0, %v2263
        %v2265 = vpop.f32.mrb[0].mxu0
        %2266 = vmatprep.mubr.f32.mxu0 %v1160
        %2267 = vmatmul.mubr.f32.gmra.mrb[0].mxu0 %v1158
        %v2268 = vpop.f32.mrb[0].mxu0
        %v2269 = vadd.f32 0.0, %v2268
        %v2270 = vpop.f32.mrb[0].mxu0
        %2271 = vdwg.mxu0
        %v2272 = vadd.f32 %v2127, %v2234
        %v2273 = vadd.f32 %v2128, %v2239
        %v2274 = vadd.f32 %v2129, %v2244
        %v2275 = vadd.f32 %v2130, %v2249
        %v2276 = vadd.f32 %v2131, %v2254
        %v2277 = vadd.f32 %v2132, %v2259
        %v2278 = vadd.f32 %v2133, %v2264
        %v2279 = vadd.f32 %v2134, %v2269
        %v2280 = vld [vmem:[%s6 + $0x700] sm:$0xff]
        %v2281 = vld [vmem:[%s6 + $0x708] sm:$0xff]
        %v2282 = vld [vmem:[%s6 + $0x710] sm:$0xff]
        %v2283 = vld [vmem:[%s6 + $0x718] sm:$0xff]
        %v2284 = vld [vmem:[%s6 + $0x720] sm:$0xff]
        %v2285 = vld [vmem:[%s6 + $0x728] sm:$0xff]
        %v2286 = vld [vmem:[%s6 + $0x730] sm:$0xff]
        %v2287 = vld [vmem:[%s6 + $0x738] sm:$0xff]
        %v2288 = vld [vmem:[%s6 + $0x740] sm:$0xff]
        %v2289 = vld [vmem:[%s6 + $0x748] sm:$0xff]
        %v2290 = vld [vmem:[%s6 + $0x750] sm:$0xff]
        %v2291 = vld [vmem:[%s6 + $0x758] sm:$0xff]
        %v2292 = vld [vmem:[%s6 + $0x760] sm:$0xff]
        %v2293 = vld [vmem:[%s6 + $0x768] sm:$0xff]
        %v2294 = vld [vmem:[%s6 + $0x770] sm:$0xff]
        %v2295 = vld [vmem:[%s6 + $0x778] sm:$0xff]
        %v2296 = vld [vmem:[%s6 + $0x780] sm:$0xff]
        %v2297 = vld [vmem:[%s6 + $0x788] sm:$0xff]
        %v2298 = vld [vmem:[%s6 + $0x790] sm:$0xff]
        %v2299 = vld [vmem:[%s6 + $0x798] sm:$0xff]
        %v2300 = vld [vmem:[%s6 + $0x7a0] sm:$0xff]
        %v2301 = vld [vmem:[%s6 + $0x7a8] sm:$0xff]
        %v2302 = vld [vmem:[%s6 + $0x7b0] sm:$0xff]
        %v2303 = vld [vmem:[%s6 + $0x7b8] sm:$0xff]
        %v2304 = vld [vmem:[%s6 + $0x7c0] sm:$0xff]
        %v2305 = vld [vmem:[%s6 + $0x7c8] sm:$0xff]
        %v2306 = vld [vmem:[%s6 + $0x7d0] sm:$0xff]
        %v2307 = vld [vmem:[%s6 + $0x7d8] sm:$0xff]
        %v2308 = vld [vmem:[%s6 + $0x7e0] sm:$0xff]
        %v2309 = vld [vmem:[%s6 + $0x7e8] sm:$0xff]
        %v2310 = vld [vmem:[%s6 + $0x7f0] sm:$0xff]
        %v2311 = vld [vmem:[%s6 + $0x7f8] sm:$0xff]
        %2312 = vmatprep.subr.mxu0 0.0
        %2313 = vmatpush1.msra.mxu0 %v2280
        %2314 = vmatprep.subr.mxu0 0.0
        %2315 = vmatpush1.msra.mxu0 %v2281
        %2316 = vmatprep.subr.mxu0 0.0
        %2317 = vmatpush1.msra.mxu0 %v2282
        %2318 = vmatprep.subr.mxu0 0.0
        %2319 = vmatpush1.msra.mxu0 %v2283
        %2320 = vmatprep.subr.mxu0 0.0
        %2321 = vmatpush1.msra.mxu0 %v2284
        %2322 = vmatprep.subr.mxu0 0.0
        %2323 = vmatpush1.msra.mxu0 %v2285
        %2324 = vmatprep.subr.mxu0 0.0
        %2325 = vmatpush1.msra.mxu0 %v2286
        %2326 = vmatprep.subr.mxu0 0.0
        %2327 = vmatpush1.msra.mxu0 %v2287
        %2328 = vmatprep.subr.mxu0 0.0
        %2329 = vmatpush1.msra.mxu0 %v2288
        %2330 = vmatprep.subr.mxu0 0.0
        %2331 = vmatpush1.msra.mxu0 %v2289
        %2332 = vmatprep.subr.mxu0 0.0
        %2333 = vmatpush1.msra.mxu0 %v2290
        %2334 = vmatprep.subr.mxu0 0.0
        %2335 = vmatpush1.msra.mxu0 %v2291
        %2336 = vmatprep.subr.mxu0 0.0
        %2337 = vmatpush1.msra.mxu0 %v2292
        %2338 = vmatprep.subr.mxu0 0.0
        %2339 = vmatpush1.msra.mxu0 %v2293
        %2340 = vmatprep.subr.mxu0 0.0
        %2341 = vmatpush1.msra.mxu0 %v2294
        %2342 = vmatprep.subr.mxu0 0.0
        %2343 = vmatpush1.msra.mxu0 %v2295
        %2344 = vmatprep.subr.mxu0 0.0
        %2345 = vmatpush1.msra.mxu0 %v2296
        %2346 = vmatprep.subr.mxu0 0.0
        %2347 = vmatpush1.msra.mxu0 %v2297
        %2348 = vmatprep.subr.mxu0 0.0
        %2349 = vmatpush1.msra.mxu0 %v2298
        %2350 = vmatprep.subr.mxu0 0.0
        %2351 = vmatpush1.msra.mxu0 %v2299
        %2352 = vmatprep.subr.mxu0 0.0
        %2353 = vmatpush1.msra.mxu0 %v2300
        %2354 = vmatprep.subr.mxu0 0.0
        %2355 = vmatpush1.msra.mxu0 %v2301
        %2356 = vmatprep.subr.mxu0 0.0
        %2357 = vmatpush1.msra.mxu0 %v2302
        %2358 = vmatprep.subr.mxu0 0.0
        %2359 = vmatpush1.msra.mxu0 %v2303
        %2360 = vmatprep.subr.mxu0 0.0
        %2361 = vmatpush1.msra.mxu0 %v2304
        %2362 = vmatprep.subr.mxu0 0.0
        %2363 = vmatpush1.msra.mxu0 %v2305
        %2364 = vmatprep.subr.mxu0 0.0
        %2365 = vmatpush1.msra.mxu0 %v2306
        %2366 = vmatprep.subr.mxu0 0.0
        %2367 = vmatpush1.msra.mxu0 %v2307
        %2368 = vmatprep.subr.mxu0 0.0
        %2369 = vmatpush1.msra.mxu0 %v2308
        %2370 = vmatprep.subr.mxu0 0.0
        %2371 = vmatpush1.msra.mxu0 %v2309
        %2372 = vmatprep.subr.mxu0 0.0
        %2373 = vmatpush1.msra.mxu0 %v2310
        %2374 = vmatprep.subr.mxu0 0.0
        %2375 = vmatpush1.msra.mxu0 %v2311
        %2376 = vmatprep.mubr.f32.mxu0 %v1166
        %2377 = vmatmul.mubr.f32.gmra.mrb[0].mxu0 %v1164
        %v2378 = vpop.f32.mrb[0].mxu0
        %v2379 = vadd.f32 0.0, %v2378
        %v2380 = vpop.f32.mrb[0].mxu0
        %2381 = vmatprep.mubr.f32.mxu0 %v1172
        %2382 = vmatmul.mubr.f32.gmra.mrb[0].mxu0 %v1170
        %v2383 = vpop.f32.mrb[0].mxu0
        %v2384 = vadd.f32 0.0, %v2383
        %v2385 = vpop.f32.mrb[0].mxu0
        %2386 = vmatprep.mubr.f32.mxu0 %v1178
        %2387 = vmatmul.mubr.f32.gmra.mrb[0].mxu0 %v1176
        %v2388 = vpop.f32.mrb[0].mxu0
        %v2389 = vadd.f32 0.0, %v2388
        %v2390 = vpop.f32.mrb[0].mxu0
        %2391 = vmatprep.mubr.f32.mxu0 %v1184
        %2392 = vmatmul.mubr.f32.gmra.mrb[0].mxu0 %v1182
        %v2393 = vpop.f32.mrb[0].mxu0
        %v2394 = vadd.f32 0.0, %v2393
        %v2395 = vpop.f32.mrb[0].mxu0
        %2396 = vmatprep.mubr.f32.mxu0 %v1190
        %2397 = vmatmul.mubr.f32.gmra.mrb[0].mxu0 %v1188
        %v2398 = vpop.f32.mrb[0].mxu0
        %v2399 = vadd.f32 0.0, %v2398
        %v2400 = vpop.f32.mrb[0].mxu0
        %2401 = vmatprep.mubr.f32.mxu0 %v1196
        %2402 = vmatmul.mubr.f32.gmra.mrb[0].mxu0 %v1194
        %v2403 = vpop.f32.mrb[0].mxu0
        %v2404 = vadd.f32 0.0, %v2403
        %v2405 = vpop.f32.mrb[0].mxu0
        %2406 = vmatprep.mubr.f32.mxu0 %v1202
        %2407 = vmatmul.mubr.f32.gmra.mrb[0].mxu0 %v1200
        %v2408 = vpop.f32.mrb[0].mxu0
        %v2409 = vadd.f32 0.0, %v2408
        %v2410 = vpop.f32.mrb[0].mxu0
        %2411 = vmatprep.mubr.f32.mxu0 %v1208
        %2412 = vmatmul.mubr.f32.gmra.mrb[0].mxu0 %v1206
        %v2413 = vpop.f32.mrb[0].mxu0
        %v2414 = vadd.f32 0.0, %v2413
        %v2415 = vpop.f32.mrb[0].mxu0
        %2416 = vdwg.mxu0
        %v2417 = vadd.f32 %v2272, %v2379
        %v2418 = vadd.f32 %v2273, %v2384
        %v2419 = vadd.f32 %v2274, %v2389
        %v2420 = vadd.f32 %v2275, %v2394
        %v2421 = vadd.f32 %v2276, %v2399
        %v2422 = vadd.f32 %v2277, %v2404
        %v2423 = vadd.f32 %v2278, %v2409
        %v2424 = vadd.f32 %v2279, %v2414
        %v2425 = vld [vmem:[%s6 + $0x800] sm:$0xff]
        %v2426 = vld [vmem:[%s6 + $0x808] sm:$0xff]
        %v2427 = vld [vmem:[%s6 + $0x810] sm:$0xff]
        %v2428 = vld [vmem:[%s6 + $0x818] sm:$0xff]
        %v2429 = vld [vmem:[%s6 + $0x820] sm:$0xff]
        %v2430 = vld [vmem:[%s6 + $0x828] sm:$0xff]
        %v2431 = vld [vmem:[%s6 + $0x830] sm:$0xff]
        %v2432 = vld [vmem:[%s6 + $0x838] sm:$0xff]
        %v2433 = vld [vmem:[%s6 + $0x840] sm:$0xff]
        %v2434 = vld [vmem:[%s6 + $0x848] sm:$0xff]
        %v2435 = vld [vmem:[%s6 + $0x850] sm:$0xff]
        %v2436 = vld [vmem:[%s6 + $0x858] sm:$0xff]
        %v2437 = vld [vmem:[%s6 + $0x860] sm:$0xff]
        %v2438 = vld [vmem:[%s6 + $0x868] sm:$0xff]
        %v2439 = vld [vmem:[%s6 + $0x870] sm:$0xff]
        %v2440 = vld [vmem:[%s6 + $0x878] sm:$0xff]
        %v2441 = vld [vmem:[%s6 + $0x880] sm:$0xff]
        %v2442 = vld [vmem:[%s6 + $0x888] sm:$0xff]
        %v2443 = vld [vmem:[%s6 + $0x890] sm:$0xff]
        %v2444 = vld [vmem:[%s6 + $0x898] sm:$0xff]
        %v2445 = vld [vmem:[%s6 + $0x8a0] sm:$0xff]
        %v2446 = vld [vmem:[%s6 + $0x8a8] sm:$0xff]
        %v2447 = vld [vmem:[%s6 + $0x8b0] sm:$0xff]
        %v2448 = vld [vmem:[%s6 + $0x8b8] sm:$0xff]
        %v2449 = vld [vmem:[%s6 + $0x8c0] sm:$0xff]
        %v2450 = vld [vmem:[%s6 + $0x8c8] sm:$0xff]
        %v2451 = vld [vmem:[%s6 + $0x8d0] sm:$0xff]
        %v2452 = vld [vmem:[%s6 + $0x8d8] sm:$0xff]
        %v2453 = vld [vmem:[%s6 + $0x8e0] sm:$0xff]
        %v2454 = vld [vmem:[%s6 + $0x8e8] sm:$0xff]
        %v2455 = vld [vmem:[%s6 + $0x8f0] sm:$0xff]
        %v2456 = vld [vmem:[%s6 + $0x8f8] sm:$0xff]
        %2457 = vmatprep.subr.mxu0 0.0
        %2458 = vmatpush1.msra.mxu0 %v2425
        %2459 = vmatprep.subr.mxu0 0.0
        %2460 = vmatpush1.msra.mxu0 %v2426
        %2461 = vmatprep.subr.mxu0 0.0
        %2462 = vmatpush1.msra.mxu0 %v2427
        %2463 = vmatprep.subr.mxu0 0.0
        %2464 = vmatpush1.msra.mxu0 %v2428
        %2465 = vmatprep.subr.mxu0 0.0
        %2466 = vmatpush1.msra.mxu0 %v2429
        %2467 = vmatprep.subr.mxu0 0.0
        %2468 = vmatpush1.msra.mxu0 %v2430
        %2469 = vmatprep.subr.mxu0 0.0
        %2470 = vmatpush1.msra.mxu0 %v2431
        %2471 = vmatprep.subr.mxu0 0.0
        %2472 = vmatpush1.msra.mxu0 %v2432
        %2473 = vmatprep.subr.mxu0 0.0
        %2474 = vmatpush1.msra.mxu0 %v2433
        %2475 = vmatprep.subr.mxu0 0.0
        %2476 = vmatpush1.msra.mxu0 %v2434
        %2477 = vmatprep.subr.mxu0 0.0
        %2478 = vmatpush1.msra.mxu0 %v2435
        %2479 = vmatprep.subr.mxu0 0.0
        %2480 = vmatpush1.msra.mxu0 %v2436
        %2481 = vmatprep.subr.mxu0 0.0
        %2482 = vmatpush1.msra.mxu0 %v2437
        %2483 = vmatprep.subr.mxu0 0.0
        %2484 = vmatpush1.msra.mxu0 %v2438
        %2485 = vmatprep.subr.mxu0 0.0
        %2486 = vmatpush1.msra.mxu0 %v2439
        %2487 = vmatprep.subr.mxu0 0.0
        %2488 = vmatpush1.msra.mxu0 %v2440
        %2489 = vmatprep.subr.mxu0 0.0
        %2490 = vmatpush1.msra.mxu0 %v2441
        %2491 = vmatprep.subr.mxu0 0.0
        %2492 = vmatpush1.msra.mxu0 %v2442
        %2493 = vmatprep.subr.mxu0 0.0
        %2494 = vmatpush1.msra.mxu0 %v2443
        %2495 = vmatprep.subr.mxu0 0.0
        %2496 = vmatpush1.msra.mxu0 %v2444
        %2497 = vmatprep.subr.mxu0 0.0
        %2498 = vmatpush1.msra.mxu0 %v2445
        %2499 = vmatprep.subr.mxu0 0.0
        %2500 = vmatpush1.msra.mxu0 %v2446
        %2501 = vmatprep.subr.mxu0 0.0
        %2502 = vmatpush1.msra.mxu0 %v2447
        %2503 = vmatprep.subr.mxu0 0.0
        %2504 = vmatpush1.msra.mxu0 %v2448
        %2505 = vmatprep.subr.mxu0 0.0
        %2506 = vmatpush1.msra.mxu0 %v2449
        %2507 = vmatprep.subr.mxu0 0.0
        %2508 = vmatpush1.msra.mxu0 %v2450
        %2509 = vmatprep.subr.mxu0 0.0
        %2510 = vmatpush1.msra.mxu0 %v2451
        %2511 = vmatprep.subr.mxu0 0.0
        %2512 = vmatpush1.msra.mxu0 %v2452
        %2513 = vmatprep.subr.mxu0 0.0
        %2514 = vmatpush1.msra.mxu0 %v2453
        %2515 = vmatprep.subr.mxu0 0.0
        %2516 = vmatpush1.msra.mxu0 %v2454
        %2517 = vmatprep.subr.mxu0 0.0
        %2518 = vmatpush1.msra.mxu0 %v2455
        %2519 = vmatprep.subr.mxu0 0.0
        %2520 = vmatpush1.msra.mxu0 %v2456
        %2521 = vmatprep.mubr.f32.mxu0 %v1214
        %2522 = vmatmul.mubr.f32.gmra.mrb[0].mxu0 %v1212
        %v2523 = vpop.f32.mrb[0].mxu0
        %v2524 = vadd.f32 0.0, %v2523
        %v2525 = vpop.f32.mrb[0].mxu0
        %2526 = vmatprep.mubr.f32.mxu0 %v1220
        %2527 = vmatmul.mubr.f32.gmra.mrb[0].mxu0 %v1218
        %v2528 = vpop.f32.mrb[0].mxu0
        %v2529 = vadd.f32 0.0, %v2528
        %v2530 = vpop.f32.mrb[0].mxu0
        %2531 = vmatprep.mubr.f32.mxu0 %v1226
        %2532 = vmatmul.mubr.f32.gmra.mrb[0].mxu0 %v1224
        %v2533 = vpop.f32.mrb[0].mxu0
        %v2534 = vadd.f32 0.0, %v2533
        %v2535 = vpop.f32.mrb[0].mxu0
        %2536 = vmatprep.mubr.f32.mxu0 %v1232
        %2537 = vmatmul.mubr.f32.gmra.mrb[0].mxu0 %v1230
        %v2538 = vpop.f32.mrb[0].mxu0
        %v2539 = vadd.f32 0.0, %v2538
        %v2540 = vpop.f32.mrb[0].mxu0
        %2541 = vmatprep.mubr.f32.mxu0 %v1238
        %2542 = vmatmul.mubr.f32.gmra.mrb[0].mxu0 %v1236
        %v2543 = vpop.f32.mrb[0].mxu0
        %v2544 = vadd.f32 0.0, %v2543
        %v2545 = vpop.f32.mrb[0].mxu0
        %2546 = vmatprep.mubr.f32.mxu0 %v1244
        %2547 = vmatmul.mubr.f32.gmra.mrb[0].mxu0 %v1242
        %v2548 = vpop.f32.mrb[0].mxu0
        %v2549 = vadd.f32 0.0, %v2548
        %v2550 = vpop.f32.mrb[0].mxu0
        %2551 = vmatprep.mubr.f32.mxu0 %v1250
        %2552 = vmatmul.mubr.f32.gmra.mrb[0].mxu0 %v1248
        %v2553 = vpop.f32.mrb[0].mxu0
        %v2554 = vadd.f32 0.0, %v2553
        %v2555 = vpop.f32.mrb[0].mxu0
        %2556 = vmatprep.mubr.f32.mxu0 %v1256
        %2557 = vmatmul.mubr.f32.gmra.mrb[0].mxu0 %v1254
        %v2558 = vpop.f32.mrb[0].mxu0
        %v2559 = vadd.f32 0.0, %v2558
        %v2560 = vpop.f32.mrb[0].mxu0
        %2561 = vdwg.mxu0
        %v2562 = vadd.f32 %v2417, %v2524
        %v2563 = vadd.f32 %v2418, %v2529
        %v2564 = vadd.f32 %v2419, %v2534
        %v2565 = vadd.f32 %v2420, %v2539
        %v2566 = vadd.f32 %v2421, %v2544
        %v2567 = vadd.f32 %v2422, %v2549
        %v2568 = vadd.f32 %v2423, %v2554
        %v2569 = vadd.f32 %v2424, %v2559
        %v2570 = vmax.f32 %v2562, 0.0
        %v2571 = vmax.f32 %v2563, 0.0
        %v2572 = vmax.f32 %v2564, 0.0
        %v2573 = vmax.f32 %v2565, 0.0
        %v2574 = vmax.f32 %v2566, 0.0
        %v2575 = vmax.f32 %v2567, 0.0
        %v2576 = vmax.f32 %v2568, 0.0
        %v2577 = vmax.f32 %v2569, 0.0
        %v2578 = vld [vmem:[%s2] sm:$0xff]
        %v2579 = vld [vmem:[%s2 + $0x8] sm:$0xff]
        %v2580 = vld [vmem:[%s2 + $0x10] sm:$0xff]
        %v2581 = vld [vmem:[%s2 + $0x18] sm:$0xff]
        %v2582 = vld [vmem:[%s2 + $0x20] sm:$0xff]
        %v2583 = vld [vmem:[%s2 + $0x28] sm:$0xff]
        %v2584 = vld [vmem:[%s2 + $0x30] sm:$0xff]
        %v2585 = vld [vmem:[%s2 + $0x38] sm:$0xff]
        %v2586 = vld [vmem:[%s2 + $0x40] sm:$0xff]
        %v2587 = vld [vmem:[%s2 + $0x48] sm:$0xff]
        %v2588 = vld [vmem:[%s2 + $0x50] sm:$0xff]
        %v2589 = vld [vmem:[%s2 + $0x58] sm:$0xff]
        %v2590 = vld [vmem:[%s2 + $0x60] sm:$0xff]
        %v2591 = vld [vmem:[%s2 + $0x68] sm:$0xff]
        %v2592 = vld [vmem:[%s2 + $0x70] sm:$0xff]
        %v2593 = vld [vmem:[%s2 + $0x78] sm:$0xff]
        %v2594 = vld [vmem:[%s2 + $0x80] sm:$0xff]
        %v2595 = vld [vmem:[%s2 + $0x88] sm:$0xff]
        %vm2596 = vcmask 523264
        %v2598 = vsel %vm2596, %v2578, 0
        %v2601 = vsel %vm2596, %v2579, 0
        %v2604 = vsel %vm2596, %v2580, 0
        %v2607 = vsel %vm2596, %v2581, 0
        %v2610 = vsel %vm2596, %v2582, 0
        %v2613 = vsel %vm2596, %v2583, 0
        %v2616 = vsel %vm2596, %v2584, 0
        %v2619 = vsel %vm2596, %v2585, 0
        %v2622 = vsel %vm2596, %v2586, 0
        %v2625 = vsel %vm2596, %v2587, 0
        %v2628 = vsel %vm2596, %v2588, 0
        %v2631 = vsel %vm2596, %v2589, 0
        %v2634 = vsel %vm2596, %v2590, 0
        %v2637 = vsel %vm2596, %v2591, 0
        %v2640 = vsel %vm2596, %v2592, 0
        %v2643 = vsel %vm2596, %v2593, 0
        %v2646 = vsel %vm2596, %v2594, 0
        %v2649 = vsel %vm2596, %v2595, 0
        %2651 = vmatprep.subr.mxu0 0.0
        %2652 = vmatpush1.msra.mxu0 %v2570
        %2653 = vmatprep.subr.mxu0 0.0
        %2654 = vmatpush1.msra.mxu0 %v2571
        %2655 = vmatprep.subr.mxu0 0.0
        %2656 = vmatpush1.msra.mxu0 %v2572
        %2657 = vmatprep.subr.mxu0 0.0
        %2658 = vmatpush1.msra.mxu0 %v2573
        %2659 = vmatprep.subr.mxu0 0.0
        %2660 = vmatpush1.msra.mxu0 %v2574
        %2661 = vmatprep.subr.mxu0 0.0
        %2662 = vmatpush1.msra.mxu0 %v2575
        %2663 = vmatprep.subr.mxu0 0.0
        %2664 = vmatpush1.msra.mxu0 %v2576
        %2665 = vmatprep.subr.mxu0 0.0
        %2666 = vmatpush1.msra.mxu0 %v2577
        %2667 = vmatprep.subr.mxu0 0.0
        %2668 = vmatpush1.msra.mxu0 0.0
        %2669 = vmatprep.subr.mxu0 0.0
        %2670 = vmatpush1.msra.mxu0 0.0
        %2671 = vmatprep.subr.mxu0 0.0
        %2672 = vmatpush1.msra.mxu0 0.0
        %2673 = vmatprep.subr.mxu0 0.0
        %2674 = vmatpush1.msra.mxu0 0.0
        %2675 = vmatprep.subr.mxu0 0.0
        %2676 = vmatpush1.msra.mxu0 0.0
        %2677 = vmatprep.subr.mxu0 0.0
        %2678 = vmatpush1.msra.mxu0 0.0
        %2679 = vmatprep.subr.mxu0 0.0
        %2680 = vmatpush1.msra.mxu0 0.0
        %2681 = vmatprep.subr.mxu0 0.0
        %2682 = vmatpush1.msra.mxu0 0.0
        %2683 = vmatprep.subr.mxu0 0.0
        %2684 = vmatpush1.msra.mxu0 0.0
        %2685 = vmatprep.subr.mxu0 0.0
        %2686 = vmatpush1.msra.mxu0 0.0
        %2687 = vmatprep.subr.mxu0 0.0
        %2688 = vmatpush1.msra.mxu0 0.0
        %2689 = vmatprep.subr.mxu0 0.0
        %2690 = vmatpush1.msra.mxu0 0.0
        %2691 = vmatprep.subr.mxu0 0.0
        %2692 = vmatpush1.msra.mxu0 0.0
        %2693 = vmatprep.subr.mxu0 0.0
        %2694 = vmatpush1.msra.mxu0 0.0
        %2695 = vmatprep.subr.mxu0 0.0
        %2696 = vmatpush1.msra.mxu0 0.0
        %2697 = vmatprep.subr.mxu0 0.0
        %2698 = vmatpush1.msra.mxu0 0.0
        %2699 = vmatprep.subr.mxu0 0.0
        %2700 = vmatpush1.msra.mxu0 0.0
        %2701 = vmatprep.subr.mxu0 0.0
        %2702 = vmatpush1.msra.mxu0 0.0
        %2703 = vmatprep.subr.mxu0 0.0
        %2704 = vmatpush1.msra.mxu0 0.0
        %2705 = vmatprep.subr.mxu0 0.0
        %2706 = vmatpush1.msra.mxu0 0.0
        %2707 = vmatprep.subr.mxu0 0.0
        %2708 = vmatpush1.msra.mxu0 0.0
        %2709 = vmatprep.subr.mxu0 0.0
        %2710 = vmatpush1.msra.mxu0 0.0
        %2711 = vmatprep.subr.mxu0 0.0
        %2712 = vmatpush1.msra.mxu0 0.0
        %2713 = vmatprep.subr.mxu0 0.0
        %2714 = vmatpush1.msra.mxu0 0.0
        %2715 = vmatprep.mubr.f32.mxu0 0.0
        %2716 = vmatmul.mubr.f32.gmra.mrb[0].mxu0 %v2598
        %v2717 = vpop.f32.mrb[0].mxu0
        %v2718 = vadd.f32 0.0, %v2717
        %v2719 = vpop.f32.mrb[0].mxu0
        %2720 = vmatprep.mubr.f32.mxu0 0.0
        %2721 = vmatmul.mubr.f32.gmra.mrb[0].mxu0 %v2601
        %v2722 = vpop.f32.mrb[0].mxu0
        %v2723 = vadd.f32 0.0, %v2722
        %v2724 = vpop.f32.mrb[0].mxu0
        %2725 = vmatprep.mubr.f32.mxu0 0.0
        %2726 = vmatmul.mubr.f32.gmra.mrb[0].mxu0 %v2604
        %v2727 = vpop.f32.mrb[0].mxu0
        %v2728 = vadd.f32 0.0, %v2727
        %v2729 = vpop.f32.mrb[0].mxu0
        %2730 = vmatprep.mubr.f32.mxu0 0.0
        %2731 = vmatmul.mubr.f32.gmra.mrb[0].mxu0 %v2607
        %v2732 = vpop.f32.mrb[0].mxu0
        %v2733 = vadd.f32 0.0, %v2732
        %v2734 = vpop.f32.mrb[0].mxu0
        %2735 = vmatprep.mubr.f32.mxu0 0.0
        %2736 = vmatmul.mubr.f32.gmra.mrb[0].mxu0 %v2610
        %v2737 = vpop.f32.mrb[0].mxu0
        %v2738 = vadd.f32 0.0, %v2737
        %v2739 = vpop.f32.mrb[0].mxu0
        %2740 = vmatprep.mubr.f32.mxu0 0.0
        %2741 = vmatmul.mubr.f32.gmra.mrb[0].mxu0 %v2613
        %v2742 = vpop.f32.mrb[0].mxu0
        %v2743 = vadd.f32 0.0, %v2742
        %v2744 = vpop.f32.mrb[0].mxu0
        %2745 = vmatprep.mubr.f32.mxu0 0.0
        %2746 = vmatmul.mubr.f32.gmra.mrb[0].mxu0 %v2616
        %v2747 = vpop.f32.mrb[0].mxu0
        %v2748 = vadd.f32 0.0, %v2747
        %v2749 = vpop.f32.mrb[0].mxu0
        %2750 = vmatprep.mubr.f32.mxu0 0.0
        %2751 = vmatmul.mubr.f32.gmra.mrb[0].mxu0 %v2619
        %v2752 = vpop.f32.mrb[0].mxu0
        %v2753 = vadd.f32 0.0, %v2752
        %v2754 = vpop.f32.mrb[0].mxu0
        %2755 = vmatprep.mubr.f32.mxu0 0.0
        %2756 = vmatmul.mubr.f32.gmra.mrb[0].mxu0 %v2622
        %v2757 = vpop.f32.mrb[0].mxu0
        %v2758 = vadd.f32 0.0, %v2757
        %v2759 = vpop.f32.mrb[0].mxu0
        %2760 = vmatprep.mubr.f32.mxu0 0.0
        %2761 = vmatmul.mubr.f32.gmra.mrb[0].mxu0 %v2625
        %v2762 = vpop.f32.mrb[0].mxu0
        %v2763 = vadd.f32 0.0, %v2762
        %v2764 = vpop.f32.mrb[0].mxu0
        %2765 = vmatprep.mubr.f32.mxu0 0.0
        %2766 = vmatmul.mubr.f32.gmra.mrb[0].mxu0 %v2628
        %v2767 = vpop.f32.mrb[0].mxu0
        %v2768 = vadd.f32 0.0, %v2767
        %v2769 = vpop.f32.mrb[0].mxu0
        %2770 = vmatprep.mubr.f32.mxu0 0.0
        %2771 = vmatmul.mubr.f32.gmra.mrb[0].mxu0 %v2631
        %v2772 = vpop.f32.mrb[0].mxu0
        %v2773 = vadd.f32 0.0, %v2772
        %v2774 = vpop.f32.mrb[0].mxu0
        %2775 = vmatprep.mubr.f32.mxu0 0.0
        %2776 = vmatmul.mubr.f32.gmra.mrb[0].mxu0 %v2634
        %v2777 = vpop.f32.mrb[0].mxu0
        %v2778 = vadd.f32 0.0, %v2777
        %v2779 = vpop.f32.mrb[0].mxu0
        %2780 = vmatprep.mubr.f32.mxu0 0.0
        %2781 = vmatmul.mubr.f32.gmra.mrb[0].mxu0 %v2637
        %v2782 = vpop.f32.mrb[0].mxu0
        %v2783 = vadd.f32 0.0, %v2782
        %v2784 = vpop.f32.mrb[0].mxu0
        %2785 = vmatprep.mubr.f32.mxu0 0.0
        %2786 = vmatmul.mubr.f32.gmra.mrb[0].mxu0 %v2640
        %v2787 = vpop.f32.mrb[0].mxu0
        %v2788 = vadd.f32 0.0, %v2787
        %v2789 = vpop.f32.mrb[0].mxu0
        %2790 = vmatprep.mubr.f32.mxu0 0.0
        %2791 = vmatmul.mubr.f32.gmra.mrb[0].mxu0 %v2643
        %v2792 = vpop.f32.mrb[0].mxu0
        %v2793 = vadd.f32 0.0, %v2792
        %v2794 = vpop.f32.mrb[0].mxu0
        %2795 = vmatprep.mubr.f32.mxu0 0.0
        %2796 = vmatmul.mubr.f32.gmra.mrb[0].mxu0 %v2646
        %v2797 = vpop.f32.mrb[0].mxu0
        %v2798 = vadd.f32 0.0, %v2797
        %v2799 = vpop.f32.mrb[0].mxu0
        %2800 = vmatprep.mubr.f32.mxu0 0.0
        %2801 = vmatmul.mubr.f32.gmra.mrb[0].mxu0 %v2649
        %v2802 = vpop.f32.mrb[0].mxu0
        %v2803 = vadd.f32 0.0, %v2802
        %v2804 = vpop.f32.mrb[0].mxu0
        %2805 = vdwg.mxu0
        %v2806 = vld [vmem:[%s12] sm:$0x1]
        %v2808 = vlaneseq
        %v2809 = vshrl.u32 %v2808, 7
        %v2810 = vsub.s32 0, %v2809
        %v2811 = vrot.slane %v2806, %v2810
        %v2813 = vld [vmem:[%s7] sm:$0xff]
        %v2814 = vld [vmem:[%s7 + $0x8] sm:$0xff]
        %v2815 = vld [vmem:[%s7 + $0x10] sm:$0xff]
        %v2816 = vld [vmem:[%s7 + $0x18] sm:$0xff]
        %v2817 = vld [vmem:[%s7 + $0x20] sm:$0xff]
        %v2818 = vld [vmem:[%s7 + $0x28] sm:$0xff]
        %v2819 = vld [vmem:[%s7 + $0x30] sm:$0xff]
        %v2820 = vld [vmem:[%s7 + $0x38] sm:$0xff]
        %v2821 = vld [vmem:[%s7 + $0x40] sm:$0xff]
        %v2822 = vld [vmem:[%s7 + $0x48] sm:$0xff]
        %v2823 = vld [vmem:[%s7 + $0x50] sm:$0xff]
        %v2824 = vld [vmem:[%s7 + $0x58] sm:$0xff]
        %v2825 = vld [vmem:[%s7 + $0x60] sm:$0xff]
        %v2826 = vld [vmem:[%s7 + $0x68] sm:$0xff]
        %v2827 = vld [vmem:[%s7 + $0x70] sm:$0xff]
        %v2828 = vld [vmem:[%s7 + $0x78] sm:$0xff]
        %2829 = vmatprep.subr.mxu0 0.0
        %2830 = vmatpush1.msra.mxu0 %v2813
        %2831 = vmatprep.subr.mxu0 0.0
        %2832 = vmatpush1.msra.mxu0 %v2814
        %2833 = vmatprep.subr.mxu0 0.0
        %2834 = vmatpush1.msra.mxu0 %v2815
        %2835 = vmatprep.subr.mxu0 0.0
        %2836 = vmatpush1.msra.mxu0 %v2816
        %2837 = vmatprep.subr.mxu0 0.0
        %2838 = vmatpush1.msra.mxu0 %v2817
        %2839 = vmatprep.subr.mxu0 0.0
        %2840 = vmatpush1.msra.mxu0 %v2818
        %2841 = vmatprep.subr.mxu0 0.0
        %2842 = vmatpush1.msra.mxu0 %v2819
        %2843 = vmatprep.subr.mxu0 0.0
        %2844 = vmatpush1.msra.mxu0 %v2820
        %2845 = vmatprep.subr.mxu0 0.0
        %2846 = vmatpush1.msra.mxu0 %v2821
        %2847 = vmatprep.subr.mxu0 0.0
        %2848 = vmatpush1.msra.mxu0 %v2822
        %2849 = vmatprep.subr.mxu0 0.0
        %2850 = vmatpush1.msra.mxu0 %v2823
        %2851 = vmatprep.subr.mxu0 0.0
        %2852 = vmatpush1.msra.mxu0 %v2824
        %2853 = vmatprep.subr.mxu0 0.0
        %2854 = vmatpush1.msra.mxu0 %v2825
        %2855 = vmatprep.subr.mxu0 0.0
        %2856 = vmatpush1.msra.mxu0 %v2826
        %2857 = vmatprep.subr.mxu0 0.0
        %2858 = vmatpush1.msra.mxu0 %v2827
        %2859 = vmatprep.subr.mxu0 0.0
        %2860 = vmatpush1.msra.mxu0 %v2828
        %2861 = vmatprep.subr.mxu0 0.0
        %2862 = vmatpush1.msra.mxu0 0.0
        %2863 = vmatprep.subr.mxu0 0.0
        %2864 = vmatpush1.msra.mxu0 0.0
        %2865 = vmatprep.subr.mxu0 0.0
        %2866 = vmatpush1.msra.mxu0 0.0
        %2867 = vmatprep.subr.mxu0 0.0
        %2868 = vmatpush1.msra.mxu0 0.0
        %2869 = vmatprep.subr.mxu0 0.0
        %2870 = vmatpush1.msra.mxu0 0.0
        %2871 = vmatprep.subr.mxu0 0.0
        %2872 = vmatpush1.msra.mxu0 0.0
        %2873 = vmatprep.subr.mxu0 0.0
        %2874 = vmatpush1.msra.mxu0 0.0
        %2875 = vmatprep.subr.mxu0 0.0
        %2876 = vmatpush1.msra.mxu0 0.0
        %2877 = vmatprep.subr.mxu0 0.0
        %2878 = vmatpush1.msra.mxu0 0.0
        %2879 = vmatprep.subr.mxu0 0.0
        %2880 = vmatpush1.msra.mxu0 0.0
        %2881 = vmatprep.subr.mxu0 0.0
        %2882 = vmatpush1.msra.mxu0 0.0
        %2883 = vmatprep.subr.mxu0 0.0
        %2884 = vmatpush1.msra.mxu0 0.0
        %2885 = vmatprep.subr.mxu0 0.0
        %2886 = vmatpush1.msra.mxu0 0.0
        %2887 = vmatprep.subr.mxu0 0.0
        %2888 = vmatpush1.msra.mxu0 0.0
        %2889 = vmatprep.subr.mxu0 0.0
        %2890 = vmatpush1.msra.mxu0 0.0
        %2891 = vmatprep.subr.mxu0 0.0
        %2892 = vmatpush1.msra.mxu0 0.0
        %2893 = vmatprep.mubr.f32.mxu0 0.0
        %2894 = vmatmul.mubr.f32.gmra.mrb[0].mxu0 %v2718
        %v2895 = vpop.f32.mrb[0].mxu0
        %v2896 = vadd.f32 0.0, %v2895
        %v2897 = vpop.f32.mrb[0].mxu0
        %2898 = vmatprep.mubr.f32.mxu0 0.0
        %2899 = vmatmul.mubr.f32.gmra.mrb[0].mxu0 %v2723
        %v2900 = vpop.f32.mrb[0].mxu0
        %v2901 = vadd.f32 0.0, %v2900
        %v2902 = vpop.f32.mrb[0].mxu0
        %2903 = vdwg.mxu0
        %v2904 = vadd.f32 %v2811, %v2896
        %v2905 = vadd.f32 %v2811, %v2901
        %v2906 = vld [vmem:[%s7 + $0x80] sm:$0xff]
        %v2907 = vld [vmem:[%s7 + $0x88] sm:$0xff]
        %v2908 = vld [vmem:[%s7 + $0x90] sm:$0xff]
        %v2909 = vld [vmem:[%s7 + $0x98] sm:$0xff]
        %v2910 = vld [vmem:[%s7 + $0xa0] sm:$0xff]
        %v2911 = vld [vmem:[%s7 + $0xa8] sm:$0xff]
        %v2912 = vld [vmem:[%s7 + $0xb0] sm:$0xff]
        %v2913 = vld [vmem:[%s7 + $0xb8] sm:$0xff]
        %v2914 = vld [vmem:[%s7 + $0xc0] sm:$0xff]
        %v2915 = vld [vmem:[%s7 + $0xc8] sm:$0xff]
        %v2916 = vld [vmem:[%s7 + $0xd0] sm:$0xff]
        %v2917 = vld [vmem:[%s7 + $0xd8] sm:$0xff]
        %v2918 = vld [vmem:[%s7 + $0xe0] sm:$0xff]
        %v2919 = vld [vmem:[%s7 + $0xe8] sm:$0xff]
        %v2920 = vld [vmem:[%s7 + $0xf0] sm:$0xff]
        %v2921 = vld [vmem:[%s7 + $0xf8] sm:$0xff]
        %2922 = vmatprep.subr.mxu0 0.0
        %2923 = vmatpush1.msra.mxu0 %v2906
        %2924 = vmatprep.subr.mxu0 0.0
        %2925 = vmatpush1.msra.mxu0 %v2907
        %2926 = vmatprep.subr.mxu0 0.0
        %2927 = vmatpush1.msra.mxu0 %v2908
        %2928 = vmatprep.subr.mxu0 0.0
        %2929 = vmatpush1.msra.mxu0 %v2909
        %2930 = vmatprep.subr.mxu0 0.0
        %2931 = vmatpush1.msra.mxu0 %v2910
        %2932 = vmatprep.subr.mxu0 0.0
        %2933 = vmatpush1.msra.mxu0 %v2911
        %2934 = vmatprep.subr.mxu0 0.0
        %2935 = vmatpush1.msra.mxu0 %v2912
        %2936 = vmatprep.subr.mxu0 0.0
        %2937 = vmatpush1.msra.mxu0 %v2913
        %2938 = vmatprep.subr.mxu0 0.0
        %2939 = vmatpush1.msra.mxu0 %v2914
        %2940 = vmatprep.subr.mxu0 0.0
        %2941 = vmatpush1.msra.mxu0 %v2915
        %2942 = vmatprep.subr.mxu0 0.0
        %2943 = vmatpush1.msra.mxu0 %v2916
        %2944 = vmatprep.subr.mxu0 0.0
        %2945 = vmatpush1.msra.mxu0 %v2917
        %2946 = vmatprep.subr.mxu0 0.0
        %2947 = vmatpush1.msra.mxu0 %v2918
        %2948 = vmatprep.subr.mxu0 0.0
        %2949 = vmatpush1.msra.mxu0 %v2919
        %2950 = vmatprep.subr.mxu0 0.0
        %2951 = vmatpush1.msra.mxu0 %v2920
        %2952 = vmatprep.subr.mxu0 0.0
        %2953 = vmatpush1.msra.mxu0 %v2921
        %2954 = vmatprep.subr.mxu0 0.0
        %2955 = vmatpush1.msra.mxu0 0.0
        %2956 = vmatprep.subr.mxu0 0.0
        %2957 = vmatpush1.msra.mxu0 0.0
        %2958 = vmatprep.subr.mxu0 0.0
        %2959 = vmatpush1.msra.mxu0 0.0
        %2960 = vmatprep.subr.mxu0 0.0
        %2961 = vmatpush1.msra.mxu0 0.0
        %2962 = vmatprep.subr.mxu0 0.0
        %2963 = vmatpush1.msra.mxu0 0.0
        %2964 = vmatprep.subr.mxu0 0.0
        %2965 = vmatpush1.msra.mxu0 0.0
        %2966 = vmatprep.subr.mxu0 0.0
        %2967 = vmatpush1.msra.mxu0 0.0
        %2968 = vmatprep.subr.mxu0 0.0
        %2969 = vmatpush1.msra.mxu0 0.0
        %2970 = vmatprep.subr.mxu0 0.0
        %2971 = vmatpush1.msra.mxu0 0.0
        %2972 = vmatprep.subr.mxu0 0.0
        %2973 = vmatpush1.msra.mxu0 0.0
        %2974 = vmatprep.subr.mxu0 0.0
        %2975 = vmatpush1.msra.mxu0 0.0
        %2976 = vmatprep.subr.mxu0 0.0
        %2977 = vmatpush1.msra.mxu0 0.0
        %2978 = vmatprep.subr.mxu0 0.0
        %2979 = vmatpush1.msra.mxu0 0.0
        %2980 = vmatprep.subr.mxu0 0.0
        %2981 = vmatpush1.msra.mxu0 0.0
        %2982 = vmatprep.subr.mxu0 0.0
        %2983 = vmatpush1.msra.mxu0 0.0
        %2984 = vmatprep.subr.mxu0 0.0
        %2985 = vmatpush1.msra.mxu0 0.0
        %2986 = vmatprep.mubr.f32.mxu0 0.0
        %2987 = vmatmul.mubr.f32.gmra.mrb[0].mxu0 %v2728
        %v2988 = vpop.f32.mrb[0].mxu0
        %v2989 = vadd.f32 0.0, %v2988
        %v2990 = vpop.f32.mrb[0].mxu0
        %2991 = vmatprep.mubr.f32.mxu0 0.0
        %2992 = vmatmul.mubr.f32.gmra.mrb[0].mxu0 %v2733
        %v2993 = vpop.f32.mrb[0].mxu0
        %v2994 = vadd.f32 0.0, %v2993
        %v2995 = vpop.f32.mrb[0].mxu0
        %2996 = vdwg.mxu0
        %v2997 = vadd.f32 %v2904, %v2989
        %v2998 = vadd.f32 %v2905, %v2994
        %v2999 = vld [vmem:[%s7 + $0x100] sm:$0xff]
        %v3000 = vld [vmem:[%s7 + $0x108] sm:$0xff]
        %v3001 = vld [vmem:[%s7 + $0x110] sm:$0xff]
        %v3002 = vld [vmem:[%s7 + $0x118] sm:$0xff]
        %v3003 = vld [vmem:[%s7 + $0x120] sm:$0xff]
        %v3004 = vld [vmem:[%s7 + $0x128] sm:$0xff]
        %v3005 = vld [vmem:[%s7 + $0x130] sm:$0xff]
        %v3006 = vld [vmem:[%s7 + $0x138] sm:$0xff]
        %v3007 = vld [vmem:[%s7 + $0x140] sm:$0xff]
        %v3008 = vld [vmem:[%s7 + $0x148] sm:$0xff]
        %v3009 = vld [vmem:[%s7 + $0x150] sm:$0xff]
        %v3010 = vld [vmem:[%s7 + $0x158] sm:$0xff]
        %v3011 = vld [vmem:[%s7 + $0x160] sm:$0xff]
        %v3012 = vld [vmem:[%s7 + $0x168] sm:$0xff]
        %v3013 = vld [vmem:[%s7 + $0x170] sm:$0xff]
        %v3014 = vld [vmem:[%s7 + $0x178] sm:$0xff]
        %3015 = vmatprep.subr.mxu0 0.0
        %3016 = vmatpush1.msra.mxu0 %v2999
        %3017 = vmatprep.subr.mxu0 0.0
        %3018 = vmatpush1.msra.mxu0 %v3000
        %3019 = vmatprep.subr.mxu0 0.0
        %3020 = vmatpush1.msra.mxu0 %v3001
        %3021 = vmatprep.subr.mxu0 0.0
        %3022 = vmatpush1.msra.mxu0 %v3002
        %3023 = vmatprep.subr.mxu0 0.0
        %3024 = vmatpush1.msra.mxu0 %v3003
        %3025 = vmatprep.subr.mxu0 0.0
        %3026 = vmatpush1.msra.mxu0 %v3004
        %3027 = vmatprep.subr.mxu0 0.0
        %3028 = vmatpush1.msra.mxu0 %v3005
        %3029 = vmatprep.subr.mxu0 0.0
        %3030 = vmatpush1.msra.mxu0 %v3006
        %3031 = vmatprep.subr.mxu0 0.0
        %3032 = vmatpush1.msra.mxu0 %v3007
        %3033 = vmatprep.subr.mxu0 0.0
        %3034 = vmatpush1.msra.mxu0 %v3008
        %3035 = vmatprep.subr.mxu0 0.0
        %3036 = vmatpush1.msra.mxu0 %v3009
        %3037 = vmatprep.subr.mxu0 0.0
        %3038 = vmatpush1.msra.mxu0 %v3010
        %3039 = vmatprep.subr.mxu0 0.0
        %3040 = vmatpush1.msra.mxu0 %v3011
        %3041 = vmatprep.subr.mxu0 0.0
        %3042 = vmatpush1.msra.mxu0 %v3012
        %3043 = vmatprep.subr.mxu0 0.0
        %3044 = vmatpush1.msra.mxu0 %v3013
        %3045 = vmatprep.subr.mxu0 0.0
        %3046 = vmatpush1.msra.mxu0 %v3014
        %3047 = vmatprep.subr.mxu0 0.0
        %3048 = vmatpush1.msra.mxu0 0.0
        %3049 = vmatprep.subr.mxu0 0.0
        %3050 = vmatpush1.msra.mxu0 0.0
        %3051 = vmatprep.subr.mxu0 0.0
        %3052 = vmatpush1.msra.mxu0 0.0
        %3053 = vmatprep.subr.mxu0 0.0
        %3054 = vmatpush1.msra.mxu0 0.0
        %3055 = vmatprep.subr.mxu0 0.0
        %3056 = vmatpush1.msra.mxu0 0.0
        %3057 = vmatprep.subr.mxu0 0.0
        %3058 = vmatpush1.msra.mxu0 0.0
        %3059 = vmatprep.subr.mxu0 0.0
        %3060 = vmatpush1.msra.mxu0 0.0
        %3061 = vmatprep.subr.mxu0 0.0
        %3062 = vmatpush1.msra.mxu0 0.0
        %3063 = vmatprep.subr.mxu0 0.0
        %3064 = vmatpush1.msra.mxu0 0.0
        %3065 = vmatprep.subr.mxu0 0.0
        %3066 = vmatpush1.msra.mxu0 0.0
        %3067 = vmatprep.subr.mxu0 0.0
        %3068 = vmatpush1.msra.mxu0 0.0
        %3069 = vmatprep.subr.mxu0 0.0
        %3070 = vmatpush1.msra.mxu0 0.0
        %3071 = vmatprep.subr.mxu0 0.0
        %3072 = vmatpush1.msra.mxu0 0.0
        %3073 = vmatprep.subr.mxu0 0.0
        %3074 = vmatpush1.msra.mxu0 0.0
        %3075 = vmatprep.subr.mxu0 0.0
        %3076 = vmatpush1.msra.mxu0 0.0
        %3077 = vmatprep.subr.mxu0 0.0
        %3078 = vmatpush1.msra.mxu0 0.0
        %3079 = vmatprep.mubr.f32.mxu0 0.0
        %3080 = vmatmul.mubr.f32.gmra.mrb[0].mxu0 %v2738
        %v3081 = vpop.f32.mrb[0].mxu0
        %v3082 = vadd.f32 0.0, %v3081
        %v3083 = vpop.f32.mrb[0].mxu0
        %3084 = vmatprep.mubr.f32.mxu0 0.0
        %3085 = vmatmul.mubr.f32.gmra.mrb[0].mxu0 %v2743
        %v3086 = vpop.f32.mrb[0].mxu0
        %v3087 = vadd.f32 0.0, %v3086
        %v3088 = vpop.f32.mrb[0].mxu0
        %3089 = vdwg.mxu0
        %v3090 = vadd.f32 %v2997, %v3082
        %v3091 = vadd.f32 %v2998, %v3087
        %v3092 = vld [vmem:[%s7 + $0x180] sm:$0xff]
        %v3093 = vld [vmem:[%s7 + $0x188] sm:$0xff]
        %v3094 = vld [vmem:[%s7 + $0x190] sm:$0xff]
        %v3095 = vld [vmem:[%s7 + $0x198] sm:$0xff]
        %v3096 = vld [vmem:[%s7 + $0x1a0] sm:$0xff]
        %v3097 = vld [vmem:[%s7 + $0x1a8] sm:$0xff]
        %v3098 = vld [vmem:[%s7 + $0x1b0] sm:$0xff]
        %v3099 = vld [vmem:[%s7 + $0x1b8] sm:$0xff]
        %v3100 = vld [vmem:[%s7 + $0x1c0] sm:$0xff]
        %v3101 = vld [vmem:[%s7 + $0x1c8] sm:$0xff]
        %v3102 = vld [vmem:[%s7 + $0x1d0] sm:$0xff]
        %v3103 = vld [vmem:[%s7 + $0x1d8] sm:$0xff]
        %v3104 = vld [vmem:[%s7 + $0x1e0] sm:$0xff]
        %v3105 = vld [vmem:[%s7 + $0x1e8] sm:$0xff]
        %v3106 = vld [vmem:[%s7 + $0x1f0] sm:$0xff]
        %v3107 = vld [vmem:[%s7 + $0x1f8] sm:$0xff]
        %3108 = vmatprep.subr.mxu0 0.0
        %3109 = vmatpush1.msra.mxu0 %v3092
        %3110 = vmatprep.subr.mxu0 0.0
        %3111 = vmatpush1.msra.mxu0 %v3093
        %3112 = vmatprep.subr.mxu0 0.0
        %3113 = vmatpush1.msra.mxu0 %v3094
        %3114 = vmatprep.subr.mxu0 0.0
        %3115 = vmatpush1.msra.mxu0 %v3095
        %3116 = vmatprep.subr.mxu0 0.0
        %3117 = vmatpush1.msra.mxu0 %v3096
        %3118 = vmatprep.subr.mxu0 0.0
        %3119 = vmatpush1.msra.mxu0 %v3097
        %3120 = vmatprep.subr.mxu0 0.0
        %3121 = vmatpush1.msra.mxu0 %v3098
        %3122 = vmatprep.subr.mxu0 0.0
        %3123 = vmatpush1.msra.mxu0 %v3099
        %3124 = vmatprep.subr.mxu0 0.0
        %3125 = vmatpush1.msra.mxu0 %v3100
        %3126 = vmatprep.subr.mxu0 0.0
        %3127 = vmatpush1.msra.mxu0 %v3101
        %3128 = vmatprep.subr.mxu0 0.0
        %3129 = vmatpush1.msra.mxu0 %v3102
        %3130 = vmatprep.subr.mxu0 0.0
        %3131 = vmatpush1.msra.mxu0 %v3103
        %3132 = vmatprep.subr.mxu0 0.0
        %3133 = vmatpush1.msra.mxu0 %v3104
        %3134 = vmatprep.subr.mxu0 0.0
        %3135 = vmatpush1.msra.mxu0 %v3105
        %3136 = vmatprep.subr.mxu0 0.0
        %3137 = vmatpush1.msra.mxu0 %v3106
        %3138 = vmatprep.subr.mxu0 0.0
        %3139 = vmatpush1.msra.mxu0 %v3107
        %3140 = vmatprep.subr.mxu0 0.0
        %3141 = vmatpush1.msra.mxu0 0.0
        %3142 = vmatprep.subr.mxu0 0.0
        %3143 = vmatpush1.msra.mxu0 0.0
        %3144 = vmatprep.subr.mxu0 0.0
        %3145 = vmatpush1.msra.mxu0 0.0
        %3146 = vmatprep.subr.mxu0 0.0
        %3147 = vmatpush1.msra.mxu0 0.0
        %3148 = vmatprep.subr.mxu0 0.0
        %3149 = vmatpush1.msra.mxu0 0.0
        %3150 = vmatprep.subr.mxu0 0.0
        %3151 = vmatpush1.msra.mxu0 0.0
        %3152 = vmatprep.subr.mxu0 0.0
        %3153 = vmatpush1.msra.mxu0 0.0
        %3154 = vmatprep.subr.mxu0 0.0
        %3155 = vmatpush1.msra.mxu0 0.0
        %3156 = vmatprep.subr.mxu0 0.0
        %3157 = vmatpush1.msra.mxu0 0.0
        %3158 = vmatprep.subr.mxu0 0.0
        %3159 = vmatpush1.msra.mxu0 0.0
        %3160 = vmatprep.subr.mxu0 0.0
        %3161 = vmatpush1.msra.mxu0 0.0
        %3162 = vmatprep.subr.mxu0 0.0
        %3163 = vmatpush1.msra.mxu0 0.0
        %3164 = vmatprep.subr.mxu0 0.0
        %3165 = vmatpush1.msra.mxu0 0.0
        %3166 = vmatprep.subr.mxu0 0.0
        %3167 = vmatpush1.msra.mxu0 0.0
        %3168 = vmatprep.subr.mxu0 0.0
        %3169 = vmatpush1.msra.mxu0 0.0
        %3170 = vmatprep.subr.mxu0 0.0
        %3171 = vmatpush1.msra.mxu0 0.0
        %3172 = vmatprep.mubr.f32.mxu0 0.0
        %3173 = vmatmul.mubr.f32.gmra.mrb[0].mxu0 %v2748
        %v3174 = vpop.f32.mrb[0].mxu0
        %v3175 = vadd.f32 0.0, %v3174
        %v3176 = vpop.f32.mrb[0].mxu0
        %3177 = vmatprep.mubr.f32.mxu0 0.0
        %3178 = vmatmul.mubr.f32.gmra.mrb[0].mxu0 %v2753
        %v3179 = vpop.f32.mrb[0].mxu0
        %v3180 = vadd.f32 0.0, %v3179
        %v3181 = vpop.f32.mrb[0].mxu0
        %3182 = vdwg.mxu0
        %v3183 = vadd.f32 %v3090, %v3175
        %v3184 = vadd.f32 %v3091, %v3180
        %v3185 = vld [vmem:[%s7 + $0x200] sm:$0xff]
        %v3186 = vld [vmem:[%s7 + $0x208] sm:$0xff]
        %v3187 = vld [vmem:[%s7 + $0x210] sm:$0xff]
        %v3188 = vld [vmem:[%s7 + $0x218] sm:$0xff]
        %v3189 = vld [vmem:[%s7 + $0x220] sm:$0xff]
        %v3190 = vld [vmem:[%s7 + $0x228] sm:$0xff]
        %v3191 = vld [vmem:[%s7 + $0x230] sm:$0xff]
        %v3192 = vld [vmem:[%s7 + $0x238] sm:$0xff]
        %v3193 = vld [vmem:[%s7 + $0x240] sm:$0xff]
        %v3194 = vld [vmem:[%s7 + $0x248] sm:$0xff]
        %v3195 = vld [vmem:[%s7 + $0x250] sm:$0xff]
        %v3196 = vld [vmem:[%s7 + $0x258] sm:$0xff]
        %v3197 = vld [vmem:[%s7 + $0x260] sm:$0xff]
        %v3198 = vld [vmem:[%s7 + $0x268] sm:$0xff]
        %v3199 = vld [vmem:[%s7 + $0x270] sm:$0xff]
        %v3200 = vld [vmem:[%s7 + $0x278] sm:$0xff]
        %3201 = vmatprep.subr.mxu0 0.0
        %3202 = vmatpush1.msra.mxu0 %v3185
        %3203 = vmatprep.subr.mxu0 0.0
        %3204 = vmatpush1.msra.mxu0 %v3186
        %3205 = vmatprep.subr.mxu0 0.0
        %3206 = vmatpush1.msra.mxu0 %v3187
        %3207 = vmatprep.subr.mxu0 0.0
        %3208 = vmatpush1.msra.mxu0 %v3188
        %3209 = vmatprep.subr.mxu0 0.0
        %3210 = vmatpush1.msra.mxu0 %v3189
        %3211 = vmatprep.subr.mxu0 0.0
        %3212 = vmatpush1.msra.mxu0 %v3190
        %3213 = vmatprep.subr.mxu0 0.0
        %3214 = vmatpush1.msra.mxu0 %v3191
        %3215 = vmatprep.subr.mxu0 0.0
        %3216 = vmatpush1.msra.mxu0 %v3192
        %3217 = vmatprep.subr.mxu0 0.0
        %3218 = vmatpush1.msra.mxu0 %v3193
        %3219 = vmatprep.subr.mxu0 0.0
        %3220 = vmatpush1.msra.mxu0 %v3194
        %3221 = vmatprep.subr.mxu0 0.0
        %3222 = vmatpush1.msra.mxu0 %v3195
        %3223 = vmatprep.subr.mxu0 0.0
        %3224 = vmatpush1.msra.mxu0 %v3196
        %3225 = vmatprep.subr.mxu0 0.0
        %3226 = vmatpush1.msra.mxu0 %v3197
        %3227 = vmatprep.subr.mxu0 0.0
        %3228 = vmatpush1.msra.mxu0 %v3198
        %3229 = vmatprep.subr.mxu0 0.0
        %3230 = vmatpush1.msra.mxu0 %v3199
        %3231 = vmatprep.subr.mxu0 0.0
        %3232 = vmatpush1.msra.mxu0 %v3200
        %3233 = vmatprep.subr.mxu0 0.0
        %3234 = vmatpush1.msra.mxu0 0.0
        %3235 = vmatprep.subr.mxu0 0.0
        %3236 = vmatpush1.msra.mxu0 0.0
        %3237 = vmatprep.subr.mxu0 0.0
        %3238 = vmatpush1.msra.mxu0 0.0
        %3239 = vmatprep.subr.mxu0 0.0
        %3240 = vmatpush1.msra.mxu0 0.0
        %3241 = vmatprep.subr.mxu0 0.0
        %3242 = vmatpush1.msra.mxu0 0.0
        %3243 = vmatprep.subr.mxu0 0.0
        %3244 = vmatpush1.msra.mxu0 0.0
        %3245 = vmatprep.subr.mxu0 0.0
        %3246 = vmatpush1.msra.mxu0 0.0
        %3247 = vmatprep.subr.mxu0 0.0
        %3248 = vmatpush1.msra.mxu0 0.0
        %3249 = vmatprep.subr.mxu0 0.0
        %3250 = vmatpush1.msra.mxu0 0.0
        %3251 = vmatprep.subr.mxu0 0.0
        %3252 = vmatpush1.msra.mxu0 0.0
        %3253 = vmatprep.subr.mxu0 0.0
        %3254 = vmatpush1.msra.mxu0 0.0
        %3255 = vmatprep.subr.mxu0 0.0
        %3256 = vmatpush1.msra.mxu0 0.0
        %3257 = vmatprep.subr.mxu0 0.0
        %3258 = vmatpush1.msra.mxu0 0.0
        %3259 = vmatprep.subr.mxu0 0.0
        %3260 = vmatpush1.msra.mxu0 0.0
        %3261 = vmatprep.subr.mxu0 0.0
        %3262 = vmatpush1.msra.mxu0 0.0
        %3263 = vmatprep.subr.mxu0 0.0
        %3264 = vmatpush1.msra.mxu0 0.0
        %3265 = vmatprep.mubr.f32.mxu0 0.0
        %3266 = vmatmul.mubr.f32.gmra.mrb[0].mxu0 %v2758
        %v3267 = vpop.f32.mrb[0].mxu0
        %v3268 = vadd.f32 0.0, %v3267
        %v3269 = vpop.f32.mrb[0].mxu0
        %3270 = vmatprep.mubr.f32.mxu0 0.0
        %3271 = vmatmul.mubr.f32.gmra.mrb[0].mxu0 %v2763
        %v3272 = vpop.f32.mrb[0].mxu0
        %v3273 = vadd.f32 0.0, %v3272
        %v3274 = vpop.f32.mrb[0].mxu0
        %3275 = vdwg.mxu0
        %v3276 = vadd.f32 %v3183, %v3268
        %v3277 = vadd.f32 %v3184, %v3273
        %v3278 = vld [vmem:[%s7 + $0x280] sm:$0xff]
        %v3279 = vld [vmem:[%s7 + $0x288] sm:$0xff]
        %v3280 = vld [vmem:[%s7 + $0x290] sm:$0xff]
        %v3281 = vld [vmem:[%s7 + $0x298] sm:$0xff]
        %v3282 = vld [vmem:[%s7 + $0x2a0] sm:$0xff]
        %v3283 = vld [vmem:[%s7 + $0x2a8] sm:$0xff]
        %v3284 = vld [vmem:[%s7 + $0x2b0] sm:$0xff]
        %v3285 = vld [vmem:[%s7 + $0x2b8] sm:$0xff]
        %v3286 = vld [vmem:[%s7 + $0x2c0] sm:$0xff]
        %v3287 = vld [vmem:[%s7 + $0x2c8] sm:$0xff]
        %v3288 = vld [vmem:[%s7 + $0x2d0] sm:$0xff]
        %v3289 = vld [vmem:[%s7 + $0x2d8] sm:$0xff]
        %v3290 = vld [vmem:[%s7 + $0x2e0] sm:$0xff]
        %v3291 = vld [vmem:[%s7 + $0x2e8] sm:$0xff]
        %v3292 = vld [vmem:[%s7 + $0x2f0] sm:$0xff]
        %v3293 = vld [vmem:[%s7 + $0x2f8] sm:$0xff]
        %3294 = vmatprep.subr.mxu0 0.0
        %3295 = vmatpush1.msra.mxu0 %v3278
        %3296 = vmatprep.subr.mxu0 0.0
        %3297 = vmatpush1.msra.mxu0 %v3279
        %3298 = vmatprep.subr.mxu0 0.0
        %3299 = vmatpush1.msra.mxu0 %v3280
        %3300 = vmatprep.subr.mxu0 0.0
        %3301 = vmatpush1.msra.mxu0 %v3281
        %3302 = vmatprep.subr.mxu0 0.0
        %3303 = vmatpush1.msra.mxu0 %v3282
        %3304 = vmatprep.subr.mxu0 0.0
        %3305 = vmatpush1.msra.mxu0 %v3283
        %3306 = vmatprep.subr.mxu0 0.0
        %3307 = vmatpush1.msra.mxu0 %v3284
        %3308 = vmatprep.subr.mxu0 0.0
        %3309 = vmatpush1.msra.mxu0 %v3285
        %3310 = vmatprep.subr.mxu0 0.0
        %3311 = vmatpush1.msra.mxu0 %v3286
        %3312 = vmatprep.subr.mxu0 0.0
        %3313 = vmatpush1.msra.mxu0 %v3287
        %3314 = vmatprep.subr.mxu0 0.0
        %3315 = vmatpush1.msra.mxu0 %v3288
        %3316 = vmatprep.subr.mxu0 0.0
        %3317 = vmatpush1.msra.mxu0 %v3289
        %3318 = vmatprep.subr.mxu0 0.0
        %3319 = vmatpush1.msra.mxu0 %v3290
        %3320 = vmatprep.subr.mxu0 0.0
        %3321 = vmatpush1.msra.mxu0 %v3291
        %3322 = vmatprep.subr.mxu0 0.0
        %3323 = vmatpush1.msra.mxu0 %v3292
        %3324 = vmatprep.subr.mxu0 0.0
        %3325 = vmatpush1.msra.mxu0 %v3293
        %3326 = vmatprep.subr.mxu0 0.0
        %3327 = vmatpush1.msra.mxu0 0.0
        %3328 = vmatprep.subr.mxu0 0.0
        %3329 = vmatpush1.msra.mxu0 0.0
        %3330 = vmatprep.subr.mxu0 0.0
        %3331 = vmatpush1.msra.mxu0 0.0
        %3332 = vmatprep.subr.mxu0 0.0
        %3333 = vmatpush1.msra.mxu0 0.0
        %3334 = vmatprep.subr.mxu0 0.0
        %3335 = vmatpush1.msra.mxu0 0.0
        %3336 = vmatprep.subr.mxu0 0.0
        %3337 = vmatpush1.msra.mxu0 0.0
        %3338 = vmatprep.subr.mxu0 0.0
        %3339 = vmatpush1.msra.mxu0 0.0
        %3340 = vmatprep.subr.mxu0 0.0
        %3341 = vmatpush1.msra.mxu0 0.0
        %3342 = vmatprep.subr.mxu0 0.0
        %3343 = vmatpush1.msra.mxu0 0.0
        %3344 = vmatprep.subr.mxu0 0.0
        %3345 = vmatpush1.msra.mxu0 0.0
        %3346 = vmatprep.subr.mxu0 0.0
        %3347 = vmatpush1.msra.mxu0 0.0
        %3348 = vmatprep.subr.mxu0 0.0
        %3349 = vmatpush1.msra.mxu0 0.0
        %3350 = vmatprep.subr.mxu0 0.0
        %3351 = vmatpush1.msra.mxu0 0.0
        %3352 = vmatprep.subr.mxu0 0.0
        %3353 = vmatpush1.msra.mxu0 0.0
        %3354 = vmatprep.subr.mxu0 0.0
        %3355 = vmatpush1.msra.mxu0 0.0
        %3356 = vmatprep.subr.mxu0 0.0
        %3357 = vmatpush1.msra.mxu0 0.0
        %3358 = vmatprep.mubr.f32.mxu0 0.0
        %3359 = vmatmul.mubr.f32.gmra.mrb[0].mxu0 %v2768
        %v3360 = vpop.f32.mrb[0].mxu0
        %v3361 = vadd.f32 0.0, %v3360
        %v3362 = vpop.f32.mrb[0].mxu0
        %3363 = vmatprep.mubr.f32.mxu0 0.0
        %3364 = vmatmul.mubr.f32.gmra.mrb[0].mxu0 %v2773
        %v3365 = vpop.f32.mrb[0].mxu0
        %v3366 = vadd.f32 0.0, %v3365
        %v3367 = vpop.f32.mrb[0].mxu0
        %3368 = vdwg.mxu0
        %v3369 = vadd.f32 %v3276, %v3361
        %v3370 = vadd.f32 %v3277, %v3366
        %v3371 = vld [vmem:[%s7 + $0x300] sm:$0xff]
        %v3372 = vld [vmem:[%s7 + $0x308] sm:$0xff]
        %v3373 = vld [vmem:[%s7 + $0x310] sm:$0xff]
        %v3374 = vld [vmem:[%s7 + $0x318] sm:$0xff]
        %v3375 = vld [vmem:[%s7 + $0x320] sm:$0xff]
        %v3376 = vld [vmem:[%s7 + $0x328] sm:$0xff]
        %v3377 = vld [vmem:[%s7 + $0x330] sm:$0xff]
        %v3378 = vld [vmem:[%s7 + $0x338] sm:$0xff]
        %v3379 = vld [vmem:[%s7 + $0x340] sm:$0xff]
        %v3380 = vld [vmem:[%s7 + $0x348] sm:$0xff]
        %v3381 = vld [vmem:[%s7 + $0x350] sm:$0xff]
        %v3382 = vld [vmem:[%s7 + $0x358] sm:$0xff]
        %v3383 = vld [vmem:[%s7 + $0x360] sm:$0xff]
        %v3384 = vld [vmem:[%s7 + $0x368] sm:$0xff]
        %v3385 = vld [vmem:[%s7 + $0x370] sm:$0xff]
        %v3386 = vld [vmem:[%s7 + $0x378] sm:$0xff]
        %3387 = vmatprep.subr.mxu0 0.0
        %3388 = vmatpush1.msra.mxu0 %v3371
        %3389 = vmatprep.subr.mxu0 0.0
        %3390 = vmatpush1.msra.mxu0 %v3372
        %3391 = vmatprep.subr.mxu0 0.0
        %3392 = vmatpush1.msra.mxu0 %v3373
        %3393 = vmatprep.subr.mxu0 0.0
        %3394 = vmatpush1.msra.mxu0 %v3374
        %3395 = vmatprep.subr.mxu0 0.0
        %3396 = vmatpush1.msra.mxu0 %v3375
        %3397 = vmatprep.subr.mxu0 0.0
        %3398 = vmatpush1.msra.mxu0 %v3376
        %3399 = vmatprep.subr.mxu0 0.0
        %3400 = vmatpush1.msra.mxu0 %v3377
        %3401 = vmatprep.subr.mxu0 0.0
        %3402 = vmatpush1.msra.mxu0 %v3378
        %3403 = vmatprep.subr.mxu0 0.0
        %3404 = vmatpush1.msra.mxu0 %v3379
        %3405 = vmatprep.subr.mxu0 0.0
        %3406 = vmatpush1.msra.mxu0 %v3380
        %3407 = vmatprep.subr.mxu0 0.0
        %3408 = vmatpush1.msra.mxu0 %v3381
        %3409 = vmatprep.subr.mxu0 0.0
        %3410 = vmatpush1.msra.mxu0 %v3382
        %3411 = vmatprep.subr.mxu0 0.0
        %3412 = vmatpush1.msra.mxu0 %v3383
        %3413 = vmatprep.subr.mxu0 0.0
        %3414 = vmatpush1.msra.mxu0 %v3384
        %3415 = vmatprep.subr.mxu0 0.0
        %3416 = vmatpush1.msra.mxu0 %v3385
        %3417 = vmatprep.subr.mxu0 0.0
        %3418 = vmatpush1.msra.mxu0 %v3386
        %3419 = vmatprep.subr.mxu0 0.0
        %3420 = vmatpush1.msra.mxu0 0.0
        %3421 = vmatprep.subr.mxu0 0.0
        %3422 = vmatpush1.msra.mxu0 0.0
        %3423 = vmatprep.subr.mxu0 0.0
        %3424 = vmatpush1.msra.mxu0 0.0
        %3425 = vmatprep.subr.mxu0 0.0
        %3426 = vmatpush1.msra.mxu0 0.0
        %3427 = vmatprep.subr.mxu0 0.0
        %3428 = vmatpush1.msra.mxu0 0.0
        %3429 = vmatprep.subr.mxu0 0.0
        %3430 = vmatpush1.msra.mxu0 0.0
        %3431 = vmatprep.subr.mxu0 0.0
        %3432 = vmatpush1.msra.mxu0 0.0
        %3433 = vmatprep.subr.mxu0 0.0
        %3434 = vmatpush1.msra.mxu0 0.0
        %3435 = vmatprep.subr.mxu0 0.0
        %3436 = vmatpush1.msra.mxu0 0.0
        %3437 = vmatprep.subr.mxu0 0.0
        %3438 = vmatpush1.msra.mxu0 0.0
        %3439 = vmatprep.subr.mxu0 0.0
        %3440 = vmatpush1.msra.mxu0 0.0
        %3441 = vmatprep.subr.mxu0 0.0
        %3442 = vmatpush1.msra.mxu0 0.0
        %3443 = vmatprep.subr.mxu0 0.0
        %3444 = vmatpush1.msra.mxu0 0.0
        %3445 = vmatprep.subr.mxu0 0.0
        %3446 = vmatpush1.msra.mxu0 0.0
        %3447 = vmatprep.subr.mxu0 0.0
        %3448 = vmatpush1.msra.mxu0 0.0
        %3449 = vmatprep.subr.mxu0 0.0
        %3450 = vmatpush1.msra.mxu0 0.0
        %3451 = vmatprep.mubr.f32.mxu0 0.0
        %3452 = vmatmul.mubr.f32.gmra.mrb[0].mxu0 %v2778
        %v3453 = vpop.f32.mrb[0].mxu0
        %v3454 = vadd.f32 0.0, %v3453
        %v3455 = vpop.f32.mrb[0].mxu0
        %3456 = vmatprep.mubr.f32.mxu0 0.0
        %3457 = vmatmul.mubr.f32.gmra.mrb[0].mxu0 %v2783
        %v3458 = vpop.f32.mrb[0].mxu0
        %v3459 = vadd.f32 0.0, %v3458
        %v3460 = vpop.f32.mrb[0].mxu0
        %3461 = vdwg.mxu0
        %v3462 = vadd.f32 %v3369, %v3454
        %v3463 = vadd.f32 %v3370, %v3459
        %v3464 = vld [vmem:[%s7 + $0x380] sm:$0xff]
        %v3465 = vld [vmem:[%s7 + $0x388] sm:$0xff]
        %v3466 = vld [vmem:[%s7 + $0x390] sm:$0xff]
        %v3467 = vld [vmem:[%s7 + $0x398] sm:$0xff]
        %v3468 = vld [vmem:[%s7 + $0x3a0] sm:$0xff]
        %v3469 = vld [vmem:[%s7 + $0x3a8] sm:$0xff]
        %v3470 = vld [vmem:[%s7 + $0x3b0] sm:$0xff]
        %v3471 = vld [vmem:[%s7 + $0x3b8] sm:$0xff]
        %v3472 = vld [vmem:[%s7 + $0x3c0] sm:$0xff]
        %v3473 = vld [vmem:[%s7 + $0x3c8] sm:$0xff]
        %v3474 = vld [vmem:[%s7 + $0x3d0] sm:$0xff]
        %v3475 = vld [vmem:[%s7 + $0x3d8] sm:$0xff]
        %v3476 = vld [vmem:[%s7 + $0x3e0] sm:$0xff]
        %v3477 = vld [vmem:[%s7 + $0x3e8] sm:$0xff]
        %v3478 = vld [vmem:[%s7 + $0x3f0] sm:$0xff]
        %v3479 = vld [vmem:[%s7 + $0x3f8] sm:$0xff]
        %3480 = vmatprep.subr.mxu0 0.0
        %3481 = vmatpush1.msra.mxu0 %v3464
        %3482 = vmatprep.subr.mxu0 0.0
        %3483 = vmatpush1.msra.mxu0 %v3465
        %3484 = vmatprep.subr.mxu0 0.0
        %3485 = vmatpush1.msra.mxu0 %v3466
        %3486 = vmatprep.subr.mxu0 0.0
        %3487 = vmatpush1.msra.mxu0 %v3467
        %3488 = vmatprep.subr.mxu0 0.0
        %3489 = vmatpush1.msra.mxu0 %v3468
        %3490 = vmatprep.subr.mxu0 0.0
        %3491 = vmatpush1.msra.mxu0 %v3469
        %3492 = vmatprep.subr.mxu0 0.0
        %3493 = vmatpush1.msra.mxu0 %v3470
        %3494 = vmatprep.subr.mxu0 0.0
        %3495 = vmatpush1.msra.mxu0 %v3471
        %3496 = vmatprep.subr.mxu0 0.0
        %3497 = vmatpush1.msra.mxu0 %v3472
        %3498 = vmatprep.subr.mxu0 0.0
        %3499 = vmatpush1.msra.mxu0 %v3473
        %3500 = vmatprep.subr.mxu0 0.0
        %3501 = vmatpush1.msra.mxu0 %v3474
        %3502 = vmatprep.subr.mxu0 0.0
        %3503 = vmatpush1.msra.mxu0 %v3475
        %3504 = vmatprep.subr.mxu0 0.0
        %3505 = vmatpush1.msra.mxu0 %v3476
        %3506 = vmatprep.subr.mxu0 0.0
        %3507 = vmatpush1.msra.mxu0 %v3477
        %3508 = vmatprep.subr.mxu0 0.0
        %3509 = vmatpush1.msra.mxu0 %v3478
        %3510 = vmatprep.subr.mxu0 0.0
        %3511 = vmatpush1.msra.mxu0 %v3479
        %3512 = vmatprep.subr.mxu0 0.0
        %3513 = vmatpush1.msra.mxu0 0.0
        %3514 = vmatprep.subr.mxu0 0.0
        %3515 = vmatpush1.msra.mxu0 0.0
        %3516 = vmatprep.subr.mxu0 0.0
        %3517 = vmatpush1.msra.mxu0 0.0
        %3518 = vmatprep.subr.mxu0 0.0
        %3519 = vmatpush1.msra.mxu0 0.0
        %3520 = vmatprep.subr.mxu0 0.0
        %3521 = vmatpush1.msra.mxu0 0.0
        %3522 = vmatprep.subr.mxu0 0.0
        %3523 = vmatpush1.msra.mxu0 0.0
        %3524 = vmatprep.subr.mxu0 0.0
        %3525 = vmatpush1.msra.mxu0 0.0
        %3526 = vmatprep.subr.mxu0 0.0
        %3527 = vmatpush1.msra.mxu0 0.0
        %3528 = vmatprep.subr.mxu0 0.0
        %3529 = vmatpush1.msra.mxu0 0.0
        %3530 = vmatprep.subr.mxu0 0.0
        %3531 = vmatpush1.msra.mxu0 0.0
        %3532 = vmatprep.subr.mxu0 0.0
        %3533 = vmatpush1.msra.mxu0 0.0
        %3534 = vmatprep.subr.mxu0 0.0
        %3535 = vmatpush1.msra.mxu0 0.0
        %3536 = vmatprep.subr.mxu0 0.0
        %3537 = vmatpush1.msra.mxu0 0.0
        %3538 = vmatprep.subr.mxu0 0.0
        %3539 = vmatpush1.msra.mxu0 0.0
        %3540 = vmatprep.subr.mxu0 0.0
        %3541 = vmatpush1.msra.mxu0 0.0
        %3542 = vmatprep.subr.mxu0 0.0
        %3543 = vmatpush1.msra.mxu0 0.0
        %3544 = vmatprep.mubr.f32.mxu0 0.0
        %3545 = vmatmul.mubr.f32.gmra.mrb[0].mxu0 %v2788
        %v3546 = vpop.f32.mrb[0].mxu0
        %v3547 = vadd.f32 0.0, %v3546
        %v3548 = vpop.f32.mrb[0].mxu0
        %3549 = vmatprep.mubr.f32.mxu0 0.0
        %3550 = vmatmul.mubr.f32.gmra.mrb[0].mxu0 %v2793
        %v3551 = vpop.f32.mrb[0].mxu0
        %v3552 = vadd.f32 0.0, %v3551
        %v3553 = vpop.f32.mrb[0].mxu0
        %3554 = vdwg.mxu0
        %v3555 = vadd.f32 %v3462, %v3547
        %v3556 = vadd.f32 %v3463, %v3552
        %v3557 = vld [vmem:[%s7 + $0x400] sm:$0xff]
        %v3558 = vld [vmem:[%s7 + $0x408] sm:$0xff]
        %v3559 = vld [vmem:[%s7 + $0x410] sm:$0xff]
        %v3560 = vld [vmem:[%s7 + $0x418] sm:$0xff]
        %v3561 = vld [vmem:[%s7 + $0x420] sm:$0xff]
        %v3562 = vld [vmem:[%s7 + $0x428] sm:$0xff]
        %v3563 = vld [vmem:[%s7 + $0x430] sm:$0xff]
        %v3564 = vld [vmem:[%s7 + $0x438] sm:$0xff]
        %v3565 = vld [vmem:[%s7 + $0x440] sm:$0xff]
        %v3566 = vld [vmem:[%s7 + $0x448] sm:$0xff]
        %v3567 = vld [vmem:[%s7 + $0x450] sm:$0xff]
        %v3568 = vld [vmem:[%s7 + $0x458] sm:$0xff]
        %v3569 = vld [vmem:[%s7 + $0x460] sm:$0xff]
        %v3570 = vld [vmem:[%s7 + $0x468] sm:$0xff]
        %v3571 = vld [vmem:[%s7 + $0x470] sm:$0xff]
        %v3572 = vld [vmem:[%s7 + $0x478] sm:$0xff]
        %3573 = vmatprep.subr.mxu0 0.0
        %3574 = vmatpush1.msra.mxu0 %v3557
        %3575 = vmatprep.subr.mxu0 0.0
        %3576 = vmatpush1.msra.mxu0 %v3558
        %3577 = vmatprep.subr.mxu0 0.0
        %3578 = vmatpush1.msra.mxu0 %v3559
        %3579 = vmatprep.subr.mxu0 0.0
        %3580 = vmatpush1.msra.mxu0 %v3560
        %3581 = vmatprep.subr.mxu0 0.0
        %3582 = vmatpush1.msra.mxu0 %v3561
        %3583 = vmatprep.subr.mxu0 0.0
        %3584 = vmatpush1.msra.mxu0 %v3562
        %3585 = vmatprep.subr.mxu0 0.0
        %3586 = vmatpush1.msra.mxu0 %v3563
        %3587 = vmatprep.subr.mxu0 0.0
        %3588 = vmatpush1.msra.mxu0 %v3564
        %3589 = vmatprep.subr.mxu0 0.0
        %3590 = vmatpush1.msra.mxu0 %v3565
        %3591 = vmatprep.subr.mxu0 0.0
        %3592 = vmatpush1.msra.mxu0 %v3566
        %3593 = vmatprep.subr.mxu0 0.0
        %3594 = vmatpush1.msra.mxu0 %v3567
        %3595 = vmatprep.subr.mxu0 0.0
        %3596 = vmatpush1.msra.mxu0 %v3568
        %3597 = vmatprep.subr.mxu0 0.0
        %3598 = vmatpush1.msra.mxu0 %v3569
        %3599 = vmatprep.subr.mxu0 0.0
        %3600 = vmatpush1.msra.mxu0 %v3570
        %3601 = vmatprep.subr.mxu0 0.0
        %3602 = vmatpush1.msra.mxu0 %v3571
        %3603 = vmatprep.subr.mxu0 0.0
        %3604 = vmatpush1.msra.mxu0 %v3572
        %3605 = vmatprep.subr.mxu0 0.0
        %3606 = vmatpush1.msra.mxu0 0.0
        %3607 = vmatprep.subr.mxu0 0.0
        %3608 = vmatpush1.msra.mxu0 0.0
        %3609 = vmatprep.subr.mxu0 0.0
        %3610 = vmatpush1.msra.mxu0 0.0
        %3611 = vmatprep.subr.mxu0 0.0
        %3612 = vmatpush1.msra.mxu0 0.0
        %3613 = vmatprep.subr.mxu0 0.0
        %3614 = vmatpush1.msra.mxu0 0.0
        %3615 = vmatprep.subr.mxu0 0.0
        %3616 = vmatpush1.msra.mxu0 0.0
        %3617 = vmatprep.subr.mxu0 0.0
        %3618 = vmatpush1.msra.mxu0 0.0
        %3619 = vmatprep.subr.mxu0 0.0
        %3620 = vmatpush1.msra.mxu0 0.0
        %3621 = vmatprep.subr.mxu0 0.0
        %3622 = vmatpush1.msra.mxu0 0.0
        %3623 = vmatprep.subr.mxu0 0.0
        %3624 = vmatpush1.msra.mxu0 0.0
        %3625 = vmatprep.subr.mxu0 0.0
        %3626 = vmatpush1.msra.mxu0 0.0
        %3627 = vmatprep.subr.mxu0 0.0
        %3628 = vmatpush1.msra.mxu0 0.0
        %3629 = vmatprep.subr.mxu0 0.0
        %3630 = vmatpush1.msra.mxu0 0.0
        %3631 = vmatprep.subr.mxu0 0.0
        %3632 = vmatpush1.msra.mxu0 0.0
        %3633 = vmatprep.subr.mxu0 0.0
        %3634 = vmatpush1.msra.mxu0 0.0
        %3635 = vmatprep.subr.mxu0 0.0
        %3636 = vmatpush1.msra.mxu0 0.0
        %3637 = vmatprep.mubr.f32.mxu0 0.0
        %3638 = vmatmul.mubr.f32.gmra.mrb[0].mxu0 %v2798
        %v3639 = vpop.f32.mrb[0].mxu0
        %v3640 = vadd.f32 0.0, %v3639
        %v3641 = vpop.f32.mrb[0].mxu0
        %3642 = vmatprep.mubr.f32.mxu0 0.0
        %3643 = vmatmul.mubr.f32.gmra.mrb[0].mxu0 %v2803
        %v3644 = vpop.f32.mrb[0].mxu0
        %v3645 = vadd.f32 0.0, %v3644
        %v3646 = vpop.f32.mrb[0].mxu0
        %3647 = vdwg.mxu0
        %v3648 = vadd.f32 %v3555, %v3640
        %v3649 = vadd.f32 %v3556, %v3645
        %v3650 = vmax.f32 %v3648, 0.0
        %v3651 = vmax.f32 %v3649, 0.0
        %v3652 = vld [vmem:[%s3] sm:$0xff]
        %v3653 = vld [vmem:[%s3 + $0x8] sm:$0xff]
        %v3654 = vld [vmem:[%s3 + $0x10] sm:$0xff]
        %v3655 = vld [vmem:[%s3 + $0x18] sm:$0xff]
        %v3656 = vld [vmem:[%s3 + $0x20] sm:$0xff]
        %v3657 = vld [vmem:[%s3 + $0x28] sm:$0xff]
        %v3658 = vld [vmem:[%s3 + $0x30] sm:$0xff]
        %v3659 = vld [vmem:[%s3 + $0x38] sm:$0xff]
        %v3660 = vld [vmem:[%s3 + $0x40] sm:$0xff]
        %vm3661 = vcmask 130048
        %v3663 = vsel %vm3661, %v3652, 0
        %v3666 = vsel %vm3661, %v3653, 0
        %v3669 = vsel %vm3661, %v3654, 0
        %v3672 = vsel %vm3661, %v3655, 0
        %v3675 = vsel %vm3661, %v3656, 0
        %v3678 = vsel %vm3661, %v3657, 0
        %v3681 = vsel %vm3661, %v3658, 0
        %v3684 = vsel %vm3661, %v3659, 0
        %v3687 = vsel %vm3661, %v3660, 0
        %3689 = vmatprep.subr.mxu0 0.0
        %3690 = vmatpush1.msra.mxu0 %v3650
        %3691 = vmatprep.subr.mxu0 0.0
        %3692 = vmatpush1.msra.mxu0 %v3651
        %3693 = vmatprep.subr.mxu0 0.0
        %3694 = vmatpush1.msra.mxu0 0.0
        %3695 = vmatprep.subr.mxu0 0.0
        %3696 = vmatpush1.msra.mxu0 0.0
        %3697 = vmatprep.subr.mxu0 0.0
        %3698 = vmatpush1.msra.mxu0 0.0
        %3699 = vmatprep.subr.mxu0 0.0
        %3700 = vmatpush1.msra.mxu0 0.0
        %3701 = vmatprep.subr.mxu0 0.0
        %3702 = vmatpush1.msra.mxu0 0.0
        %3703 = vmatprep.subr.mxu0 0.0
        %3704 = vmatpush1.msra.mxu0 0.0
        %3705 = vmatprep.subr.mxu0 0.0
        %3706 = vmatpush1.msra.mxu0 0.0
        %3707 = vmatprep.subr.mxu0 0.0
        %3708 = vmatpush1.msra.mxu0 0.0
        %3709 = vmatprep.subr.mxu0 0.0
        %3710 = vmatpush1.msra.mxu0 0.0
        %3711 = vmatprep.subr.mxu0 0.0
        %3712 = vmatpush1.msra.mxu0 0.0
        %3713 = vmatprep.subr.mxu0 0.0
        %3714 = vmatpush1.msra.mxu0 0.0
        %3715 = vmatprep.subr.mxu0 0.0
        %3716 = vmatpush1.msra.mxu0 0.0
        %3717 = vmatprep.subr.mxu0 0.0
        %3718 = vmatpush1.msra.mxu0 0.0
        %3719 = vmatprep.subr.mxu0 0.0
        %3720 = vmatpush1.msra.mxu0 0.0
        %3721 = vmatprep.subr.mxu0 0.0
        %3722 = vmatpush1.msra.mxu0 0.0
        %3723 = vmatprep.subr.mxu0 0.0
        %3724 = vmatpush1.msra.mxu0 0.0
        %3725 = vmatprep.subr.mxu0 0.0
        %3726 = vmatpush1.msra.mxu0 0.0
        %3727 = vmatprep.subr.mxu0 0.0
        %3728 = vmatpush1.msra.mxu0 0.0
        %3729 = vmatprep.subr.mxu0 0.0
        %3730 = vmatpush1.msra.mxu0 0.0
        %3731 = vmatprep.subr.mxu0 0.0
        %3732 = vmatpush1.msra.mxu0 0.0
        %3733 = vmatprep.subr.mxu0 0.0
        %3734 = vmatpush1.msra.mxu0 0.0
        %3735 = vmatprep.subr.mxu0 0.0
        %3736 = vmatpush1.msra.mxu0 0.0
        %3737 = vmatprep.subr.mxu0 0.0
        %3738 = vmatpush1.msra.mxu0 0.0
        %3739 = vmatprep.subr.mxu0 0.0
        %3740 = vmatpush1.msra.mxu0 0.0
        %3741 = vmatprep.subr.mxu0 0.0
        %3742 = vmatpush1.msra.mxu0 0.0
        %3743 = vmatprep.subr.mxu0 0.0
        %3744 = vmatpush1.msra.mxu0 0.0
        %3745 = vmatprep.subr.mxu0 0.0
        %3746 = vmatpush1.msra.mxu0 0.0
        %3747 = vmatprep.subr.mxu0 0.0
        %3748 = vmatpush1.msra.mxu0 0.0
        %3749 = vmatprep.subr.mxu0 0.0
        %3750 = vmatpush1.msra.mxu0 0.0
        %3751 = vmatprep.subr.mxu0 0.0
        %3752 = vmatpush1.msra.mxu0 0.0
        %3753 = vmatprep.mubr.f32.mxu0 0.0
        %3754 = vmatmul.mubr.f32.gmra.mrb[0].mxu0 %v3663
        %v3755 = vpop.f32.mrb[0].mxu0
        %v3756 = vadd.f32 0.0, %v3755
        %v3757 = vpop.f32.mrb[0].mxu0
        %3758 = vmatprep.mubr.f32.mxu0 0.0
        %3759 = vmatmul.mubr.f32.gmra.mrb[0].mxu0 %v3666
        %v3760 = vpop.f32.mrb[0].mxu0
        %v3761 = vadd.f32 0.0, %v3760
        %v3762 = vpop.f32.mrb[0].mxu0
        %3763 = vmatprep.mubr.f32.mxu0 0.0
        %3764 = vmatmul.mubr.f32.gmra.mrb[0].mxu0 %v3669
        %v3765 = vpop.f32.mrb[0].mxu0
        %v3766 = vadd.f32 0.0, %v3765
        %v3767 = vpop.f32.mrb[0].mxu0
        %3768 = vmatprep.mubr.f32.mxu0 0.0
        %3769 = vmatmul.mubr.f32.gmra.mrb[0].mxu0 %v3672
        %v3770 = vpop.f32.mrb[0].mxu0
        %v3771 = vadd.f32 0.0, %v3770
        %v3772 = vpop.f32.mrb[0].mxu0
        %3773 = vmatprep.mubr.f32.mxu0 0.0
        %3774 = vmatmul.mubr.f32.gmra.mrb[0].mxu0 %v3675
        %v3775 = vpop.f32.mrb[0].mxu0
        %v3776 = vadd.f32 0.0, %v3775
        %v3777 = vpop.f32.mrb[0].mxu0
        %3778 = vmatprep.mubr.f32.mxu0 0.0
        %3779 = vmatmul.mubr.f32.gmra.mrb[0].mxu0 %v3678
        %v3780 = vpop.f32.mrb[0].mxu0
        %v3781 = vadd.f32 0.0, %v3780
        %v3782 = vpop.f32.mrb[0].mxu0
        %3783 = vmatprep.mubr.f32.mxu0 0.0
        %3784 = vmatmul.mubr.f32.gmra.mrb[0].mxu0 %v3681
        %v3785 = vpop.f32.mrb[0].mxu0
        %v3786 = vadd.f32 0.0, %v3785
        %v3787 = vpop.f32.mrb[0].mxu0
        %3788 = vmatprep.mubr.f32.mxu0 0.0
        %3789 = vmatmul.mubr.f32.gmra.mrb[0].mxu0 %v3684
        %v3790 = vpop.f32.mrb[0].mxu0
        %v3791 = vadd.f32 0.0, %v3790
        %v3792 = vpop.f32.mrb[0].mxu0
        %3793 = vmatprep.mubr.f32.mxu0 0.0
        %3794 = vmatmul.mubr.f32.gmra.mrb[0].mxu0 %v3687
        %v3795 = vpop.f32.mrb[0].mxu0
        %v3796 = vadd.f32 0.0, %v3795
        %v3797 = vpop.f32.mrb[0].mxu0
        %3798 = vdwg.mxu0
        %v3799 = vld [vmem:[%s13] sm:$0x1]
        %v3801 = vlaneseq
        %v3802 = vshrl.u32 %v3801, 7
        %v3803 = vsub.s32 0, %v3802
        %v3804 = vrot.slane %v3799, %v3803
        %v3806 = vld [vmem:[%s8] sm:$0xff]
        %v3807 = vld [vmem:[%s8 + $0x8] sm:$0xff]
        %v3808 = vld [vmem:[%s8 + $0x10] sm:$0xff]
        %v3809 = vld [vmem:[%s8 + $0x18] sm:$0xff]
        %v3810 = vld [vmem:[%s8 + $0x20] sm:$0xff]
        %v3811 = vld [vmem:[%s8 + $0x28] sm:$0xff]
        %v3812 = vld [vmem:[%s8 + $0x30] sm:$0xff]
        %v3813 = vld [vmem:[%s8 + $0x38] sm:$0xff]
        %v3815 = vsel %vm2596, %v3756, 0
        %3817 = vmatprep.subr.mxu0 0.0
        %3818 = vmatpush1.msra.mxu0 %v3806
        %3819 = vmatprep.subr.mxu0 0.0
        %3820 = vmatpush1.msra.mxu0 %v3807
        %3821 = vmatprep.subr.mxu0 0.0
        %3822 = vmatpush1.msra.mxu0 %v3808
        %3823 = vmatprep.subr.mxu0 0.0
        %3824 = vmatpush1.msra.mxu0 %v3809
        %3825 = vmatprep.subr.mxu0 0.0
        %3826 = vmatpush1.msra.mxu0 %v3810
        %3827 = vmatprep.subr.mxu0 0.0
        %3828 = vmatpush1.msra.mxu0 %v3811
        %3829 = vmatprep.subr.mxu0 0.0
        %3830 = vmatpush1.msra.mxu0 %v3812
        %3831 = vmatprep.subr.mxu0 0.0
        %3832 = vmatpush1.msra.mxu0 %v3813
        %3833 = vmatprep.subr.mxu0 0.0
        %3834 = vmatpush1.msra.mxu0 0.0
        %3835 = vmatprep.subr.mxu0 0.0
        %3836 = vmatpush1.msra.mxu0 0.0
        %3837 = vmatprep.subr.mxu0 0.0
        %3838 = vmatpush1.msra.mxu0 0.0
        %3839 = vmatprep.subr.mxu0 0.0
        %3840 = vmatpush1.msra.mxu0 0.0
        %3841 = vmatprep.subr.mxu0 0.0
        %3842 = vmatpush1.msra.mxu0 0.0
        %3843 = vmatprep.subr.mxu0 0.0
        %3844 = vmatpush1.msra.mxu0 0.0
        %3845 = vmatprep.subr.mxu0 0.0
        %3846 = vmatpush1.msra.mxu0 0.0
        %3847 = vmatprep.subr.mxu0 0.0
        %3848 = vmatpush1.msra.mxu0 0.0
        %3849 = vmatprep.subr.mxu0 0.0
        %3850 = vmatpush1.msra.mxu0 0.0
        %3851 = vmatprep.subr.mxu0 0.0
        %3852 = vmatpush1.msra.mxu0 0.0
        %3853 = vmatprep.subr.mxu0 0.0
        %3854 = vmatpush1.msra.mxu0 0.0
        %3855 = vmatprep.subr.mxu0 0.0
        %3856 = vmatpush1.msra.mxu0 0.0
        %3857 = vmatprep.subr.mxu0 0.0
        %3858 = vmatpush1.msra.mxu0 0.0
        %3859 = vmatprep.subr.mxu0 0.0
        %3860 = vmatpush1.msra.mxu0 0.0
        %3861 = vmatprep.subr.mxu0 0.0
        %3862 = vmatpush1.msra.mxu0 0.0
        %3863 = vmatprep.subr.mxu0 0.0
        %3864 = vmatpush1.msra.mxu0 0.0
        %3865 = vmatprep.subr.mxu0 0.0
        %3866 = vmatpush1.msra.mxu0 0.0
        %3867 = vmatprep.subr.mxu0 0.0
        %3868 = vmatpush1.msra.mxu0 0.0
        %3869 = vmatprep.subr.mxu0 0.0
        %3870 = vmatpush1.msra.mxu0 0.0
        %3871 = vmatprep.subr.mxu0 0.0
        %3872 = vmatpush1.msra.mxu0 0.0
        %3873 = vmatprep.subr.mxu0 0.0
        %3874 = vmatpush1.msra.mxu0 0.0
        %3875 = vmatprep.subr.mxu0 0.0
        %3876 = vmatpush1.msra.mxu0 0.0
        %3877 = vmatprep.subr.mxu0 0.0
        %3878 = vmatpush1.msra.mxu0 0.0
        %3879 = vmatprep.subr.mxu0 0.0
        %3880 = vmatpush1.msra.mxu0 0.0
        %3881 = vmatprep.mubr.f32.mxu0 0.0
        %3882 = vmatmul.mubr.f32.gmra.mrb[0].mxu0 %v3815
        %v3883 = vpop.f32.mrb[0].mxu0
        %v3884 = vadd.f32 0.0, %v3883
        %v3885 = vpop.f32.mrb[0].mxu0
        %3886 = vdwg.mxu0
        %v3887 = vadd.f32 %v3804, %v3884
        %v3888 = vld [vmem:[%s8 + $0x40] sm:$0xff]
        %v3889 = vld [vmem:[%s8 + $0x48] sm:$0xff]
        %v3890 = vld [vmem:[%s8 + $0x50] sm:$0xff]
        %v3891 = vld [vmem:[%s8 + $0x58] sm:$0xff]
        %v3892 = vld [vmem:[%s8 + $0x60] sm:$0xff]
        %v3893 = vld [vmem:[%s8 + $0x68] sm:$0xff]
        %v3894 = vld [vmem:[%s8 + $0x70] sm:$0xff]
        %v3895 = vld [vmem:[%s8 + $0x78] sm:$0xff]
        %v3897 = vsel %vm2596, %v3761, 0
        %3899 = vmatprep.subr.mxu0 0.0
        %3900 = vmatpush1.msra.mxu0 %v3888
        %3901 = vmatprep.subr.mxu0 0.0
        %3902 = vmatpush1.msra.mxu0 %v3889
        %3903 = vmatprep.subr.mxu0 0.0
        %3904 = vmatpush1.msra.mxu0 %v3890
        %3905 = vmatprep.subr.mxu0 0.0
        %3906 = vmatpush1.msra.mxu0 %v3891
        %3907 = vmatprep.subr.mxu0 0.0
        %3908 = vmatpush1.msra.mxu0 %v3892
        %3909 = vmatprep.subr.mxu0 0.0
        %3910 = vmatpush1.msra.mxu0 %v3893
        %3911 = vmatprep.subr.mxu0 0.0
        %3912 = vmatpush1.msra.mxu0 %v3894
        %3913 = vmatprep.subr.mxu0 0.0
        %3914 = vmatpush1.msra.mxu0 %v3895
        %3915 = vmatprep.subr.mxu0 0.0
        %3916 = vmatpush1.msra.mxu0 0.0
        %3917 = vmatprep.subr.mxu0 0.0
        %3918 = vmatpush1.msra.mxu0 0.0
        %3919 = vmatprep.subr.mxu0 0.0
        %3920 = vmatpush1.msra.mxu0 0.0
        %3921 = vmatprep.subr.mxu0 0.0
        %3922 = vmatpush1.msra.mxu0 0.0
        %3923 = vmatprep.subr.mxu0 0.0
        %3924 = vmatpush1.msra.mxu0 0.0
        %3925 = vmatprep.subr.mxu0 0.0
        %3926 = vmatpush1.msra.mxu0 0.0
        %3927 = vmatprep.subr.mxu0 0.0
        %3928 = vmatpush1.msra.mxu0 0.0
        %3929 = vmatprep.subr.mxu0 0.0
        %3930 = vmatpush1.msra.mxu0 0.0
        %3931 = vmatprep.subr.mxu0 0.0
        %3932 = vmatpush1.msra.mxu0 0.0
        %3933 = vmatprep.subr.mxu0 0.0
        %3934 = vmatpush1.msra.mxu0 0.0
        %3935 = vmatprep.subr.mxu0 0.0
        %3936 = vmatpush1.msra.mxu0 0.0
        %3937 = vmatprep.subr.mxu0 0.0
        %3938 = vmatpush1.msra.mxu0 0.0
        %3939 = vmatprep.subr.mxu0 0.0
        %3940 = vmatpush1.msra.mxu0 0.0
        %3941 = vmatprep.subr.mxu0 0.0
        %3942 = vmatpush1.msra.mxu0 0.0
        %3943 = vmatprep.subr.mxu0 0.0
        %3944 = vmatpush1.msra.mxu0 0.0
        %3945 = vmatprep.subr.mxu0 0.0
        %3946 = vmatpush1.msra.mxu0 0.0
        %3947 = vmatprep.subr.mxu0 0.0
        %3948 = vmatpush1.msra.mxu0 0.0
        %3949 = vmatprep.subr.mxu0 0.0
        %3950 = vmatpush1.msra.mxu0 0.0
        %3951 = vmatprep.subr.mxu0 0.0
        %3952 = vmatpush1.msra.mxu0 0.0
        %3953 = vmatprep.subr.mxu0 0.0
        %3954 = vmatpush1.msra.mxu0 0.0
        %3955 = vmatprep.subr.mxu0 0.0
        %3956 = vmatpush1.msra.mxu0 0.0
        %3957 = vmatprep.subr.mxu0 0.0
        %3958 = vmatpush1.msra.mxu0 0.0
        %3959 = vmatprep.subr.mxu0 0.0
        %3960 = vmatpush1.msra.mxu0 0.0
        %3961 = vmatprep.subr.mxu0 0.0
        %3962 = vmatpush1.msra.mxu0 0.0
        %3963 = vmatprep.mubr.f32.mxu0 0.0
        %3964 = vmatmul.mubr.f32.gmra.mrb[0].mxu0 %v3897
        %v3965 = vpop.f32.mrb[0].mxu0
        %v3966 = vadd.f32 0.0, %v3965
        %v3967 = vpop.f32.mrb[0].mxu0
        %3968 = vdwg.mxu0
        %v3969 = vadd.f32 %v3887, %v3966
        %v3970 = vld [vmem:[%s8 + $0x80] sm:$0xff]
        %v3971 = vld [vmem:[%s8 + $0x88] sm:$0xff]
        %v3972 = vld [vmem:[%s8 + $0x90] sm:$0xff]
        %v3973 = vld [vmem:[%s8 + $0x98] sm:$0xff]
        %v3974 = vld [vmem:[%s8 + $0xa0] sm:$0xff]
        %v3975 = vld [vmem:[%s8 + $0xa8] sm:$0xff]
        %v3976 = vld [vmem:[%s8 + $0xb0] sm:$0xff]
        %v3977 = vld [vmem:[%s8 + $0xb8] sm:$0xff]
        %v3979 = vsel %vm2596, %v3766, 0
        %3981 = vmatprep.subr.mxu0 0.0
        %3982 = vmatpush1.msra.mxu0 %v3970
        %3983 = vmatprep.subr.mxu0 0.0
        %3984 = vmatpush1.msra.mxu0 %v3971
        %3985 = vmatprep.subr.mxu0 0.0
        %3986 = vmatpush1.msra.mxu0 %v3972
        %3987 = vmatprep.subr.mxu0 0.0
        %3988 = vmatpush1.msra.mxu0 %v3973
        %3989 = vmatprep.subr.mxu0 0.0
        %3990 = vmatpush1.msra.mxu0 %v3974
        %3991 = vmatprep.subr.mxu0 0.0
        %3992 = vmatpush1.msra.mxu0 %v3975
        %3993 = vmatprep.subr.mxu0 0.0
        %3994 = vmatpush1.msra.mxu0 %v3976
        %3995 = vmatprep.subr.mxu0 0.0
        %3996 = vmatpush1.msra.mxu0 %v3977
        %3997 = vmatprep.subr.mxu0 0.0
        %3998 = vmatpush1.msra.mxu0 0.0
        %3999 = vmatprep.subr.mxu0 0.0
        %4000 = vmatpush1.msra.mxu0 0.0
        %4001 = vmatprep.subr.mxu0 0.0
        %4002 = vmatpush1.msra.mxu0 0.0
        %4003 = vmatprep.subr.mxu0 0.0
        %4004 = vmatpush1.msra.mxu0 0.0
        %4005 = vmatprep.subr.mxu0 0.0
        %4006 = vmatpush1.msra.mxu0 0.0
        %4007 = vmatprep.subr.mxu0 0.0
        %4008 = vmatpush1.msra.mxu0 0.0
        %4009 = vmatprep.subr.mxu0 0.0
        %4010 = vmatpush1.msra.mxu0 0.0
        %4011 = vmatprep.subr.mxu0 0.0
        %4012 = vmatpush1.msra.mxu0 0.0
        %4013 = vmatprep.subr.mxu0 0.0
        %4014 = vmatpush1.msra.mxu0 0.0
        %4015 = vmatprep.subr.mxu0 0.0
        %4016 = vmatpush1.msra.mxu0 0.0
        %4017 = vmatprep.subr.mxu0 0.0
        %4018 = vmatpush1.msra.mxu0 0.0
        %4019 = vmatprep.subr.mxu0 0.0
        %4020 = vmatpush1.msra.mxu0 0.0
        %4021 = vmatprep.subr.mxu0 0.0
        %4022 = vmatpush1.msra.mxu0 0.0
        %4023 = vmatprep.subr.mxu0 0.0
        %4024 = vmatpush1.msra.mxu0 0.0
        %4025 = vmatprep.subr.mxu0 0.0
        %4026 = vmatpush1.msra.mxu0 0.0
        %4027 = vmatprep.subr.mxu0 0.0
        %4028 = vmatpush1.msra.mxu0 0.0
        %4029 = vmatprep.subr.mxu0 0.0
        %4030 = vmatpush1.msra.mxu0 0.0
        %4031 = vmatprep.subr.mxu0 0.0
        %4032 = vmatpush1.msra.mxu0 0.0
        %4033 = vmatprep.subr.mxu0 0.0
        %4034 = vmatpush1.msra.mxu0 0.0
        %4035 = vmatprep.subr.mxu0 0.0
        %4036 = vmatpush1.msra.mxu0 0.0
        %4037 = vmatprep.subr.mxu0 0.0
        %4038 = vmatpush1.msra.mxu0 0.0
        %4039 = vmatprep.subr.mxu0 0.0
        %4040 = vmatpush1.msra.mxu0 0.0
        %4041 = vmatprep.subr.mxu0 0.0
        %4042 = vmatpush1.msra.mxu0 0.0
        %4043 = vmatprep.subr.mxu0 0.0
        %4044 = vmatpush1.msra.mxu0 0.0
        %4045 = vmatprep.mubr.f32.mxu0 0.0
        %4046 = vmatmul.mubr.f32.gmra.mrb[0].mxu0 %v3979
        %v4047 = vpop.f32.mrb[0].mxu0
        %v4048 = vadd.f32 0.0, %v4047
        %v4049 = vpop.f32.mrb[0].mxu0
        %4050 = vdwg.mxu0
        %v4051 = vadd.f32 %v3969, %v4048
        %v4052 = vld [vmem:[%s8 + $0xc0] sm:$0xff]
        %v4053 = vld [vmem:[%s8 + $0xc8] sm:$0xff]
        %v4054 = vld [vmem:[%s8 + $0xd0] sm:$0xff]
        %v4055 = vld [vmem:[%s8 + $0xd8] sm:$0xff]
        %v4056 = vld [vmem:[%s8 + $0xe0] sm:$0xff]
        %v4057 = vld [vmem:[%s8 + $0xe8] sm:$0xff]
        %v4058 = vld [vmem:[%s8 + $0xf0] sm:$0xff]
        %v4059 = vld [vmem:[%s8 + $0xf8] sm:$0xff]
        %v4061 = vsel %vm2596, %v3771, 0
        %4063 = vmatprep.subr.mxu0 0.0
        %4064 = vmatpush1.msra.mxu0 %v4052
        %4065 = vmatprep.subr.mxu0 0.0
        %4066 = vmatpush1.msra.mxu0 %v4053
        %4067 = vmatprep.subr.mxu0 0.0
        %4068 = vmatpush1.msra.mxu0 %v4054
        %4069 = vmatprep.subr.mxu0 0.0
        %4070 = vmatpush1.msra.mxu0 %v4055
        %4071 = vmatprep.subr.mxu0 0.0
        %4072 = vmatpush1.msra.mxu0 %v4056
        %4073 = vmatprep.subr.mxu0 0.0
        %4074 = vmatpush1.msra.mxu0 %v4057
        %4075 = vmatprep.subr.mxu0 0.0
        %4076 = vmatpush1.msra.mxu0 %v4058
        %4077 = vmatprep.subr.mxu0 0.0
        %4078 = vmatpush1.msra.mxu0 %v4059
        %4079 = vmatprep.subr.mxu0 0.0
        %4080 = vmatpush1.msra.mxu0 0.0
        %4081 = vmatprep.subr.mxu0 0.0
        %4082 = vmatpush1.msra.mxu0 0.0
        %4083 = vmatprep.subr.mxu0 0.0
        %4084 = vmatpush1.msra.mxu0 0.0
        %4085 = vmatprep.subr.mxu0 0.0
        %4086 = vmatpush1.msra.mxu0 0.0
        %4087 = vmatprep.subr.mxu0 0.0
        %4088 = vmatpush1.msra.mxu0 0.0
        %4089 = vmatprep.subr.mxu0 0.0
        %4090 = vmatpush1.msra.mxu0 0.0
        %4091 = vmatprep.subr.mxu0 0.0
        %4092 = vmatpush1.msra.mxu0 0.0
        %4093 = vmatprep.subr.mxu0 0.0
        %4094 = vmatpush1.msra.mxu0 0.0
        %4095 = vmatprep.subr.mxu0 0.0
        %4096 = vmatpush1.msra.mxu0 0.0
        %4097 = vmatprep.subr.mxu0 0.0
        %4098 = vmatpush1.msra.mxu0 0.0
        %4099 = vmatprep.subr.mxu0 0.0
        %4100 = vmatpush1.msra.mxu0 0.0
        %4101 = vmatprep.subr.mxu0 0.0
        %4102 = vmatpush1.msra.mxu0 0.0
        %4103 = vmatprep.subr.mxu0 0.0
        %4104 = vmatpush1.msra.mxu0 0.0
        %4105 = vmatprep.subr.mxu0 0.0
        %4106 = vmatpush1.msra.mxu0 0.0
        %4107 = vmatprep.subr.mxu0 0.0
        %4108 = vmatpush1.msra.mxu0 0.0
        %4109 = vmatprep.subr.mxu0 0.0
        %4110 = vmatpush1.msra.mxu0 0.0
        %4111 = vmatprep.subr.mxu0 0.0
        %4112 = vmatpush1.msra.mxu0 0.0
        %4113 = vmatprep.subr.mxu0 0.0
        %4114 = vmatpush1.msra.mxu0 0.0
        %4115 = vmatprep.subr.mxu0 0.0
        %4116 = vmatpush1.msra.mxu0 0.0
        %4117 = vmatprep.subr.mxu0 0.0
        %4118 = vmatpush1.msra.mxu0 0.0
        %4119 = vmatprep.subr.mxu0 0.0
        %4120 = vmatpush1.msra.mxu0 0.0
        %4121 = vmatprep.subr.mxu0 0.0
        %4122 = vmatpush1.msra.mxu0 0.0
        %4123 = vmatprep.subr.mxu0 0.0
        %4124 = vmatpush1.msra.mxu0 0.0
        %4125 = vmatprep.subr.mxu0 0.0
        %4126 = vmatpush1.msra.mxu0 0.0
        %4127 = vmatprep.mubr.f32.mxu0 0.0
        %4128 = vmatmul.mubr.f32.gmra.mrb[0].mxu0 %v4061
        %v4129 = vpop.f32.mrb[0].mxu0
        %v4130 = vadd.f32 0.0, %v4129
        %v4131 = vpop.f32.mrb[0].mxu0
        %4132 = vdwg.mxu0
        %v4133 = vadd.f32 %v4051, %v4130
        %v4134 = vld [vmem:[%s8 + $0x100] sm:$0xff]
        %v4135 = vld [vmem:[%s8 + $0x108] sm:$0xff]
        %v4136 = vld [vmem:[%s8 + $0x110] sm:$0xff]
        %v4137 = vld [vmem:[%s8 + $0x118] sm:$0xff]
        %v4138 = vld [vmem:[%s8 + $0x120] sm:$0xff]
        %v4139 = vld [vmem:[%s8 + $0x128] sm:$0xff]
        %v4140 = vld [vmem:[%s8 + $0x130] sm:$0xff]
        %v4141 = vld [vmem:[%s8 + $0x138] sm:$0xff]
        %v4143 = vsel %vm2596, %v3776, 0
        %4145 = vmatprep.subr.mxu0 0.0
        %4146 = vmatpush1.msra.mxu0 %v4134
        %4147 = vmatprep.subr.mxu0 0.0
        %4148 = vmatpush1.msra.mxu0 %v4135
        %4149 = vmatprep.subr.mxu0 0.0
        %4150 = vmatpush1.msra.mxu0 %v4136
        %4151 = vmatprep.subr.mxu0 0.0
        %4152 = vmatpush1.msra.mxu0 %v4137
        %4153 = vmatprep.subr.mxu0 0.0
        %4154 = vmatpush1.msra.mxu0 %v4138
        %4155 = vmatprep.subr.mxu0 0.0
        %4156 = vmatpush1.msra.mxu0 %v4139
        %4157 = vmatprep.subr.mxu0 0.0
        %4158 = vmatpush1.msra.mxu0 %v4140
        %4159 = vmatprep.subr.mxu0 0.0
        %4160 = vmatpush1.msra.mxu0 %v4141
        %4161 = vmatprep.subr.mxu0 0.0
        %4162 = vmatpush1.msra.mxu0 0.0
        %4163 = vmatprep.subr.mxu0 0.0
        %4164 = vmatpush1.msra.mxu0 0.0
        %4165 = vmatprep.subr.mxu0 0.0
        %4166 = vmatpush1.msra.mxu0 0.0
        %4167 = vmatprep.subr.mxu0 0.0
        %4168 = vmatpush1.msra.mxu0 0.0
        %4169 = vmatprep.subr.mxu0 0.0
        %4170 = vmatpush1.msra.mxu0 0.0
        %4171 = vmatprep.subr.mxu0 0.0
        %4172 = vmatpush1.msra.mxu0 0.0
        %4173 = vmatprep.subr.mxu0 0.0
        %4174 = vmatpush1.msra.mxu0 0.0
        %4175 = vmatprep.subr.mxu0 0.0
        %4176 = vmatpush1.msra.mxu0 0.0
        %4177 = vmatprep.subr.mxu0 0.0
        %4178 = vmatpush1.msra.mxu0 0.0
        %4179 = vmatprep.subr.mxu0 0.0
        %4180 = vmatpush1.msra.mxu0 0.0
        %4181 = vmatprep.subr.mxu0 0.0
        %4182 = vmatpush1.msra.mxu0 0.0
        %4183 = vmatprep.subr.mxu0 0.0
        %4184 = vmatpush1.msra.mxu0 0.0
        %4185 = vmatprep.subr.mxu0 0.0
        %4186 = vmatpush1.msra.mxu0 0.0
        %4187 = vmatprep.subr.mxu0 0.0
        %4188 = vmatpush1.msra.mxu0 0.0
        %4189 = vmatprep.subr.mxu0 0.0
        %4190 = vmatpush1.msra.mxu0 0.0
        %4191 = vmatprep.subr.mxu0 0.0
        %4192 = vmatpush1.msra.mxu0 0.0
        %4193 = vmatprep.subr.mxu0 0.0
        %4194 = vmatpush1.msra.mxu0 0.0
        %4195 = vmatprep.subr.mxu0 0.0
        %4196 = vmatpush1.msra.mxu0 0.0
        %4197 = vmatprep.subr.mxu0 0.0
        %4198 = vmatpush1.msra.mxu0 0.0
        %4199 = vmatprep.subr.mxu0 0.0
        %4200 = vmatpush1.msra.mxu0 0.0
        %4201 = vmatprep.subr.mxu0 0.0
        %4202 = vmatpush1.msra.mxu0 0.0
        %4203 = vmatprep.subr.mxu0 0.0
        %4204 = vmatpush1.msra.mxu0 0.0
        %4205 = vmatprep.subr.mxu0 0.0
        %4206 = vmatpush1.msra.mxu0 0.0
        %4207 = vmatprep.subr.mxu0 0.0
        %4208 = vmatpush1.msra.mxu0 0.0
        %4209 = vmatprep.mubr.f32.mxu0 0.0
        %4210 = vmatmul.mubr.f32.gmra.mrb[0].mxu0 %v4143
        %v4211 = vpop.f32.mrb[0].mxu0
        %v4212 = vadd.f32 0.0, %v4211
        %v4213 = vpop.f32.mrb[0].mxu0
        %4214 = vdwg.mxu0
        %v4215 = vadd.f32 %v4133, %v4212
        %v4216 = vld [vmem:[%s8 + $0x140] sm:$0xff]
        %v4217 = vld [vmem:[%s8 + $0x148] sm:$0xff]
        %v4218 = vld [vmem:[%s8 + $0x150] sm:$0xff]
        %v4219 = vld [vmem:[%s8 + $0x158] sm:$0xff]
        %v4220 = vld [vmem:[%s8 + $0x160] sm:$0xff]
        %v4221 = vld [vmem:[%s8 + $0x168] sm:$0xff]
        %v4222 = vld [vmem:[%s8 + $0x170] sm:$0xff]
        %v4223 = vld [vmem:[%s8 + $0x178] sm:$0xff]
        %v4225 = vsel %vm2596, %v3781, 0
        %4227 = vmatprep.subr.mxu0 0.0
        %4228 = vmatpush1.msra.mxu0 %v4216
        %4229 = vmatprep.subr.mxu0 0.0
        %4230 = vmatpush1.msra.mxu0 %v4217
        %4231 = vmatprep.subr.mxu0 0.0
        %4232 = vmatpush1.msra.mxu0 %v4218
        %4233 = vmatprep.subr.mxu0 0.0
        %4234 = vmatpush1.msra.mxu0 %v4219
        %4235 = vmatprep.subr.mxu0 0.0
        %4236 = vmatpush1.msra.mxu0 %v4220
        %4237 = vmatprep.subr.mxu0 0.0
        %4238 = vmatpush1.msra.mxu0 %v4221
        %4239 = vmatprep.subr.mxu0 0.0
        %4240 = vmatpush1.msra.mxu0 %v4222
        %4241 = vmatprep.subr.mxu0 0.0
        %4242 = vmatpush1.msra.mxu0 %v4223
        %4243 = vmatprep.subr.mxu0 0.0
        %4244 = vmatpush1.msra.mxu0 0.0
        %4245 = vmatprep.subr.mxu0 0.0
        %4246 = vmatpush1.msra.mxu0 0.0
        %4247 = vmatprep.subr.mxu0 0.0
        %4248 = vmatpush1.msra.mxu0 0.0
        %4249 = vmatprep.subr.mxu0 0.0
        %4250 = vmatpush1.msra.mxu0 0.0
        %4251 = vmatprep.subr.mxu0 0.0
        %4252 = vmatpush1.msra.mxu0 0.0
        %4253 = vmatprep.subr.mxu0 0.0
        %4254 = vmatpush1.msra.mxu0 0.0
        %4255 = vmatprep.subr.mxu0 0.0
        %4256 = vmatpush1.msra.mxu0 0.0
        %4257 = vmatprep.subr.mxu0 0.0
        %4258 = vmatpush1.msra.mxu0 0.0
        %4259 = vmatprep.subr.mxu0 0.0
        %4260 = vmatpush1.msra.mxu0 0.0
        %4261 = vmatprep.subr.mxu0 0.0
        %4262 = vmatpush1.msra.mxu0 0.0
        %4263 = vmatprep.subr.mxu0 0.0
        %4264 = vmatpush1.msra.mxu0 0.0
        %4265 = vmatprep.subr.mxu0 0.0
        %4266 = vmatpush1.msra.mxu0 0.0
        %4267 = vmatprep.subr.mxu0 0.0
        %4268 = vmatpush1.msra.mxu0 0.0
        %4269 = vmatprep.subr.mxu0 0.0
        %4270 = vmatpush1.msra.mxu0 0.0
        %4271 = vmatprep.subr.mxu0 0.0
        %4272 = vmatpush1.msra.mxu0 0.0
        %4273 = vmatprep.subr.mxu0 0.0
        %4274 = vmatpush1.msra.mxu0 0.0
        %4275 = vmatprep.subr.mxu0 0.0
        %4276 = vmatpush1.msra.mxu0 0.0
        %4277 = vmatprep.subr.mxu0 0.0
        %4278 = vmatpush1.msra.mxu0 0.0
        %4279 = vmatprep.subr.mxu0 0.0
        %4280 = vmatpush1.msra.mxu0 0.0
        %4281 = vmatprep.subr.mxu0 0.0
        %4282 = vmatpush1.msra.mxu0 0.0
        %4283 = vmatprep.subr.mxu0 0.0
        %4284 = vmatpush1.msra.mxu0 0.0
        %4285 = vmatprep.subr.mxu0 0.0
        %4286 = vmatpush1.msra.mxu0 0.0
        %4287 = vmatprep.subr.mxu0 0.0
        %4288 = vmatpush1.msra.mxu0 0.0
        %4289 = vmatprep.subr.mxu0 0.0
        %4290 = vmatpush1.msra.mxu0 0.0
        %4291 = vmatprep.mubr.f32.mxu0 0.0
        %4292 = vmatmul.mubr.f32.gmra.mrb[0].mxu0 %v4225
        %v4293 = vpop.f32.mrb[0].mxu0
        %v4294 = vadd.f32 0.0, %v4293
        %v4295 = vpop.f32.mrb[0].mxu0
        %4296 = vdwg.mxu0
        %v4297 = vadd.f32 %v4215, %v4294
        %v4298 = vld [vmem:[%s8 + $0x180] sm:$0xff]
        %v4299 = vld [vmem:[%s8 + $0x188] sm:$0xff]
        %v4300 = vld [vmem:[%s8 + $0x190] sm:$0xff]
        %v4301 = vld [vmem:[%s8 + $0x198] sm:$0xff]
        %v4302 = vld [vmem:[%s8 + $0x1a0] sm:$0xff]
        %v4303 = vld [vmem:[%s8 + $0x1a8] sm:$0xff]
        %v4304 = vld [vmem:[%s8 + $0x1b0] sm:$0xff]
        %v4305 = vld [vmem:[%s8 + $0x1b8] sm:$0xff]
        %v4307 = vsel %vm2596, %v3786, 0
        %4309 = vmatprep.subr.mxu0 0.0
        %4310 = vmatpush1.msra.mxu0 %v4298
        %4311 = vmatprep.subr.mxu0 0.0
        %4312 = vmatpush1.msra.mxu0 %v4299
        %4313 = vmatprep.subr.mxu0 0.0
        %4314 = vmatpush1.msra.mxu0 %v4300
        %4315 = vmatprep.subr.mxu0 0.0
        %4316 = vmatpush1.msra.mxu0 %v4301
        %4317 = vmatprep.subr.mxu0 0.0
        %4318 = vmatpush1.msra.mxu0 %v4302
        %4319 = vmatprep.subr.mxu0 0.0
        %4320 = vmatpush1.msra.mxu0 %v4303
        %4321 = vmatprep.subr.mxu0 0.0
        %4322 = vmatpush1.msra.mxu0 %v4304
        %4323 = vmatprep.subr.mxu0 0.0
        %4324 = vmatpush1.msra.mxu0 %v4305
        %4325 = vmatprep.subr.mxu0 0.0
        %4326 = vmatpush1.msra.mxu0 0.0
        %4327 = vmatprep.subr.mxu0 0.0
        %4328 = vmatpush1.msra.mxu0 0.0
        %4329 = vmatprep.subr.mxu0 0.0
        %4330 = vmatpush1.msra.mxu0 0.0
        %4331 = vmatprep.subr.mxu0 0.0
        %4332 = vmatpush1.msra.mxu0 0.0
        %4333 = vmatprep.subr.mxu0 0.0
        %4334 = vmatpush1.msra.mxu0 0.0
        %4335 = vmatprep.subr.mxu0 0.0
        %4336 = vmatpush1.msra.mxu0 0.0
        %4337 = vmatprep.subr.mxu0 0.0
        %4338 = vmatpush1.msra.mxu0 0.0
        %4339 = vmatprep.subr.mxu0 0.0
        %4340 = vmatpush1.msra.mxu0 0.0
        %4341 = vmatprep.subr.mxu0 0.0
        %4342 = vmatpush1.msra.mxu0 0.0
        %4343 = vmatprep.subr.mxu0 0.0
        %4344 = vmatpush1.msra.mxu0 0.0
        %4345 = vmatprep.subr.mxu0 0.0
        %4346 = vmatpush1.msra.mxu0 0.0
        %4347 = vmatprep.subr.mxu0 0.0
        %4348 = vmatpush1.msra.mxu0 0.0
        %4349 = vmatprep.subr.mxu0 0.0
        %4350 = vmatpush1.msra.mxu0 0.0
        %4351 = vmatprep.subr.mxu0 0.0
        %4352 = vmatpush1.msra.mxu0 0.0
        %4353 = vmatprep.subr.mxu0 0.0
        %4354 = vmatpush1.msra.mxu0 0.0
        %4355 = vmatprep.subr.mxu0 0.0
        %4356 = vmatpush1.msra.mxu0 0.0
        %4357 = vmatprep.subr.mxu0 0.0
        %4358 = vmatpush1.msra.mxu0 0.0
        %4359 = vmatprep.subr.mxu0 0.0
        %4360 = vmatpush1.msra.mxu0 0.0
        %4361 = vmatprep.subr.mxu0 0.0
        %4362 = vmatpush1.msra.mxu0 0.0
        %4363 = vmatprep.subr.mxu0 0.0
        %4364 = vmatpush1.msra.mxu0 0.0
        %4365 = vmatprep.subr.mxu0 0.0
        %4366 = vmatpush1.msra.mxu0 0.0
        %4367 = vmatprep.subr.mxu0 0.0
        %4368 = vmatpush1.msra.mxu0 0.0
        %4369 = vmatprep.subr.mxu0 0.0
        %4370 = vmatpush1.msra.mxu0 0.0
        %4371 = vmatprep.subr.mxu0 0.0
        %4372 = vmatpush1.msra.mxu0 0.0
        %4373 = vmatprep.mubr.f32.mxu0 0.0
        %4374 = vmatmul.mubr.f32.gmra.mrb[0].mxu0 %v4307
        %v4375 = vpop.f32.mrb[0].mxu0
        %v4376 = vadd.f32 0.0, %v4375
        %v4377 = vpop.f32.mrb[0].mxu0
        %4378 = vdwg.mxu0
        %v4379 = vadd.f32 %v4297, %v4376
        %v4380 = vld [vmem:[%s8 + $0x1c0] sm:$0xff]
        %v4381 = vld [vmem:[%s8 + $0x1c8] sm:$0xff]
        %v4382 = vld [vmem:[%s8 + $0x1d0] sm:$0xff]
        %v4383 = vld [vmem:[%s8 + $0x1d8] sm:$0xff]
        %v4384 = vld [vmem:[%s8 + $0x1e0] sm:$0xff]
        %v4385 = vld [vmem:[%s8 + $0x1e8] sm:$0xff]
        %v4386 = vld [vmem:[%s8 + $0x1f0] sm:$0xff]
        %v4387 = vld [vmem:[%s8 + $0x1f8] sm:$0xff]
        %v4389 = vsel %vm2596, %v3791, 0
        %4391 = vmatprep.subr.mxu0 0.0
        %4392 = vmatpush1.msra.mxu0 %v4380
        %4393 = vmatprep.subr.mxu0 0.0
        %4394 = vmatpush1.msra.mxu0 %v4381
        %4395 = vmatprep.subr.mxu0 0.0
        %4396 = vmatpush1.msra.mxu0 %v4382
        %4397 = vmatprep.subr.mxu0 0.0
        %4398 = vmatpush1.msra.mxu0 %v4383
        %4399 = vmatprep.subr.mxu0 0.0
        %4400 = vmatpush1.msra.mxu0 %v4384
        %4401 = vmatprep.subr.mxu0 0.0
        %4402 = vmatpush1.msra.mxu0 %v4385
        %4403 = vmatprep.subr.mxu0 0.0
        %4404 = vmatpush1.msra.mxu0 %v4386
        %4405 = vmatprep.subr.mxu0 0.0
        %4406 = vmatpush1.msra.mxu0 %v4387
        %4407 = vmatprep.subr.mxu0 0.0
        %4408 = vmatpush1.msra.mxu0 0.0
        %4409 = vmatprep.subr.mxu0 0.0
        %4410 = vmatpush1.msra.mxu0 0.0
        %4411 = vmatprep.subr.mxu0 0.0
        %4412 = vmatpush1.msra.mxu0 0.0
        %4413 = vmatprep.subr.mxu0 0.0
        %4414 = vmatpush1.msra.mxu0 0.0
        %4415 = vmatprep.subr.mxu0 0.0
        %4416 = vmatpush1.msra.mxu0 0.0
        %4417 = vmatprep.subr.mxu0 0.0
        %4418 = vmatpush1.msra.mxu0 0.0
        %4419 = vmatprep.subr.mxu0 0.0
        %4420 = vmatpush1.msra.mxu0 0.0
        %4421 = vmatprep.subr.mxu0 0.0
        %4422 = vmatpush1.msra.mxu0 0.0
        %4423 = vmatprep.subr.mxu0 0.0
        %4424 = vmatpush1.msra.mxu0 0.0
        %4425 = vmatprep.subr.mxu0 0.0
        %4426 = vmatpush1.msra.mxu0 0.0
        %4427 = vmatprep.subr.mxu0 0.0
        %4428 = vmatpush1.msra.mxu0 0.0
        %4429 = vmatprep.subr.mxu0 0.0
        %4430 = vmatpush1.msra.mxu0 0.0
        %4431 = vmatprep.subr.mxu0 0.0
        %4432 = vmatpush1.msra.mxu0 0.0
        %4433 = vmatprep.subr.mxu0 0.0
        %4434 = vmatpush1.msra.mxu0 0.0
        %4435 = vmatprep.subr.mxu0 0.0
        %4436 = vmatpush1.msra.mxu0 0.0
        %4437 = vmatprep.subr.mxu0 0.0
        %4438 = vmatpush1.msra.mxu0 0.0
        %4439 = vmatprep.subr.mxu0 0.0
        %4440 = vmatpush1.msra.mxu0 0.0
        %4441 = vmatprep.subr.mxu0 0.0
        %4442 = vmatpush1.msra.mxu0 0.0
        %4443 = vmatprep.subr.mxu0 0.0
        %4444 = vmatpush1.msra.mxu0 0.0
        %4445 = vmatprep.subr.mxu0 0.0
        %4446 = vmatpush1.msra.mxu0 0.0
        %4447 = vmatprep.subr.mxu0 0.0
        %4448 = vmatpush1.msra.mxu0 0.0
        %4449 = vmatprep.subr.mxu0 0.0
        %4450 = vmatpush1.msra.mxu0 0.0
        %4451 = vmatprep.subr.mxu0 0.0
        %4452 = vmatpush1.msra.mxu0 0.0
        %4453 = vmatprep.subr.mxu0 0.0
        %4454 = vmatpush1.msra.mxu0 0.0
        %4455 = vmatprep.mubr.f32.mxu0 0.0
        %4456 = vmatmul.mubr.f32.gmra.mrb[0].mxu0 %v4389
        %v4457 = vpop.f32.mrb[0].mxu0
        %v4458 = vadd.f32 0.0, %v4457
        %v4459 = vpop.f32.mrb[0].mxu0
        %4460 = vdwg.mxu0
        %v4461 = vadd.f32 %v4379, %v4458
        %v4462 = vld [vmem:[%s8 + $0x200] sm:$0xff]
        %v4463 = vld [vmem:[%s8 + $0x208] sm:$0xff]
        %v4464 = vld [vmem:[%s8 + $0x210] sm:$0xff]
        %v4465 = vld [vmem:[%s8 + $0x218] sm:$0xff]
        %v4466 = vld [vmem:[%s8 + $0x220] sm:$0xff]
        %v4467 = vld [vmem:[%s8 + $0x228] sm:$0xff]
        %v4468 = vld [vmem:[%s8 + $0x230] sm:$0xff]
        %v4469 = vld [vmem:[%s8 + $0x238] sm:$0xff]
        %v4471 = vsel %vm2596, %v3796, 0
        %4473 = vmatprep.subr.mxu0 0.0
        %4474 = vmatpush1.msra.mxu0 %v4462
        %4475 = vmatprep.subr.mxu0 0.0
        %4476 = vmatpush1.msra.mxu0 %v4463
        %4477 = vmatprep.subr.mxu0 0.0
        %4478 = vmatpush1.msra.mxu0 %v4464
        %4479 = vmatprep.subr.mxu0 0.0
        %4480 = vmatpush1.msra.mxu0 %v4465
        %4481 = vmatprep.subr.mxu0 0.0
        %4482 = vmatpush1.msra.mxu0 %v4466
        %4483 = vmatprep.subr.mxu0 0.0
        %4484 = vmatpush1.msra.mxu0 %v4467
        %4485 = vmatprep.subr.mxu0 0.0
        %4486 = vmatpush1.msra.mxu0 %v4468
        %4487 = vmatprep.subr.mxu0 0.0
        %4488 = vmatpush1.msra.mxu0 %v4469
        %4489 = vmatprep.subr.mxu0 0.0
        %4490 = vmatpush1.msra.mxu0 0.0
        %4491 = vmatprep.subr.mxu0 0.0
        %4492 = vmatpush1.msra.mxu0 0.0
        %4493 = vmatprep.subr.mxu0 0.0
        %4494 = vmatpush1.msra.mxu0 0.0
        %4495 = vmatprep.subr.mxu0 0.0
        %4496 = vmatpush1.msra.mxu0 0.0
        %4497 = vmatprep.subr.mxu0 0.0
        %4498 = vmatpush1.msra.mxu0 0.0
        %4499 = vmatprep.subr.mxu0 0.0
        %4500 = vmatpush1.msra.mxu0 0.0
        %4501 = vmatprep.subr.mxu0 0.0
        %4502 = vmatpush1.msra.mxu0 0.0
        %4503 = vmatprep.subr.mxu0 0.0
        %4504 = vmatpush1.msra.mxu0 0.0
        %4505 = vmatprep.subr.mxu0 0.0
        %4506 = vmatpush1.msra.mxu0 0.0
        %4507 = vmatprep.subr.mxu0 0.0
        %4508 = vmatpush1.msra.mxu0 0.0
        %4509 = vmatprep.subr.mxu0 0.0
        %4510 = vmatpush1.msra.mxu0 0.0
        %4511 = vmatprep.subr.mxu0 0.0
        %4512 = vmatpush1.msra.mxu0 0.0
        %4513 = vmatprep.subr.mxu0 0.0
        %4514 = vmatpush1.msra.mxu0 0.0
        %4515 = vmatprep.subr.mxu0 0.0
        %4516 = vmatpush1.msra.mxu0 0.0
        %4517 = vmatprep.subr.mxu0 0.0
        %4518 = vmatpush1.msra.mxu0 0.0
        %4519 = vmatprep.subr.mxu0 0.0
        %4520 = vmatpush1.msra.mxu0 0.0
        %4521 = vmatprep.subr.mxu0 0.0
        %4522 = vmatpush1.msra.mxu0 0.0
        %4523 = vmatprep.subr.mxu0 0.0
        %4524 = vmatpush1.msra.mxu0 0.0
        %4525 = vmatprep.subr.mxu0 0.0
        %4526 = vmatpush1.msra.mxu0 0.0
        %4527 = vmatprep.subr.mxu0 0.0
        %4528 = vmatpush1.msra.mxu0 0.0
        %4529 = vmatprep.subr.mxu0 0.0
        %4530 = vmatpush1.msra.mxu0 0.0
        %4531 = vmatprep.subr.mxu0 0.0
        %4532 = vmatpush1.msra.mxu0 0.0
        %4533 = vmatprep.subr.mxu0 0.0
        %4534 = vmatpush1.msra.mxu0 0.0
        %4535 = vmatprep.subr.mxu0 0.0
        %4536 = vmatpush1.msra.mxu0 0.0
        %4537 = vmatprep.mubr.f32.mxu0 0.0
        %4538 = vmatmul.mubr.f32.gmra.mrb[0].mxu0 %v4471
        %v4539 = vpop.f32.mrb[0].mxu0
        %v4540 = vadd.f32 0.0, %v4539
        %v4541 = vpop.f32.mrb[0].mxu0
        %4542 = vdwg.mxu0
        %v4543 = vadd.f32 %v4461, %v4540
        %v4544 = vmax.f32 %v4543, 0.0
        %v4545 = vld [vmem:[%s4] sm:$0xff]
        %v4546 = vld [vmem:[%s4 + $0x8] sm:$0xff]
        %v4547 = vld [vmem:[%s4 + $0x10] sm:$0xff]
        %v4548 = vld [vmem:[%s4 + $0x18] sm:$0xff]
        %v4549 = vld [vmem:[%s4 + $0x20] sm:$0xff]
        %v4550 = vld [vmem:[%s4 + $0x28] sm:$0xff]
        %v4551 = vld [vmem:[%s4 + $0x30] sm:$0xff]
        %v4552 = vld [vmem:[%s4 + $0x38] sm:$0xff]
        %v4553 = vld [vmem:[%s4 + $0x40] sm:$0xff]
        %vm4554 = vcmask 64512
        %v4556 = vsel %vm4554, %v4545, 0
        %v4559 = vsel %vm4554, %v4546, 0
        %v4562 = vsel %vm4554, %v4547, 0
        %v4565 = vsel %vm4554, %v4548, 0
        %v4568 = vsel %vm4554, %v4549, 0
        %v4571 = vsel %vm4554, %v4550, 0
        %v4574 = vsel %vm4554, %v4551, 0
        %v4577 = vsel %vm4554, %v4552, 0
        %v4580 = vsel %vm4554, %v4553, 0
        %4582 = vmatprep.subr.mxu0 0.0
        %4583 = vmatpush1.msra.mxu0 %v4544
        %4584 = vmatprep.subr.mxu0 0.0
        %4585 = vmatpush1.msra.mxu0 0.0
        %4586 = vmatprep.subr.mxu0 0.0
        %4587 = vmatpush1.msra.mxu0 0.0
        %4588 = vmatprep.subr.mxu0 0.0
        %4589 = vmatpush1.msra.mxu0 0.0
        %4590 = vmatprep.subr.mxu0 0.0
        %4591 = vmatpush1.msra.mxu0 0.0
        %4592 = vmatprep.subr.mxu0 0.0
        %4593 = vmatpush1.msra.mxu0 0.0
        %4594 = vmatprep.subr.mxu0 0.0
        %4595 = vmatpush1.msra.mxu0 0.0
        %4596 = vmatprep.subr.mxu0 0.0
        %4597 = vmatpush1.msra.mxu0 0.0
        %4598 = vmatprep.subr.mxu0 0.0
        %4599 = vmatpush1.msra.mxu0 0.0
        %4600 = vmatprep.subr.mxu0 0.0
        %4601 = vmatpush1.msra.mxu0 0.0
        %4602 = vmatprep.subr.mxu0 0.0
        %4603 = vmatpush1.msra.mxu0 0.0
        %4604 = vmatprep.subr.mxu0 0.0
        %4605 = vmatpush1.msra.mxu0 0.0
        %4606 = vmatprep.subr.mxu0 0.0
        %4607 = vmatpush1.msra.mxu0 0.0
        %4608 = vmatprep.subr.mxu0 0.0
        %4609 = vmatpush1.msra.mxu0 0.0
        %4610 = vmatprep.subr.mxu0 0.0
        %4611 = vmatpush1.msra.mxu0 0.0
        %4612 = vmatprep.subr.mxu0 0.0
        %4613 = vmatpush1.msra.mxu0 0.0
        %4614 = vmatprep.subr.mxu0 0.0
        %4615 = vmatpush1.msra.mxu0 0.0
        %4616 = vmatprep.subr.mxu0 0.0
        %4617 = vmatpush1.msra.mxu0 0.0
        %4618 = vmatprep.subr.mxu0 0.0
        %4619 = vmatpush1.msra.mxu0 0.0
        %4620 = vmatprep.subr.mxu0 0.0
        %4621 = vmatpush1.msra.mxu0 0.0
        %4622 = vmatprep.subr.mxu0 0.0
        %4623 = vmatpush1.msra.mxu0 0.0
        %4624 = vmatprep.subr.mxu0 0.0
        %4625 = vmatpush1.msra.mxu0 0.0
        %4626 = vmatprep.subr.mxu0 0.0
        %4627 = vmatpush1.msra.mxu0 0.0
        %4628 = vmatprep.subr.mxu0 0.0
        %4629 = vmatpush1.msra.mxu0 0.0
        %4630 = vmatprep.subr.mxu0 0.0
        %4631 = vmatpush1.msra.mxu0 0.0
        %4632 = vmatprep.subr.mxu0 0.0
        %4633 = vmatpush1.msra.mxu0 0.0
        %4634 = vmatprep.subr.mxu0 0.0
        %4635 = vmatpush1.msra.mxu0 0.0
        %4636 = vmatprep.subr.mxu0 0.0
        %4637 = vmatpush1.msra.mxu0 0.0
        %4638 = vmatprep.subr.mxu0 0.0
        %4639 = vmatpush1.msra.mxu0 0.0
        %4640 = vmatprep.subr.mxu0 0.0
        %4641 = vmatpush1.msra.mxu0 0.0
        %4642 = vmatprep.subr.mxu0 0.0
        %4643 = vmatpush1.msra.mxu0 0.0
        %4644 = vmatprep.subr.mxu0 0.0
        %4645 = vmatpush1.msra.mxu0 0.0
        %4646 = vmatprep.mubr.f32.mxu0 0.0
        %4647 = vmatmul.mubr.f32.gmra.mrb[0].mxu0 %v4556
        %v4648 = vpop.f32.mrb[0].mxu0
        %v4649 = vadd.f32 0.0, %v4648
        %v4650 = vpop.f32.mrb[0].mxu0
        %4651 = vmatprep.mubr.f32.mxu0 0.0
        %4652 = vmatmul.mubr.f32.gmra.mrb[0].mxu0 %v4559
        %v4653 = vpop.f32.mrb[0].mxu0
        %v4654 = vadd.f32 0.0, %v4653
        %v4655 = vpop.f32.mrb[0].mxu0
        %4656 = vmatprep.mubr.f32.mxu0 0.0
        %4657 = vmatmul.mubr.f32.gmra.mrb[0].mxu0 %v4562
        %v4658 = vpop.f32.mrb[0].mxu0
        %v4659 = vadd.f32 0.0, %v4658
        %v4660 = vpop.f32.mrb[0].mxu0
        %4661 = vmatprep.mubr.f32.mxu0 0.0
        %4662 = vmatmul.mubr.f32.gmra.mrb[0].mxu0 %v4565
        %v4663 = vpop.f32.mrb[0].mxu0
        %v4664 = vadd.f32 0.0, %v4663
        %v4665 = vpop.f32.mrb[0].mxu0
        %4666 = vmatprep.mubr.f32.mxu0 0.0
        %4667 = vmatmul.mubr.f32.gmra.mrb[0].mxu0 %v4568
        %v4668 = vpop.f32.mrb[0].mxu0
        %v4669 = vadd.f32 0.0, %v4668
        %v4670 = vpop.f32.mrb[0].mxu0
        %4671 = vmatprep.mubr.f32.mxu0 0.0
        %4672 = vmatmul.mubr.f32.gmra.mrb[0].mxu0 %v4571
        %v4673 = vpop.f32.mrb[0].mxu0
        %v4674 = vadd.f32 0.0, %v4673
        %v4675 = vpop.f32.mrb[0].mxu0
        %4676 = vmatprep.mubr.f32.mxu0 0.0
        %4677 = vmatmul.mubr.f32.gmra.mrb[0].mxu0 %v4574
        %v4678 = vpop.f32.mrb[0].mxu0
        %v4679 = vadd.f32 0.0, %v4678
        %v4680 = vpop.f32.mrb[0].mxu0
        %4681 = vmatprep.mubr.f32.mxu0 0.0
        %4682 = vmatmul.mubr.f32.gmra.mrb[0].mxu0 %v4577
        %v4683 = vpop.f32.mrb[0].mxu0
        %v4684 = vadd.f32 0.0, %v4683
        %v4685 = vpop.f32.mrb[0].mxu0
        %4686 = vmatprep.mubr.f32.mxu0 0.0
        %4687 = vmatmul.mubr.f32.gmra.mrb[0].mxu0 %v4580
        %v4688 = vpop.f32.mrb[0].mxu0
        %v4689 = vadd.f32 0.0, %v4688
        %v4690 = vpop.f32.mrb[0].mxu0
        %4691 = vdwg.mxu0
        %v4692 = vld [vmem:[%s14] sm:$0x1]
        %v4694 = vlaneseq
        %v4695 = vshrl.u32 %v4694, 7
        %v4696 = vsub.s32 0, %v4695
        %v4697 = vrot.slane %v4692, %v4696
        %v4699 = vld [vmem:[%s9] sm:$0xff]
        %v4700 = vld [vmem:[%s9 + $0x8] sm:$0xff]
        %v4701 = vld [vmem:[%s9 + $0x10] sm:$0xff]
        %v4702 = vld [vmem:[%s9 + $0x18] sm:$0xff]
        %vm4703 = vcmask 261120
        %v4705 = vsel %vm4703, %v4649, 0
        %4707 = vmatprep.subr.mxu0 0.0
        %4708 = vmatpush1.msra.mxu0 %v4699
        %4709 = vmatprep.subr.mxu0 0.0
        %4710 = vmatpush1.msra.mxu0 %v4700
        %4711 = vmatprep.subr.mxu0 0.0
        %4712 = vmatpush1.msra.mxu0 %v4701
        %4713 = vmatprep.subr.mxu0 0.0
        %4714 = vmatpush1.msra.mxu0 %v4702
        %4715 = vmatprep.subr.mxu0 0.0
        %4716 = vmatpush1.msra.mxu0 0.0
        %4717 = vmatprep.subr.mxu0 0.0
        %4718 = vmatpush1.msra.mxu0 0.0
        %4719 = vmatprep.subr.mxu0 0.0
        %4720 = vmatpush1.msra.mxu0 0.0
        %4721 = vmatprep.subr.mxu0 0.0
        %4722 = vmatpush1.msra.mxu0 0.0
        %4723 = vmatprep.subr.mxu0 0.0
        %4724 = vmatpush1.msra.mxu0 0.0
        %4725 = vmatprep.subr.mxu0 0.0
        %4726 = vmatpush1.msra.mxu0 0.0
        %4727 = vmatprep.subr.mxu0 0.0
        %4728 = vmatpush1.msra.mxu0 0.0
        %4729 = vmatprep.subr.mxu0 0.0
        %4730 = vmatpush1.msra.mxu0 0.0
        %4731 = vmatprep.subr.mxu0 0.0
        %4732 = vmatpush1.msra.mxu0 0.0
        %4733 = vmatprep.subr.mxu0 0.0
        %4734 = vmatpush1.msra.mxu0 0.0
        %4735 = vmatprep.subr.mxu0 0.0
        %4736 = vmatpush1.msra.mxu0 0.0
        %4737 = vmatprep.subr.mxu0 0.0
        %4738 = vmatpush1.msra.mxu0 0.0
        %4739 = vmatprep.subr.mxu0 0.0
        %4740 = vmatpush1.msra.mxu0 0.0
        %4741 = vmatprep.subr.mxu0 0.0
        %4742 = vmatpush1.msra.mxu0 0.0
        %4743 = vmatprep.subr.mxu0 0.0
        %4744 = vmatpush1.msra.mxu0 0.0
        %4745 = vmatprep.subr.mxu0 0.0
        %4746 = vmatpush1.msra.mxu0 0.0
        %4747 = vmatprep.subr.mxu0 0.0
        %4748 = vmatpush1.msra.mxu0 0.0
        %4749 = vmatprep.subr.mxu0 0.0
        %4750 = vmatpush1.msra.mxu0 0.0
        %4751 = vmatprep.subr.mxu0 0.0
        %4752 = vmatpush1.msra.mxu0 0.0
        %4753 = vmatprep.subr.mxu0 0.0
        %4754 = vmatpush1.msra.mxu0 0.0
        %4755 = vmatprep.subr.mxu0 0.0
        %4756 = vmatpush1.msra.mxu0 0.0
        %4757 = vmatprep.subr.mxu0 0.0
        %4758 = vmatpush1.msra.mxu0 0.0
        %4759 = vmatprep.subr.mxu0 0.0
        %4760 = vmatpush1.msra.mxu0 0.0
        %4761 = vmatprep.subr.mxu0 0.0
        %4762 = vmatpush1.msra.mxu0 0.0
        %4763 = vmatprep.subr.mxu0 0.0
        %4764 = vmatpush1.msra.mxu0 0.0
        %4765 = vmatprep.subr.mxu0 0.0
        %4766 = vmatpush1.msra.mxu0 0.0
        %4767 = vmatprep.subr.mxu0 0.0
        %4768 = vmatpush1.msra.mxu0 0.0
        %4769 = vmatprep.subr.mxu0 0.0
        %4770 = vmatpush1.msra.mxu0 0.0
        %4771 = vmatprep.mubr.f32.mxu0 0.0
        %4772 = vmatmul.mubr.f32.gmra.mrb[0].mxu0 %v4705
        %v4773 = vpop.f32.mrb[0].mxu0
        %v4774 = vadd.f32 0.0, %v4773
        %v4775 = vpop.f32.mrb[0].mxu0
        %4776 = vdwg.mxu0
        %v4777 = vadd.f32 %v4697, %v4774
        %v4778 = vld [vmem:[%s9 + $0x20] sm:$0xff]
        %v4779 = vld [vmem:[%s9 + $0x28] sm:$0xff]
        %v4780 = vld [vmem:[%s9 + $0x30] sm:$0xff]
        %v4781 = vld [vmem:[%s9 + $0x38] sm:$0xff]
        %v4783 = vsel %vm4703, %v4654, 0
        %4785 = vmatprep.subr.mxu0 0.0
        %4786 = vmatpush1.msra.mxu0 %v4778
        %4787 = vmatprep.subr.mxu0 0.0
        %4788 = vmatpush1.msra.mxu0 %v4779
        %4789 = vmatprep.subr.mxu0 0.0
        %4790 = vmatpush1.msra.mxu0 %v4780
        %4791 = vmatprep.subr.mxu0 0.0
        %4792 = vmatpush1.msra.mxu0 %v4781
        %4793 = vmatprep.subr.mxu0 0.0
        %4794 = vmatpush1.msra.mxu0 0.0
        %4795 = vmatprep.subr.mxu0 0.0
        %4796 = vmatpush1.msra.mxu0 0.0
        %4797 = vmatprep.subr.mxu0 0.0
        %4798 = vmatpush1.msra.mxu0 0.0
        %4799 = vmatprep.subr.mxu0 0.0
        %4800 = vmatpush1.msra.mxu0 0.0
        %4801 = vmatprep.subr.mxu0 0.0
        %4802 = vmatpush1.msra.mxu0 0.0
        %4803 = vmatprep.subr.mxu0 0.0
        %4804 = vmatpush1.msra.mxu0 0.0
        %4805 = vmatprep.subr.mxu0 0.0
        %4806 = vmatpush1.msra.mxu0 0.0
        %4807 = vmatprep.subr.mxu0 0.0
        %4808 = vmatpush1.msra.mxu0 0.0
        %4809 = vmatprep.subr.mxu0 0.0
        %4810 = vmatpush1.msra.mxu0 0.0
        %4811 = vmatprep.subr.mxu0 0.0
        %4812 = vmatpush1.msra.mxu0 0.0
        %4813 = vmatprep.subr.mxu0 0.0
        %4814 = vmatpush1.msra.mxu0 0.0
        %4815 = vmatprep.subr.mxu0 0.0
        %4816 = vmatpush1.msra.mxu0 0.0
        %4817 = vmatprep.subr.mxu0 0.0
        %4818 = vmatpush1.msra.mxu0 0.0
        %4819 = vmatprep.subr.mxu0 0.0
        %4820 = vmatpush1.msra.mxu0 0.0
        %4821 = vmatprep.subr.mxu0 0.0
        %4822 = vmatpush1.msra.mxu0 0.0
        %4823 = vmatprep.subr.mxu0 0.0
        %4824 = vmatpush1.msra.mxu0 0.0
        %4825 = vmatprep.subr.mxu0 0.0
        %4826 = vmatpush1.msra.mxu0 0.0
        %4827 = vmatprep.subr.mxu0 0.0
        %4828 = vmatpush1.msra.mxu0 0.0
        %4829 = vmatprep.subr.mxu0 0.0
        %4830 = vmatpush1.msra.mxu0 0.0
        %4831 = vmatprep.subr.mxu0 0.0
        %4832 = vmatpush1.msra.mxu0 0.0
        %4833 = vmatprep.subr.mxu0 0.0
        %4834 = vmatpush1.msra.mxu0 0.0
        %4835 = vmatprep.subr.mxu0 0.0
        %4836 = vmatpush1.msra.mxu0 0.0
        %4837 = vmatprep.subr.mxu0 0.0
        %4838 = vmatpush1.msra.mxu0 0.0
        %4839 = vmatprep.subr.mxu0 0.0
        %4840 = vmatpush1.msra.mxu0 0.0
        %4841 = vmatprep.subr.mxu0 0.0
        %4842 = vmatpush1.msra.mxu0 0.0
        %4843 = vmatprep.subr.mxu0 0.0
        %4844 = vmatpush1.msra.mxu0 0.0
        %4845 = vmatprep.subr.mxu0 0.0
        %4846 = vmatpush1.msra.mxu0 0.0
        %4847 = vmatprep.subr.mxu0 0.0
        %4848 = vmatpush1.msra.mxu0 0.0
        %4849 = vmatprep.mubr.f32.mxu0 0.0
        %4850 = vmatmul.mubr.f32.gmra.mrb[0].mxu0 %v4783
        %v4851 = vpop.f32.mrb[0].mxu0
        %v4852 = vadd.f32 0.0, %v4851
        %v4853 = vpop.f32.mrb[0].mxu0
        %4854 = vdwg.mxu0
        %v4855 = vadd.f32 %v4777, %v4852
        %v4856 = vld [vmem:[%s9 + $0x40] sm:$0xff]
        %v4857 = vld [vmem:[%s9 + $0x48] sm:$0xff]
        %v4858 = vld [vmem:[%s9 + $0x50] sm:$0xff]
        %v4859 = vld [vmem:[%s9 + $0x58] sm:$0xff]
        %v4861 = vsel %vm4703, %v4659, 0
        %4863 = vmatprep.subr.mxu0 0.0
        %4864 = vmatpush1.msra.mxu0 %v4856
        %4865 = vmatprep.subr.mxu0 0.0
        %4866 = vmatpush1.msra.mxu0 %v4857
        %4867 = vmatprep.subr.mxu0 0.0
        %4868 = vmatpush1.msra.mxu0 %v4858
        %4869 = vmatprep.subr.mxu0 0.0
        %4870 = vmatpush1.msra.mxu0 %v4859
        %4871 = vmatprep.subr.mxu0 0.0
        %4872 = vmatpush1.msra.mxu0 0.0
        %4873 = vmatprep.subr.mxu0 0.0
        %4874 = vmatpush1.msra.mxu0 0.0
        %4875 = vmatprep.subr.mxu0 0.0
        %4876 = vmatpush1.msra.mxu0 0.0
        %4877 = vmatprep.subr.mxu0 0.0
        %4878 = vmatpush1.msra.mxu0 0.0
        %4879 = vmatprep.subr.mxu0 0.0
        %4880 = vmatpush1.msra.mxu0 0.0
        %4881 = vmatprep.subr.mxu0 0.0
        %4882 = vmatpush1.msra.mxu0 0.0
        %4883 = vmatprep.subr.mxu0 0.0
        %4884 = vmatpush1.msra.mxu0 0.0
        %4885 = vmatprep.subr.mxu0 0.0
        %4886 = vmatpush1.msra.mxu0 0.0
        %4887 = vmatprep.subr.mxu0 0.0
        %4888 = vmatpush1.msra.mxu0 0.0
        %4889 = vmatprep.subr.mxu0 0.0
        %4890 = vmatpush1.msra.mxu0 0.0
        %4891 = vmatprep.subr.mxu0 0.0
        %4892 = vmatpush1.msra.mxu0 0.0
        %4893 = vmatprep.subr.mxu0 0.0
        %4894 = vmatpush1.msra.mxu0 0.0
        %4895 = vmatprep.subr.mxu0 0.0
        %4896 = vmatpush1.msra.mxu0 0.0
        %4897 = vmatprep.subr.mxu0 0.0
        %4898 = vmatpush1.msra.mxu0 0.0
        %4899 = vmatprep.subr.mxu0 0.0
        %4900 = vmatpush1.msra.mxu0 0.0
        %4901 = vmatprep.subr.mxu0 0.0
        %4902 = vmatpush1.msra.mxu0 0.0
        %4903 = vmatprep.subr.mxu0 0.0
        %4904 = vmatpush1.msra.mxu0 0.0
        %4905 = vmatprep.subr.mxu0 0.0
        %4906 = vmatpush1.msra.mxu0 0.0
        %4907 = vmatprep.subr.mxu0 0.0
        %4908 = vmatpush1.msra.mxu0 0.0
        %4909 = vmatprep.subr.mxu0 0.0
        %4910 = vmatpush1.msra.mxu0 0.0
        %4911 = vmatprep.subr.mxu0 0.0
        %4912 = vmatpush1.msra.mxu0 0.0
        %4913 = vmatprep.subr.mxu0 0.0
        %4914 = vmatpush1.msra.mxu0 0.0
        %4915 = vmatprep.subr.mxu0 0.0
        %4916 = vmatpush1.msra.mxu0 0.0
        %4917 = vmatprep.subr.mxu0 0.0
        %4918 = vmatpush1.msra.mxu0 0.0
        %4919 = vmatprep.subr.mxu0 0.0
        %4920 = vmatpush1.msra.mxu0 0.0
        %4921 = vmatprep.subr.mxu0 0.0
        %4922 = vmatpush1.msra.mxu0 0.0
        %4923 = vmatprep.subr.mxu0 0.0
        %4924 = vmatpush1.msra.mxu0 0.0
        %4925 = vmatprep.subr.mxu0 0.0
        %4926 = vmatpush1.msra.mxu0 0.0
        %4927 = vmatprep.mubr.f32.mxu0 0.0
        %4928 = vmatmul.mubr.f32.gmra.mrb[0].mxu0 %v4861
        %v4929 = vpop.f32.mrb[0].mxu0
        %v4930 = vadd.f32 0.0, %v4929
        %v4931 = vpop.f32.mrb[0].mxu0
        %4932 = vdwg.mxu0
        %v4933 = vadd.f32 %v4855, %v4930
        %v4934 = vld [vmem:[%s9 + $0x60] sm:$0xff]
        %v4935 = vld [vmem:[%s9 + $0x68] sm:$0xff]
        %v4936 = vld [vmem:[%s9 + $0x70] sm:$0xff]
        %v4937 = vld [vmem:[%s9 + $0x78] sm:$0xff]
        %v4939 = vsel %vm4703, %v4664, 0
        %4941 = vmatprep.subr.mxu0 0.0
        %4942 = vmatpush1.msra.mxu0 %v4934
        %4943 = vmatprep.subr.mxu0 0.0
        %4944 = vmatpush1.msra.mxu0 %v4935
        %4945 = vmatprep.subr.mxu0 0.0
        %4946 = vmatpush1.msra.mxu0 %v4936
        %4947 = vmatprep.subr.mxu0 0.0
        %4948 = vmatpush1.msra.mxu0 %v4937
        %4949 = vmatprep.subr.mxu0 0.0
        %4950 = vmatpush1.msra.mxu0 0.0
        %4951 = vmatprep.subr.mxu0 0.0
        %4952 = vmatpush1.msra.mxu0 0.0
        %4953 = vmatprep.subr.mxu0 0.0
        %4954 = vmatpush1.msra.mxu0 0.0
        %4955 = vmatprep.subr.mxu0 0.0
        %4956 = vmatpush1.msra.mxu0 0.0
        %4957 = vmatprep.subr.mxu0 0.0
        %4958 = vmatpush1.msra.mxu0 0.0
        %4959 = vmatprep.subr.mxu0 0.0
        %4960 = vmatpush1.msra.mxu0 0.0
        %4961 = vmatprep.subr.mxu0 0.0
        %4962 = vmatpush1.msra.mxu0 0.0
        %4963 = vmatprep.subr.mxu0 0.0
        %4964 = vmatpush1.msra.mxu0 0.0
        %4965 = vmatprep.subr.mxu0 0.0
        %4966 = vmatpush1.msra.mxu0 0.0
        %4967 = vmatprep.subr.mxu0 0.0
        %4968 = vmatpush1.msra.mxu0 0.0
        %4969 = vmatprep.subr.mxu0 0.0
        %4970 = vmatpush1.msra.mxu0 0.0
        %4971 = vmatprep.subr.mxu0 0.0
        %4972 = vmatpush1.msra.mxu0 0.0
        %4973 = vmatprep.subr.mxu0 0.0
        %4974 = vmatpush1.msra.mxu0 0.0
        %4975 = vmatprep.subr.mxu0 0.0
        %4976 = vmatpush1.msra.mxu0 0.0
        %4977 = vmatprep.subr.mxu0 0.0
        %4978 = vmatpush1.msra.mxu0 0.0
        %4979 = vmatprep.subr.mxu0 0.0
        %4980 = vmatpush1.msra.mxu0 0.0
        %4981 = vmatprep.subr.mxu0 0.0
        %4982 = vmatpush1.msra.mxu0 0.0
        %4983 = vmatprep.subr.mxu0 0.0
        %4984 = vmatpush1.msra.mxu0 0.0
        %4985 = vmatprep.subr.mxu0 0.0
        %4986 = vmatpush1.msra.mxu0 0.0
        %4987 = vmatprep.subr.mxu0 0.0
        %4988 = vmatpush1.msra.mxu0 0.0
        %4989 = vmatprep.subr.mxu0 0.0
        %4990 = vmatpush1.msra.mxu0 0.0
        %4991 = vmatprep.subr.mxu0 0.0
        %4992 = vmatpush1.msra.mxu0 0.0
        %4993 = vmatprep.subr.mxu0 0.0
        %4994 = vmatpush1.msra.mxu0 0.0
        %4995 = vmatprep.subr.mxu0 0.0
        %4996 = vmatpush1.msra.mxu0 0.0
        %4997 = vmatprep.subr.mxu0 0.0
        %4998 = vmatpush1.msra.mxu0 0.0
        %4999 = vmatprep.subr.mxu0 0.0
        %5000 = vmatpush1.msra.mxu0 0.0
        %5001 = vmatprep.subr.mxu0 0.0
        %5002 = vmatpush1.msra.mxu0 0.0
        %5003 = vmatprep.subr.mxu0 0.0
        %5004 = vmatpush1.msra.mxu0 0.0
        %5005 = vmatprep.mubr.f32.mxu0 0.0
        %5006 = vmatmul.mubr.f32.gmra.mrb[0].mxu0 %v4939
        %v5007 = vpop.f32.mrb[0].mxu0
        %v5008 = vadd.f32 0.0, %v5007
        %v5009 = vpop.f32.mrb[0].mxu0
        %5010 = vdwg.mxu0
        %v5011 = vadd.f32 %v4933, %v5008
        %v5012 = vld [vmem:[%s9 + $0x80] sm:$0xff]
        %v5013 = vld [vmem:[%s9 + $0x88] sm:$0xff]
        %v5014 = vld [vmem:[%s9 + $0x90] sm:$0xff]
        %v5015 = vld [vmem:[%s9 + $0x98] sm:$0xff]
        %v5017 = vsel %vm4703, %v4669, 0
        %5019 = vmatprep.subr.mxu0 0.0
        %5020 = vmatpush1.msra.mxu0 %v5012
        %5021 = vmatprep.subr.mxu0 0.0
        %5022 = vmatpush1.msra.mxu0 %v5013
        %5023 = vmatprep.subr.mxu0 0.0
        %5024 = vmatpush1.msra.mxu0 %v5014
        %5025 = vmatprep.subr.mxu0 0.0
        %5026 = vmatpush1.msra.mxu0 %v5015
        %5027 = vmatprep.subr.mxu0 0.0
        %5028 = vmatpush1.msra.mxu0 0.0
        %5029 = vmatprep.subr.mxu0 0.0
        %5030 = vmatpush1.msra.mxu0 0.0
        %5031 = vmatprep.subr.mxu0 0.0
        %5032 = vmatpush1.msra.mxu0 0.0
        %5033 = vmatprep.subr.mxu0 0.0
        %5034 = vmatpush1.msra.mxu0 0.0
        %5035 = vmatprep.subr.mxu0 0.0
        %5036 = vmatpush1.msra.mxu0 0.0
        %5037 = vmatprep.subr.mxu0 0.0
        %5038 = vmatpush1.msra.mxu0 0.0
        %5039 = vmatprep.subr.mxu0 0.0
        %5040 = vmatpush1.msra.mxu0 0.0
        %5041 = vmatprep.subr.mxu0 0.0
        %5042 = vmatpush1.msra.mxu0 0.0
        %5043 = vmatprep.subr.mxu0 0.0
        %5044 = vmatpush1.msra.mxu0 0.0
        %5045 = vmatprep.subr.mxu0 0.0
        %5046 = vmatpush1.msra.mxu0 0.0
        %5047 = vmatprep.subr.mxu0 0.0
        %5048 = vmatpush1.msra.mxu0 0.0
        %5049 = vmatprep.subr.mxu0 0.0
        %5050 = vmatpush1.msra.mxu0 0.0
        %5051 = vmatprep.subr.mxu0 0.0
        %5052 = vmatpush1.msra.mxu0 0.0
        %5053 = vmatprep.subr.mxu0 0.0
        %5054 = vmatpush1.msra.mxu0 0.0
        %5055 = vmatprep.subr.mxu0 0.0
        %5056 = vmatpush1.msra.mxu0 0.0
        %5057 = vmatprep.subr.mxu0 0.0
        %5058 = vmatpush1.msra.mxu0 0.0
        %5059 = vmatprep.subr.mxu0 0.0
        %5060 = vmatpush1.msra.mxu0 0.0
        %5061 = vmatprep.subr.mxu0 0.0
        %5062 = vmatpush1.msra.mxu0 0.0
        %5063 = vmatprep.subr.mxu0 0.0
        %5064 = vmatpush1.msra.mxu0 0.0
        %5065 = vmatprep.subr.mxu0 0.0
        %5066 = vmatpush1.msra.mxu0 0.0
        %5067 = vmatprep.subr.mxu0 0.0
        %5068 = vmatpush1.msra.mxu0 0.0
        %5069 = vmatprep.subr.mxu0 0.0
        %5070 = vmatpush1.msra.mxu0 0.0
        %5071 = vmatprep.subr.mxu0 0.0
        %5072 = vmatpush1.msra.mxu0 0.0
        %5073 = vmatprep.subr.mxu0 0.0
        %5074 = vmatpush1.msra.mxu0 0.0
        %5075 = vmatprep.subr.mxu0 0.0
        %5076 = vmatpush1.msra.mxu0 0.0
        %5077 = vmatprep.subr.mxu0 0.0
        %5078 = vmatpush1.msra.mxu0 0.0
        %5079 = vmatprep.subr.mxu0 0.0
        %5080 = vmatpush1.msra.mxu0 0.0
        %5081 = vmatprep.subr.mxu0 0.0
        %5082 = vmatpush1.msra.mxu0 0.0
        %5083 = vmatprep.mubr.f32.mxu0 0.0
        %5084 = vmatmul.mubr.f32.gmra.mrb[0].mxu0 %v5017
        %v5085 = vpop.f32.mrb[0].mxu0
        %v5086 = vadd.f32 0.0, %v5085
        %v5087 = vpop.f32.mrb[0].mxu0
        %5088 = vdwg.mxu0
        %v5089 = vadd.f32 %v5011, %v5086
        %v5090 = vld [vmem:[%s9 + $0xa0] sm:$0xff]
        %v5091 = vld [vmem:[%s9 + $0xa8] sm:$0xff]
        %v5092 = vld [vmem:[%s9 + $0xb0] sm:$0xff]
        %v5093 = vld [vmem:[%s9 + $0xb8] sm:$0xff]
        %v5095 = vsel %vm4703, %v4674, 0
        %5097 = vmatprep.subr.mxu0 0.0
        %5098 = vmatpush1.msra.mxu0 %v5090
        %5099 = vmatprep.subr.mxu0 0.0
        %5100 = vmatpush1.msra.mxu0 %v5091
        %5101 = vmatprep.subr.mxu0 0.0
        %5102 = vmatpush1.msra.mxu0 %v5092
        %5103 = vmatprep.subr.mxu0 0.0
        %5104 = vmatpush1.msra.mxu0 %v5093
        %5105 = vmatprep.subr.mxu0 0.0
        %5106 = vmatpush1.msra.mxu0 0.0
        %5107 = vmatprep.subr.mxu0 0.0
        %5108 = vmatpush1.msra.mxu0 0.0
        %5109 = vmatprep.subr.mxu0 0.0
        %5110 = vmatpush1.msra.mxu0 0.0
        %5111 = vmatprep.subr.mxu0 0.0
        %5112 = vmatpush1.msra.mxu0 0.0
        %5113 = vmatprep.subr.mxu0 0.0
        %5114 = vmatpush1.msra.mxu0 0.0
        %5115 = vmatprep.subr.mxu0 0.0
        %5116 = vmatpush1.msra.mxu0 0.0
        %5117 = vmatprep.subr.mxu0 0.0
        %5118 = vmatpush1.msra.mxu0 0.0
        %5119 = vmatprep.subr.mxu0 0.0
        %5120 = vmatpush1.msra.mxu0 0.0
        %5121 = vmatprep.subr.mxu0 0.0
        %5122 = vmatpush1.msra.mxu0 0.0
        %5123 = vmatprep.subr.mxu0 0.0
        %5124 = vmatpush1.msra.mxu0 0.0
        %5125 = vmatprep.subr.mxu0 0.0
        %5126 = vmatpush1.msra.mxu0 0.0
        %5127 = vmatprep.subr.mxu0 0.0
        %5128 = vmatpush1.msra.mxu0 0.0
        %5129 = vmatprep.subr.mxu0 0.0
        %5130 = vmatpush1.msra.mxu0 0.0
        %5131 = vmatprep.subr.mxu0 0.0
        %5132 = vmatpush1.msra.mxu0 0.0
        %5133 = vmatprep.subr.mxu0 0.0
        %5134 = vmatpush1.msra.mxu0 0.0
        %5135 = vmatprep.subr.mxu0 0.0
        %5136 = vmatpush1.msra.mxu0 0.0
        %5137 = vmatprep.subr.mxu0 0.0
        %5138 = vmatpush1.msra.mxu0 0.0
        %5139 = vmatprep.subr.mxu0 0.0
        %5140 = vmatpush1.msra.mxu0 0.0
        %5141 = vmatprep.subr.mxu0 0.0
        %5142 = vmatpush1.msra.mxu0 0.0
        %5143 = vmatprep.subr.mxu0 0.0
        %5144 = vmatpush1.msra.mxu0 0.0
        %5145 = vmatprep.subr.mxu0 0.0
        %5146 = vmatpush1.msra.mxu0 0.0
        %5147 = vmatprep.subr.mxu0 0.0
        %5148 = vmatpush1.msra.mxu0 0.0
        %5149 = vmatprep.subr.mxu0 0.0
        %5150 = vmatpush1.msra.mxu0 0.0
        %5151 = vmatprep.subr.mxu0 0.0
        %5152 = vmatpush1.msra.mxu0 0.0
        %5153 = vmatprep.subr.mxu0 0.0
        %5154 = vmatpush1.msra.mxu0 0.0
        %5155 = vmatprep.subr.mxu0 0.0
        %5156 = vmatpush1.msra.mxu0 0.0
        %5157 = vmatprep.subr.mxu0 0.0
        %5158 = vmatpush1.msra.mxu0 0.0
        %5159 = vmatprep.subr.mxu0 0.0
        %5160 = vmatpush1.msra.mxu0 0.0
        %5161 = vmatprep.mubr.f32.mxu0 0.0
        %5162 = vmatmul.mubr.f32.gmra.mrb[0].mxu0 %v5095
        %v5163 = vpop.f32.mrb[0].mxu0
        %v5164 = vadd.f32 0.0, %v5163
        %v5165 = vpop.f32.mrb[0].mxu0
        %5166 = vdwg.mxu0
        %v5167 = vadd.f32 %v5089, %v5164
        %v5168 = vld [vmem:[%s9 + $0xc0] sm:$0xff]
        %v5169 = vld [vmem:[%s9 + $0xc8] sm:$0xff]
        %v5170 = vld [vmem:[%s9 + $0xd0] sm:$0xff]
        %v5171 = vld [vmem:[%s9 + $0xd8] sm:$0xff]
        %v5173 = vsel %vm4703, %v4679, 0
        %5175 = vmatprep.subr.mxu0 0.0
        %5176 = vmatpush1.msra.mxu0 %v5168
        %5177 = vmatprep.subr.mxu0 0.0
        %5178 = vmatpush1.msra.mxu0 %v5169
        %5179 = vmatprep.subr.mxu0 0.0
        %5180 = vmatpush1.msra.mxu0 %v5170
        %5181 = vmatprep.subr.mxu0 0.0
        %5182 = vmatpush1.msra.mxu0 %v5171
        %5183 = vmatprep.subr.mxu0 0.0
        %5184 = vmatpush1.msra.mxu0 0.0
        %5185 = vmatprep.subr.mxu0 0.0
        %5186 = vmatpush1.msra.mxu0 0.0
        %5187 = vmatprep.subr.mxu0 0.0
        %5188 = vmatpush1.msra.mxu0 0.0
        %5189 = vmatprep.subr.mxu0 0.0
        %5190 = vmatpush1.msra.mxu0 0.0
        %5191 = vmatprep.subr.mxu0 0.0
        %5192 = vmatpush1.msra.mxu0 0.0
        %5193 = vmatprep.subr.mxu0 0.0
        %5194 = vmatpush1.msra.mxu0 0.0
        %5195 = vmatprep.subr.mxu0 0.0
        %5196 = vmatpush1.msra.mxu0 0.0
        %5197 = vmatprep.subr.mxu0 0.0
        %5198 = vmatpush1.msra.mxu0 0.0
        %5199 = vmatprep.subr.mxu0 0.0
        %5200 = vmatpush1.msra.mxu0 0.0
        %5201 = vmatprep.subr.mxu0 0.0
        %5202 = vmatpush1.msra.mxu0 0.0
        %5203 = vmatprep.subr.mxu0 0.0
        %5204 = vmatpush1.msra.mxu0 0.0
        %5205 = vmatprep.subr.mxu0 0.0
        %5206 = vmatpush1.msra.mxu0 0.0
        %5207 = vmatprep.subr.mxu0 0.0
        %5208 = vmatpush1.msra.mxu0 0.0
        %5209 = vmatprep.subr.mxu0 0.0
        %5210 = vmatpush1.msra.mxu0 0.0
        %5211 = vmatprep.subr.mxu0 0.0
        %5212 = vmatpush1.msra.mxu0 0.0
        %5213 = vmatprep.subr.mxu0 0.0
        %5214 = vmatpush1.msra.mxu0 0.0
        %5215 = vmatprep.subr.mxu0 0.0
        %5216 = vmatpush1.msra.mxu0 0.0
        %5217 = vmatprep.subr.mxu0 0.0
        %5218 = vmatpush1.msra.mxu0 0.0
        %5219 = vmatprep.subr.mxu0 0.0
        %5220 = vmatpush1.msra.mxu0 0.0
        %5221 = vmatprep.subr.mxu0 0.0
        %5222 = vmatpush1.msra.mxu0 0.0
        %5223 = vmatprep.subr.mxu0 0.0
        %5224 = vmatpush1.msra.mxu0 0.0
        %5225 = vmatprep.subr.mxu0 0.0
        %5226 = vmatpush1.msra.mxu0 0.0
        %5227 = vmatprep.subr.mxu0 0.0
        %5228 = vmatpush1.msra.mxu0 0.0
        %5229 = vmatprep.subr.mxu0 0.0
        %5230 = vmatpush1.msra.mxu0 0.0
        %5231 = vmatprep.subr.mxu0 0.0
        %5232 = vmatpush1.msra.mxu0 0.0
        %5233 = vmatprep.subr.mxu0 0.0
        %5234 = vmatpush1.msra.mxu0 0.0
        %5235 = vmatprep.subr.mxu0 0.0
        %5236 = vmatpush1.msra.mxu0 0.0
        %5237 = vmatprep.subr.mxu0 0.0
        %5238 = vmatpush1.msra.mxu0 0.0
        %5239 = vmatprep.mubr.f32.mxu0 0.0
        %5240 = vmatmul.mubr.f32.gmra.mrb[0].mxu0 %v5173
        %v5241 = vpop.f32.mrb[0].mxu0
        %v5242 = vadd.f32 0.0, %v5241
        %v5243 = vpop.f32.mrb[0].mxu0
        %5244 = vdwg.mxu0
        %v5245 = vadd.f32 %v5167, %v5242
        %v5246 = vld [vmem:[%s9 + $0xe0] sm:$0xff]
        %v5247 = vld [vmem:[%s9 + $0xe8] sm:$0xff]
        %v5248 = vld [vmem:[%s9 + $0xf0] sm:$0xff]
        %v5249 = vld [vmem:[%s9 + $0xf8] sm:$0xff]
        %v5251 = vsel %vm4703, %v4684, 0
        %5253 = vmatprep.subr.mxu0 0.0
        %5254 = vmatpush1.msra.mxu0 %v5246
        %5255 = vmatprep.subr.mxu0 0.0
        %5256 = vmatpush1.msra.mxu0 %v5247
        %5257 = vmatprep.subr.mxu0 0.0
        %5258 = vmatpush1.msra.mxu0 %v5248
        %5259 = vmatprep.subr.mxu0 0.0
        %5260 = vmatpush1.msra.mxu0 %v5249
        %5261 = vmatprep.subr.mxu0 0.0
        %5262 = vmatpush1.msra.mxu0 0.0
        %5263 = vmatprep.subr.mxu0 0.0
        %5264 = vmatpush1.msra.mxu0 0.0
        %5265 = vmatprep.subr.mxu0 0.0
        %5266 = vmatpush1.msra.mxu0 0.0
        %5267 = vmatprep.subr.mxu0 0.0
        %5268 = vmatpush1.msra.mxu0 0.0
        %5269 = vmatprep.subr.mxu0 0.0
        %5270 = vmatpush1.msra.mxu0 0.0
        %5271 = vmatprep.subr.mxu0 0.0
        %5272 = vmatpush1.msra.mxu0 0.0
        %5273 = vmatprep.subr.mxu0 0.0
        %5274 = vmatpush1.msra.mxu0 0.0
        %5275 = vmatprep.subr.mxu0 0.0
        %5276 = vmatpush1.msra.mxu0 0.0
        %5277 = vmatprep.subr.mxu0 0.0
        %5278 = vmatpush1.msra.mxu0 0.0
        %5279 = vmatprep.subr.mxu0 0.0
        %5280 = vmatpush1.msra.mxu0 0.0
        %5281 = vmatprep.subr.mxu0 0.0
        %5282 = vmatpush1.msra.mxu0 0.0
        %5283 = vmatprep.subr.mxu0 0.0
        %5284 = vmatpush1.msra.mxu0 0.0
        %5285 = vmatprep.subr.mxu0 0.0
        %5286 = vmatpush1.msra.mxu0 0.0
        %5287 = vmatprep.subr.mxu0 0.0
        %5288 = vmatpush1.msra.mxu0 0.0
        %5289 = vmatprep.subr.mxu0 0.0
        %5290 = vmatpush1.msra.mxu0 0.0
        %5291 = vmatprep.subr.mxu0 0.0
        %5292 = vmatpush1.msra.mxu0 0.0
        %5293 = vmatprep.subr.mxu0 0.0
        %5294 = vmatpush1.msra.mxu0 0.0
        %5295 = vmatprep.subr.mxu0 0.0
        %5296 = vmatpush1.msra.mxu0 0.0
        %5297 = vmatprep.subr.mxu0 0.0
        %5298 = vmatpush1.msra.mxu0 0.0
        %5299 = vmatprep.subr.mxu0 0.0
        %5300 = vmatpush1.msra.mxu0 0.0
        %5301 = vmatprep.subr.mxu0 0.0
        %5302 = vmatpush1.msra.mxu0 0.0
        %5303 = vmatprep.subr.mxu0 0.0
        %5304 = vmatpush1.msra.mxu0 0.0
        %5305 = vmatprep.subr.mxu0 0.0
        %5306 = vmatpush1.msra.mxu0 0.0
        %5307 = vmatprep.subr.mxu0 0.0
        %5308 = vmatpush1.msra.mxu0 0.0
        %5309 = vmatprep.subr.mxu0 0.0
        %5310 = vmatpush1.msra.mxu0 0.0
        %5311 = vmatprep.subr.mxu0 0.0
        %5312 = vmatpush1.msra.mxu0 0.0
        %5313 = vmatprep.subr.mxu0 0.0
        %5314 = vmatpush1.msra.mxu0 0.0
        %5315 = vmatprep.subr.mxu0 0.0
        %5316 = vmatpush1.msra.mxu0 0.0
        %5317 = vmatprep.mubr.f32.mxu0 0.0
        %5318 = vmatmul.mubr.f32.gmra.mrb[0].mxu0 %v5251
        %v5319 = vpop.f32.mrb[0].mxu0
        %v5320 = vadd.f32 0.0, %v5319
        %v5321 = vpop.f32.mrb[0].mxu0
        %5322 = vdwg.mxu0
        %v5323 = vadd.f32 %v5245, %v5320
        %v5324 = vld [vmem:[%s9 + $0x100] sm:$0xff]
        %v5325 = vld [vmem:[%s9 + $0x108] sm:$0xff]
        %v5326 = vld [vmem:[%s9 + $0x110] sm:$0xff]
        %v5327 = vld [vmem:[%s9 + $0x118] sm:$0xff]
        %v5329 = vsel %vm4703, %v4689, 0
        %5331 = vmatprep.subr.mxu0 0.0
        %5332 = vmatpush1.msra.mxu0 %v5324
        %5333 = vmatprep.subr.mxu0 0.0
        %5334 = vmatpush1.msra.mxu0 %v5325
        %5335 = vmatprep.subr.mxu0 0.0
        %5336 = vmatpush1.msra.mxu0 %v5326
        %5337 = vmatprep.subr.mxu0 0.0
        %5338 = vmatpush1.msra.mxu0 %v5327
        %5339 = vmatprep.subr.mxu0 0.0
        %5340 = vmatpush1.msra.mxu0 0.0
        %5341 = vmatprep.subr.mxu0 0.0
        %5342 = vmatpush1.msra.mxu0 0.0
        %5343 = vmatprep.subr.mxu0 0.0
        %5344 = vmatpush1.msra.mxu0 0.0
        %5345 = vmatprep.subr.mxu0 0.0
        %5346 = vmatpush1.msra.mxu0 0.0
        %5347 = vmatprep.subr.mxu0 0.0
        %5348 = vmatpush1.msra.mxu0 0.0
        %5349 = vmatprep.subr.mxu0 0.0
        %5350 = vmatpush1.msra.mxu0 0.0
        %5351 = vmatprep.subr.mxu0 0.0
        %5352 = vmatpush1.msra.mxu0 0.0
        %5353 = vmatprep.subr.mxu0 0.0
        %5354 = vmatpush1.msra.mxu0 0.0
        %5355 = vmatprep.subr.mxu0 0.0
        %5356 = vmatpush1.msra.mxu0 0.0
        %5357 = vmatprep.subr.mxu0 0.0
        %5358 = vmatpush1.msra.mxu0 0.0
        %5359 = vmatprep.subr.mxu0 0.0
        %5360 = vmatpush1.msra.mxu0 0.0
        %5361 = vmatprep.subr.mxu0 0.0
        %5362 = vmatpush1.msra.mxu0 0.0
        %5363 = vmatprep.subr.mxu0 0.0
        %5364 = vmatpush1.msra.mxu0 0.0
        %5365 = vmatprep.subr.mxu0 0.0
        %5366 = vmatpush1.msra.mxu0 0.0
        %5367 = vmatprep.subr.mxu0 0.0
        %5368 = vmatpush1.msra.mxu0 0.0
        %5369 = vmatprep.subr.mxu0 0.0
        %5370 = vmatpush1.msra.mxu0 0.0
        %5371 = vmatprep.subr.mxu0 0.0
        %5372 = vmatpush1.msra.mxu0 0.0
        %5373 = vmatprep.subr.mxu0 0.0
        %5374 = vmatpush1.msra.mxu0 0.0
        %5375 = vmatprep.subr.mxu0 0.0
        %5376 = vmatpush1.msra.mxu0 0.0
        %5377 = vmatprep.subr.mxu0 0.0
        %5378 = vmatpush1.msra.mxu0 0.0
        %5379 = vmatprep.subr.mxu0 0.0
        %5380 = vmatpush1.msra.mxu0 0.0
        %5381 = vmatprep.subr.mxu0 0.0
        %5382 = vmatpush1.msra.mxu0 0.0
        %5383 = vmatprep.subr.mxu0 0.0
        %5384 = vmatpush1.msra.mxu0 0.0
        %5385 = vmatprep.subr.mxu0 0.0
        %5386 = vmatpush1.msra.mxu0 0.0
        %5387 = vmatprep.subr.mxu0 0.0
        %5388 = vmatpush1.msra.mxu0 0.0
        %5389 = vmatprep.subr.mxu0 0.0
        %5390 = vmatpush1.msra.mxu0 0.0
        %5391 = vmatprep.subr.mxu0 0.0
        %5392 = vmatpush1.msra.mxu0 0.0
        %5393 = vmatprep.subr.mxu0 0.0
        %5394 = vmatpush1.msra.mxu0 0.0
        %5395 = vmatprep.mubr.f32.mxu0 0.0
        %5396 = vmatmul.mubr.f32.gmra.mrb[0].mxu0 %v5329
        %v5397 = vpop.f32.mrb[0].mxu0
        %v5398 = vadd.f32 0.0, %v5397
        %v5399 = vpop.f32.mrb[0].mxu0
        %5400 = vdwg.mxu0
        %v5401 = vadd.f32 %v5323, %v5398
        %v5402 = vmax.f32 %v5401, 0.0
        %v5403 = vld [vmem:[%s5] sm:$0xff]
        %v5404 = vld [vmem:[%s5 + $0x8] sm:$0xff]
        %v5405 = vld [vmem:[%s5 + $0x10] sm:$0xff]
        %v5406 = vld [vmem:[%s5 + $0x18] sm:$0xff]
        %v5407 = vld [vmem:[%s5 + $0x20] sm:$0xff]
        %v5408 = vld [vmem:[%s5 + $0x28] sm:$0xff]
        %v5409 = vld [vmem:[%s5 + $0x30] sm:$0xff]
        %v5410 = vld [vmem:[%s5 + $0x38] sm:$0xff]
        %v5411 = vld [vmem:[%s5 + $0x40] sm:$0xff]
        %v5413 = vsel %vm4554, %v5403, 0
        %v5416 = vsel %vm4554, %v5404, 0
        %v5419 = vsel %vm4554, %v5405, 0
        %v5422 = vsel %vm4554, %v5406, 0
        %v5425 = vsel %vm4554, %v5407, 0
        %v5428 = vsel %vm4554, %v5408, 0
        %v5431 = vsel %vm4554, %v5409, 0
        %v5434 = vsel %vm4554, %v5410, 0
        %v5437 = vsel %vm4554, %v5411, 0
        %5439 = vmatprep.subr.mxu0 0.0
        %5440 = vmatpush1.msra.mxu0 %v5402
        %5441 = vmatprep.subr.mxu0 0.0
        %5442 = vmatpush1.msra.mxu0 0.0
        %5443 = vmatprep.subr.mxu0 0.0
        %5444 = vmatpush1.msra.mxu0 0.0
        %5445 = vmatprep.subr.mxu0 0.0
        %5446 = vmatpush1.msra.mxu0 0.0
        %5447 = vmatprep.subr.mxu0 0.0
        %5448 = vmatpush1.msra.mxu0 0.0
        %5449 = vmatprep.subr.mxu0 0.0
        %5450 = vmatpush1.msra.mxu0 0.0
        %5451 = vmatprep.subr.mxu0 0.0
        %5452 = vmatpush1.msra.mxu0 0.0
        %5453 = vmatprep.subr.mxu0 0.0
        %5454 = vmatpush1.msra.mxu0 0.0
        %5455 = vmatprep.subr.mxu0 0.0
        %5456 = vmatpush1.msra.mxu0 0.0
        %5457 = vmatprep.subr.mxu0 0.0
        %5458 = vmatpush1.msra.mxu0 0.0
        %5459 = vmatprep.subr.mxu0 0.0
        %5460 = vmatpush1.msra.mxu0 0.0
        %5461 = vmatprep.subr.mxu0 0.0
        %5462 = vmatpush1.msra.mxu0 0.0
        %5463 = vmatprep.subr.mxu0 0.0
        %5464 = vmatpush1.msra.mxu0 0.0
        %5465 = vmatprep.subr.mxu0 0.0
        %5466 = vmatpush1.msra.mxu0 0.0
        %5467 = vmatprep.subr.mxu0 0.0
        %5468 = vmatpush1.msra.mxu0 0.0
        %5469 = vmatprep.subr.mxu0 0.0
        %5470 = vmatpush1.msra.mxu0 0.0
        %5471 = vmatprep.subr.mxu0 0.0
        %5472 = vmatpush1.msra.mxu0 0.0
        %5473 = vmatprep.subr.mxu0 0.0
        %5474 = vmatpush1.msra.mxu0 0.0
        %5475 = vmatprep.subr.mxu0 0.0
        %5476 = vmatpush1.msra.mxu0 0.0
        %5477 = vmatprep.subr.mxu0 0.0
        %5478 = vmatpush1.msra.mxu0 0.0
        %5479 = vmatprep.subr.mxu0 0.0
        %5480 = vmatpush1.msra.mxu0 0.0
        %5481 = vmatprep.subr.mxu0 0.0
        %5482 = vmatpush1.msra.mxu0 0.0
        %5483 = vmatprep.subr.mxu0 0.0
        %5484 = vmatpush1.msra.mxu0 0.0
        %5485 = vmatprep.subr.mxu0 0.0
        %5486 = vmatpush1.msra.mxu0 0.0
        %5487 = vmatprep.subr.mxu0 0.0
        %5488 = vmatpush1.msra.mxu0 0.0
        %5489 = vmatprep.subr.mxu0 0.0
        %5490 = vmatpush1.msra.mxu0 0.0
        %5491 = vmatprep.subr.mxu0 0.0
        %5492 = vmatpush1.msra.mxu0 0.0
        %5493 = vmatprep.subr.mxu0 0.0
        %5494 = vmatpush1.msra.mxu0 0.0
        %5495 = vmatprep.subr.mxu0 0.0
        %5496 = vmatpush1.msra.mxu0 0.0
        %5497 = vmatprep.subr.mxu0 0.0
        %5498 = vmatpush1.msra.mxu0 0.0
        %5499 = vmatprep.subr.mxu0 0.0
        %5500 = vmatpush1.msra.mxu0 0.0
        %5501 = vmatprep.subr.mxu0 0.0
        %5502 = vmatpush1.msra.mxu0 0.0
        %5503 = vmatprep.mubr.f32.mxu0 0.0
        %5504 = vmatmul.mubr.f32.gmra.mrb[0].mxu0 %v5413
        %v5505 = vpop.f32.mrb[0].mxu0
        %v5506 = vadd.f32 0.0, %v5505
        %v5507 = vpop.f32.mrb[0].mxu0
        %5508 = vmatprep.mubr.f32.mxu0 0.0
        %5509 = vmatmul.mubr.f32.gmra.mrb[0].mxu0 %v5416
        %v5510 = vpop.f32.mrb[0].mxu0
        %v5511 = vadd.f32 0.0, %v5510
        %v5512 = vpop.f32.mrb[0].mxu0
        %5513 = vmatprep.mubr.f32.mxu0 0.0
        %5514 = vmatmul.mubr.f32.gmra.mrb[0].mxu0 %v5419
        %v5515 = vpop.f32.mrb[0].mxu0
        %v5516 = vadd.f32 0.0, %v5515
        %v5517 = vpop.f32.mrb[0].mxu0
        %5518 = vmatprep.mubr.f32.mxu0 0.0
        %5519 = vmatmul.mubr.f32.gmra.mrb[0].mxu0 %v5422
        %v5520 = vpop.f32.mrb[0].mxu0
        %v5521 = vadd.f32 0.0, %v5520
        %v5522 = vpop.f32.mrb[0].mxu0
        %5523 = vmatprep.mubr.f32.mxu0 0.0
        %5524 = vmatmul.mubr.f32.gmra.mrb[0].mxu0 %v5425
        %v5525 = vpop.f32.mrb[0].mxu0
        %v5526 = vadd.f32 0.0, %v5525
        %v5527 = vpop.f32.mrb[0].mxu0
        %5528 = vmatprep.mubr.f32.mxu0 0.0
        %5529 = vmatmul.mubr.f32.gmra.mrb[0].mxu0 %v5428
        %v5530 = vpop.f32.mrb[0].mxu0
        %v5531 = vadd.f32 0.0, %v5530
        %v5532 = vpop.f32.mrb[0].mxu0
        %5533 = vmatprep.mubr.f32.mxu0 0.0
        %5534 = vmatmul.mubr.f32.gmra.mrb[0].mxu0 %v5431
        %v5535 = vpop.f32.mrb[0].mxu0
        %v5536 = vadd.f32 0.0, %v5535
        %v5537 = vpop.f32.mrb[0].mxu0
        %5538 = vmatprep.mubr.f32.mxu0 0.0
        %5539 = vmatmul.mubr.f32.gmra.mrb[0].mxu0 %v5434
        %v5540 = vpop.f32.mrb[0].mxu0
        %v5541 = vadd.f32 0.0, %v5540
        %v5542 = vpop.f32.mrb[0].mxu0
        %5543 = vmatprep.mubr.f32.mxu0 0.0
        %5544 = vmatmul.mubr.f32.gmra.mrb[0].mxu0 %v5437
        %v5545 = vpop.f32.mrb[0].mxu0
        %v5546 = vadd.f32 0.0, %v5545
        %v5547 = vpop.f32.mrb[0].mxu0
        %5548 = vdwg.mxu0
        %v5549 = vld [vmem:[%s15] sm:$0x1]
        %v5551 = vlaneseq
        %v5552 = vshrl.u32 %v5551, 7
        %v5553 = vsub.s32 0, %v5552
        %v5554 = vrot.slane %v5549, %v5553
        %v5556 = vld [vmem:[#allocation4] sm:$0xff]
        %v5557 = vld [vmem:[#allocation4 + $0x8] sm:$0xff]
        %v5559 = vsel %vm3661, %v5506, 0
        %5561 = vmatprep.subr.mxu0 0.0
        %5562 = vmatpush1.msra.mxu0 %v5556
        %5563 = vmatprep.subr.mxu0 0.0
        %5564 = vmatpush1.msra.mxu0 %v5557
        %5565 = vmatprep.subr.mxu0 0.0
        %5566 = vmatpush1.msra.mxu0 0.0
        %5567 = vmatprep.subr.mxu0 0.0
        %5568 = vmatpush1.msra.mxu0 0.0
        %5569 = vmatprep.subr.mxu0 0.0
        %5570 = vmatpush1.msra.mxu0 0.0
        %5571 = vmatprep.subr.mxu0 0.0
        %5572 = vmatpush1.msra.mxu0 0.0
        %5573 = vmatprep.subr.mxu0 0.0
        %5574 = vmatpush1.msra.mxu0 0.0
        %5575 = vmatprep.subr.mxu0 0.0
        %5576 = vmatpush1.msra.mxu0 0.0
        %5577 = vmatprep.subr.mxu0 0.0
        %5578 = vmatpush1.msra.mxu0 0.0
        %5579 = vmatprep.subr.mxu0 0.0
        %5580 = vmatpush1.msra.mxu0 0.0
        %5581 = vmatprep.subr.mxu0 0.0
        %5582 = vmatpush1.msra.mxu0 0.0
        %5583 = vmatprep.subr.mxu0 0.0
        %5584 = vmatpush1.msra.mxu0 0.0
        %5585 = vmatprep.subr.mxu0 0.0
        %5586 = vmatpush1.msra.mxu0 0.0
        %5587 = vmatprep.subr.mxu0 0.0
        %5588 = vmatpush1.msra.mxu0 0.0
        %5589 = vmatprep.subr.mxu0 0.0
        %5590 = vmatpush1.msra.mxu0 0.0
        %5591 = vmatprep.subr.mxu0 0.0
        %5592 = vmatpush1.msra.mxu0 0.0
        %5593 = vmatprep.subr.mxu0 0.0
        %5594 = vmatpush1.msra.mxu0 0.0
        %5595 = vmatprep.subr.mxu0 0.0
        %5596 = vmatpush1.msra.mxu0 0.0
        %5597 = vmatprep.subr.mxu0 0.0
        %5598 = vmatpush1.msra.mxu0 0.0
        %5599 = vmatprep.subr.mxu0 0.0
        %5600 = vmatpush1.msra.mxu0 0.0
        %5601 = vmatprep.subr.mxu0 0.0
        %5602 = vmatpush1.msra.mxu0 0.0
        %5603 = vmatprep.subr.mxu0 0.0
        %5604 = vmatpush1.msra.mxu0 0.0
        %5605 = vmatprep.subr.mxu0 0.0
        %5606 = vmatpush1.msra.mxu0 0.0
        %5607 = vmatprep.subr.mxu0 0.0
        %5608 = vmatpush1.msra.mxu0 0.0
        %5609 = vmatprep.subr.mxu0 0.0
        %5610 = vmatpush1.msra.mxu0 0.0
        %5611 = vmatprep.subr.mxu0 0.0
        %5612 = vmatpush1.msra.mxu0 0.0
        %5613 = vmatprep.subr.mxu0 0.0
        %5614 = vmatpush1.msra.mxu0 0.0
        %5615 = vmatprep.subr.mxu0 0.0
        %5616 = vmatpush1.msra.mxu0 0.0
        %5617 = vmatprep.subr.mxu0 0.0
        %5618 = vmatpush1.msra.mxu0 0.0
        %5619 = vmatprep.subr.mxu0 0.0
        %5620 = vmatpush1.msra.mxu0 0.0
        %5621 = vmatprep.subr.mxu0 0.0
        %5622 = vmatpush1.msra.mxu0 0.0
        %5623 = vmatprep.subr.mxu0 0.0
        %5624 = vmatpush1.msra.mxu0 0.0
        %5625 = vmatprep.mubr.f32.mxu0 0.0
        %5626 = vmatmul.mubr.f32.gmra.mrb[0].mxu0 %v5559
        %v5627 = vpop.f32.mrb[0].mxu0
        %v5628 = vadd.f32 0.0, %v5627
        %v5629 = vpop.f32.mrb[0].mxu0
        %5630 = vdwg.mxu0
        %v5631 = vadd.f32 %v5554, %v5628
        %v5632 = vld [vmem:[#allocation4 + $0x10] sm:$0xff]
        %v5633 = vld [vmem:[#allocation4 + $0x18] sm:$0xff]
        %v5635 = vsel %vm3661, %v5511, 0
        %5637 = vmatprep.subr.mxu0 0.0
        %5638 = vmatpush1.msra.mxu0 %v5632
        %5639 = vmatprep.subr.mxu0 0.0
        %5640 = vmatpush1.msra.mxu0 %v5633
        %5641 = vmatprep.subr.mxu0 0.0
        %5642 = vmatpush1.msra.mxu0 0.0
        %5643 = vmatprep.subr.mxu0 0.0
        %5644 = vmatpush1.msra.mxu0 0.0
        %5645 = vmatprep.subr.mxu0 0.0
        %5646 = vmatpush1.msra.mxu0 0.0
        %5647 = vmatprep.subr.mxu0 0.0
        %5648 = vmatpush1.msra.mxu0 0.0
        %5649 = vmatprep.subr.mxu0 0.0
        %5650 = vmatpush1.msra.mxu0 0.0
        %5651 = vmatprep.subr.mxu0 0.0
        %5652 = vmatpush1.msra.mxu0 0.0
        %5653 = vmatprep.subr.mxu0 0.0
        %5654 = vmatpush1.msra.mxu0 0.0
        %5655 = vmatprep.subr.mxu0 0.0
        %5656 = vmatpush1.msra.mxu0 0.0
        %5657 = vmatprep.subr.mxu0 0.0
        %5658 = vmatpush1.msra.mxu0 0.0
        %5659 = vmatprep.subr.mxu0 0.0
        %5660 = vmatpush1.msra.mxu0 0.0
        %5661 = vmatprep.subr.mxu0 0.0
        %5662 = vmatpush1.msra.mxu0 0.0
        %5663 = vmatprep.subr.mxu0 0.0
        %5664 = vmatpush1.msra.mxu0 0.0
        %5665 = vmatprep.subr.mxu0 0.0
        %5666 = vmatpush1.msra.mxu0 0.0
        %5667 = vmatprep.subr.mxu0 0.0
        %5668 = vmatpush1.msra.mxu0 0.0
        %5669 = vmatprep.subr.mxu0 0.0
        %5670 = vmatpush1.msra.mxu0 0.0
        %5671 = vmatprep.subr.mxu0 0.0
        %5672 = vmatpush1.msra.mxu0 0.0
        %5673 = vmatprep.subr.mxu0 0.0
        %5674 = vmatpush1.msra.mxu0 0.0
        %5675 = vmatprep.subr.mxu0 0.0
        %5676 = vmatpush1.msra.mxu0 0.0
        %5677 = vmatprep.subr.mxu0 0.0
        %5678 = vmatpush1.msra.mxu0 0.0
        %5679 = vmatprep.subr.mxu0 0.0
        %5680 = vmatpush1.msra.mxu0 0.0
        %5681 = vmatprep.subr.mxu0 0.0
        %5682 = vmatpush1.msra.mxu0 0.0
        %5683 = vmatprep.subr.mxu0 0.0
        %5684 = vmatpush1.msra.mxu0 0.0
        %5685 = vmatprep.subr.mxu0 0.0
        %5686 = vmatpush1.msra.mxu0 0.0
        %5687 = vmatprep.subr.mxu0 0.0
        %5688 = vmatpush1.msra.mxu0 0.0
        %5689 = vmatprep.subr.mxu0 0.0
        %5690 = vmatpush1.msra.mxu0 0.0
        %5691 = vmatprep.subr.mxu0 0.0
        %5692 = vmatpush1.msra.mxu0 0.0
        %5693 = vmatprep.subr.mxu0 0.0
        %5694 = vmatpush1.msra.mxu0 0.0
        %5695 = vmatprep.subr.mxu0 0.0
        %5696 = vmatpush1.msra.mxu0 0.0
        %5697 = vmatprep.subr.mxu0 0.0
        %5698 = vmatpush1.msra.mxu0 0.0
        %5699 = vmatprep.subr.mxu0 0.0
        %5700 = vmatpush1.msra.mxu0 0.0
        %5701 = vmatprep.mubr.f32.mxu0 0.0
        %5702 = vmatmul.mubr.f32.gmra.mrb[0].mxu0 %v5635
        %v5703 = vpop.f32.mrb[0].mxu0
        %v5704 = vadd.f32 0.0, %v5703
        %v5705 = vpop.f32.mrb[0].mxu0
        %5706 = vdwg.mxu0
        %v5707 = vadd.f32 %v5631, %v5704
        %v5708 = vld [vmem:[#allocation4 + $0x20] sm:$0xff]
        %v5709 = vld [vmem:[#allocation4 + $0x28] sm:$0xff]
        %v5711 = vsel %vm3661, %v5516, 0
        %5713 = vmatprep.subr.mxu0 0.0
        %5714 = vmatpush1.msra.mxu0 %v5708
        %5715 = vmatprep.subr.mxu0 0.0
        %5716 = vmatpush1.msra.mxu0 %v5709
        %5717 = vmatprep.subr.mxu0 0.0
        %5718 = vmatpush1.msra.mxu0 0.0
        %5719 = vmatprep.subr.mxu0 0.0
        %5720 = vmatpush1.msra.mxu0 0.0
        %5721 = vmatprep.subr.mxu0 0.0
        %5722 = vmatpush1.msra.mxu0 0.0
        %5723 = vmatprep.subr.mxu0 0.0
        %5724 = vmatpush1.msra.mxu0 0.0
        %5725 = vmatprep.subr.mxu0 0.0
        %5726 = vmatpush1.msra.mxu0 0.0
        %5727 = vmatprep.subr.mxu0 0.0
        %5728 = vmatpush1.msra.mxu0 0.0
        %5729 = vmatprep.subr.mxu0 0.0
        %5730 = vmatpush1.msra.mxu0 0.0
        %5731 = vmatprep.subr.mxu0 0.0
        %5732 = vmatpush1.msra.mxu0 0.0
        %5733 = vmatprep.subr.mxu0 0.0
        %5734 = vmatpush1.msra.mxu0 0.0
        %5735 = vmatprep.subr.mxu0 0.0
        %5736 = vmatpush1.msra.mxu0 0.0
        %5737 = vmatprep.subr.mxu0 0.0
        %5738 = vmatpush1.msra.mxu0 0.0
        %5739 = vmatprep.subr.mxu0 0.0
        %5740 = vmatpush1.msra.mxu0 0.0
        %5741 = vmatprep.subr.mxu0 0.0
        %5742 = vmatpush1.msra.mxu0 0.0
        %5743 = vmatprep.subr.mxu0 0.0
        %5744 = vmatpush1.msra.mxu0 0.0
        %5745 = vmatprep.subr.mxu0 0.0
        %5746 = vmatpush1.msra.mxu0 0.0
        %5747 = vmatprep.subr.mxu0 0.0
        %5748 = vmatpush1.msra.mxu0 0.0
        %5749 = vmatprep.subr.mxu0 0.0
        %5750 = vmatpush1.msra.mxu0 0.0
        %5751 = vmatprep.subr.mxu0 0.0
        %5752 = vmatpush1.msra.mxu0 0.0
        %5753 = vmatprep.subr.mxu0 0.0
        %5754 = vmatpush1.msra.mxu0 0.0
        %5755 = vmatprep.subr.mxu0 0.0
        %5756 = vmatpush1.msra.mxu0 0.0
        %5757 = vmatprep.subr.mxu0 0.0
        %5758 = vmatpush1.msra.mxu0 0.0
        %5759 = vmatprep.subr.mxu0 0.0
        %5760 = vmatpush1.msra.mxu0 0.0
        %5761 = vmatprep.subr.mxu0 0.0
        %5762 = vmatpush1.msra.mxu0 0.0
        %5763 = vmatprep.subr.mxu0 0.0
        %5764 = vmatpush1.msra.mxu0 0.0
        %5765 = vmatprep.subr.mxu0 0.0
        %5766 = vmatpush1.msra.mxu0 0.0
        %5767 = vmatprep.subr.mxu0 0.0
        %5768 = vmatpush1.msra.mxu0 0.0
        %5769 = vmatprep.subr.mxu0 0.0
        %5770 = vmatpush1.msra.mxu0 0.0
        %5771 = vmatprep.subr.mxu0 0.0
        %5772 = vmatpush1.msra.mxu0 0.0
        %5773 = vmatprep.subr.mxu0 0.0
        %5774 = vmatpush1.msra.mxu0 0.0
        %5775 = vmatprep.subr.mxu0 0.0
        %5776 = vmatpush1.msra.mxu0 0.0
        %5777 = vmatprep.mubr.f32.mxu0 0.0
        %5778 = vmatmul.mubr.f32.gmra.mrb[0].mxu0 %v5711
        %v5779 = vpop.f32.mrb[0].mxu0
        %v5780 = vadd.f32 0.0, %v5779
        %v5781 = vpop.f32.mrb[0].mxu0
        %5782 = vdwg.mxu0
        %v5783 = vadd.f32 %v5707, %v5780
        %v5784 = vld [vmem:[#allocation4 + $0x30] sm:$0xff]
        %v5785 = vld [vmem:[#allocation4 + $0x38] sm:$0xff]
        %v5787 = vsel %vm3661, %v5521, 0
        %5789 = vmatprep.subr.mxu0 0.0
        %5790 = vmatpush1.msra.mxu0 %v5784
        %5791 = vmatprep.subr.mxu0 0.0
        %5792 = vmatpush1.msra.mxu0 %v5785
        %5793 = vmatprep.subr.mxu0 0.0
        %5794 = vmatpush1.msra.mxu0 0.0
        %5795 = vmatprep.subr.mxu0 0.0
        %5796 = vmatpush1.msra.mxu0 0.0
        %5797 = vmatprep.subr.mxu0 0.0
        %5798 = vmatpush1.msra.mxu0 0.0
        %5799 = vmatprep.subr.mxu0 0.0
        %5800 = vmatpush1.msra.mxu0 0.0
        %5801 = vmatprep.subr.mxu0 0.0
        %5802 = vmatpush1.msra.mxu0 0.0
        %5803 = vmatprep.subr.mxu0 0.0
        %5804 = vmatpush1.msra.mxu0 0.0
        %5805 = vmatprep.subr.mxu0 0.0
        %5806 = vmatpush1.msra.mxu0 0.0
        %5807 = vmatprep.subr.mxu0 0.0
        %5808 = vmatpush1.msra.mxu0 0.0
        %5809 = vmatprep.subr.mxu0 0.0
        %5810 = vmatpush1.msra.mxu0 0.0
        %5811 = vmatprep.subr.mxu0 0.0
        %5812 = vmatpush1.msra.mxu0 0.0
        %5813 = vmatprep.subr.mxu0 0.0
        %5814 = vmatpush1.msra.mxu0 0.0
        %5815 = vmatprep.subr.mxu0 0.0
        %5816 = vmatpush1.msra.mxu0 0.0
        %5817 = vmatprep.subr.mxu0 0.0
        %5818 = vmatpush1.msra.mxu0 0.0
        %5819 = vmatprep.subr.mxu0 0.0
        %5820 = vmatpush1.msra.mxu0 0.0
        %5821 = vmatprep.subr.mxu0 0.0
        %5822 = vmatpush1.msra.mxu0 0.0
        %5823 = vmatprep.subr.mxu0 0.0
        %5824 = vmatpush1.msra.mxu0 0.0
        %5825 = vmatprep.subr.mxu0 0.0
        %5826 = vmatpush1.msra.mxu0 0.0
        %5827 = vmatprep.subr.mxu0 0.0
        %5828 = vmatpush1.msra.mxu0 0.0
        %5829 = vmatprep.subr.mxu0 0.0
        %5830 = vmatpush1.msra.mxu0 0.0
        %5831 = vmatprep.subr.mxu0 0.0
        %5832 = vmatpush1.msra.mxu0 0.0
        %5833 = vmatprep.subr.mxu0 0.0
        %5834 = vmatpush1.msra.mxu0 0.0
        %5835 = vmatprep.subr.mxu0 0.0
        %5836 = vmatpush1.msra.mxu0 0.0
        %5837 = vmatprep.subr.mxu0 0.0
        %5838 = vmatpush1.msra.mxu0 0.0
        %5839 = vmatprep.subr.mxu0 0.0
        %5840 = vmatpush1.msra.mxu0 0.0
        %5841 = vmatprep.subr.mxu0 0.0
        %5842 = vmatpush1.msra.mxu0 0.0
        %5843 = vmatprep.subr.mxu0 0.0
        %5844 = vmatpush1.msra.mxu0 0.0
        %5845 = vmatprep.subr.mxu0 0.0
        %5846 = vmatpush1.msra.mxu0 0.0
        %5847 = vmatprep.subr.mxu0 0.0
        %5848 = vmatpush1.msra.mxu0 0.0
        %5849 = vmatprep.subr.mxu0 0.0
        %5850 = vmatpush1.msra.mxu0 0.0
        %5851 = vmatprep.subr.mxu0 0.0
        %5852 = vmatpush1.msra.mxu0 0.0
        %5853 = vmatprep.mubr.f32.mxu0 0.0
        %5854 = vmatmul.mubr.f32.gmra.mrb[0].mxu0 %v5787
        %v5855 = vpop.f32.mrb[0].mxu0
        %v5856 = vadd.f32 0.0, %v5855
        %v5857 = vpop.f32.mrb[0].mxu0
        %5858 = vdwg.mxu0
        %v5859 = vadd.f32 %v5783, %v5856
        %v5860 = vld [vmem:[#allocation4 + $0x40] sm:$0xff]
        %v5861 = vld [vmem:[#allocation4 + $0x48] sm:$0xff]
        %v5863 = vsel %vm3661, %v5526, 0
        %5865 = vmatprep.subr.mxu0 0.0
        %5866 = vmatpush1.msra.mxu0 %v5860
        %5867 = vmatprep.subr.mxu0 0.0
        %5868 = vmatpush1.msra.mxu0 %v5861
        %5869 = vmatprep.subr.mxu0 0.0
        %5870 = vmatpush1.msra.mxu0 0.0
        %5871 = vmatprep.subr.mxu0 0.0
        %5872 = vmatpush1.msra.mxu0 0.0
        %5873 = vmatprep.subr.mxu0 0.0
        %5874 = vmatpush1.msra.mxu0 0.0
        %5875 = vmatprep.subr.mxu0 0.0
        %5876 = vmatpush1.msra.mxu0 0.0
        %5877 = vmatprep.subr.mxu0 0.0
        %5878 = vmatpush1.msra.mxu0 0.0
        %5879 = vmatprep.subr.mxu0 0.0
        %5880 = vmatpush1.msra.mxu0 0.0
        %5881 = vmatprep.subr.mxu0 0.0
        %5882 = vmatpush1.msra.mxu0 0.0
        %5883 = vmatprep.subr.mxu0 0.0
        %5884 = vmatpush1.msra.mxu0 0.0
        %5885 = vmatprep.subr.mxu0 0.0
        %5886 = vmatpush1.msra.mxu0 0.0
        %5887 = vmatprep.subr.mxu0 0.0
        %5888 = vmatpush1.msra.mxu0 0.0
        %5889 = vmatprep.subr.mxu0 0.0
        %5890 = vmatpush1.msra.mxu0 0.0
        %5891 = vmatprep.subr.mxu0 0.0
        %5892 = vmatpush1.msra.mxu0 0.0
        %5893 = vmatprep.subr.mxu0 0.0
        %5894 = vmatpush1.msra.mxu0 0.0
        %5895 = vmatprep.subr.mxu0 0.0
        %5896 = vmatpush1.msra.mxu0 0.0
        %5897 = vmatprep.subr.mxu0 0.0
        %5898 = vmatpush1.msra.mxu0 0.0
        %5899 = vmatprep.subr.mxu0 0.0
        %5900 = vmatpush1.msra.mxu0 0.0
        %5901 = vmatprep.subr.mxu0 0.0
        %5902 = vmatpush1.msra.mxu0 0.0
        %5903 = vmatprep.subr.mxu0 0.0
        %5904 = vmatpush1.msra.mxu0 0.0
        %5905 = vmatprep.subr.mxu0 0.0
        %5906 = vmatpush1.msra.mxu0 0.0
        %5907 = vmatprep.subr.mxu0 0.0
        %5908 = vmatpush1.msra.mxu0 0.0
        %5909 = vmatprep.subr.mxu0 0.0
        %5910 = vmatpush1.msra.mxu0 0.0
        %5911 = vmatprep.subr.mxu0 0.0
        %5912 = vmatpush1.msra.mxu0 0.0
        %5913 = vmatprep.subr.mxu0 0.0
        %5914 = vmatpush1.msra.mxu0 0.0
        %5915 = vmatprep.subr.mxu0 0.0
        %5916 = vmatpush1.msra.mxu0 0.0
        %5917 = vmatprep.subr.mxu0 0.0
        %5918 = vmatpush1.msra.mxu0 0.0
        %5919 = vmatprep.subr.mxu0 0.0
        %5920 = vmatpush1.msra.mxu0 0.0
        %5921 = vmatprep.subr.mxu0 0.0
        %5922 = vmatpush1.msra.mxu0 0.0
        %5923 = vmatprep.subr.mxu0 0.0
        %5924 = vmatpush1.msra.mxu0 0.0
        %5925 = vmatprep.subr.mxu0 0.0
        %5926 = vmatpush1.msra.mxu0 0.0
        %5927 = vmatprep.subr.mxu0 0.0
        %5928 = vmatpush1.msra.mxu0 0.0
        %5929 = vmatprep.mubr.f32.mxu0 0.0
        %5930 = vmatmul.mubr.f32.gmra.mrb[0].mxu0 %v5863
        %v5931 = vpop.f32.mrb[0].mxu0
        %v5932 = vadd.f32 0.0, %v5931
        %v5933 = vpop.f32.mrb[0].mxu0
        %5934 = vdwg.mxu0
        %v5935 = vadd.f32 %v5859, %v5932
        %v5936 = vld [vmem:[#allocation4 + $0x50] sm:$0xff]
        %v5937 = vld [vmem:[#allocation4 + $0x58] sm:$0xff]
        %v5939 = vsel %vm3661, %v5531, 0
        %5941 = vmatprep.subr.mxu0 0.0
        %5942 = vmatpush1.msra.mxu0 %v5936
        %5943 = vmatprep.subr.mxu0 0.0
        %5944 = vmatpush1.msra.mxu0 %v5937
        %5945 = vmatprep.subr.mxu0 0.0
        %5946 = vmatpush1.msra.mxu0 0.0
        %5947 = vmatprep.subr.mxu0 0.0
        %5948 = vmatpush1.msra.mxu0 0.0
        %5949 = vmatprep.subr.mxu0 0.0
        %5950 = vmatpush1.msra.mxu0 0.0
        %5951 = vmatprep.subr.mxu0 0.0
        %5952 = vmatpush1.msra.mxu0 0.0
        %5953 = vmatprep.subr.mxu0 0.0
        %5954 = vmatpush1.msra.mxu0 0.0
        %5955 = vmatprep.subr.mxu0 0.0
        %5956 = vmatpush1.msra.mxu0 0.0
        %5957 = vmatprep.subr.mxu0 0.0
        %5958 = vmatpush1.msra.mxu0 0.0
        %5959 = vmatprep.subr.mxu0 0.0
        %5960 = vmatpush1.msra.mxu0 0.0
        %5961 = vmatprep.subr.mxu0 0.0
        %5962 = vmatpush1.msra.mxu0 0.0
        %5963 = vmatprep.subr.mxu0 0.0
        %5964 = vmatpush1.msra.mxu0 0.0
        %5965 = vmatprep.subr.mxu0 0.0
        %5966 = vmatpush1.msra.mxu0 0.0
        %5967 = vmatprep.subr.mxu0 0.0
        %5968 = vmatpush1.msra.mxu0 0.0
        %5969 = vmatprep.subr.mxu0 0.0
        %5970 = vmatpush1.msra.mxu0 0.0
        %5971 = vmatprep.subr.mxu0 0.0
        %5972 = vmatpush1.msra.mxu0 0.0
        %5973 = vmatprep.subr.mxu0 0.0
        %5974 = vmatpush1.msra.mxu0 0.0
        %5975 = vmatprep.subr.mxu0 0.0
        %5976 = vmatpush1.msra.mxu0 0.0
        %5977 = vmatprep.subr.mxu0 0.0
        %5978 = vmatpush1.msra.mxu0 0.0
        %5979 = vmatprep.subr.mxu0 0.0
        %5980 = vmatpush1.msra.mxu0 0.0
        %5981 = vmatprep.subr.mxu0 0.0
        %5982 = vmatpush1.msra.mxu0 0.0
        %5983 = vmatprep.subr.mxu0 0.0
        %5984 = vmatpush1.msra.mxu0 0.0
        %5985 = vmatprep.subr.mxu0 0.0
        %5986 = vmatpush1.msra.mxu0 0.0
        %5987 = vmatprep.subr.mxu0 0.0
        %5988 = vmatpush1.msra.mxu0 0.0
        %5989 = vmatprep.subr.mxu0 0.0
        %5990 = vmatpush1.msra.mxu0 0.0
        %5991 = vmatprep.subr.mxu0 0.0
        %5992 = vmatpush1.msra.mxu0 0.0
        %5993 = vmatprep.subr.mxu0 0.0
        %5994 = vmatpush1.msra.mxu0 0.0
        %5995 = vmatprep.subr.mxu0 0.0
        %5996 = vmatpush1.msra.mxu0 0.0
        %5997 = vmatprep.subr.mxu0 0.0
        %5998 = vmatpush1.msra.mxu0 0.0
        %5999 = vmatprep.subr.mxu0 0.0
        %6000 = vmatpush1.msra.mxu0 0.0
        %6001 = vmatprep.subr.mxu0 0.0
        %6002 = vmatpush1.msra.mxu0 0.0
        %6003 = vmatprep.subr.mxu0 0.0
        %6004 = vmatpush1.msra.mxu0 0.0
        %6005 = vmatprep.mubr.f32.mxu0 0.0
        %6006 = vmatmul.mubr.f32.gmra.mrb[0].mxu0 %v5939
        %v6007 = vpop.f32.mrb[0].mxu0
        %v6008 = vadd.f32 0.0, %v6007
        %v6009 = vpop.f32.mrb[0].mxu0
        %6010 = vdwg.mxu0
        %v6011 = vadd.f32 %v5935, %v6008
        %v6012 = vld [vmem:[#allocation4 + $0x60] sm:$0xff]
        %v6013 = vld [vmem:[#allocation4 + $0x68] sm:$0xff]
        %v6015 = vsel %vm3661, %v5536, 0
        %6017 = vmatprep.subr.mxu0 0.0
        %6018 = vmatpush1.msra.mxu0 %v6012
        %6019 = vmatprep.subr.mxu0 0.0
        %6020 = vmatpush1.msra.mxu0 %v6013
        %6021 = vmatprep.subr.mxu0 0.0
        %6022 = vmatpush1.msra.mxu0 0.0
        %6023 = vmatprep.subr.mxu0 0.0
        %6024 = vmatpush1.msra.mxu0 0.0
        %6025 = vmatprep.subr.mxu0 0.0
        %6026 = vmatpush1.msra.mxu0 0.0
        %6027 = vmatprep.subr.mxu0 0.0
        %6028 = vmatpush1.msra.mxu0 0.0
        %6029 = vmatprep.subr.mxu0 0.0
        %6030 = vmatpush1.msra.mxu0 0.0
        %6031 = vmatprep.subr.mxu0 0.0
        %6032 = vmatpush1.msra.mxu0 0.0
        %6033 = vmatprep.subr.mxu0 0.0
        %6034 = vmatpush1.msra.mxu0 0.0
        %6035 = vmatprep.subr.mxu0 0.0
        %6036 = vmatpush1.msra.mxu0 0.0
        %6037 = vmatprep.subr.mxu0 0.0
        %6038 = vmatpush1.msra.mxu0 0.0
        %6039 = vmatprep.subr.mxu0 0.0
        %6040 = vmatpush1.msra.mxu0 0.0
        %6041 = vmatprep.subr.mxu0 0.0
        %6042 = vmatpush1.msra.mxu0 0.0
        %6043 = vmatprep.subr.mxu0 0.0
        %6044 = vmatpush1.msra.mxu0 0.0
        %6045 = vmatprep.subr.mxu0 0.0
        %6046 = vmatpush1.msra.mxu0 0.0
        %6047 = vmatprep.subr.mxu0 0.0
        %6048 = vmatpush1.msra.mxu0 0.0
        %6049 = vmatprep.subr.mxu0 0.0
        %6050 = vmatpush1.msra.mxu0 0.0
        %6051 = vmatprep.subr.mxu0 0.0
        %6052 = vmatpush1.msra.mxu0 0.0
        %6053 = vmatprep.subr.mxu0 0.0
        %6054 = vmatpush1.msra.mxu0 0.0
        %6055 = vmatprep.subr.mxu0 0.0
        %6056 = vmatpush1.msra.mxu0 0.0
        %6057 = vmatprep.subr.mxu0 0.0
        %6058 = vmatpush1.msra.mxu0 0.0
        %6059 = vmatprep.subr.mxu0 0.0
        %6060 = vmatpush1.msra.mxu0 0.0
        %6061 = vmatprep.subr.mxu0 0.0
        %6062 = vmatpush1.msra.mxu0 0.0
        %6063 = vmatprep.subr.mxu0 0.0
        %6064 = vmatpush1.msra.mxu0 0.0
        %6065 = vmatprep.subr.mxu0 0.0
        %6066 = vmatpush1.msra.mxu0 0.0
        %6067 = vmatprep.subr.mxu0 0.0
        %6068 = vmatpush1.msra.mxu0 0.0
        %6069 = vmatprep.subr.mxu0 0.0
        %6070 = vmatpush1.msra.mxu0 0.0
        %6071 = vmatprep.subr.mxu0 0.0
        %6072 = vmatpush1.msra.mxu0 0.0
        %6073 = vmatprep.subr.mxu0 0.0
        %6074 = vmatpush1.msra.mxu0 0.0
        %6075 = vmatprep.subr.mxu0 0.0
        %6076 = vmatpush1.msra.mxu0 0.0
        %6077 = vmatprep.subr.mxu0 0.0
        %6078 = vmatpush1.msra.mxu0 0.0
        %6079 = vmatprep.subr.mxu0 0.0
        %6080 = vmatpush1.msra.mxu0 0.0
        %6081 = vmatprep.mubr.f32.mxu0 0.0
        %6082 = vmatmul.mubr.f32.gmra.mrb[0].mxu0 %v6015
        %v6083 = vpop.f32.mrb[0].mxu0
        %v6084 = vadd.f32 0.0, %v6083
        %v6085 = vpop.f32.mrb[0].mxu0
        %6086 = vdwg.mxu0
        %v6087 = vadd.f32 %v6011, %v6084
        %v6088 = vld [vmem:[#allocation4 + $0x70] sm:$0xff]
        %v6089 = vld [vmem:[#allocation4 + $0x78] sm:$0xff]
        %v6091 = vsel %vm3661, %v5541, 0
        %6093 = vmatprep.subr.mxu0 0.0
        %6094 = vmatpush1.msra.mxu0 %v6088
        %6095 = vmatprep.subr.mxu0 0.0
        %6096 = vmatpush1.msra.mxu0 %v6089
        %6097 = vmatprep.subr.mxu0 0.0
        %6098 = vmatpush1.msra.mxu0 0.0
        %6099 = vmatprep.subr.mxu0 0.0
        %6100 = vmatpush1.msra.mxu0 0.0
        %6101 = vmatprep.subr.mxu0 0.0
        %6102 = vmatpush1.msra.mxu0 0.0
        %6103 = vmatprep.subr.mxu0 0.0
        %6104 = vmatpush1.msra.mxu0 0.0
        %6105 = vmatprep.subr.mxu0 0.0
        %6106 = vmatpush1.msra.mxu0 0.0
        %6107 = vmatprep.subr.mxu0 0.0
        %6108 = vmatpush1.msra.mxu0 0.0
        %6109 = vmatprep.subr.mxu0 0.0
        %6110 = vmatpush1.msra.mxu0 0.0
        %6111 = vmatprep.subr.mxu0 0.0
        %6112 = vmatpush1.msra.mxu0 0.0
        %6113 = vmatprep.subr.mxu0 0.0
        %6114 = vmatpush1.msra.mxu0 0.0
        %6115 = vmatprep.subr.mxu0 0.0
        %6116 = vmatpush1.msra.mxu0 0.0
        %6117 = vmatprep.subr.mxu0 0.0
        %6118 = vmatpush1.msra.mxu0 0.0
        %6119 = vmatprep.subr.mxu0 0.0
        %6120 = vmatpush1.msra.mxu0 0.0
        %6121 = vmatprep.subr.mxu0 0.0
        %6122 = vmatpush1.msra.mxu0 0.0
        %6123 = vmatprep.subr.mxu0 0.0
        %6124 = vmatpush1.msra.mxu0 0.0
        %6125 = vmatprep.subr.mxu0 0.0
        %6126 = vmatpush1.msra.mxu0 0.0
        %6127 = vmatprep.subr.mxu0 0.0
        %6128 = vmatpush1.msra.mxu0 0.0
        %6129 = vmatprep.subr.mxu0 0.0
        %6130 = vmatpush1.msra.mxu0 0.0
        %6131 = vmatprep.subr.mxu0 0.0
        %6132 = vmatpush1.msra.mxu0 0.0
        %6133 = vmatprep.subr.mxu0 0.0
        %6134 = vmatpush1.msra.mxu0 0.0
        %6135 = vmatprep.subr.mxu0 0.0
        %6136 = vmatpush1.msra.mxu0 0.0
        %6137 = vmatprep.subr.mxu0 0.0
        %6138 = vmatpush1.msra.mxu0 0.0
        %6139 = vmatprep.subr.mxu0 0.0
        %6140 = vmatpush1.msra.mxu0 0.0
        %6141 = vmatprep.subr.mxu0 0.0
        %6142 = vmatpush1.msra.mxu0 0.0
        %6143 = vmatprep.subr.mxu0 0.0
        %6144 = vmatpush1.msra.mxu0 0.0
        %6145 = vmatprep.subr.mxu0 0.0
        %6146 = vmatpush1.msra.mxu0 0.0
        %6147 = vmatprep.subr.mxu0 0.0
        %6148 = vmatpush1.msra.mxu0 0.0
        %6149 = vmatprep.subr.mxu0 0.0
        %6150 = vmatpush1.msra.mxu0 0.0
        %6151 = vmatprep.subr.mxu0 0.0
        %6152 = vmatpush1.msra.mxu0 0.0
        %6153 = vmatprep.subr.mxu0 0.0
        %6154 = vmatpush1.msra.mxu0 0.0
        %6155 = vmatprep.subr.mxu0 0.0
        %6156 = vmatpush1.msra.mxu0 0.0
        %6157 = vmatprep.mubr.f32.mxu0 0.0
        %6158 = vmatmul.mubr.f32.gmra.mrb[0].mxu0 %v6091
        %v6159 = vpop.f32.mrb[0].mxu0
        %v6160 = vadd.f32 0.0, %v6159
        %v6161 = vpop.f32.mrb[0].mxu0
        %6162 = vdwg.mxu0
        %v6163 = vadd.f32 %v6087, %v6160
        %v6164 = vld [vmem:[#allocation4 + $0x80] sm:$0xff]
        %v6165 = vld [vmem:[#allocation4 + $0x88] sm:$0xff]
        %v6167 = vsel %vm3661, %v5546, 0
        %6169 = vmatprep.subr.mxu0 0.0
        %6170 = vmatpush1.msra.mxu0 %v6164
        %6171 = vmatprep.subr.mxu0 0.0
        %6172 = vmatpush1.msra.mxu0 %v6165
        %6173 = vmatprep.subr.mxu0 0.0
        %6174 = vmatpush1.msra.mxu0 0.0
        %6175 = vmatprep.subr.mxu0 0.0
        %6176 = vmatpush1.msra.mxu0 0.0
        %6177 = vmatprep.subr.mxu0 0.0
        %6178 = vmatpush1.msra.mxu0 0.0
        %6179 = vmatprep.subr.mxu0 0.0
        %6180 = vmatpush1.msra.mxu0 0.0
        %6181 = vmatprep.subr.mxu0 0.0
        %6182 = vmatpush1.msra.mxu0 0.0
        %6183 = vmatprep.subr.mxu0 0.0
        %6184 = vmatpush1.msra.mxu0 0.0
        %6185 = vmatprep.subr.mxu0 0.0
        %6186 = vmatpush1.msra.mxu0 0.0
        %6187 = vmatprep.subr.mxu0 0.0
        %6188 = vmatpush1.msra.mxu0 0.0
        %6189 = vmatprep.subr.mxu0 0.0
        %6190 = vmatpush1.msra.mxu0 0.0
        %6191 = vmatprep.subr.mxu0 0.0
        %6192 = vmatpush1.msra.mxu0 0.0
        %6193 = vmatprep.subr.mxu0 0.0
        %6194 = vmatpush1.msra.mxu0 0.0
        %6195 = vmatprep.subr.mxu0 0.0
        %6196 = vmatpush1.msra.mxu0 0.0
        %6197 = vmatprep.subr.mxu0 0.0
        %6198 = vmatpush1.msra.mxu0 0.0
        %6199 = vmatprep.subr.mxu0 0.0
        %6200 = vmatpush1.msra.mxu0 0.0
        %6201 = vmatprep.subr.mxu0 0.0
        %6202 = vmatpush1.msra.mxu0 0.0
        %6203 = vmatprep.subr.mxu0 0.0
        %6204 = vmatpush1.msra.mxu0 0.0
        %6205 = vmatprep.subr.mxu0 0.0
        %6206 = vmatpush1.msra.mxu0 0.0
        %6207 = vmatprep.subr.mxu0 0.0
        %6208 = vmatpush1.msra.mxu0 0.0
        %6209 = vmatprep.subr.mxu0 0.0
        %6210 = vmatpush1.msra.mxu0 0.0
        %6211 = vmatprep.subr.mxu0 0.0
        %6212 = vmatpush1.msra.mxu0 0.0
        %6213 = vmatprep.subr.mxu0 0.0
        %6214 = vmatpush1.msra.mxu0 0.0
        %6215 = vmatprep.subr.mxu0 0.0
        %6216 = vmatpush1.msra.mxu0 0.0
        %6217 = vmatprep.subr.mxu0 0.0
        %6218 = vmatpush1.msra.mxu0 0.0
        %6219 = vmatprep.subr.mxu0 0.0
        %6220 = vmatpush1.msra.mxu0 0.0
        %6221 = vmatprep.subr.mxu0 0.0
        %6222 = vmatpush1.msra.mxu0 0.0
        %6223 = vmatprep.subr.mxu0 0.0
        %6224 = vmatpush1.msra.mxu0 0.0
        %6225 = vmatprep.subr.mxu0 0.0
        %6226 = vmatpush1.msra.mxu0 0.0
        %6227 = vmatprep.subr.mxu0 0.0
        %6228 = vmatpush1.msra.mxu0 0.0
        %6229 = vmatprep.subr.mxu0 0.0
        %6230 = vmatpush1.msra.mxu0 0.0
        %6231 = vmatprep.subr.mxu0 0.0
        %6232 = vmatpush1.msra.mxu0 0.0
        %6233 = vmatprep.mubr.f32.mxu0 0.0
        %6234 = vmatmul.mubr.f32.gmra.mrb[0].mxu0 %v6167
        %v6235 = vpop.f32.mrb[0].mxu0
        %v6236 = vadd.f32 0.0, %v6235
        %v6237 = vpop.f32.mrb[0].mxu0
        %6238 = vdwg.mxu0
        %v6239 = vadd.f32 %v6163, %v6236
        %v6240 = vxor.u32 %v6239, 2147483648
        %v6241 = vmul.f32 %v6240, 1.442695
        %v6242 = vpow.pop %v6241
        %v6243 = vadd.f32 %v6242, 1.0
        %v6244 = vrcp.pop %v6243
        %v6245 = vmul.f32 1.0, %v6244
        %vm6246 = vcmask 0
        %6247 = vst.msk [vmem:[%s552] sm:$0x1] %vm6246, %v6245
        %p6248 = scmp.lt.s32.totalorder %s29, 1
        %s6249 = scalar_select %p6248, %s29, 1
        %s6250 = scalar_lea.vmem %s16, %s6249
        // Predicated region
        $region93: #{tpu_custom_call.1} parent=83 // pred_check
          %p6251 = pneg %p388
        $region94: #{tpu_custom_call.1} parent=83 // pred_check_branch
          %6253 = sbr.rel (%p6251) target = $region96
        $region95: #{tpu_custom_call.1} parent=83 // pred_region
          _
        $region96: #{tpu_custom_call.1} parent=83 // pred_fallthru
          _
      $region84: #{tpu_custom_call.1} parent=5 // pred_fallthru
        _
      %p6254 = scmp.le.s32.totalorder 2, %s24
      // Predicated region
      $region97: #{tpu_custom_call.1} parent=5 // pred_check
        %p6255 = pneg %p6254
      $region98: #{tpu_custom_call.1} parent=5 // pred_check_branch
        %6257 = sbr.rel (%p6255) target = $region100
      $region99: #{tpu_custom_call.1} parent=5 // pred_region
        %s6258 = ssub.s32 %s24, 2
        // Predicated region
        $region101: #{tpu_custom_call.1} parent=99 // pred_check
          %p6259 = pneg %p394
        $region102: #{tpu_custom_call.1} parent=99 // pred_check_branch
          %6261 = sbr.rel (%p6259) target = $region104
        $region103: #{tpu_custom_call.1} parent=99 // pred_region
          %p6262 = scmp.lt.s32.totalorder %s30, 1
          %s6263 = scalar_select %p6262, %s30, 1
          %s6264 = scalar_lea.vmem %s16, %s6263
        $region104: #{tpu_custom_call.1} parent=99 // pred_fallthru
          _
      $region100: #{tpu_custom_call.1} parent=5 // pred_fallthru
        _
    $region6: #{tpu_custom_call.1} parent=1 // loop_footer
      %s28 = sadd.s32 1, %s24
    $region7: #{tpu_custom_call.1} parent=1 // loop_footer_branch
      %23 = sbr.rel target = $region3
    $region8: #{tpu_custom_call.1} parent=1 // loop_exit
      _
    %6265 = vsyncpa [#allocation3], 1
    %s6266 = scalar_lea.sflag [#allocation3], 1
    %6267 = vsyncpa %s6266, 1
    %6268 = vsyncpa [#allocation5], 1

</llo_original>
